<compile_context>
chip_gen: v7x
topology: tpu7x:2x2x1
jax: 0.10.0
libtpu: 0.0.40
codegen_flags: <defaults>
</compile_context>

<pallas_src>
import jax
import jax.numpy as jnp
from jax import lax
from jax.experimental import pallas as pl
from jax.experimental.pallas import tpu as pltpu

N_EMBED = 384
N_HEAD = 6
HEAD_SIZE = N_EMBED // N_HEAD          # 64
BLOCK_SIZE = 256                       # max sequence length (causal mask buffer)
LN_EPS = 1e-5
# NOTE: the PyTorch reference scales logits by C**-0.5 with C = n_embed (not head_size).
_ATTN_SCALE = float(N_EMBED) ** -0.5
_NEG_BIG = -1e30                       # large-negative instead of -inf (mask-safe)


def _layernorm(x, gamma, beta):
    mu = jnp.mean(x, axis=-1, keepdims=True)
    var = jnp.mean((x - mu) ** 2, axis=-1, keepdims=True)
    return (x - mu) * lax.rsqrt(var + LN_EPS) * gamma + beta


def block_kernel(x_ref,
                 ln1_g_ref, ln1_b_ref,
                 wqkv_ref,                       # (C, 3C) bf16 -- fused Q|K|V columns
                 wproj_ref, bproj_ref,           # (C, C) bf16, (1, C) f32
                 ln2_g_ref, ln2_b_ref,
                 w1_ref, b1_ref, w2_ref, b2_ref,  # bf16 weights, f32 biases
                 out_ref):
    BB, T, C = x_ref.shape
    D = HEAD_SIZE
    M = BB * T
    x = x_ref[...].reshape(M, C)                      # f32 residual stream

    # ---------------- x = x + sa(ln1(x)) ----------------
    xn = _layernorm(x, ln1_g_ref[0], ln1_b_ref[0]).astype(jnp.bfloat16)

    # One lane-dense QKV matmul: (M, 384) x (384, 1152) -> f32.
    qkv = jnp.dot(xn, wqkv_ref[...], preferred_element_type=jnp.float32)
    # 128-aligned slices for Q / K / V; scale folded into the q bf16 cast.
    q = (qkv[:, 0 * C:1 * C] * _ATTN_SCALE).astype(jnp.bfloat16)
    k = qkv[:, 1 * C:2 * C].astype(jnp.bfloat16)
    v = qkv[:, 2 * C:3 * C].astype(jnp.bfloat16)

    row = lax.broadcasted_iota(jnp.int32, (T, T), 0)
    col = lax.broadcasted_iota(jnp.int32, (T, T), 1)
    causal = (row >= col)[None]                       # (1, T, T) broadcast over BB

    heads = []
    for h in range(N_HEAD):                           # static unroll over 6 heads only
        qh = q[:, h * D:(h + 1) * D].reshape(BB, T, D)
        kh = k[:, h * D:(h + 1) * D].reshape(BB, T, D)
        vh = v[:, h * D:(h + 1) * D].reshape(BB, T, D)
        # Batched QK^T over BB in a single dot_general (no per-batch Python loop).
        logits = jnp.einsum('bqd,bkd->bqk', qh, kh,
                            preferred_element_type=jnp.float32)          # (BB, T, T)
        logits = jnp.where(causal, logits, _NEG_BIG)
        p = jnp.exp(logits - jnp.max(logits, axis=-1, keepdims=True))    # unnormalized
        # TODO(synk): attention-weight dropout is identity (eval mode).
        o = jnp.einsum('bqk,bkd->bqd', p.astype(jnp.bfloat16), vh,
                       preferred_element_type=jnp.float32)               # (BB, T, D)
        # Deferred softmax normalization: scale the (T, D) output, not the (T, T) probs.
        o = o * pl.reciprocal(jnp.sum(p, axis=-1, keepdims=True), approx=True)
        heads.append(o.astype(jnp.bfloat16))

    # Fused output projection: one (M, 384) x (384, 384) matmul, K fully filled.
    sa_in = jnp.concatenate(heads, axis=-1).reshape(M, C)
    sa = jnp.dot(sa_in, wproj_ref[...], preferred_element_type=jnp.float32)
    x = x + sa + bproj_ref[0]
    # TODO(synk): residual (proj) dropout is identity (eval mode).

    # ---------------- x = x + ffwd(ln2(x)) ----------------
    xn2 = _layernorm(x, ln2_g_ref[0], ln2_b_ref[0]).astype(jnp.bfloat16)
    h1 = jnp.dot(xn2, w1_ref[...], preferred_element_type=jnp.float32) + b1_ref[0]
    h1 = jnp.maximum(h1, 0.0).astype(jnp.bfloat16)
    h2 = jnp.dot(h1, w2_ref[...], preferred_element_type=jnp.float32) + b2_ref[0]
    # TODO(synk): FFN output dropout is identity (eval mode).
    x = x + h2

    out_ref[...] = x.reshape(BB, T, C)


def _pick_batch_block(B, T, target_rows=1024):
    """Largest divisor of B giving ~target_rows rows per grid step, while keeping
    >=2 grid steps (preferably an even count) so both v7x TensorCores get work."""
    cap = max(1, target_rows // max(T, 1))
    divs = [d for d in range(1, B + 1) if B % d == 0 and d <= cap] or [1]
    multi = [d for d in divs if B // d >= 2]
    if multi:
        even = [d for d in multi if (B // d) % 2 == 0]
        return max(even) if even else max(multi)
    return max(divs)


def block_forward(x, params):
    """x: (B, T, C) float32; params: tuple from init_params (bf16 matmul weights)."""
    B, T, C = x.shape
    assert C == N_EMBED and T <= BLOCK_SIZE
    assert T % 8 == 0, "T must be a multiple of 8 (sublane tiling)"
    BB = _pick_batch_block(B, T)
    grid = (B // BB,)

    def weight_spec(p):
        n = p.ndim
        # Grid-invariant index_map -> the block is fetched once and kept resident.
        return pl.BlockSpec(p.shape, lambda b, n=n: (0,) * n)

    in_specs = [pl.BlockSpec((BB, T, C), lambda b: (b, 0, 0))]
    in_specs += [weight_spec(p) for p in params]

    # Weights (bf16) are ~3.5 MiB; even double-buffered they plus the ~1k-row f32
    # intermediates fit well under the 40 MiB scoped limit (>=16 MiB headroom on
    # v7x's 64 MiB physical VMEM; far below v5e/v6e's 128 MiB).
    return pl.pallas_call(
        block_kernel,
        out_shape=jax.ShapeDtypeStruct((B, T, C), jnp.float32),
        grid_spec=pltpu.PrefetchScalarGridSpec(
            num_scalar_prefetch=0,
            grid=grid,
            in_specs=in_specs,
            out_specs=pl.BlockSpec((BB, T, C), lambda b: (b, 0, 0)),
        ),
        compiler_params=pltpu.CompilerParams(
            dimension_semantics=("parallel",),
            vmem_limit_bytes=40 * 1024 * 1024),
    )(x, *params)


def init_params(key):
    """Deterministic synthetic parameters.  Matmul weights stored in bf16 with fused,
    lane-dense layouts: wqkv (C, 3C) with columns [Q heads | K heads | V heads],
    each head occupying 64 consecutive columns; wproj (C, C)."""
    ks = jax.random.split(key, 8)
    s = 0.02
    f32, bf16 = jnp.float32, jnp.bfloat16

    ln1_g = jnp.ones((1, N_EMBED), f32)
    ln1_b = jnp.zeros((1, N_EMBED), f32)
    wqkv = (s * jax.random.normal(ks[0], (N_EMBED, 3 * N_EMBED), f32)).astype(bf16)
    wproj = (s * jax.random.normal(ks[1], (N_EMBED, N_EMBED), f32)).astype(bf16)
    bproj = s * jax.random.normal(ks[2], (1, N_EMBED), f32)
    ln2_g = jnp.ones((1, N_EMBED), f32)
    ln2_b = jnp.zeros((1, N_EMBED), f32)
    w1 = (s * jax.random.normal(ks[3], (N_EMBED, 4 * N_EMBED), f32)).astype(bf16)
    b1 = s * jax.random.normal(ks[4], (1, 4 * N_EMBED), f32)
    w2 = (s * jax.random.normal(ks[5], (4 * N_EMBED, N_EMBED), f32)).astype(bf16)
    b2 = jnp.zeros((1, N_EMBED), f32)

    return (ln1_g, ln1_b, wqkv, wproj, bproj,
            ln2_g, ln2_b, w1, b1, w2, b2)


def block_forward_ref(x, params):
    """Pure-JAX f32 reference of Block.forward (eval mode) using the same params."""
    (ln1_g, ln1_b, wqkv, wproj, bproj,
     ln2_g, ln2_b, w1, b1, w2, b2) = [p.astype(jnp.float32) for p in params]
    B, T, C = x.shape
    D = HEAD_SIZE

    xn = _layernorm(x, ln1_g[0], ln1_b[0])
    q = xn @ wqkv[:, 0 * C:1 * C]
    k = xn @ wqkv[:, 1 * C:2 * C]
    v = xn @ wqkv[:, 2 * C:3 * C]
    mask = jnp.tril(jnp.ones((T, T), bool))
    heads = []
    for h in range(N_HEAD):
        sl = slice(h * D, (h + 1) * D)
        wei = jnp.einsum('btd,bsd->bts', q[..., sl], k[..., sl]) * (C ** -0.5)
        wei = jnp.where(mask, wei, -jnp.inf)
        wei = jax.nn.softmax(wei, axis=-1)
        heads.append(jnp.einsum('bts,bsd->btd', wei, v[..., sl]))
    sa = jnp.concatenate(heads, axis=-1)                 # (B, T, C)
    x = x + sa @ wproj + bproj[0]

    xn2 = _layernorm(x, ln2_g[0], ln2_b[0])
    h1 = jnp.maximum(xn2 @ w1 + b1[0], 0.0)
    x = x + h1 @ w2 + b2[0]
    return x


if __name__ == "__main__":
    key = jax.random.PRNGKey(0)
    kx, kp = jax.random.split(key)

    B, T = 2, 8                          # small test shapes; C fixed at n_embed = 384
    x = jax.random.normal(kx, (B, T, N_EMBED), jnp.float32)
    params = init_params(kp)

    out = jax.block_until_ready(block_forward(x, params))
    ref = block_forward_ref(x, params)

    assert out.shape == (B, T, N_EMBED)
    err = jnp.max(jnp.abs(out - ref))
    # bf16 matmul operands (f32 accumulation) + approx reciprocal in the softmax
    # epilogue -> relaxed tolerance vs the pure-f32 reference.
    assert jnp.allclose(out, ref, atol=2e-2, rtol=2e-2), f"max err {err}"

    print("KERNEL_OK")
</pallas_src>

<mosaic_0001>
module attributes {stable_mosaic.version = 11 : i64} {
  func.func @block_kernel(%arg0: i32, %arg1: memref<1x8x384xf32, #tpu.memory_space<vmem>>, %arg2: memref<1x384xf32, #tpu.memory_space<vmem>>, %arg3: memref<1x384xf32, #tpu.memory_space<vmem>>, %arg4: memref<384x1152xbf16, #tpu.memory_space<vmem>>, %arg5: memref<384x384xbf16, #tpu.memory_space<vmem>>, %arg6: memref<1x384xf32, #tpu.memory_space<vmem>>, %arg7: memref<1x384xf32, #tpu.memory_space<vmem>>, %arg8: memref<1x384xf32, #tpu.memory_space<vmem>>, %arg9: memref<384x1536xbf16, #tpu.memory_space<vmem>>, %arg10: memref<1x1536xf32, #tpu.memory_space<vmem>>, %arg11: memref<1536x384xbf16, #tpu.memory_space<vmem>>, %arg12: memref<1x384xf32, #tpu.memory_space<vmem>>, %arg13: memref<1x8x384xf32, #tpu.memory_space<vmem>>) attributes {dimension_semantics = [#tpu.dimension_semantics<parallel>], iteration_bounds = array<i64: 2>, scalar_prefetch = 0 : i64, scratch_operands = 0 : i64, tpu.core_type = #tpu.core_type<tc>, window_params = [{transform_indices = @transform_0, window_bounds = array<i64: 1, 8, 384>}, {pipeline_mode = #tpu.pipeline_mode<synchronous>, transform_indices = @transform_1, window_bounds = array<i64: 1, 384>}, {pipeline_mode = #tpu.pipeline_mode<synchronous>, transform_indices = @transform_2, window_bounds = array<i64: 1, 384>}, {pipeline_mode = #tpu.pipeline_mode<synchronous>, transform_indices = @transform_3, window_bounds = array<i64: 384, 1152>}, {pipeline_mode = #tpu.pipeline_mode<synchronous>, transform_indices = @transform_4, window_bounds = array<i64: 384, 384>}, {pipeline_mode = #tpu.pipeline_mode<synchronous>, transform_indices = @transform_5, window_bounds = array<i64: 1, 384>}, {pipeline_mode = #tpu.pipeline_mode<synchronous>, transform_indices = @transform_6, window_bounds = array<i64: 1, 384>}, {pipeline_mode = #tpu.pipeline_mode<synchronous>, transform_indices = @transform_7, window_bounds = array<i64: 1, 384>}, {pipeline_mode = #tpu.pipeline_mode<synchronous>, transform_indices = @transform_8, window_bounds = array<i64: 384, 1536>}, {pipeline_mode = #tpu.pipeline_mode<synchronous>, transform_indices = @transform_9, window_bounds = array<i64: 1, 1536>}, {pipeline_mode = #tpu.pipeline_mode<synchronous>, transform_indices = @transform_10, window_bounds = array<i64: 1536, 384>}, {pipeline_mode = #tpu.pipeline_mode<synchronous>, transform_indices = @transform_11, window_bounds = array<i64: 1, 384>}, {transform_indices = @transform_12, window_bounds = array<i64: 1, 8, 384>}]} {
    %c0 = arith.constant 0 : index
    %c0_0 = arith.constant 0 : index
    %c0_1 = arith.constant 0 : index
    %0 = vector.load %arg1[%c0, %c0_0, %c0_1] : memref<1x8x384xf32, #tpu.memory_space<vmem>>, vector<1x8x384xf32>
    %1 = vector.shape_cast %0 : vector<1x8x384xf32> to vector<8x384xf32>
    %c0_2 = arith.constant 0 : index
    %c0_3 = arith.constant 0 : index
    %2 = vector.load %arg2[%c0_2, %c0_3] : memref<1x384xf32, #tpu.memory_space<vmem>>, vector<1x384xf32>
    %3 = vector.shape_cast %2 : vector<1x384xf32> to vector<384xf32>
    %c0_4 = arith.constant 0 : index
    %c0_5 = arith.constant 0 : index
    %4 = vector.load %arg3[%c0_4, %c0_5] : memref<1x384xf32, #tpu.memory_space<vmem>>, vector<1x384xf32>
    %5 = vector.shape_cast %4 : vector<1x384xf32> to vector<384xf32>
    %cst = arith.constant dense<0.000000e+00> : vector<8xf32>
    %6 = vector.multi_reduction <add>, %1, %cst [1] : vector<8x384xf32> to vector<8xf32>
    %7 = vector.shape_cast %6 : vector<8xf32> to vector<8x1xf32>
    %cst_6 = arith.constant 3.840000e+02 : f32
    %8 = vector.broadcast %cst_6 : f32 to vector<8x1xf32>
    %9 = arith.divf %7, %8 : vector<8x1xf32>
    %10 = vector.broadcast %9 : vector<8x1xf32> to vector<8x384xf32>
    %11 = arith.subf %1, %10 : vector<8x384xf32>
    %12 = arith.mulf %11, %11 : vector<8x384xf32>
    %cst_7 = arith.constant dense<0.000000e+00> : vector<8xf32>
    %13 = vector.multi_reduction <add>, %12, %cst_7 [1] : vector<8x384xf32> to vector<8xf32>
    %14 = vector.shape_cast %13 : vector<8xf32> to vector<8x1xf32>
    %cst_8 = arith.constant 3.840000e+02 : f32
    %15 = vector.broadcast %cst_8 : f32 to vector<8x1xf32>
    %16 = arith.divf %14, %15 : vector<8x1xf32>
    %17 = vector.broadcast %9 : vector<8x1xf32> to vector<8x384xf32>
    %18 = arith.subf %1, %17 : vector<8x384xf32>
    %cst_9 = arith.constant 9.99999974E-6 : f32
    %19 = vector.broadcast %cst_9 : f32 to vector<8x1xf32>
    %20 = arith.addf %16, %19 : vector<8x1xf32>
    %21 = math.rsqrt %20 : vector<8x1xf32>
    %22 = vector.broadcast %21 : vector<8x1xf32> to vector<8x384xf32>
    %23 = arith.mulf %18, %22 : vector<8x384xf32>
    %24 = vector.shape_cast %3 : vector<384xf32> to vector<1x384xf32>
    %25 = vector.broadcast %24 : vector<1x384xf32> to vector<8x384xf32>
    %26 = arith.mulf %23, %25 : vector<8x384xf32>
    %27 = vector.shape_cast %5 : vector<384xf32> to vector<1x384xf32>
    %28 = vector.broadcast %27 : vector<1x384xf32> to vector<8x384xf32>
    %29 = arith.addf %26, %28 : vector<8x384xf32>
    %30 = arith.truncf %29 : vector<8x384xf32> to vector<8x384xbf16>
    %c0_10 = arith.constant 0 : index
    %c0_11 = arith.constant 0 : index
    %31 = vector.load %arg4[%c0_10, %c0_11] : memref<384x1152xbf16, #tpu.memory_space<vmem>>, vector<384x1152xbf16>
    %cst_12 = arith.constant dense<0.000000e+00> : vector<8x1152xf32>
    %32 = tpu.matmul %30, %31, %cst_12 {dimension_numbers = #tpu.dot_dimension_numbers<[1], [0], [0], [1], [0, 0, 1, 1], [], []>} : vector<8x384xbf16>, vector<384x1152xbf16>, vector<8x1152xf32> -> vector<8x1152xf32>
    %33 = vector.extract_strided_slice %32 {offsets = [0, 0], sizes = [8, 384], strides = [1, 1]} : vector<8x1152xf32> to vector<8x384xf32>
    %cst_13 = arith.constant 0.0510310382 : f32
    %34 = vector.broadcast %cst_13 : f32 to vector<8x384xf32>
    %35 = arith.mulf %33, %34 : vector<8x384xf32>
    %36 = arith.truncf %35 : vector<8x384xf32> to vector<8x384xbf16>
    %37 = vector.extract_strided_slice %32 {offsets = [0, 384], sizes = [8, 384], strides = [1, 1]} : vector<8x1152xf32> to vector<8x384xf32>
    %38 = arith.truncf %37 : vector<8x384xf32> to vector<8x384xbf16>
    %39 = vector.extract_strided_slice %32 {offsets = [0, 768], sizes = [8, 384], strides = [1, 1]} : vector<8x1152xf32> to vector<8x384xf32>
    %40 = arith.truncf %39 : vector<8x384xf32> to vector<8x384xbf16>
    %41 = tpu.iota {dimensions = array<i32: 0>} : vector<8x8xi32>
    %42 = tpu.iota {dimensions = array<i32: 1>} : vector<8x8xi32>
    %43 = arith.cmpi sge, %41, %42 : vector<8x8xi32>
    %44 = vector.shape_cast %43 : vector<8x8xi1> to vector<1x8x8xi1>
    %45 = vector.extract_strided_slice %36 {offsets = [0, 0], sizes = [8, 64], strides = [1, 1]} : vector<8x384xbf16> to vector<8x64xbf16>
    %46 = vector.shape_cast %45 : vector<8x64xbf16> to vector<1x8x64xbf16>
    %47 = vector.extract_strided_slice %38 {offsets = [0, 0], sizes = [8, 64], strides = [1, 1]} : vector<8x384xbf16> to vector<8x64xbf16>
    %48 = vector.shape_cast %47 : vector<8x64xbf16> to vector<1x8x64xbf16>
    %49 = vector.extract_strided_slice %40 {offsets = [0, 0], sizes = [8, 64], strides = [1, 1]} : vector<8x384xbf16> to vector<8x64xbf16>
    %50 = vector.shape_cast %49 : vector<8x64xbf16> to vector<1x8x64xbf16>
    "tpu.trace_start"() <{level = 10 : i32, message = "bqd,bkd->bqk"}> : () -> ()
    %cst_14 = arith.constant dense<0.000000e+00> : vector<1x8x8xf32>
    %51 = tpu.matmul %46, %48, %cst_14 {dimension_numbers = #tpu.dot_dimension_numbers<[2], [2], [1], [1], [0, 0, 0, 1, 1, 1], [0], [0]>} : vector<1x8x64xbf16>, vector<1x8x64xbf16>, vector<1x8x8xf32> -> vector<1x8x8xf32>
    %cst_15 = arith.constant -1.000000e+30 : f32
    "tpu.trace_stop"() : () -> ()
    %52 = vector.broadcast %cst_15 : f32 to vector<1x8x8xf32>
    %53 = arith.select %44, %51, %52 : vector<1x8x8xi1>, vector<1x8x8xf32>
    %cst_16 = arith.constant dense<0xFF800000> : vector<1x8xf32>
    %54 = vector.multi_reduction <maximumf>, %53, %cst_16 [2] : vector<1x8x8xf32> to vector<1x8xf32>
    %55 = vector.shape_cast %54 : vector<1x8xf32> to vector<1x8x1xf32>
    %56 = vector.broadcast %55 : vector<1x8x1xf32> to vector<1x8x8xf32>
    %57 = arith.subf %53, %56 : vector<1x8x8xf32>
    %58 = math.exp %57 : vector<1x8x8xf32>
    %59 = arith.truncf %58 : vector<1x8x8xf32> to vector<1x8x8xbf16>
    "tpu.trace_start"() <{level = 10 : i32, message = "bqk,bkd->bqd"}> : () -> ()
    %cst_17 = arith.constant dense<0.000000e+00> : vector<1x8x64xf32>
    %60 = tpu.matmul %59, %50, %cst_17 {dimension_numbers = #tpu.dot_dimension_numbers<[2], [1], [1], [2], [0, 0, 0, 1, 1, 2], [0], [0]>} : vector<1x8x8xbf16>, vector<1x8x64xbf16>, vector<1x8x64xf32> -> vector<1x8x64xf32>
    "tpu.trace_stop"() : () -> ()
    %cst_18 = arith.constant dense<0.000000e+00> : vector<1x8xf32>
    %61 = vector.multi_reduction <add>, %58, %cst_18 [2] : vector<1x8x8xf32> to vector<1x8xf32>
    %62 = vector.shape_cast %61 : vector<1x8xf32> to vector<1x8x1xf32>
    %63 = tpu.reciprocal %62 {approx = true} : vector<1x8x1xf32> -> vector<1x8x1xf32>
    %64 = vector.broadcast %63 : vector<1x8x1xf32> to vector<1x8x64xf32>
    %65 = arith.mulf %60, %64 : vector<1x8x64xf32>
    %66 = arith.truncf %65 : vector<1x8x64xf32> to vector<1x8x64xbf16>
    %67 = vector.extract_strided_slice %36 {offsets = [0, 64], sizes = [8, 64], strides = [1, 1]} : vector<8x384xbf16> to vector<8x64xbf16>
    %68 = vector.shape_cast %67 : vector<8x64xbf16> to vector<1x8x64xbf16>
    %69 = vector.extract_strided_slice %38 {offsets = [0, 64], sizes = [8, 64], strides = [1, 1]} : vector<8x384xbf16> to vector<8x64xbf16>
    %70 = vector.shape_cast %69 : vector<8x64xbf16> to vector<1x8x64xbf16>
    %71 = vector.extract_strided_slice %40 {offsets = [0, 64], sizes = [8, 64], strides = [1, 1]} : vector<8x384xbf16> to vector<8x64xbf16>
    %72 = vector.shape_cast %71 : vector<8x64xbf16> to vector<1x8x64xbf16>
    "tpu.trace_start"() <{level = 10 : i32, message = "bqd,bkd->bqk"}> : () -> ()
    %cst_19 = arith.constant dense<0.000000e+00> : vector<1x8x8xf32>
    %73 = tpu.matmul %68, %70, %cst_19 {dimension_numbers = #tpu.dot_dimension_numbers<[2], [2], [1], [1], [0, 0, 0, 1, 1, 1], [0], [0]>} : vector<1x8x64xbf16>, vector<1x8x64xbf16>, vector<1x8x8xf32> -> vector<1x8x8xf32>
    %cst_20 = arith.constant -1.000000e+30 : f32
    "tpu.trace_stop"() : () -> ()
    %74 = vector.broadcast %cst_20 : f32 to vector<1x8x8xf32>
    %75 = arith.select %44, %73, %74 : vector<1x8x8xi1>, vector<1x8x8xf32>
    %cst_21 = arith.constant dense<0xFF800000> : vector<1x8xf32>
    %76 = vector.multi_reduction <maximumf>, %75, %cst_21 [2] : vector<1x8x8xf32> to vector<1x8xf32>
    %77 = vector.shape_cast %76 : vector<1x8xf32> to vector<1x8x1xf32>
    %78 = vector.broadcast %77 : vector<1x8x1xf32> to vector<1x8x8xf32>
    %79 = arith.subf %75, %78 : vector<1x8x8xf32>
    %80 = math.exp %79 : vector<1x8x8xf32>
    %81 = arith.truncf %80 : vector<1x8x8xf32> to vector<1x8x8xbf16>
    "tpu.trace_start"() <{level = 10 : i32, message = "bqk,bkd->bqd"}> : () -> ()
    %cst_22 = arith.constant dense<0.000000e+00> : vector<1x8x64xf32>
    %82 = tpu.matmul %81, %72, %cst_22 {dimension_numbers = #tpu.dot_dimension_numbers<[2], [1], [1], [2], [0, 0, 0, 1, 1, 2], [0], [0]>} : vector<1x8x8xbf16>, vector<1x8x64xbf16>, vector<1x8x64xf32> -> vector<1x8x64xf32>
    "tpu.trace_stop"() : () -> ()
    %cst_23 = arith.constant dense<0.000000e+00> : vector<1x8xf32>
    %83 = vector.multi_reduction <add>, %80, %cst_23 [2] : vector<1x8x8xf32> to vector<1x8xf32>
    %84 = vector.shape_cast %83 : vector<1x8xf32> to vector<1x8x1xf32>
    %85 = tpu.reciprocal %84 {approx = true} : vector<1x8x1xf32> -> vector<1x8x1xf32>
    %86 = vector.broadcast %85 : vector<1x8x1xf32> to vector<1x8x64xf32>
    %87 = arith.mulf %82, %86 : vector<1x8x64xf32>
    %88 = arith.truncf %87 : vector<1x8x64xf32> to vector<1x8x64xbf16>
    %89 = vector.extract_strided_slice %36 {offsets = [0, 128], sizes = [8, 64], strides = [1, 1]} : vector<8x384xbf16> to vector<8x64xbf16>
    %90 = vector.shape_cast %89 : vector<8x64xbf16> to vector<1x8x64xbf16>
    %91 = vector.extract_strided_slice %38 {offsets = [0, 128], sizes = [8, 64], strides = [1, 1]} : vector<8x384xbf16> to vector<8x64xbf16>
    %92 = vector.shape_cast %91 : vector<8x64xbf16> to vector<1x8x64xbf16>
    %93 = vector.extract_strided_slice %40 {offsets = [0, 128], sizes = [8, 64], strides = [1, 1]} : vector<8x384xbf16> to vector<8x64xbf16>
    %94 = vector.shape_cast %93 : vector<8x64xbf16> to vector<1x8x64xbf16>
    "tpu.trace_start"() <{level = 10 : i32, message = "bqd,bkd->bqk"}> : () -> ()
    %cst_24 = arith.constant dense<0.000000e+00> : vector<1x8x8xf32>
    %95 = tpu.matmul %90, %92, %cst_24 {dimension_numbers = #tpu.dot_dimension_numbers<[2], [2], [1], [1], [0, 0, 0, 1, 1, 1], [0], [0]>} : vector<1x8x64xbf16>, vector<1x8x64xbf16>, vector<1x8x8xf32> -> vector<1x8x8xf32>
    %cst_25 = arith.constant -1.000000e+30 : f32
    "tpu.trace_stop"() : () -> ()
    %96 = vector.broadcast %cst_25 : f32 to vector<1x8x8xf32>
    %97 = arith.select %44, %95, %96 : vector<1x8x8xi1>, vector<1x8x8xf32>
    %cst_26 = arith.constant dense<0xFF800000> : vector<1x8xf32>
    %98 = vector.multi_reduction <maximumf>, %97, %cst_26 [2] : vector<1x8x8xf32> to vector<1x8xf32>
    %99 = vector.shape_cast %98 : vector<1x8xf32> to vector<1x8x1xf32>
    %100 = vector.broadcast %99 : vector<1x8x1xf32> to vector<1x8x8xf32>
    %101 = arith.subf %97, %100 : vector<1x8x8xf32>
    %102 = math.exp %101 : vector<1x8x8xf32>
    %103 = arith.truncf %102 : vector<1x8x8xf32> to vector<1x8x8xbf16>
    "tpu.trace_start"() <{level = 10 : i32, message = "bqk,bkd->bqd"}> : () -> ()
    %cst_27 = arith.constant dense<0.000000e+00> : vector<1x8x64xf32>
    %104 = tpu.matmul %103, %94, %cst_27 {dimension_numbers = #tpu.dot_dimension_numbers<[2], [1], [1], [2], [0, 0, 0, 1, 1, 2], [0], [0]>} : vector<1x8x8xbf16>, vector<1x8x64xbf16>, vector<1x8x64xf32> -> vector<1x8x64xf32>
    "tpu.trace_stop"() : () -> ()
    %cst_28 = arith.constant dense<0.000000e+00> : vector<1x8xf32>
    %105 = vector.multi_reduction <add>, %102, %cst_28 [2] : vector<1x8x8xf32> to vector<1x8xf32>
    %106 = vector.shape_cast %105 : vector<1x8xf32> to vector<1x8x1xf32>
    %107 = tpu.reciprocal %106 {approx = true} : vector<1x8x1xf32> -> vector<1x8x1xf32>
    %108 = vector.broadcast %107 : vector<1x8x1xf32> to vector<1x8x64xf32>
    %109 = arith.mulf %104, %108 : vector<1x8x64xf32>
    %110 = arith.truncf %109 : vector<1x8x64xf32> to vector<1x8x64xbf16>
    %111 = vector.extract_strided_slice %36 {offsets = [0, 192], sizes = [8, 64], strides = [1, 1]} : vector<8x384xbf16> to vector<8x64xbf16>
    %112 = vector.shape_cast %111 : vector<8x64xbf16> to vector<1x8x64xbf16>
    %113 = vector.extract_strided_slice %38 {offsets = [0, 192], sizes = [8, 64], strides = [1, 1]} : vector<8x384xbf16> to vector<8x64xbf16>
    %114 = vector.shape_cast %113 : vector<8x64xbf16> to vector<1x8x64xbf16>
    %115 = vector.extract_strided_slice %40 {offsets = [0, 192], sizes = [8, 64], strides = [1, 1]} : vector<8x384xbf16> to vector<8x64xbf16>
    %116 = vector.shape_cast %115 : vector<8x64xbf16> to vector<1x8x64xbf16>
    "tpu.trace_start"() <{level = 10 : i32, message = "bqd,bkd->bqk"}> : () -> ()
    %cst_29 = arith.constant dense<0.000000e+00> : vector<1x8x8xf32>
    %117 = tpu.matmul %112, %114, %cst_29 {dimension_numbers = #tpu.dot_dimension_numbers<[2], [2], [1], [1], [0, 0, 0, 1, 1, 1], [0], [0]>} : vector<1x8x64xbf16>, vector<1x8x64xbf16>, vector<1x8x8xf32> -> vector<1x8x8xf32>
    %cst_30 = arith.constant -1.000000e+30 : f32
    "tpu.trace_stop"() : () -> ()
    %118 = vector.broadcast %cst_30 : f32 to vector<1x8x8xf32>
    %119 = arith.select %44, %117, %118 : vector<1x8x8xi1>, vector<1x8x8xf32>
    %cst_31 = arith.constant dense<0xFF800000> : vector<1x8xf32>
    %120 = vector.multi_reduction <maximumf>, %119, %cst_31 [2] : vector<1x8x8xf32> to vector<1x8xf32>
    %121 = vector.shape_cast %120 : vector<1x8xf32> to vector<1x8x1xf32>
    %122 = vector.broadcast %121 : vector<1x8x1xf32> to vector<1x8x8xf32>
    %123 = arith.subf %119, %122 : vector<1x8x8xf32>
    %124 = math.exp %123 : vector<1x8x8xf32>
    %125 = arith.truncf %124 : vector<1x8x8xf32> to vector<1x8x8xbf16>
    "tpu.trace_start"() <{level = 10 : i32, message = "bqk,bkd->bqd"}> : () -> ()
    %cst_32 = arith.constant dense<0.000000e+00> : vector<1x8x64xf32>
    %126 = tpu.matmul %125, %116, %cst_32 {dimension_numbers = #tpu.dot_dimension_numbers<[2], [1], [1], [2], [0, 0, 0, 1, 1, 2], [0], [0]>} : vector<1x8x8xbf16>, vector<1x8x64xbf16>, vector<1x8x64xf32> -> vector<1x8x64xf32>
    "tpu.trace_stop"() : () -> ()
    %cst_33 = arith.constant dense<0.000000e+00> : vector<1x8xf32>
    %127 = vector.multi_reduction <add>, %124, %cst_33 [2] : vector<1x8x8xf32> to vector<1x8xf32>
    %128 = vector.shape_cast %127 : vector<1x8xf32> to vector<1x8x1xf32>
    %129 = tpu.reciprocal %128 {approx = true} : vector<1x8x1xf32> -> vector<1x8x1xf32>
    %130 = vector.broadcast %129 : vector<1x8x1xf32> to vector<1x8x64xf32>
    %131 = arith.mulf %126, %130 : vector<1x8x64xf32>
    %132 = arith.truncf %131 : vector<1x8x64xf32> to vector<1x8x64xbf16>
    %133 = vector.extract_strided_slice %36 {offsets = [0, 256], sizes = [8, 64], strides = [1, 1]} : vector<8x384xbf16> to vector<8x64xbf16>
    %134 = vector.shape_cast %133 : vector<8x64xbf16> to vector<1x8x64xbf16>
    %135 = vector.extract_strided_slice %38 {offsets = [0, 256], sizes = [8, 64], strides = [1, 1]} : vector<8x384xbf16> to vector<8x64xbf16>
    %136 = vector.shape_cast %135 : vector<8x64xbf16> to vector<1x8x64xbf16>
    %137 = vector.extract_strided_slice %40 {offsets = [0, 256], sizes = [8, 64], strides = [1, 1]} : vector<8x384xbf16> to vector<8x64xbf16>
    %138 = vector.shape_cast %137 : vector<8x64xbf16> to vector<1x8x64xbf16>
    "tpu.trace_start"() <{level = 10 : i32, message = "bqd,bkd->bqk"}> : () -> ()
    %cst_34 = arith.constant dense<0.000000e+00> : vector<1x8x8xf32>
    %139 = tpu.matmul %134, %136, %cst_34 {dimension_numbers = #tpu.dot_dimension_numbers<[2], [2], [1], [1], [0, 0, 0, 1, 1, 1], [0], [0]>} : vector<1x8x64xbf16>, vector<1x8x64xbf16>, vector<1x8x8xf32> -> vector<1x8x8xf32>
    %cst_35 = arith.constant -1.000000e+30 : f32
    "tpu.trace_stop"() : () -> ()
    %140 = vector.broadcast %cst_35 : f32 to vector<1x8x8xf32>
    %141 = arith.select %44, %139, %140 : vector<1x8x8xi1>, vector<1x8x8xf32>
    %cst_36 = arith.constant dense<0xFF800000> : vector<1x8xf32>
    %142 = vector.multi_reduction <maximumf>, %141, %cst_36 [2] : vector<1x8x8xf32> to vector<1x8xf32>
    %143 = vector.shape_cast %142 : vector<1x8xf32> to vector<1x8x1xf32>
    %144 = vector.broadcast %143 : vector<1x8x1xf32> to vector<1x8x8xf32>
    %145 = arith.subf %141, %144 : vector<1x8x8xf32>
    %146 = math.exp %145 : vector<1x8x8xf32>
    %147 = arith.truncf %146 : vector<1x8x8xf32> to vector<1x8x8xbf16>
    "tpu.trace_start"() <{level = 10 : i32, message = "bqk,bkd->bqd"}> : () -> ()
    %cst_37 = arith.constant dense<0.000000e+00> : vector<1x8x64xf32>
    %148 = tpu.matmul %147, %138, %cst_37 {dimension_numbers = #tpu.dot_dimension_numbers<[2], [1], [1], [2], [0, 0, 0, 1, 1, 2], [0], [0]>} : vector<1x8x8xbf16>, vector<1x8x64xbf16>, vector<1x8x64xf32> -> vector<1x8x64xf32>
    "tpu.trace_stop"() : () -> ()
    %cst_38 = arith.constant dense<0.000000e+00> : vector<1x8xf32>
    %149 = vector.multi_reduction <add>, %146, %cst_38 [2] : vector<1x8x8xf32> to vector<1x8xf32>
    %150 = vector.shape_cast %149 : vector<1x8xf32> to vector<1x8x1xf32>
    %151 = tpu.reciprocal %150 {approx = true} : vector<1x8x1xf32> -> vector<1x8x1xf32>
    %152 = vector.broadcast %151 : vector<1x8x1xf32> to vector<1x8x64xf32>
    %153 = arith.mulf %148, %152 : vector<1x8x64xf32>
    %154 = arith.truncf %153 : vector<1x8x64xf32> to vector<1x8x64xbf16>
    %155 = vector.extract_strided_slice %36 {offsets = [0, 320], sizes = [8, 64], strides = [1, 1]} : vector<8x384xbf16> to vector<8x64xbf16>
    %156 = vector.shape_cast %155 : vector<8x64xbf16> to vector<1x8x64xbf16>
    %157 = vector.extract_strided_slice %38 {offsets = [0, 320], sizes = [8, 64], strides = [1, 1]} : vector<8x384xbf16> to vector<8x64xbf16>
    %158 = vector.shape_cast %157 : vector<8x64xbf16> to vector<1x8x64xbf16>
    %159 = vector.extract_strided_slice %40 {offsets = [0, 320], sizes = [8, 64], strides = [1, 1]} : vector<8x384xbf16> to vector<8x64xbf16>
    %160 = vector.shape_cast %159 : vector<8x64xbf16> to vector<1x8x64xbf16>
    "tpu.trace_start"() <{level = 10 : i32, message = "bqd,bkd->bqk"}> : () -> ()
    %cst_39 = arith.constant dense<0.000000e+00> : vector<1x8x8xf32>
    %161 = tpu.matmul %156, %158, %cst_39 {dimension_numbers = #tpu.dot_dimension_numbers<[2], [2], [1], [1], [0, 0, 0, 1, 1, 1], [0], [0]>} : vector<1x8x64xbf16>, vector<1x8x64xbf16>, vector<1x8x8xf32> -> vector<1x8x8xf32>
    %cst_40 = arith.constant -1.000000e+30 : f32
    "tpu.trace_stop"() : () -> ()
    %162 = vector.broadcast %cst_40 : f32 to vector<1x8x8xf32>
    %163 = arith.select %44, %161, %162 : vector<1x8x8xi1>, vector<1x8x8xf32>
    %cst_41 = arith.constant dense<0xFF800000> : vector<1x8xf32>
    %164 = vector.multi_reduction <maximumf>, %163, %cst_41 [2] : vector<1x8x8xf32> to vector<1x8xf32>
    %165 = vector.shape_cast %164 : vector<1x8xf32> to vector<1x8x1xf32>
    %166 = vector.broadcast %165 : vector<1x8x1xf32> to vector<1x8x8xf32>
    %167 = arith.subf %163, %166 : vector<1x8x8xf32>
    %168 = math.exp %167 : vector<1x8x8xf32>
    %169 = arith.truncf %168 : vector<1x8x8xf32> to vector<1x8x8xbf16>
    "tpu.trace_start"() <{level = 10 : i32, message = "bqk,bkd->bqd"}> : () -> ()
    %cst_42 = arith.constant dense<0.000000e+00> : vector<1x8x64xf32>
    %170 = tpu.matmul %169, %160, %cst_42 {dimension_numbers = #tpu.dot_dimension_numbers<[2], [1], [1], [2], [0, 0, 0, 1, 1, 2], [0], [0]>} : vector<1x8x8xbf16>, vector<1x8x64xbf16>, vector<1x8x64xf32> -> vector<1x8x64xf32>
    "tpu.trace_stop"() : () -> ()
    %cst_43 = arith.constant dense<0.000000e+00> : vector<1x8xf32>
    %171 = vector.multi_reduction <add>, %168, %cst_43 [2] : vector<1x8x8xf32> to vector<1x8xf32>
    %172 = vector.shape_cast %171 : vector<1x8xf32> to vector<1x8x1xf32>
    %173 = tpu.reciprocal %172 {approx = true} : vector<1x8x1xf32> -> vector<1x8x1xf32>
    %174 = vector.broadcast %173 : vector<1x8x1xf32> to vector<1x8x64xf32>
    %175 = arith.mulf %170, %174 : vector<1x8x64xf32>
    %176 = arith.truncf %175 : vector<1x8x64xf32> to vector<1x8x64xbf16>
    %177 = tpu.concatenate %66, %88, %110, %132, %154, %176 in 2 : vector<1x8x64xbf16>, vector<1x8x64xbf16>, vector<1x8x64xbf16>, vector<1x8x64xbf16>, vector<1x8x64xbf16>, vector<1x8x64xbf16> -> vector<1x8x384xbf16>
    %178 = vector.shape_cast %177 : vector<1x8x384xbf16> to vector<8x384xbf16>
    %c0_44 = arith.constant 0 : index
    %c0_45 = arith.constant 0 : index
    %179 = vector.load %arg5[%c0_44, %c0_45] : memref<384x384xbf16, #tpu.memory_space<vmem>>, vector<384x384xbf16>
    %cst_46 = arith.constant dense<0.000000e+00> : vector<8x384xf32>
    %180 = tpu.matmul %178, %179, %cst_46 {dimension_numbers = #tpu.dot_dimension_numbers<[1], [0], [0], [1], [0, 0, 1, 1], [], []>} : vector<8x384xbf16>, vector<384x384xbf16>, vector<8x384xf32> -> vector<8x384xf32>
    %181 = arith.addf %1, %180 : vector<8x384xf32>
    %c0_47 = arith.constant 0 : index
    %c0_48 = arith.constant 0 : index
    %182 = vector.load %arg6[%c0_47, %c0_48] : memref<1x384xf32, #tpu.memory_space<vmem>>, vector<1x384xf32>
    %183 = vector.shape_cast %182 : vector<1x384xf32> to vector<384xf32>
    %184 = vector.shape_cast %183 : vector<384xf32> to vector<1x384xf32>
    %185 = vector.broadcast %184 : vector<1x384xf32> to vector<8x384xf32>
    %186 = arith.addf %181, %185 : vector<8x384xf32>
    %c0_49 = arith.constant 0 : index
    %c0_50 = arith.constant 0 : index
    %187 = vector.load %arg7[%c0_49, %c0_50] : memref<1x384xf32, #tpu.memory_space<vmem>>, vector<1x384xf32>
    %188 = vector.shape_cast %187 : vector<1x384xf32> to vector<384xf32>
    %c0_51 = arith.constant 0 : index
    %c0_52 = arith.constant 0 : index
    %189 = vector.load %arg8[%c0_51, %c0_52] : memref<1x384xf32, #tpu.memory_space<vmem>>, vector<1x384xf32>
    %190 = vector.shape_cast %189 : vector<1x384xf32> to vector<384xf32>
    %cst_53 = arith.constant dense<0.000000e+00> : vector<8xf32>
    %191 = vector.multi_reduction <add>, %186, %cst_53 [1] : vector<8x384xf32> to vector<8xf32>
    %192 = vector.shape_cast %191 : vector<8xf32> to vector<8x1xf32>
    %cst_54 = arith.constant 3.840000e+02 : f32
    %193 = vector.broadcast %cst_54 : f32 to vector<8x1xf32>
    %194 = arith.divf %192, %193 : vector<8x1xf32>
    %195 = vector.broadcast %194 : vector<8x1xf32> to vector<8x384xf32>
    %196 = arith.subf %186, %195 : vector<8x384xf32>
    %197 = arith.mulf %196, %196 : vector<8x384xf32>
    %cst_55 = arith.constant dense<0.000000e+00> : vector<8xf32>
    %198 = vector.multi_reduction <add>, %197, %cst_55 [1] : vector<8x384xf32> to vector<8xf32>
    %199 = vector.shape_cast %198 : vector<8xf32> to vector<8x1xf32>
    %cst_56 = arith.constant 3.840000e+02 : f32
    %200 = vector.broadcast %cst_56 : f32 to vector<8x1xf32>
    %201 = arith.divf %199, %200 : vector<8x1xf32>
    %202 = vector.broadcast %194 : vector<8x1xf32> to vector<8x384xf32>
    %203 = arith.subf %186, %202 : vector<8x384xf32>
    %cst_57 = arith.constant 9.99999974E-6 : f32
    %204 = vector.broadcast %cst_57 : f32 to vector<8x1xf32>
    %205 = arith.addf %201, %204 : vector<8x1xf32>
    %206 = math.rsqrt %205 : vector<8x1xf32>
    %207 = vector.broadcast %206 : vector<8x1xf32> to vector<8x384xf32>
    %208 = arith.mulf %203, %207 : vector<8x384xf32>
    %209 = vector.shape_cast %188 : vector<384xf32> to vector<1x384xf32>
    %210 = vector.broadcast %209 : vector<1x384xf32> to vector<8x384xf32>
    %211 = arith.mulf %208, %210 : vector<8x384xf32>
    %212 = vector.shape_cast %190 : vector<384xf32> to vector<1x384xf32>
    %213 = vector.broadcast %212 : vector<1x384xf32> to vector<8x384xf32>
    %214 = arith.addf %211, %213 : vector<8x384xf32>
    %215 = arith.truncf %214 : vector<8x384xf32> to vector<8x384xbf16>
    %c0_58 = arith.constant 0 : index
    %c0_59 = arith.constant 0 : index
    %216 = vector.load %arg9[%c0_58, %c0_59] : memref<384x1536xbf16, #tpu.memory_space<vmem>>, vector<384x1536xbf16>
    %cst_60 = arith.constant dense<0.000000e+00> : vector<8x1536xf32>
    %217 = tpu.matmul %215, %216, %cst_60 {dimension_numbers = #tpu.dot_dimension_numbers<[1], [0], [0], [1], [0, 0, 1, 1], [], []>} : vector<8x384xbf16>, vector<384x1536xbf16>, vector<8x1536xf32> -> vector<8x1536xf32>
    %c0_61 = arith.constant 0 : index
    %c0_62 = arith.constant 0 : index
    %218 = vector.load %arg10[%c0_61, %c0_62] : memref<1x1536xf32, #tpu.memory_space<vmem>>, vector<1x1536xf32>
    %219 = vector.shape_cast %218 : vector<1x1536xf32> to vector<1536xf32>
    %220 = vector.shape_cast %219 : vector<1536xf32> to vector<1x1536xf32>
    %221 = vector.broadcast %220 : vector<1x1536xf32> to vector<8x1536xf32>
    %222 = arith.addf %217, %221 : vector<8x1536xf32>
    %cst_63 = arith.constant 0.000000e+00 : f32
    %223 = vector.broadcast %cst_63 : f32 to vector<8x1536xf32>
    %224 = arith.maximumf %222, %223 : vector<8x1536xf32>
    %225 = arith.truncf %224 : vector<8x1536xf32> to vector<8x1536xbf16>
    %c0_64 = arith.constant 0 : index
    %c0_65 = arith.constant 0 : index
    %226 = vector.load %arg11[%c0_64, %c0_65] : memref<1536x384xbf16, #tpu.memory_space<vmem>>, vector<1536x384xbf16>
    %cst_66 = arith.constant dense<0.000000e+00> : vector<8x384xf32>
    %227 = tpu.matmul %225, %226, %cst_66 {dimension_numbers = #tpu.dot_dimension_numbers<[1], [0], [0], [1], [0, 0, 1, 1], [], []>} : vector<8x1536xbf16>, vector<1536x384xbf16>, vector<8x384xf32> -> vector<8x384xf32>
    %c0_67 = arith.constant 0 : index
    %c0_68 = arith.constant 0 : index
    %228 = vector.load %arg12[%c0_67, %c0_68] : memref<1x384xf32, #tpu.memory_space<vmem>>, vector<1x384xf32>
    %229 = vector.shape_cast %228 : vector<1x384xf32> to vector<384xf32>
    %230 = vector.shape_cast %229 : vector<384xf32> to vector<1x384xf32>
    %231 = vector.broadcast %230 : vector<1x384xf32> to vector<8x384xf32>
    %232 = arith.addf %227, %231 : vector<8x384xf32>
    %233 = arith.addf %186, %232 : vector<8x384xf32>
    %234 = vector.shape_cast %233 : vector<8x384xf32> to vector<1x8x384xf32>
    %c0_69 = arith.constant 0 : index
    %c0_70 = arith.constant 0 : index
    %c0_71 = arith.constant 0 : index
    %235 = vector.load %arg13[%c0_69, %c0_70, %c0_71] : memref<1x8x384xf32, #tpu.memory_space<vmem>>, vector<1x8x384xf32>
    tpu.vector_store %arg13[%c0_69, %c0_70, %c0_71], %234 {strides = array<i32>} : memref<1x8x384xf32, #tpu.memory_space<vmem>>, vector<1x8x384xf32>,
    return
  }
  func.func @transform_0(%arg0: i32) -> (i32, i32, i32) {
    %c0_i32 = arith.constant 0 : i32
    %c0_i32_0 = arith.constant 0 : i32
    %c0_i32_1 = arith.constant 0 : i32
    return %arg0, %c0_i32, %c0_i32_0 : i32, i32, i32
  }
  func.func @transform_1(%arg0: i32) -> (i32, i32) {
    %c0_i32 = arith.constant 0 : i32
    %c0_i32_0 = arith.constant 0 : i32
    %c0_i32_1 = arith.constant 0 : i32
    return %c0_i32, %c0_i32_0 : i32, i32
  }
  func.func @transform_2(%arg0: i32) -> (i32, i32) {
    %c0_i32 = arith.constant 0 : i32
    %c0_i32_0 = arith.constant 0 : i32
    %c0_i32_1 = arith.constant 0 : i32
    return %c0_i32, %c0_i32_0 : i32, i32
  }
  func.func @transform_3(%arg0: i32) -> (i32, i32) {
    %c0_i32 = arith.constant 0 : i32
    %c0_i32_0 = arith.constant 0 : i32
    %c0_i32_1 = arith.constant 0 : i32
    return %c0_i32, %c0_i32_0 : i32, i32
  }
  func.func @transform_4(%arg0: i32) -> (i32, i32) {
    %c0_i32 = arith.constant 0 : i32
    %c0_i32_0 = arith.constant 0 : i32
    %c0_i32_1 = arith.constant 0 : i32
    return %c0_i32, %c0_i32_0 : i32, i32
  }
  func.func @transform_5(%arg0: i32) -> (i32, i32) {
    %c0_i32 = arith.constant 0 : i32
    %c0_i32_0 = arith.constant 0 : i32
    %c0_i32_1 = arith.constant 0 : i32
    return %c0_i32, %c0_i32_0 : i32, i32
  }
  func.func @transform_6(%arg0: i32) -> (i32, i32) {
    %c0_i32 = arith.constant 0 : i32
    %c0_i32_0 = arith.constant 0 : i32
    %c0_i32_1 = arith.constant 0 : i32
    return %c0_i32, %c0_i32_0 : i32, i32
  }
  func.func @transform_7(%arg0: i32) -> (i32, i32) {
    %c0_i32 = arith.constant 0 : i32
    %c0_i32_0 = arith.constant 0 : i32
    %c0_i32_1 = arith.constant 0 : i32
    return %c0_i32, %c0_i32_0 : i32, i32
  }
  func.func @transform_8(%arg0: i32) -> (i32, i32) {
    %c0_i32 = arith.constant 0 : i32
    %c0_i32_0 = arith.constant 0 : i32
    %c0_i32_1 = arith.constant 0 : i32
    return %c0_i32, %c0_i32_0 : i32, i32
  }
  func.func @transform_9(%arg0: i32) -> (i32, i32) {
    %c0_i32 = arith.constant 0 : i32
    %c0_i32_0 = arith.constant 0 : i32
    %c0_i32_1 = arith.constant 0 : i32
    return %c0_i32, %c0_i32_0 : i32, i32
  }
  func.func @transform_10(%arg0: i32) -> (i32, i32) {
    %c0_i32 = arith.constant 0 : i32
    %c0_i32_0 = arith.constant 0 : i32
    %c0_i32_1 = arith.constant 0 : i32
    return %c0_i32, %c0_i32_0 : i32, i32
  }
  func.func @transform_11(%arg0: i32) -> (i32, i32) {
    %c0_i32 = arith.constant 0 : i32
    %c0_i32_0 = arith.constant 0 : i32
    %c0_i32_1 = arith.constant 0 : i32
    return %c0_i32, %c0_i32_0 : i32, i32
  }
  func.func @transform_12(%arg0: i32) -> (i32, i32, i32) {
    %c0_i32 = arith.constant 0 : i32
    %c0_i32_0 = arith.constant 0 : i32
    %c0_i32_1 = arith.constant 0 : i32
    return %arg0, %c0_i32, %c0_i32_0 : i32, i32, i32
  }
}

</mosaic_0001>

<llo_original>
// kernel: tpu_custom_call.1
$region0: #{tpu_custom_call.1}
  #allocation0 [shape = 'u32[]', space=smem, size = 0x4, offset = 0x4, fixed_abs, tag = 'smem constant byte address 0x4 - core index']
  #allocation1 [shape = 'u32[144,128]{1,0:T(1,128)}', space=vmem, size = 0x12000, scoped, tag = 'internal scratch']
  %s0 = inlined_call_operand.hbm [shape: f32[2,8,384], index: 0, kind: input, shape index: {}]
  %s1 = inlined_call_operand.hbm [shape: f32[1,384], index: 1, kind: input, shape index: {}]
  %s2 = inlined_call_operand.hbm [shape: f32[1,384], index: 2, kind: input, shape index: {}]
  %s3 = inlined_call_operand.hbm [shape: bf16[384,1152], index: 3, kind: input, shape index: {}]
  %s4 = inlined_call_operand.hbm [shape: bf16[384,384], index: 4, kind: input, shape index: {}]
  %s5 = inlined_call_operand.hbm [shape: f32[1,384], index: 5, kind: input, shape index: {}]
  %s6 = inlined_call_operand.hbm [shape: f32[1,384], index: 6, kind: input, shape index: {}]
  %s7 = inlined_call_operand.hbm [shape: f32[1,384], index: 7, kind: input, shape index: {}]
  %s8 = inlined_call_operand.hbm [shape: bf16[384,1536], index: 8, kind: input, shape index: {}]
  %s9 = inlined_call_operand.hbm [shape: f32[1,1536], index: 9, kind: input, shape index: {}]
  %s10 = inlined_call_operand.hbm [shape: bf16[1536,384], index: 10, kind: input, shape index: {}]
  %s11 = inlined_call_operand.hbm [shape: f32[1,384], index: 11, kind: input, shape index: {}]
  %s12 = inlined_call_operand.hbm [shape: f32[2,8,384], index: 12, kind: output, shape index: {}]
  %s13 = sld [smem:[#allocation0]]
  $region129: #{tpu_custom_call.1} parent=0
    _
  %s15 = ssub.s32 1, %s13
  %s16 = scalar_select 0, %s15, %s13
  $region1: #{tpu_custom_call.1} parent=0
    #allocation2 [shape = 'u8[24576]{0}', space=vmem, size = 0x6000, scoped, tag = 'input window, operand 0']
    #allocation3 [shape = 's32[2]{0}', space=sflag, size = 0x8, scoped, tag = 'scoped memory for tpu_custom_call.1']
    #allocation4 [shape = 's32[2]{0}', space=sflag, size = 0x8, scoped, tag = 'scoped memory for tpu_custom_call.1']
    #allocation5 [shape = 'u8[1536]{0}', space=vmem, size = 0x800, scoped, tag = 'input window, operand 1, single buffered']
    #allocation6 [shape = 's32[1]{0}', space=sflag, size = 0x4, scoped, tag = 'scoped memory for tpu_custom_call.1']
    #allocation7 [shape = 'u8[1536]{0}', space=vmem, size = 0x800, scoped, tag = 'input window, operand 2, single buffered']
    #allocation8 [shape = 'u8[884736]{0}', space=vmem, size = 0xd8000, scoped, tag = 'input window, operand 3, single buffered']
    #allocation9 [shape = 's32[1]{0}', space=sflag, size = 0x4, scoped, tag = 'scoped memory for tpu_custom_call.1']
    #allocation10 [shape = 'u8[294912]{0}', space=vmem, size = 0x48000, scoped, tag = 'input window, operand 4, single buffered']
    #allocation11 [shape = 'u8[1536]{0}', space=vmem, size = 0x800, scoped, tag = 'input window, operand 5, single buffered']
    #allocation12 [shape = 's32[1]{0}', space=sflag, size = 0x4, scoped, tag = 'scoped memory for tpu_custom_call.1']
    #allocation13 [shape = 'u8[1536]{0}', space=vmem, size = 0x800, scoped, tag = 'input window, operand 6, single buffered']
    #allocation14 [shape = 'u8[1536]{0}', space=vmem, size = 0x800, scoped, tag = 'input window, operand 7, single buffered']
    #allocation15 [shape = 's32[1]{0}', space=sflag, size = 0x4, scoped, tag = 'scoped memory for tpu_custom_call.1']
    #allocation16 [shape = 'u8[1179648]{0}', space=vmem, size = 0x120000, scoped, tag = 'input window, operand 8, single buffered']
    #allocation17 [shape = 'u8[6144]{0}', space=vmem, size = 0x1800, scoped, tag = 'input window, operand 9, single buffered']
    #allocation18 [shape = 's32[1]{0}', space=sflag, size = 0x4, scoped, tag = 'scoped memory for tpu_custom_call.1']
    #allocation19 [shape = 'u8[1179648]{0}', space=vmem, size = 0x120000, scoped, tag = 'input window, operand 10, single buffered']
    #allocation20 [shape = 'u8[1536]{0}', space=vmem, size = 0x800, scoped, tag = 'input window, operand 11, single buffered']
    #allocation21 [shape = 's32[1]{0}', space=sflag, size = 0x4, scoped, tag = 'scoped memory for tpu_custom_call.1']
    #allocation22 [shape = 'u8[24576]{0}', space=vmem, size = 0x6000, scoped, tag = 'output window, operand 0']
    %17 = vsyncpa [#allocation3], 0
    %s18 = scalar_lea.sflag [#allocation3], 1
    %19 = vsyncpa %s18, 0
    %20 = vsyncpa [#allocation6], 0
    %21 = vsyncpa [#allocation9], 0
    %22 = vsyncpa [#allocation12], 0
    %23 = vsyncpa [#allocation15], 0
    %24 = vsyncpa [#allocation18], 0
    %25 = vsyncpa [#allocation21], 0
    %26 = vsyncpa [#allocation4], 0
    %s27 = scalar_lea.sflag [#allocation4], 1
    %28 = vsyncpa %s27, 0
    loop: start=0, step=1, limit=4
    $region2: #{tpu_custom_call.1} parent=1 // loop_pre_header
      _
    $region3: #{tpu_custom_call.1} parent=1 // loop_header
      %s30 = sphi 0, %s34
      %p31 = scmp.ge.s32.totalorder %s30, 4
      %s40 = sphi 0, %s42
      %s43 = sphi 0, %s40
      %s44 = sphi 0, %s43
      %s60 = sphi 0, %s44
      %s64 = sphi 0, %s64
      %s66 = sphi 0, %s64
      %s67 = sphi 0, %s66
      %s81 = sphi 0, %s67
      %s85 = sphi 0, %s85
      %s87 = sphi 0, %s85
      %s88 = sphi 0, %s87
      %s102 = sphi 0, %s88
      %s106 = sphi 0, %s106
      %s108 = sphi 0, %s106
      %s109 = sphi 0, %s108
      %s123 = sphi 0, %s109
      %s127 = sphi 0, %s127
      %s129 = sphi 0, %s127
      %s130 = sphi 0, %s129
      %s144 = sphi 0, %s130
      %s148 = sphi 0, %s148
      %s150 = sphi 0, %s148
      %s151 = sphi 0, %s150
      %s165 = sphi 0, %s151
      %s169 = sphi 0, %s169
      %s171 = sphi 0, %s169
      %s172 = sphi 0, %s171
      %s186 = sphi 0, %s172
      %s190 = sphi 0, %s190
      %s192 = sphi 0, %s190
      %s193 = sphi 0, %s192
      %s207 = sphi 0, %s193
      %s211 = sphi 0, %s211
      %s213 = sphi 0, %s211
      %s214 = sphi 0, %s213
      %s228 = sphi 0, %s214
      %s232 = sphi 0, %s232
      %s234 = sphi 0, %s232
      %s235 = sphi 0, %s234
      %s249 = sphi 0, %s235
      %s253 = sphi 0, %s253
      %s255 = sphi 0, %s253
      %s256 = sphi 0, %s255
      %s270 = sphi 0, %s256
      %s274 = sphi 0, %s274
      %s276 = sphi 0, %s274
      %s277 = sphi 0, %s276
      %s291 = sphi 0, %s277
      %s297 = sphi 0, %s299
      %s300 = sphi 0, %s297
      %s301 = sphi 0, %s300
      %s317 = sphi 0, %s301
    $region4: #{tpu_custom_call.1} parent=1 // loop_header_branch
      %33 = sbr.rel (%p31) target = $region8
    $region5: #{tpu_custom_call.1} parent=1 // loop_body
      %s35 = ssub.s32 %s30, 1
      %s36 = ssub.s32 %s30, 2
      %s37 = sadd.s32 %s30, 1
      %s38 = ssub.s32 %s30, %s37
      %p39 = scmp.eq.s32.totalorder %s38, 0
      %s41 = sadd.s32 %s40, 1
      %s42 = scalar_select %p39, %s40, %s41
      %p45 = pneg %p39
      %p46 = scmp.eq.s32.totalorder %s30, 1
      %p47 = por %p45, %p46
      %p48 = scmp.ne.s32.totalorder %s40, %s43
      %p49 = scmp.eq.s32.totalorder %s30, 0
      %p50 = por %p48, %p49
      %p51 = scmp.ne.s32.totalorder %s40, %s43
      %p52 = scmp.eq.s32.totalorder %s35, 1
      %p53 = por %p51, %p52
      %p54 = scmp.ne.s32.totalorder %s43, %s44
      %p55 = scmp.eq.s32.totalorder %s35, 0
      %p56 = por %p54, %p55
      %p57 = scmp.ne.s32.totalorder %s43, %s44
      %p58 = scmp.eq.s32.totalorder %s36, 1
      %p59 = por %p57, %p58
      %p61 = scmp.ne.s32.totalorder %s44, %s60
      %p62 = scmp.eq.s32.totalorder %s36, 0
      %p63 = por %p61, %p62
      %s65 = sadd.s32 %s64, 1
      %p68 = scmp.eq.s32.totalorder %s30, 1
      %p69 = scmp.ne.s32.totalorder %s64, %s66
      %p70 = scmp.eq.s32.totalorder %s30, 0
      %p71 = por %p69, %p70
      %p72 = scmp.ne.s32.totalorder %s64, %s66
      %p73 = scmp.eq.s32.totalorder %s35, 1
      %p74 = por %p72, %p73
      %p75 = scmp.ne.s32.totalorder %s66, %s67
      %p76 = scmp.eq.s32.totalorder %s35, 0
      %p77 = por %p75, %p76
      %p78 = scmp.ne.s32.totalorder %s66, %s67
      %p79 = scmp.eq.s32.totalorder %s36, 1
      %p80 = por %p78, %p79
      %p82 = scmp.ne.s32.totalorder %s67, %s81
      %p83 = scmp.eq.s32.totalorder %s36, 0
      %p84 = por %p82, %p83
      %s86 = sadd.s32 %s85, 1
      %p89 = scmp.eq.s32.totalorder %s30, 1
      %p90 = scmp.ne.s32.totalorder %s85, %s87
      %p91 = scmp.eq.s32.totalorder %s30, 0
      %p92 = por %p90, %p91
      %p93 = scmp.ne.s32.totalorder %s85, %s87
      %p94 = scmp.eq.s32.totalorder %s35, 1
      %p95 = por %p93, %p94
      %p96 = scmp.ne.s32.totalorder %s87, %s88
      %p97 = scmp.eq.s32.totalorder %s35, 0
      %p98 = por %p96, %p97
      %p99 = scmp.ne.s32.totalorder %s87, %s88
      %p100 = scmp.eq.s32.totalorder %s36, 1
      %p101 = por %p99, %p100
      %p103 = scmp.ne.s32.totalorder %s88, %s102
      %p104 = scmp.eq.s32.totalorder %s36, 0
      %p105 = por %p103, %p104
      %s107 = sadd.s32 %s106, 1
      %p110 = scmp.eq.s32.totalorder %s30, 1
      %p111 = scmp.ne.s32.totalorder %s106, %s108
      %p112 = scmp.eq.s32.totalorder %s30, 0
      %p113 = por %p111, %p112
      %p114 = scmp.ne.s32.totalorder %s106, %s108
      %p115 = scmp.eq.s32.totalorder %s35, 1
      %p116 = por %p114, %p115
      %p117 = scmp.ne.s32.totalorder %s108, %s109
      %p118 = scmp.eq.s32.totalorder %s35, 0
      %p119 = por %p117, %p118
      %p120 = scmp.ne.s32.totalorder %s108, %s109
      %p121 = scmp.eq.s32.totalorder %s36, 1
      %p122 = por %p120, %p121
      %p124 = scmp.ne.s32.totalorder %s109, %s123
      %p125 = scmp.eq.s32.totalorder %s36, 0
      %p126 = por %p124, %p125
      %s128 = sadd.s32 %s127, 1
      %p131 = scmp.eq.s32.totalorder %s30, 1
      %p132 = scmp.ne.s32.totalorder %s127, %s129
      %p133 = scmp.eq.s32.totalorder %s30, 0
      %p134 = por %p132, %p133
      %p135 = scmp.ne.s32.totalorder %s127, %s129
      %p136 = scmp.eq.s32.totalorder %s35, 1
      %p137 = por %p135, %p136
      %p138 = scmp.ne.s32.totalorder %s129, %s130
      %p139 = scmp.eq.s32.totalorder %s35, 0
      %p140 = por %p138, %p139
      %p141 = scmp.ne.s32.totalorder %s129, %s130
      %p142 = scmp.eq.s32.totalorder %s36, 1
      %p143 = por %p141, %p142
      %p145 = scmp.ne.s32.totalorder %s130, %s144
      %p146 = scmp.eq.s32.totalorder %s36, 0
      %p147 = por %p145, %p146
      %s149 = sadd.s32 %s148, 1
      %p152 = scmp.eq.s32.totalorder %s30, 1
      %p153 = scmp.ne.s32.totalorder %s148, %s150
      %p154 = scmp.eq.s32.totalorder %s30, 0
      %p155 = por %p153, %p154
      %p156 = scmp.ne.s32.totalorder %s148, %s150
      %p157 = scmp.eq.s32.totalorder %s35, 1
      %p158 = por %p156, %p157
      %p159 = scmp.ne.s32.totalorder %s150, %s151
      %p160 = scmp.eq.s32.totalorder %s35, 0
      %p161 = por %p159, %p160
      %p162 = scmp.ne.s32.totalorder %s150, %s151
      %p163 = scmp.eq.s32.totalorder %s36, 1
      %p164 = por %p162, %p163
      %p166 = scmp.ne.s32.totalorder %s151, %s165
      %p167 = scmp.eq.s32.totalorder %s36, 0
      %p168 = por %p166, %p167
      %s170 = sadd.s32 %s169, 1
      %p173 = scmp.eq.s32.totalorder %s30, 1
      %p174 = scmp.ne.s32.totalorder %s169, %s171
      %p175 = scmp.eq.s32.totalorder %s30, 0
      %p176 = por %p174, %p175
      %p177 = scmp.ne.s32.totalorder %s169, %s171
      %p178 = scmp.eq.s32.totalorder %s35, 1
      %p179 = por %p177, %p178
      %p180 = scmp.ne.s32.totalorder %s171, %s172
      %p181 = scmp.eq.s32.totalorder %s35, 0
      %p182 = por %p180, %p181
      %p183 = scmp.ne.s32.totalorder %s171, %s172
      %p184 = scmp.eq.s32.totalorder %s36, 1
      %p185 = por %p183, %p184
      %p187 = scmp.ne.s32.totalorder %s172, %s186
      %p188 = scmp.eq.s32.totalorder %s36, 0
      %p189 = por %p187, %p188
      %s191 = sadd.s32 %s190, 1
      %p194 = scmp.eq.s32.totalorder %s30, 1
      %p195 = scmp.ne.s32.totalorder %s190, %s192
      %p196 = scmp.eq.s32.totalorder %s30, 0
      %p197 = por %p195, %p196
      %p198 = scmp.ne.s32.totalorder %s190, %s192
      %p199 = scmp.eq.s32.totalorder %s35, 1
      %p200 = por %p198, %p199
      %p201 = scmp.ne.s32.totalorder %s192, %s193
      %p202 = scmp.eq.s32.totalorder %s35, 0
      %p203 = por %p201, %p202
      %p204 = scmp.ne.s32.totalorder %s192, %s193
      %p205 = scmp.eq.s32.totalorder %s36, 1
      %p206 = por %p204, %p205
      %p208 = scmp.ne.s32.totalorder %s193, %s207
      %p209 = scmp.eq.s32.totalorder %s36, 0
      %p210 = por %p208, %p209
      %s212 = sadd.s32 %s211, 1
      %p215 = scmp.eq.s32.totalorder %s30, 1
      %p216 = scmp.ne.s32.totalorder %s211, %s213
      %p217 = scmp.eq.s32.totalorder %s30, 0
      %p218 = por %p216, %p217
      %p219 = scmp.ne.s32.totalorder %s211, %s213
      %p220 = scmp.eq.s32.totalorder %s35, 1
      %p221 = por %p219, %p220
      %p222 = scmp.ne.s32.totalorder %s213, %s214
      %p223 = scmp.eq.s32.totalorder %s35, 0
      %p224 = por %p222, %p223
      %p225 = scmp.ne.s32.totalorder %s213, %s214
      %p226 = scmp.eq.s32.totalorder %s36, 1
      %p227 = por %p225, %p226
      %p229 = scmp.ne.s32.totalorder %s214, %s228
      %p230 = scmp.eq.s32.totalorder %s36, 0
      %p231 = por %p229, %p230
      %s233 = sadd.s32 %s232, 1
      %p236 = scmp.eq.s32.totalorder %s30, 1
      %p237 = scmp.ne.s32.totalorder %s232, %s234
      %p238 = scmp.eq.s32.totalorder %s30, 0
      %p239 = por %p237, %p238
      %p240 = scmp.ne.s32.totalorder %s232, %s234
      %p241 = scmp.eq.s32.totalorder %s35, 1
      %p242 = por %p240, %p241
      %p243 = scmp.ne.s32.totalorder %s234, %s235
      %p244 = scmp.eq.s32.totalorder %s35, 0
      %p245 = por %p243, %p244
      %p246 = scmp.ne.s32.totalorder %s234, %s235
      %p247 = scmp.eq.s32.totalorder %s36, 1
      %p248 = por %p246, %p247
      %p250 = scmp.ne.s32.totalorder %s235, %s249
      %p251 = scmp.eq.s32.totalorder %s36, 0
      %p252 = por %p250, %p251
      %s254 = sadd.s32 %s253, 1
      %p257 = scmp.eq.s32.totalorder %s30, 1
      %p258 = scmp.ne.s32.totalorder %s253, %s255
      %p259 = scmp.eq.s32.totalorder %s30, 0
      %p260 = por %p258, %p259
      %p261 = scmp.ne.s32.totalorder %s253, %s255
      %p262 = scmp.eq.s32.totalorder %s35, 1
      %p263 = por %p261, %p262
      %p264 = scmp.ne.s32.totalorder %s255, %s256
      %p265 = scmp.eq.s32.totalorder %s35, 0
      %p266 = por %p264, %p265
      %p267 = scmp.ne.s32.totalorder %s255, %s256
      %p268 = scmp.eq.s32.totalorder %s36, 1
      %p269 = por %p267, %p268
      %p271 = scmp.ne.s32.totalorder %s256, %s270
      %p272 = scmp.eq.s32.totalorder %s36, 0
      %p273 = por %p271, %p272
      %s275 = sadd.s32 %s274, 1
      %p278 = scmp.eq.s32.totalorder %s30, 1
      %p279 = scmp.ne.s32.totalorder %s274, %s276
      %p280 = scmp.eq.s32.totalorder %s30, 0
      %p281 = por %p279, %p280
      %p282 = scmp.ne.s32.totalorder %s274, %s276
      %p283 = scmp.eq.s32.totalorder %s35, 1
      %p284 = por %p282, %p283
      %p285 = scmp.ne.s32.totalorder %s276, %s277
      %p286 = scmp.eq.s32.totalorder %s35, 0
      %p287 = por %p285, %p286
      %p288 = scmp.ne.s32.totalorder %s276, %s277
      %p289 = scmp.eq.s32.totalorder %s36, 1
      %p290 = por %p288, %p289
      %p292 = scmp.ne.s32.totalorder %s277, %s291
      %p293 = scmp.eq.s32.totalorder %s36, 0
      %p294 = por %p292, %p293
      %s295 = ssub.s32 %s30, %s37
      %p296 = scmp.eq.s32.totalorder %s295, 0
      %s298 = sadd.s32 %s297, 1
      %s299 = scalar_select %p296, %s297, %s298
      %p302 = pneg %p296
      %p303 = scmp.eq.s32.totalorder %s30, 1
      %p304 = por %p302, %p303
      %p305 = scmp.ne.s32.totalorder %s297, %s300
      %p306 = scmp.eq.s32.totalorder %s30, 0
      %p307 = por %p305, %p306
      %p308 = scmp.ne.s32.totalorder %s297, %s300
      %p309 = scmp.eq.s32.totalorder %s35, 1
      %p310 = por %p308, %p309
      %p311 = scmp.ne.s32.totalorder %s300, %s301
      %p312 = scmp.eq.s32.totalorder %s35, 0
      %p313 = por %p311, %p312
      %p314 = scmp.ne.s32.totalorder %s300, %s301
      %p315 = scmp.eq.s32.totalorder %s36, 1
      %p316 = por %p314, %p315
      %p318 = scmp.ne.s32.totalorder %s301, %s317
      %p319 = scmp.eq.s32.totalorder %s36, 0
      %p320 = por %p318, %p319
      %p321 = scmp.le.s32.totalorder 1, %s30
      %p322 = scmp.lt.s32.totalorder %s30, 3
      %p323 = pnand %p321, %p322
      %p324 = pneg %p323
      // Predicated region
      $region9: #{tpu_custom_call.1} parent=5 // pred_check
        _
      $region10: #{tpu_custom_call.1} parent=5 // pred_check_branch
        %326 = sbr.rel (%p323) target = $region12
      $region11: #{tpu_custom_call.1} parent=5 // pred_region
        %s327 = ssub.s32 %s30, 1
        // Predicated region
        $region13: #{tpu_custom_call.1} parent=11 // pred_check
          %p328 = pneg %p77
        $region14: #{tpu_custom_call.1} parent=11 // pred_check_branch
          %330 = sbr.rel (%p328) target = $region16
        $region15: #{tpu_custom_call.1} parent=11 // pred_region
          %s332 = ssub.s32 48, 48
          %333 = vsyncadd [#allocation6], %s332
          %s335 = sshll.u32 [#allocation5], 4
          %s336 = int_to_ptr.vmem [resolvable:$true] %s335
          %338 = dma.hbm_to_vmem [thread:$0]  %s1, 48, %s336, [#allocation6]
        $region16: #{tpu_custom_call.1} parent=11 // pred_fallthru
          _
        // Predicated region
        $region17: #{tpu_custom_call.1} parent=11 // pred_check
          %p339 = pneg %p98
        $region18: #{tpu_custom_call.1} parent=11 // pred_check_branch
          %341 = sbr.rel (%p339) target = $region20
        $region19: #{tpu_custom_call.1} parent=11 // pred_region
          %s343 = ssub.s32 48, 48
          %344 = vsyncadd [#allocation6], %s343
          %s346 = sshll.u32 [#allocation7], 4
          %s347 = int_to_ptr.vmem [resolvable:$true] %s346
          %349 = dma.hbm_to_vmem [thread:$0]  %s2, 48, %s347, [#allocation6]
        $region20: #{tpu_custom_call.1} parent=11 // pred_fallthru
          _
        // Predicated region
        $region21: #{tpu_custom_call.1} parent=11 // pred_check
          %p350 = pneg %p119
        $region22: #{tpu_custom_call.1} parent=11 // pred_check_branch
          %352 = sbr.rel (%p350) target = $region24
        $region23: #{tpu_custom_call.1} parent=11 // pred_region
          %s354 = ssub.s32 27648, 27648
          %355 = vsyncadd [#allocation9], %s354
          %s356 = sshll.u32 [#allocation8], 4
          %s357 = int_to_ptr.vmem [resolvable:$true] %s356
          %362 = dma.hbm_to_vmem [thread:$0]  %s3, 27648, %s357, [#allocation9], 576, 576, 36
        $region24: #{tpu_custom_call.1} parent=11 // pred_fallthru
          _
        // Predicated region
        $region25: #{tpu_custom_call.1} parent=11 // pred_check
          %p363 = pneg %p140
        $region26: #{tpu_custom_call.1} parent=11 // pred_check_branch
          %365 = sbr.rel (%p363) target = $region28
        $region27: #{tpu_custom_call.1} parent=11 // pred_region
          %s367 = ssub.s32 9216, 9216
          %368 = vsyncadd [#allocation9], %s367
          %s369 = sshll.u32 [#allocation10], 4
          %s370 = int_to_ptr.vmem [resolvable:$true] %s369
          %375 = dma.hbm_to_vmem [thread:$0]  %s4, 9216, %s370, [#allocation9], 192, 192, 12
        $region28: #{tpu_custom_call.1} parent=11 // pred_fallthru
          _
        // Predicated region
        $region29: #{tpu_custom_call.1} parent=11 // pred_check
          %p376 = pneg %p161
        $region30: #{tpu_custom_call.1} parent=11 // pred_check_branch
          %378 = sbr.rel (%p376) target = $region32
        $region31: #{tpu_custom_call.1} parent=11 // pred_region
          %s380 = ssub.s32 48, 48
          %381 = vsyncadd [#allocation12], %s380
          %s383 = sshll.u32 [#allocation11], 4
          %s384 = int_to_ptr.vmem [resolvable:$true] %s383
          %386 = dma.hbm_to_vmem [thread:$0]  %s5, 48, %s384, [#allocation12]
        $region32: #{tpu_custom_call.1} parent=11 // pred_fallthru
          _
        // Predicated region
        $region33: #{tpu_custom_call.1} parent=11 // pred_check
          %p387 = pneg %p182
        $region34: #{tpu_custom_call.1} parent=11 // pred_check_branch
          %389 = sbr.rel (%p387) target = $region36
        $region35: #{tpu_custom_call.1} parent=11 // pred_region
          %s391 = ssub.s32 48, 48
          %392 = vsyncadd [#allocation12], %s391
          %s394 = sshll.u32 [#allocation13], 4
          %s395 = int_to_ptr.vmem [resolvable:$true] %s394
          %397 = dma.hbm_to_vmem [thread:$0]  %s6, 48, %s395, [#allocation12]
        $region36: #{tpu_custom_call.1} parent=11 // pred_fallthru
          _
        // Predicated region
        $region37: #{tpu_custom_call.1} parent=11 // pred_check
          %p398 = pneg %p203
        $region38: #{tpu_custom_call.1} parent=11 // pred_check_branch
          %400 = sbr.rel (%p398) target = $region40
        $region39: #{tpu_custom_call.1} parent=11 // pred_region
          %s402 = ssub.s32 48, 48
          %403 = vsyncadd [#allocation15], %s402
          %s405 = sshll.u32 [#allocation14], 4
          %s406 = int_to_ptr.vmem [resolvable:$true] %s405
          %408 = dma.hbm_to_vmem [thread:$0]  %s7, 48, %s406, [#allocation15]
        $region40: #{tpu_custom_call.1} parent=11 // pred_fallthru
          _
        // Predicated region
        $region41: #{tpu_custom_call.1} parent=11 // pred_check
          %p409 = pneg %p224
        $region42: #{tpu_custom_call.1} parent=11 // pred_check_branch
          %411 = sbr.rel (%p409) target = $region44
        $region43: #{tpu_custom_call.1} parent=11 // pred_region
          %s413 = ssub.s32 36864, 36864
          %414 = vsyncadd [#allocation15], %s413
          %s415 = sshll.u32 [#allocation16], 4
          %s416 = int_to_ptr.vmem [resolvable:$true] %s415
          %421 = dma.hbm_to_vmem [thread:$0]  %s8, 36864, %s416, [#allocation15], 768, 768, 48
        $region44: #{tpu_custom_call.1} parent=11 // pred_fallthru
          _
        // Predicated region
        $region45: #{tpu_custom_call.1} parent=11 // pred_check
          %p422 = pneg %p245
        $region46: #{tpu_custom_call.1} parent=11 // pred_check_branch
          %424 = sbr.rel (%p422) target = $region48
        $region47: #{tpu_custom_call.1} parent=11 // pred_region
          %s426 = ssub.s32 192, 192
          %427 = vsyncadd [#allocation18], %s426
          %s429 = sshll.u32 [#allocation17], 4
          %s430 = int_to_ptr.vmem [resolvable:$true] %s429
          %432 = dma.hbm_to_vmem [thread:$0]  %s9, 192, %s430, [#allocation18]
        $region48: #{tpu_custom_call.1} parent=11 // pred_fallthru
          _
        // Predicated region
        $region49: #{tpu_custom_call.1} parent=11 // pred_check
          %p433 = pneg %p266
        $region50: #{tpu_custom_call.1} parent=11 // pred_check_branch
          %435 = sbr.rel (%p433) target = $region52
        $region51: #{tpu_custom_call.1} parent=11 // pred_region
          %s437 = ssub.s32 36864, 36864
          %438 = vsyncadd [#allocation18], %s437
          %s439 = sshll.u32 [#allocation19], 4
          %s440 = int_to_ptr.vmem [resolvable:$true] %s439
          %445 = dma.hbm_to_vmem [thread:$0]  %s10, 36864, %s440, [#allocation18], 192, 192, 12
        $region52: #{tpu_custom_call.1} parent=11 // pred_fallthru
          _
        // Predicated region
        $region53: #{tpu_custom_call.1} parent=11 // pred_check
          %p446 = pneg %p287
        $region54: #{tpu_custom_call.1} parent=11 // pred_check_branch
          %448 = sbr.rel (%p446) target = $region56
        $region55: #{tpu_custom_call.1} parent=11 // pred_region
          %s450 = ssub.s32 48, 48
          %451 = vsyncadd [#allocation21], %s450
          %s453 = sshll.u32 [#allocation20], 4
          %s454 = int_to_ptr.vmem [resolvable:$true] %s453
          %456 = dma.hbm_to_vmem [thread:$0]  %s11, 48, %s454, [#allocation21]
        $region56: #{tpu_custom_call.1} parent=11 // pred_fallthru
          _
      $region12: #{tpu_custom_call.1} parent=5 // pred_fallthru
        _
      %p457 = scmp.lt.s32.totalorder %s30, 2
      // Predicated region
      $region57: #{tpu_custom_call.1} parent=5 // pred_check
        %p458 = pneg %p457
      $region58: #{tpu_custom_call.1} parent=5 // pred_check_branch
        %460 = sbr.rel (%p458) target = $region60
      $region59: #{tpu_custom_call.1} parent=5 // pred_region
        // Predicated region
        $region61: #{tpu_custom_call.1} parent=59 // pred_check
          %p461 = pneg %p50
        $region62: #{tpu_custom_call.1} parent=59 // pred_check_branch
          %463 = sbr.rel (%p461) target = $region64
        $region63: #{tpu_custom_call.1} parent=59 // pred_region
          %s464 = sand.u32 %s40, 1
          %s465 = scalar_lea.sflag [#allocation3], %s464
          %s466 = sand.u32 %s40, 1
          %s467 = smul.addr %s466, 24
          %s468 = scalar_lea.vmem [#allocation2], %s467
          %s470 = ssub.s32 384, 384
          %471 = vsyncadd %s465, %s470
          %s472 = smul.addr %s30, 3
          %s473 = smul.addr %s472, 128
          %s474 = scalar_lea.hbm %s0, %s473
          %s476 = sshll.u32 %s468, 4
          %s477 = int_to_ptr.vmem [resolvable:$true] %s476
          %479 = dma.hbm_to_vmem [thread:$0]  %s474, 384, %s477, %s465
        $region64: #{tpu_custom_call.1} parent=59 // pred_fallthru
          _
      $region60: #{tpu_custom_call.1} parent=5 // pred_fallthru
        _
      %p480 = scmp.le.s32.totalorder 1, %s30
      %p481 = scmp.lt.s32.totalorder %s30, 3
      %p482 = pnand %p480, %p481
      %p483 = pneg %p482
      // Predicated region
      $region65: #{tpu_custom_call.1} parent=5 // pred_check
        _
      $region66: #{tpu_custom_call.1} parent=5 // pred_check_branch
        %485 = sbr.rel (%p482) target = $region68
      $region67: #{tpu_custom_call.1} parent=5 // pred_region
        %s486 = ssub.s32 %s30, 1
        %s487 = sand.u32 %s43, 1
        %s488 = scalar_lea.sflag [#allocation3], %s487
        %s489 = sand.u32 %s43, 1
        %s490 = smul.addr %s489, 24
        %s491 = scalar_lea.vmem [#allocation2], %s490
        // Predicated region
        $region69: #{tpu_custom_call.1} parent=67 // pred_check
          %p492 = pneg %p56
        $region70: #{tpu_custom_call.1} parent=67 // pred_check_branch
          %494 = sbr.rel (%p492) target = $region72
        $region71: #{tpu_custom_call.1} parent=67 // pred_region
          %495 = dma.done %s488, 384
        $region72: #{tpu_custom_call.1} parent=67 // pred_fallthru
          _
        // Predicated region
        $region73: #{tpu_custom_call.1} parent=67 // pred_check
          %p496 = pneg %p77
        $region74: #{tpu_custom_call.1} parent=67 // pred_check_branch
          %498 = sbr.rel (%p496) target = $region76
        $region75: #{tpu_custom_call.1} parent=67 // pred_region
          %499 = dma.done [#allocation6], 48
        $region76: #{tpu_custom_call.1} parent=67 // pred_fallthru
          _
        // Predicated region
        $region77: #{tpu_custom_call.1} parent=67 // pred_check
          %p500 = pneg %p98
        $region78: #{tpu_custom_call.1} parent=67 // pred_check_branch
          %502 = sbr.rel (%p500) target = $region80
        $region79: #{tpu_custom_call.1} parent=67 // pred_region
          %503 = dma.done [#allocation6], 48
        $region80: #{tpu_custom_call.1} parent=67 // pred_fallthru
          _
        // Predicated region
        $region81: #{tpu_custom_call.1} parent=67 // pred_check
          %p504 = pneg %p119
        $region82: #{tpu_custom_call.1} parent=67 // pred_check_branch
          %506 = sbr.rel (%p504) target = $region84
        $region83: #{tpu_custom_call.1} parent=67 // pred_region
          %507 = dma.done [#allocation9], 27648
        $region84: #{tpu_custom_call.1} parent=67 // pred_fallthru
          _
        // Predicated region
        $region85: #{tpu_custom_call.1} parent=67 // pred_check
          %p508 = pneg %p140
        $region86: #{tpu_custom_call.1} parent=67 // pred_check_branch
          %510 = sbr.rel (%p508) target = $region88
        $region87: #{tpu_custom_call.1} parent=67 // pred_region
          %511 = dma.done [#allocation9], 9216
        $region88: #{tpu_custom_call.1} parent=67 // pred_fallthru
          _
        // Predicated region
        $region89: #{tpu_custom_call.1} parent=67 // pred_check
          %p512 = pneg %p161
        $region90: #{tpu_custom_call.1} parent=67 // pred_check_branch
          %514 = sbr.rel (%p512) target = $region92
        $region91: #{tpu_custom_call.1} parent=67 // pred_region
          %515 = dma.done [#allocation12], 48
        $region92: #{tpu_custom_call.1} parent=67 // pred_fallthru
          _
        // Predicated region
        $region93: #{tpu_custom_call.1} parent=67 // pred_check
          %p516 = pneg %p182
        $region94: #{tpu_custom_call.1} parent=67 // pred_check_branch
          %518 = sbr.rel (%p516) target = $region96
        $region95: #{tpu_custom_call.1} parent=67 // pred_region
          %519 = dma.done [#allocation12], 48
        $region96: #{tpu_custom_call.1} parent=67 // pred_fallthru
          _
        // Predicated region
        $region97: #{tpu_custom_call.1} parent=67 // pred_check
          %p520 = pneg %p203
        $region98: #{tpu_custom_call.1} parent=67 // pred_check_branch
          %522 = sbr.rel (%p520) target = $region100
        $region99: #{tpu_custom_call.1} parent=67 // pred_region
          %523 = dma.done [#allocation15], 48
        $region100: #{tpu_custom_call.1} parent=67 // pred_fallthru
          _
        // Predicated region
        $region101: #{tpu_custom_call.1} parent=67 // pred_check
          %p524 = pneg %p224
        $region102: #{tpu_custom_call.1} parent=67 // pred_check_branch
          %526 = sbr.rel (%p524) target = $region104
        $region103: #{tpu_custom_call.1} parent=67 // pred_region
          %527 = dma.done [#allocation15], 36864
        $region104: #{tpu_custom_call.1} parent=67 // pred_fallthru
          _
        // Predicated region
        $region105: #{tpu_custom_call.1} parent=67 // pred_check
          %p528 = pneg %p245
        $region106: #{tpu_custom_call.1} parent=67 // pred_check_branch
          %530 = sbr.rel (%p528) target = $region108
        $region107: #{tpu_custom_call.1} parent=67 // pred_region
          %531 = dma.done [#allocation18], 192
        $region108: #{tpu_custom_call.1} parent=67 // pred_fallthru
          _
        // Predicated region
        $region109: #{tpu_custom_call.1} parent=67 // pred_check
          %p532 = pneg %p266
        $region110: #{tpu_custom_call.1} parent=67 // pred_check_branch
          %534 = sbr.rel (%p532) target = $region112
        $region111: #{tpu_custom_call.1} parent=67 // pred_region
          %535 = dma.done [#allocation18], 36864
        $region112: #{tpu_custom_call.1} parent=67 // pred_fallthru
          _
        // Predicated region
        $region113: #{tpu_custom_call.1} parent=67 // pred_check
          %p536 = pneg %p287
        $region114: #{tpu_custom_call.1} parent=67 // pred_check_branch
          %538 = sbr.rel (%p536) target = $region116
        $region115: #{tpu_custom_call.1} parent=67 // pred_region
          %539 = dma.done [#allocation21], 48
        $region116: #{tpu_custom_call.1} parent=67 // pred_fallthru
          _
        %s540 = sand.u32 %s43, 1
        %s541 = scalar_lea.sflag [#allocation3], %s540
        %s542 = sand.u32 %s43, 1
        %s543 = smul.addr %s542, 24
        %s544 = scalar_lea.vmem [#allocation2], %s543
        %p545 = pneg %p56
        %p546 = pneg %p53
        %p547 = pneg %p77
        %p548 = pneg %p74
        %p549 = pneg %p98
        %p550 = pneg %p95
        %p551 = pneg %p119
        %p552 = pneg %p116
        %p553 = pneg %p140
        %p554 = pneg %p137
        %p555 = pneg %p161
        %p556 = pneg %p158
        %p557 = pneg %p182
        %p558 = pneg %p179
        %p559 = pneg %p203
        %p560 = pneg %p200
        %p561 = pneg %p224
        %p562 = pneg %p221
        %p563 = pneg %p245
        %p564 = pneg %p242
        %p565 = pneg %p266
        %p566 = pneg %p263
        %p567 = pneg %p287
        %p568 = pneg %p284
        %p569 = pneg %p313
        %p570 = pneg %p310
        %s571 = sand.u32 %s300, 1
        %s572 = scalar_lea.sflag [#allocation4], %s571
        %s573 = sand.u32 %s300, 1
        %s574 = smul.addr %s573, 24
        %s575 = scalar_lea.vmem [#allocation22], %s574
        %v577 = vld [vmem:[%s491] sm:$0xff]
        %v578 = vld [vmem:[%s491 + $0x8] sm:$0xff]
        %v579 = vld [vmem:[%s491 + $0x10] sm:$0xff]
        %v580 = vld [vmem:[#allocation5] sm:$0x7]
        %v581 = vld [vmem:[#allocation7] sm:$0x7]
        %v582 = vadd.f32 %v577, %v578
        %v583 = vadd.f32 %v582, %v579
        %584 = vadd.xlane.f32.xlu0 %v583
        %v585 = vpop.xlane.xlu0 %584
        %v586 = vrcp.pop 384.0
        %v587 = vmul.f32 %v585, %v586
        %v588 = vsub.f32 %v577, %v587
        %v589 = vsub.f32 %v578, %v587
        %v590 = vsub.f32 %v579, %v587
        %v591 = vmul.f32 %v588, %v588
        %v592 = vmul.f32 %v589, %v589
        %v593 = vmul.f32 %v590, %v590
        %v594 = vadd.f32 %v591, %v592
        %v595 = vadd.f32 %v594, %v593
        %596 = vadd.xlane.f32.xlu0 %v595
        %v597 = vpop.xlane.xlu0 %596
        %v598 = vmul.f32 %v597, %v586
        %v599 = vadd.f32 %v598, 1e-05
        %v600 = vrsqrt.pop %v599
        %v601 = vmul.f32 %v588, %v600
        %v602 = vmul.f32 %v589, %v600
        %v603 = vmul.f32 %v590, %v600
        %v605 = vlaneseq
        %v606 = vshrl.u32 %v605, 7
        %v607 = vsub.s32 0, %v606
        %v608 = vrot.slane %v580, %v607
        %v609 = vlaneseq
        %v610 = vshrl.u32 %v609, 7
        %v611 = vsub.s32 1, %v610
        %v612 = vrot.slane %v580, %v611
        %v613 = vlaneseq
        %v614 = vshrl.u32 %v613, 7
        %v615 = vsub.s32 2, %v614
        %v616 = vrot.slane %v580, %v615
        %v620 = vmul.f32 %v601, %v608
        %v621 = vmul.f32 %v602, %v612
        %v622 = vmul.f32 %v603, %v616
        %v624 = vlaneseq
        %v625 = vshrl.u32 %v624, 7
        %v626 = vsub.s32 0, %v625
        %v627 = vrot.slane %v581, %v626
        %v628 = vlaneseq
        %v629 = vshrl.u32 %v628, 7
        %v630 = vsub.s32 1, %v629
        %v631 = vrot.slane %v581, %v630
        %v632 = vlaneseq
        %v633 = vshrl.u32 %v632, 7
        %v634 = vsub.s32 2, %v633
        %v635 = vrot.slane %v581, %v634
        %v639 = vadd.f32 %v620, %v627
        %v640 = vadd.f32 %v621, %v631
        %v641 = vadd.f32 %v622, %v635
        %v642 = vpack.c.bf16 %v639, %v639
        %v643 = vpack.c.bf16 %v640, %v640
        %v644 = vpack.c.bf16 %v641, %v641
        %v645 = vld [vmem:[#allocation8] sm:$0xff]
        %v646 = vld [vmem:[#allocation8 + $0x8] sm:$0xff]
        %v647 = vld [vmem:[#allocation8 + $0x10] sm:$0xff]
        %v648 = vld [vmem:[#allocation8 + $0x18] sm:$0xff]
        %v649 = vld [vmem:[#allocation8 + $0x20] sm:$0xf]
        %v650 = vld [vmem:[#allocation8 + $0x24] sm:$0xff]
        %v651 = vld [vmem:[#allocation8 + $0x2c] sm:$0xff]
        %v652 = vld [vmem:[#allocation8 + $0x34] sm:$0xff]
        %v653 = vld [vmem:[#allocation8 + $0x3c] sm:$0xff]
        %v654 = vld [vmem:[#allocation8 + $0x44] sm:$0xf]
        %v655 = vld [vmem:[#allocation8 + $0x48] sm:$0xff]
        %v656 = vld [vmem:[#allocation8 + $0x50] sm:$0xff]
        %v657 = vld [vmem:[#allocation8 + $0x58] sm:$0xff]
        %v658 = vld [vmem:[#allocation8 + $0x60] sm:$0xff]
        %v659 = vld [vmem:[#allocation8 + $0x68] sm:$0xf]
        %v660 = vld [vmem:[#allocation8 + $0x6c] sm:$0xff]
        %v661 = vld [vmem:[#allocation8 + $0x74] sm:$0xff]
        %v662 = vld [vmem:[#allocation8 + $0x7c] sm:$0xff]
        %v663 = vld [vmem:[#allocation8 + $0x84] sm:$0xff]
        %v664 = vld [vmem:[#allocation8 + $0x8c] sm:$0xf]
        %v665 = vld [vmem:[#allocation8 + $0x90] sm:$0xff]
        %v666 = vld [vmem:[#allocation8 + $0x98] sm:$0xff]
        %v667 = vld [vmem:[#allocation8 + $0xa0] sm:$0xff]
        %v668 = vld [vmem:[#allocation8 + $0xa8] sm:$0xff]
        %v669 = vld [vmem:[#allocation8 + $0xb0] sm:$0xf]
        %v670 = vld [vmem:[#allocation8 + $0xb4] sm:$0xff]
        %v671 = vld [vmem:[#allocation8 + $0xbc] sm:$0xff]
        %v672 = vld [vmem:[#allocation8 + $0xc4] sm:$0xff]
        %v673 = vld [vmem:[#allocation8 + $0xcc] sm:$0xff]
        %v674 = vld [vmem:[#allocation8 + $0xd4] sm:$0xf]
        %v675 = vld [vmem:[#allocation8 + $0xd8] sm:$0xff]
        %v676 = vld [vmem:[#allocation8 + $0xe0] sm:$0xff]
        %v677 = vld [vmem:[#allocation8 + $0xe8] sm:$0xff]
        %v678 = vld [vmem:[#allocation8 + $0xf0] sm:$0xff]
        %v679 = vld [vmem:[#allocation8 + $0xf8] sm:$0xf]
        %v680 = vld [vmem:[#allocation8 + $0xfc] sm:$0xff]
        %v681 = vld [vmem:[#allocation8 + $0x104] sm:$0xff]
        %v682 = vld [vmem:[#allocation8 + $0x10c] sm:$0xff]
        %v683 = vld [vmem:[#allocation8 + $0x114] sm:$0xff]
        %v684 = vld [vmem:[#allocation8 + $0x11c] sm:$0xf]
        %v685 = vld [vmem:[#allocation8 + $0x120] sm:$0xff]
        %v686 = vld [vmem:[#allocation8 + $0x128] sm:$0xff]
        %v687 = vld [vmem:[#allocation8 + $0x130] sm:$0xff]
        %v688 = vld [vmem:[#allocation8 + $0x138] sm:$0xff]
        %v689 = vld [vmem:[#allocation8 + $0x140] sm:$0xf]
        %v690 = vld [vmem:[#allocation8 + $0x144] sm:$0xff]
        %v691 = vld [vmem:[#allocation8 + $0x14c] sm:$0xff]
        %v692 = vld [vmem:[#allocation8 + $0x154] sm:$0xff]
        %v693 = vld [vmem:[#allocation8 + $0x15c] sm:$0xff]
        %v694 = vld [vmem:[#allocation8 + $0x164] sm:$0xf]
        %v695 = vld [vmem:[#allocation8 + $0x168] sm:$0xff]
        %v696 = vld [vmem:[#allocation8 + $0x170] sm:$0xff]
        %v697 = vld [vmem:[#allocation8 + $0x178] sm:$0xff]
        %v698 = vld [vmem:[#allocation8 + $0x180] sm:$0xff]
        %v699 = vld [vmem:[#allocation8 + $0x188] sm:$0xf]
        %v700 = vld [vmem:[#allocation8 + $0x18c] sm:$0xff]
        %v701 = vld [vmem:[#allocation8 + $0x194] sm:$0xff]
        %v702 = vld [vmem:[#allocation8 + $0x19c] sm:$0xff]
        %v703 = vld [vmem:[#allocation8 + $0x1a4] sm:$0xff]
        %v704 = vld [vmem:[#allocation8 + $0x1ac] sm:$0xf]
        %v705 = vld [vmem:[#allocation8 + $0x1b0] sm:$0xff]
        %v706 = vld [vmem:[#allocation8 + $0x1b8] sm:$0xff]
        %v707 = vld [vmem:[#allocation8 + $0x1c0] sm:$0xff]
        %v708 = vld [vmem:[#allocation8 + $0x1c8] sm:$0xff]
        %v709 = vld [vmem:[#allocation8 + $0x1d0] sm:$0xf]
        %v710 = vld [vmem:[#allocation8 + $0x1d4] sm:$0xff]
        %v711 = vld [vmem:[#allocation8 + $0x1dc] sm:$0xff]
        %v712 = vld [vmem:[#allocation8 + $0x1e4] sm:$0xff]
        %v713 = vld [vmem:[#allocation8 + $0x1ec] sm:$0xff]
        %v714 = vld [vmem:[#allocation8 + $0x1f4] sm:$0xf]
        %v715 = vld [vmem:[#allocation8 + $0x1f8] sm:$0xff]
        %v716 = vld [vmem:[#allocation8 + $0x200] sm:$0xff]
        %v717 = vld [vmem:[#allocation8 + $0x208] sm:$0xff]
        %v718 = vld [vmem:[#allocation8 + $0x210] sm:$0xff]
        %v719 = vld [vmem:[#allocation8 + $0x218] sm:$0xf]
        %v720 = vld [vmem:[#allocation8 + $0x21c] sm:$0xff]
        %v721 = vld [vmem:[#allocation8 + $0x224] sm:$0xff]
        %v722 = vld [vmem:[#allocation8 + $0x22c] sm:$0xff]
        %v723 = vld [vmem:[#allocation8 + $0x234] sm:$0xff]
        %v724 = vld [vmem:[#allocation8 + $0x23c] sm:$0xf]
        %v725 = vld [vmem:[#allocation8 + $0x240] sm:$0xff]
        %v726 = vld [vmem:[#allocation8 + $0x248] sm:$0xff]
        %v727 = vld [vmem:[#allocation8 + $0x250] sm:$0xff]
        %v728 = vld [vmem:[#allocation8 + $0x258] sm:$0xff]
        %v729 = vld [vmem:[#allocation8 + $0x260] sm:$0xf]
        %v730 = vld [vmem:[#allocation8 + $0x264] sm:$0xff]
        %v731 = vld [vmem:[#allocation8 + $0x26c] sm:$0xff]
        %v732 = vld [vmem:[#allocation8 + $0x274] sm:$0xff]
        %v733 = vld [vmem:[#allocation8 + $0x27c] sm:$0xff]
        %v734 = vld [vmem:[#allocation8 + $0x284] sm:$0xf]
        %v735 = vld [vmem:[#allocation8 + $0x288] sm:$0xff]
        %v736 = vld [vmem:[#allocation8 + $0x290] sm:$0xff]
        %v737 = vld [vmem:[#allocation8 + $0x298] sm:$0xff]
        %v738 = vld [vmem:[#allocation8 + $0x2a0] sm:$0xff]
        %v739 = vld [vmem:[#allocation8 + $0x2a8] sm:$0xf]
        %v740 = vld [vmem:[#allocation8 + $0x2ac] sm:$0xff]
        %v741 = vld [vmem:[#allocation8 + $0x2b4] sm:$0xff]
        %v742 = vld [vmem:[#allocation8 + $0x2bc] sm:$0xff]
        %v743 = vld [vmem:[#allocation8 + $0x2c4] sm:$0xff]
        %v744 = vld [vmem:[#allocation8 + $0x2cc] sm:$0xf]
        %v745 = vld [vmem:[#allocation8 + $0x2d0] sm:$0xff]
        %v746 = vld [vmem:[#allocation8 + $0x2d8] sm:$0xff]
        %v747 = vld [vmem:[#allocation8 + $0x2e0] sm:$0xff]
        %v748 = vld [vmem:[#allocation8 + $0x2e8] sm:$0xff]
        %v749 = vld [vmem:[#allocation8 + $0x2f0] sm:$0xf]
        %v750 = vld [vmem:[#allocation8 + $0x2f4] sm:$0xff]
        %v751 = vld [vmem:[#allocation8 + $0x2fc] sm:$0xff]
        %v752 = vld [vmem:[#allocation8 + $0x304] sm:$0xff]
        %v753 = vld [vmem:[#allocation8 + $0x30c] sm:$0xff]
        %v754 = vld [vmem:[#allocation8 + $0x314] sm:$0xf]
        %v755 = vld [vmem:[#allocation8 + $0x318] sm:$0xff]
        %v756 = vld [vmem:[#allocation8 + $0x320] sm:$0xff]
        %v757 = vld [vmem:[#allocation8 + $0x328] sm:$0xff]
        %v758 = vld [vmem:[#allocation8 + $0x330] sm:$0xff]
        %v759 = vld [vmem:[#allocation8 + $0x338] sm:$0xf]
        %v760 = vld [vmem:[#allocation8 + $0x33c] sm:$0xff]
        %v761 = vld [vmem:[#allocation8 + $0x344] sm:$0xff]
        %v762 = vld [vmem:[#allocation8 + $0x34c] sm:$0xff]
        %v763 = vld [vmem:[#allocation8 + $0x354] sm:$0xff]
        %v764 = vld [vmem:[#allocation8 + $0x35c] sm:$0xf]
        %v765 = vld [vmem:[#allocation8 + $0x360] sm:$0xff]
        %v766 = vld [vmem:[#allocation8 + $0x368] sm:$0xff]
        %v767 = vld [vmem:[#allocation8 + $0x370] sm:$0xff]
        %v768 = vld [vmem:[#allocation8 + $0x378] sm:$0xff]
        %v769 = vld [vmem:[#allocation8 + $0x380] sm:$0xf]
        %v770 = vld [vmem:[#allocation8 + $0x384] sm:$0xff]
        %v771 = vld [vmem:[#allocation8 + $0x38c] sm:$0xff]
        %v772 = vld [vmem:[#allocation8 + $0x394] sm:$0xff]
        %v773 = vld [vmem:[#allocation8 + $0x39c] sm:$0xff]
        %v774 = vld [vmem:[#allocation8 + $0x3a4] sm:$0xf]
        %v775 = vld [vmem:[#allocation8 + $0x3a8] sm:$0xff]
        %v776 = vld [vmem:[#allocation8 + $0x3b0] sm:$0xff]
        %v777 = vld [vmem:[#allocation8 + $0x3b8] sm:$0xff]
        %v778 = vld [vmem:[#allocation8 + $0x3c0] sm:$0xff]
        %v779 = vld [vmem:[#allocation8 + $0x3c8] sm:$0xf]
        %v780 = vld [vmem:[#allocation8 + $0x3cc] sm:$0xff]
        %v781 = vld [vmem:[#allocation8 + $0x3d4] sm:$0xff]
        %v782 = vld [vmem:[#allocation8 + $0x3dc] sm:$0xff]
        %v783 = vld [vmem:[#allocation8 + $0x3e4] sm:$0xff]
        %v784 = vld [vmem:[#allocation8 + $0x3ec] sm:$0xf]
        %v785 = vld [vmem:[#allocation8 + $0x3f0] sm:$0xff]
        %v786 = vld [vmem:[#allocation8 + $0x3f8] sm:$0xff]
        %v787 = vld [vmem:[#allocation8 + $0x400] sm:$0xff]
        %v788 = vld [vmem:[#allocation8 + $0x408] sm:$0xff]
        %v789 = vld [vmem:[#allocation8 + $0x410] sm:$0xf]
        %v790 = vld [vmem:[#allocation8 + $0x414] sm:$0xff]
        %v791 = vld [vmem:[#allocation8 + $0x41c] sm:$0xff]
        %v792 = vld [vmem:[#allocation8 + $0x424] sm:$0xff]
        %v793 = vld [vmem:[#allocation8 + $0x42c] sm:$0xff]
        %v794 = vld [vmem:[#allocation8 + $0x434] sm:$0xf]
        %v795 = vld [vmem:[#allocation8 + $0x438] sm:$0xff]
        %v796 = vld [vmem:[#allocation8 + $0x440] sm:$0xff]
        %v797 = vld [vmem:[#allocation8 + $0x448] sm:$0xff]
        %v798 = vld [vmem:[#allocation8 + $0x450] sm:$0xff]
        %v799 = vld [vmem:[#allocation8 + $0x458] sm:$0xf]
        %v800 = vld [vmem:[#allocation8 + $0x45c] sm:$0xff]
        %v801 = vld [vmem:[#allocation8 + $0x464] sm:$0xff]
        %v802 = vld [vmem:[#allocation8 + $0x46c] sm:$0xff]
        %v803 = vld [vmem:[#allocation8 + $0x474] sm:$0xff]
        %v804 = vld [vmem:[#allocation8 + $0x47c] sm:$0xf]
        %v805 = vld [vmem:[#allocation8 + $0x480] sm:$0xff]
        %v806 = vld [vmem:[#allocation8 + $0x488] sm:$0xff]
        %v807 = vld [vmem:[#allocation8 + $0x490] sm:$0xff]
        %v808 = vld [vmem:[#allocation8 + $0x498] sm:$0xff]
        %v809 = vld [vmem:[#allocation8 + $0x4a0] sm:$0xf]
        %v810 = vld [vmem:[#allocation8 + $0x4a4] sm:$0xff]
        %v811 = vld [vmem:[#allocation8 + $0x4ac] sm:$0xff]
        %v812 = vld [vmem:[#allocation8 + $0x4b4] sm:$0xff]
        %v813 = vld [vmem:[#allocation8 + $0x4bc] sm:$0xff]
        %v814 = vld [vmem:[#allocation8 + $0x4c4] sm:$0xf]
        %v815 = vld [vmem:[#allocation8 + $0x4c8] sm:$0xff]
        %v816 = vld [vmem:[#allocation8 + $0x4d0] sm:$0xff]
        %v817 = vld [vmem:[#allocation8 + $0x4d8] sm:$0xff]
        %v818 = vld [vmem:[#allocation8 + $0x4e0] sm:$0xff]
        %v819 = vld [vmem:[#allocation8 + $0x4e8] sm:$0xf]
        %v820 = vld [vmem:[#allocation8 + $0x4ec] sm:$0xff]
        %v821 = vld [vmem:[#allocation8 + $0x4f4] sm:$0xff]
        %v822 = vld [vmem:[#allocation8 + $0x4fc] sm:$0xff]
        %v823 = vld [vmem:[#allocation8 + $0x504] sm:$0xff]
        %v824 = vld [vmem:[#allocation8 + $0x50c] sm:$0xf]
        %v825 = vld [vmem:[#allocation8 + $0x510] sm:$0xff]
        %v826 = vld [vmem:[#allocation8 + $0x518] sm:$0xff]
        %v827 = vld [vmem:[#allocation8 + $0x520] sm:$0xff]
        %v828 = vld [vmem:[#allocation8 + $0x528] sm:$0xff]
        %v829 = vld [vmem:[#allocation8 + $0x530] sm:$0xf]
        %v830 = vld [vmem:[#allocation8 + $0x534] sm:$0xff]
        %v831 = vld [vmem:[#allocation8 + $0x53c] sm:$0xff]
        %v832 = vld [vmem:[#allocation8 + $0x544] sm:$0xff]
        %v833 = vld [vmem:[#allocation8 + $0x54c] sm:$0xff]
        %v834 = vld [vmem:[#allocation8 + $0x554] sm:$0xf]
        %v835 = vld [vmem:[#allocation8 + $0x558] sm:$0xff]
        %v836 = vld [vmem:[#allocation8 + $0x560] sm:$0xff]
        %v837 = vld [vmem:[#allocation8 + $0x568] sm:$0xff]
        %v838 = vld [vmem:[#allocation8 + $0x570] sm:$0xff]
        %v839 = vld [vmem:[#allocation8 + $0x578] sm:$0xf]
        %v840 = vld [vmem:[#allocation8 + $0x57c] sm:$0xff]
        %v841 = vld [vmem:[#allocation8 + $0x584] sm:$0xff]
        %v842 = vld [vmem:[#allocation8 + $0x58c] sm:$0xff]
        %v843 = vld [vmem:[#allocation8 + $0x594] sm:$0xff]
        %v844 = vld [vmem:[#allocation8 + $0x59c] sm:$0xf]
        %v845 = vld [vmem:[#allocation8 + $0x5a0] sm:$0xff]
        %v846 = vld [vmem:[#allocation8 + $0x5a8] sm:$0xff]
        %v847 = vld [vmem:[#allocation8 + $0x5b0] sm:$0xff]
        %v848 = vld [vmem:[#allocation8 + $0x5b8] sm:$0xff]
        %v849 = vld [vmem:[#allocation8 + $0x5c0] sm:$0xf]
        %v850 = vld [vmem:[#allocation8 + $0x5c4] sm:$0xff]
        %v851 = vld [vmem:[#allocation8 + $0x5cc] sm:$0xff]
        %v852 = vld [vmem:[#allocation8 + $0x5d4] sm:$0xff]
        %v853 = vld [vmem:[#allocation8 + $0x5dc] sm:$0xff]
        %v854 = vld [vmem:[#allocation8 + $0x5e4] sm:$0xf]
        %v855 = vld [vmem:[#allocation8 + $0x5e8] sm:$0xff]
        %v856 = vld [vmem:[#allocation8 + $0x5f0] sm:$0xff]
        %v857 = vld [vmem:[#allocation8 + $0x5f8] sm:$0xff]
        %v858 = vld [vmem:[#allocation8 + $0x600] sm:$0xff]
        %v859 = vld [vmem:[#allocation8 + $0x608] sm:$0xf]
        %v860 = vld [vmem:[#allocation8 + $0x60c] sm:$0xff]
        %v861 = vld [vmem:[#allocation8 + $0x614] sm:$0xff]
        %v862 = vld [vmem:[#allocation8 + $0x61c] sm:$0xff]
        %v863 = vld [vmem:[#allocation8 + $0x624] sm:$0xff]
        %v864 = vld [vmem:[#allocation8 + $0x62c] sm:$0xf]
        %v865 = vld [vmem:[#allocation8 + $0x630] sm:$0xff]
        %v866 = vld [vmem:[#allocation8 + $0x638] sm:$0xff]
        %v867 = vld [vmem:[#allocation8 + $0x640] sm:$0xff]
        %v868 = vld [vmem:[#allocation8 + $0x648] sm:$0xff]
        %v869 = vld [vmem:[#allocation8 + $0x650] sm:$0xf]
        %v870 = vld [vmem:[#allocation8 + $0x654] sm:$0xff]
        %v871 = vld [vmem:[#allocation8 + $0x65c] sm:$0xff]
        %v872 = vld [vmem:[#allocation8 + $0x664] sm:$0xff]
        %v873 = vld [vmem:[#allocation8 + $0x66c] sm:$0xff]
        %v874 = vld [vmem:[#allocation8 + $0x674] sm:$0xf]
        %v875 = vld [vmem:[#allocation8 + $0x678] sm:$0xff]
        %v876 = vld [vmem:[#allocation8 + $0x680] sm:$0xff]
        %v877 = vld [vmem:[#allocation8 + $0x688] sm:$0xff]
        %v878 = vld [vmem:[#allocation8 + $0x690] sm:$0xff]
        %v879 = vld [vmem:[#allocation8 + $0x698] sm:$0xf]
        %v880 = vld [vmem:[#allocation8 + $0x69c] sm:$0xff]
        %v881 = vld [vmem:[#allocation8 + $0x6a4] sm:$0xff]
        %v882 = vld [vmem:[#allocation8 + $0x6ac] sm:$0xff]
        %v883 = vld [vmem:[#allocation8 + $0x6b4] sm:$0xff]
        %v884 = vld [vmem:[#allocation8 + $0x6bc] sm:$0xf]
        %v1125 = vunpack.c.l.b16 %v645
        %v1126 = vunpack.c.h.b16 %v645
        %v1127 = vunpack.c.l.b16 %v646
        %v1128 = vunpack.c.h.b16 %v646
        %v1129 = vunpack.c.l.b16 %v647
        %v1130 = vunpack.c.h.b16 %v647
        %v1131 = vunpack.c.l.b16 %v648
        %v1132 = vunpack.c.h.b16 %v648
        %v1133 = vunpack.c.l.b16 %v649
        %v1134 = vunpack.c.l.b16 %v650
        %v1135 = vunpack.c.h.b16 %v650
        %v1136 = vunpack.c.l.b16 %v651
        %v1137 = vunpack.c.h.b16 %v651
        %v1138 = vunpack.c.l.b16 %v652
        %v1139 = vunpack.c.h.b16 %v652
        %v1140 = vunpack.c.l.b16 %v653
        %v1141 = vunpack.c.h.b16 %v653
        %v1142 = vunpack.c.l.b16 %v654
        %v1143 = vunpack.c.l.b16 %v655
        %v1144 = vunpack.c.h.b16 %v655
        %v1145 = vunpack.c.l.b16 %v656
        %v1146 = vunpack.c.h.b16 %v656
        %v1147 = vunpack.c.l.b16 %v657
        %v1148 = vunpack.c.h.b16 %v657
        %v1149 = vunpack.c.l.b16 %v658
        %v1150 = vunpack.c.h.b16 %v658
        %v1151 = vunpack.c.l.b16 %v659
        %v1152 = vunpack.c.l.b16 %v660
        %v1153 = vunpack.c.h.b16 %v660
        %v1154 = vunpack.c.l.b16 %v661
        %v1155 = vunpack.c.h.b16 %v661
        %v1156 = vunpack.c.l.b16 %v662
        %v1157 = vunpack.c.h.b16 %v662
        %v1158 = vunpack.c.l.b16 %v663
        %v1159 = vunpack.c.h.b16 %v663
        %v1160 = vunpack.c.l.b16 %v664
        %v1161 = vunpack.c.l.b16 %v665
        %v1162 = vunpack.c.h.b16 %v665
        %v1163 = vunpack.c.l.b16 %v666
        %v1164 = vunpack.c.h.b16 %v666
        %v1165 = vunpack.c.l.b16 %v667
        %v1166 = vunpack.c.h.b16 %v667
        %v1167 = vunpack.c.l.b16 %v668
        %v1168 = vunpack.c.h.b16 %v668
        %v1169 = vunpack.c.l.b16 %v669
        %v1170 = vunpack.c.l.b16 %v670
        %v1171 = vunpack.c.h.b16 %v670
        %v1172 = vunpack.c.l.b16 %v671
        %v1173 = vunpack.c.h.b16 %v671
        %v1174 = vunpack.c.l.b16 %v672
        %v1175 = vunpack.c.h.b16 %v672
        %v1176 = vunpack.c.l.b16 %v673
        %v1177 = vunpack.c.h.b16 %v673
        %v1178 = vunpack.c.l.b16 %v674
        %v1179 = vunpack.c.l.b16 %v675
        %v1180 = vunpack.c.h.b16 %v675
        %v1181 = vunpack.c.l.b16 %v676
        %v1182 = vunpack.c.h.b16 %v676
        %v1183 = vunpack.c.l.b16 %v677
        %v1184 = vunpack.c.h.b16 %v677
        %v1185 = vunpack.c.l.b16 %v678
        %v1186 = vunpack.c.h.b16 %v678
        %v1187 = vunpack.c.l.b16 %v679
        %v1188 = vunpack.c.l.b16 %v680
        %v1189 = vunpack.c.h.b16 %v680
        %v1190 = vunpack.c.l.b16 %v681
        %v1191 = vunpack.c.h.b16 %v681
        %v1192 = vunpack.c.l.b16 %v682
        %v1193 = vunpack.c.h.b16 %v682
        %v1194 = vunpack.c.l.b16 %v683
        %v1195 = vunpack.c.h.b16 %v683
        %v1196 = vunpack.c.l.b16 %v684
        %v1197 = vunpack.c.l.b16 %v685
        %v1198 = vunpack.c.h.b16 %v685
        %v1199 = vunpack.c.l.b16 %v686
        %v1200 = vunpack.c.h.b16 %v686
        %v1201 = vunpack.c.l.b16 %v687
        %v1202 = vunpack.c.h.b16 %v687
        %v1203 = vunpack.c.l.b16 %v688
        %v1204 = vunpack.c.h.b16 %v688
        %v1205 = vunpack.c.l.b16 %v689
        %v1206 = vunpack.c.l.b16 %v690
        %v1207 = vunpack.c.h.b16 %v690
        %v1208 = vunpack.c.l.b16 %v691
        %v1209 = vunpack.c.h.b16 %v691
        %v1210 = vunpack.c.l.b16 %v692
        %v1211 = vunpack.c.h.b16 %v692
        %v1212 = vunpack.c.l.b16 %v693
        %v1213 = vunpack.c.h.b16 %v693
        %v1214 = vunpack.c.l.b16 %v694
        %v1215 = vunpack.c.l.b16 %v695
        %v1216 = vunpack.c.h.b16 %v695
        %v1217 = vunpack.c.l.b16 %v696
        %v1218 = vunpack.c.h.b16 %v696
        %v1219 = vunpack.c.l.b16 %v697
        %v1220 = vunpack.c.h.b16 %v697
        %v1221 = vunpack.c.l.b16 %v698
        %v1222 = vunpack.c.h.b16 %v698
        %v1223 = vunpack.c.l.b16 %v699
        %v1224 = vunpack.c.l.b16 %v700
        %v1225 = vunpack.c.h.b16 %v700
        %v1226 = vunpack.c.l.b16 %v701
        %v1227 = vunpack.c.h.b16 %v701
        %v1228 = vunpack.c.l.b16 %v702
        %v1229 = vunpack.c.h.b16 %v702
        %v1230 = vunpack.c.l.b16 %v703
        %v1231 = vunpack.c.h.b16 %v703
        %v1232 = vunpack.c.l.b16 %v704
        %v1233 = vunpack.c.l.b16 %v705
        %v1234 = vunpack.c.h.b16 %v705
        %v1235 = vunpack.c.l.b16 %v706
        %v1236 = vunpack.c.h.b16 %v706
        %v1237 = vunpack.c.l.b16 %v707
        %v1238 = vunpack.c.h.b16 %v707
        %v1239 = vunpack.c.l.b16 %v708
        %v1240 = vunpack.c.h.b16 %v708
        %v1241 = vunpack.c.l.b16 %v709
        %v1242 = vunpack.c.l.b16 %v710
        %v1243 = vunpack.c.h.b16 %v710
        %v1244 = vunpack.c.l.b16 %v711
        %v1245 = vunpack.c.h.b16 %v711
        %v1246 = vunpack.c.l.b16 %v712
        %v1247 = vunpack.c.h.b16 %v712
        %v1248 = vunpack.c.l.b16 %v713
        %v1249 = vunpack.c.h.b16 %v713
        %v1250 = vunpack.c.l.b16 %v714
        %v1251 = vunpack.c.l.b16 %v715
        %v1252 = vunpack.c.h.b16 %v715
        %v1253 = vunpack.c.l.b16 %v716
        %v1254 = vunpack.c.h.b16 %v716
        %v1255 = vunpack.c.l.b16 %v717
        %v1256 = vunpack.c.h.b16 %v717
        %v1257 = vunpack.c.l.b16 %v718
        %v1258 = vunpack.c.h.b16 %v718
        %v1259 = vunpack.c.l.b16 %v719
        %v1260 = vunpack.c.l.b16 %v720
        %v1261 = vunpack.c.h.b16 %v720
        %v1262 = vunpack.c.l.b16 %v721
        %v1263 = vunpack.c.h.b16 %v721
        %v1264 = vunpack.c.l.b16 %v722
        %v1265 = vunpack.c.h.b16 %v722
        %v1266 = vunpack.c.l.b16 %v723
        %v1267 = vunpack.c.h.b16 %v723
        %v1268 = vunpack.c.l.b16 %v724
        %v1269 = vunpack.c.l.b16 %v725
        %v1270 = vunpack.c.h.b16 %v725
        %v1271 = vunpack.c.l.b16 %v726
        %v1272 = vunpack.c.h.b16 %v726
        %v1273 = vunpack.c.l.b16 %v727
        %v1274 = vunpack.c.h.b16 %v727
        %v1275 = vunpack.c.l.b16 %v728
        %v1276 = vunpack.c.h.b16 %v728
        %v1277 = vunpack.c.l.b16 %v729
        %v1278 = vunpack.c.l.b16 %v730
        %v1279 = vunpack.c.h.b16 %v730
        %v1280 = vunpack.c.l.b16 %v731
        %v1281 = vunpack.c.h.b16 %v731
        %v1282 = vunpack.c.l.b16 %v732
        %v1283 = vunpack.c.h.b16 %v732
        %v1284 = vunpack.c.l.b16 %v733
        %v1285 = vunpack.c.h.b16 %v733
        %v1286 = vunpack.c.l.b16 %v734
        %v1287 = vunpack.c.l.b16 %v735
        %v1288 = vunpack.c.h.b16 %v735
        %v1289 = vunpack.c.l.b16 %v736
        %v1290 = vunpack.c.h.b16 %v736
        %v1291 = vunpack.c.l.b16 %v737
        %v1292 = vunpack.c.h.b16 %v737
        %v1293 = vunpack.c.l.b16 %v738
        %v1294 = vunpack.c.h.b16 %v738
        %v1295 = vunpack.c.l.b16 %v739
        %v1296 = vunpack.c.l.b16 %v740
        %v1297 = vunpack.c.h.b16 %v740
        %v1298 = vunpack.c.l.b16 %v741
        %v1299 = vunpack.c.h.b16 %v741
        %v1300 = vunpack.c.l.b16 %v742
        %v1301 = vunpack.c.h.b16 %v742
        %v1302 = vunpack.c.l.b16 %v743
        %v1303 = vunpack.c.h.b16 %v743
        %v1304 = vunpack.c.l.b16 %v744
        %v1305 = vunpack.c.l.b16 %v745
        %v1306 = vunpack.c.h.b16 %v745
        %v1307 = vunpack.c.l.b16 %v746
        %v1308 = vunpack.c.h.b16 %v746
        %v1309 = vunpack.c.l.b16 %v747
        %v1310 = vunpack.c.h.b16 %v747
        %v1311 = vunpack.c.l.b16 %v748
        %v1312 = vunpack.c.h.b16 %v748
        %v1313 = vunpack.c.l.b16 %v749
        %v1314 = vunpack.c.l.b16 %v750
        %v1315 = vunpack.c.h.b16 %v750
        %v1316 = vunpack.c.l.b16 %v751
        %v1317 = vunpack.c.h.b16 %v751
        %v1318 = vunpack.c.l.b16 %v752
        %v1319 = vunpack.c.h.b16 %v752
        %v1320 = vunpack.c.l.b16 %v753
        %v1321 = vunpack.c.h.b16 %v753
        %v1322 = vunpack.c.l.b16 %v754
        %v1323 = vunpack.c.l.b16 %v755
        %v1324 = vunpack.c.h.b16 %v755
        %v1325 = vunpack.c.l.b16 %v756
        %v1326 = vunpack.c.h.b16 %v756
        %v1327 = vunpack.c.l.b16 %v757
        %v1328 = vunpack.c.h.b16 %v757
        %v1329 = vunpack.c.l.b16 %v758
        %v1330 = vunpack.c.h.b16 %v758
        %v1331 = vunpack.c.l.b16 %v759
        %v1332 = vunpack.c.l.b16 %v760
        %v1333 = vunpack.c.h.b16 %v760
        %v1334 = vunpack.c.l.b16 %v761
        %v1335 = vunpack.c.h.b16 %v761
        %v1336 = vunpack.c.l.b16 %v762
        %v1337 = vunpack.c.h.b16 %v762
        %v1338 = vunpack.c.l.b16 %v763
        %v1339 = vunpack.c.h.b16 %v763
        %v1340 = vunpack.c.l.b16 %v764
        %v1341 = vunpack.c.l.b16 %v765
        %v1342 = vunpack.c.h.b16 %v765
        %v1343 = vunpack.c.l.b16 %v766
        %v1344 = vunpack.c.h.b16 %v766
        %v1345 = vunpack.c.l.b16 %v767
        %v1346 = vunpack.c.h.b16 %v767
        %v1347 = vunpack.c.l.b16 %v768
        %v1348 = vunpack.c.h.b16 %v768
        %v1349 = vunpack.c.l.b16 %v769
        %v1350 = vunpack.c.l.b16 %v770
        %v1351 = vunpack.c.h.b16 %v770
        %v1352 = vunpack.c.l.b16 %v771
        %v1353 = vunpack.c.h.b16 %v771
        %v1354 = vunpack.c.l.b16 %v772
        %v1355 = vunpack.c.h.b16 %v772
        %v1356 = vunpack.c.l.b16 %v773
        %v1357 = vunpack.c.h.b16 %v773
        %v1358 = vunpack.c.l.b16 %v774
        %v1359 = vunpack.c.l.b16 %v775
        %v1360 = vunpack.c.h.b16 %v775
        %v1361 = vunpack.c.l.b16 %v776
        %v1362 = vunpack.c.h.b16 %v776
        %v1363 = vunpack.c.l.b16 %v777
        %v1364 = vunpack.c.h.b16 %v777
        %v1365 = vunpack.c.l.b16 %v778
        %v1366 = vunpack.c.h.b16 %v778
        %v1367 = vunpack.c.l.b16 %v779
        %v1368 = vunpack.c.l.b16 %v780
        %v1369 = vunpack.c.h.b16 %v780
        %v1370 = vunpack.c.l.b16 %v781
        %v1371 = vunpack.c.h.b16 %v781
        %v1372 = vunpack.c.l.b16 %v782
        %v1373 = vunpack.c.h.b16 %v782
        %v1374 = vunpack.c.l.b16 %v783
        %v1375 = vunpack.c.h.b16 %v783
        %v1376 = vunpack.c.l.b16 %v784
        %v1377 = vunpack.c.l.b16 %v785
        %v1378 = vunpack.c.h.b16 %v785
        %v1379 = vunpack.c.l.b16 %v786
        %v1380 = vunpack.c.h.b16 %v786
        %v1381 = vunpack.c.l.b16 %v787
        %v1382 = vunpack.c.h.b16 %v787
        %v1383 = vunpack.c.l.b16 %v788
        %v1384 = vunpack.c.h.b16 %v788
        %v1385 = vunpack.c.l.b16 %v789
        %v1386 = vunpack.c.l.b16 %v790
        %v1387 = vunpack.c.h.b16 %v790
        %v1388 = vunpack.c.l.b16 %v791
        %v1389 = vunpack.c.h.b16 %v791
        %v1390 = vunpack.c.l.b16 %v792
        %v1391 = vunpack.c.h.b16 %v792
        %v1392 = vunpack.c.l.b16 %v793
        %v1393 = vunpack.c.h.b16 %v793
        %v1394 = vunpack.c.l.b16 %v794
        %v1395 = vunpack.c.l.b16 %v795
        %v1396 = vunpack.c.h.b16 %v795
        %v1397 = vunpack.c.l.b16 %v796
        %v1398 = vunpack.c.h.b16 %v796
        %v1399 = vunpack.c.l.b16 %v797
        %v1400 = vunpack.c.h.b16 %v797
        %v1401 = vunpack.c.l.b16 %v798
        %v1402 = vunpack.c.h.b16 %v798
        %v1403 = vunpack.c.l.b16 %v799
        %v1404 = vunpack.c.l.b16 %v800
        %v1405 = vunpack.c.h.b16 %v800
        %v1406 = vunpack.c.l.b16 %v801
        %v1407 = vunpack.c.h.b16 %v801
        %v1408 = vunpack.c.l.b16 %v802
        %v1409 = vunpack.c.h.b16 %v802
        %v1410 = vunpack.c.l.b16 %v803
        %v1411 = vunpack.c.h.b16 %v803
        %v1412 = vunpack.c.l.b16 %v804
        %v1413 = vunpack.c.l.b16 %v805
        %v1414 = vunpack.c.h.b16 %v805
        %v1415 = vunpack.c.l.b16 %v806
        %v1416 = vunpack.c.h.b16 %v806
        %v1417 = vunpack.c.l.b16 %v807
        %v1418 = vunpack.c.h.b16 %v807
        %v1419 = vunpack.c.l.b16 %v808
        %v1420 = vunpack.c.h.b16 %v808
        %v1421 = vunpack.c.l.b16 %v809
        %v1422 = vunpack.c.l.b16 %v810
        %v1423 = vunpack.c.h.b16 %v810
        %v1424 = vunpack.c.l.b16 %v811
        %v1425 = vunpack.c.h.b16 %v811
        %v1426 = vunpack.c.l.b16 %v812
        %v1427 = vunpack.c.h.b16 %v812
        %v1428 = vunpack.c.l.b16 %v813
        %v1429 = vunpack.c.h.b16 %v813
        %v1430 = vunpack.c.l.b16 %v814
        %v1431 = vunpack.c.l.b16 %v815
        %v1432 = vunpack.c.h.b16 %v815
        %v1433 = vunpack.c.l.b16 %v816
        %v1434 = vunpack.c.h.b16 %v816
        %v1435 = vunpack.c.l.b16 %v817
        %v1436 = vunpack.c.h.b16 %v817
        %v1437 = vunpack.c.l.b16 %v818
        %v1438 = vunpack.c.h.b16 %v818
        %v1439 = vunpack.c.l.b16 %v819
        %v1440 = vunpack.c.l.b16 %v820
        %v1441 = vunpack.c.h.b16 %v820
        %v1442 = vunpack.c.l.b16 %v821
        %v1443 = vunpack.c.h.b16 %v821
        %v1444 = vunpack.c.l.b16 %v822
        %v1445 = vunpack.c.h.b16 %v822
        %v1446 = vunpack.c.l.b16 %v823
        %v1447 = vunpack.c.h.b16 %v823
        %v1448 = vunpack.c.l.b16 %v824
        %v1449 = vunpack.c.l.b16 %v825
        %v1450 = vunpack.c.h.b16 %v825
        %v1451 = vunpack.c.l.b16 %v826
        %v1452 = vunpack.c.h.b16 %v826
        %v1453 = vunpack.c.l.b16 %v827
        %v1454 = vunpack.c.h.b16 %v827
        %v1455 = vunpack.c.l.b16 %v828
        %v1456 = vunpack.c.h.b16 %v828
        %v1457 = vunpack.c.l.b16 %v829
        %v1458 = vunpack.c.l.b16 %v830
        %v1459 = vunpack.c.h.b16 %v830
        %v1460 = vunpack.c.l.b16 %v831
        %v1461 = vunpack.c.h.b16 %v831
        %v1462 = vunpack.c.l.b16 %v832
        %v1463 = vunpack.c.h.b16 %v832
        %v1464 = vunpack.c.l.b16 %v833
        %v1465 = vunpack.c.h.b16 %v833
        %v1466 = vunpack.c.l.b16 %v834
        %v1467 = vunpack.c.l.b16 %v835
        %v1468 = vunpack.c.h.b16 %v835
        %v1469 = vunpack.c.l.b16 %v836
        %v1470 = vunpack.c.h.b16 %v836
        %v1471 = vunpack.c.l.b16 %v837
        %v1472 = vunpack.c.h.b16 %v837
        %v1473 = vunpack.c.l.b16 %v838
        %v1474 = vunpack.c.h.b16 %v838
        %v1475 = vunpack.c.l.b16 %v839
        %v1476 = vunpack.c.l.b16 %v840
        %v1477 = vunpack.c.h.b16 %v840
        %v1478 = vunpack.c.l.b16 %v841
        %v1479 = vunpack.c.h.b16 %v841
        %v1480 = vunpack.c.l.b16 %v842
        %v1481 = vunpack.c.h.b16 %v842
        %v1482 = vunpack.c.l.b16 %v843
        %v1483 = vunpack.c.h.b16 %v843
        %v1484 = vunpack.c.l.b16 %v844
        %v1485 = vunpack.c.l.b16 %v845
        %v1486 = vunpack.c.h.b16 %v845
        %v1487 = vunpack.c.l.b16 %v846
        %v1488 = vunpack.c.h.b16 %v846
        %v1489 = vunpack.c.l.b16 %v847
        %v1490 = vunpack.c.h.b16 %v847
        %v1491 = vunpack.c.l.b16 %v848
        %v1492 = vunpack.c.h.b16 %v848
        %v1493 = vunpack.c.l.b16 %v849
        %v1494 = vunpack.c.l.b16 %v850
        %v1495 = vunpack.c.h.b16 %v850
        %v1496 = vunpack.c.l.b16 %v851
        %v1497 = vunpack.c.h.b16 %v851
        %v1498 = vunpack.c.l.b16 %v852
        %v1499 = vunpack.c.h.b16 %v852
        %v1500 = vunpack.c.l.b16 %v853
        %v1501 = vunpack.c.h.b16 %v853
        %v1502 = vunpack.c.l.b16 %v854
        %v1503 = vunpack.c.l.b16 %v855
        %v1504 = vunpack.c.h.b16 %v855
        %v1505 = vunpack.c.l.b16 %v856
        %v1506 = vunpack.c.h.b16 %v856
        %v1507 = vunpack.c.l.b16 %v857
        %v1508 = vunpack.c.h.b16 %v857
        %v1509 = vunpack.c.l.b16 %v858
        %v1510 = vunpack.c.h.b16 %v858
        %v1511 = vunpack.c.l.b16 %v859
        %v1512 = vunpack.c.l.b16 %v860
        %v1513 = vunpack.c.h.b16 %v860
        %v1514 = vunpack.c.l.b16 %v861
        %v1515 = vunpack.c.h.b16 %v861
        %v1516 = vunpack.c.l.b16 %v862
        %v1517 = vunpack.c.h.b16 %v862
        %v1518 = vunpack.c.l.b16 %v863
        %v1519 = vunpack.c.h.b16 %v863
        %v1520 = vunpack.c.l.b16 %v864
        %v1521 = vunpack.c.l.b16 %v865
        %v1522 = vunpack.c.h.b16 %v865
        %v1523 = vunpack.c.l.b16 %v866
        %v1524 = vunpack.c.h.b16 %v866
        %v1525 = vunpack.c.l.b16 %v867
        %v1526 = vunpack.c.h.b16 %v867
        %v1527 = vunpack.c.l.b16 %v868
        %v1528 = vunpack.c.h.b16 %v868
        %v1529 = vunpack.c.l.b16 %v869
        %v1530 = vunpack.c.l.b16 %v870
        %v1531 = vunpack.c.h.b16 %v870
        %v1532 = vunpack.c.l.b16 %v871
        %v1533 = vunpack.c.h.b16 %v871
        %v1534 = vunpack.c.l.b16 %v872
        %v1535 = vunpack.c.h.b16 %v872
        %v1536 = vunpack.c.l.b16 %v873
        %v1537 = vunpack.c.h.b16 %v873
        %v1538 = vunpack.c.l.b16 %v874
        %v1539 = vunpack.c.l.b16 %v875
        %v1540 = vunpack.c.h.b16 %v875
        %v1541 = vunpack.c.l.b16 %v876
        %v1542 = vunpack.c.h.b16 %v876
        %v1543 = vunpack.c.l.b16 %v877
        %v1544 = vunpack.c.h.b16 %v877
        %v1545 = vunpack.c.l.b16 %v878
        %v1546 = vunpack.c.h.b16 %v878
        %v1547 = vunpack.c.l.b16 %v879
        %v1548 = vunpack.c.l.b16 %v880
        %v1549 = vunpack.c.h.b16 %v880
        %v1550 = vunpack.c.l.b16 %v881
        %v1551 = vunpack.c.h.b16 %v881
        %v1552 = vunpack.c.l.b16 %v882
        %v1553 = vunpack.c.h.b16 %v882
        %v1554 = vunpack.c.l.b16 %v883
        %v1555 = vunpack.c.h.b16 %v883
        %v1556 = vunpack.c.l.b16 %v884
        %v1557 = vpack.c.b16 %v1134, %v1125
        %v1558 = vpack.c.b16 %v1135, %v1126
        %v1559 = vpack.c.b16 %v1136, %v1127
        %v1560 = vpack.c.b16 %v1137, %v1128
        %v1561 = vpack.c.b16 %v1138, %v1129
        %v1562 = vpack.c.b16 %v1139, %v1130
        %v1563 = vpack.c.b16 %v1140, %v1131
        %v1564 = vpack.c.b16 %v1141, %v1132
        %v1565 = vpack.c.b16 %v1142, %v1133
        %v1566 = vpack.c.b16 %v1152, %v1143
        %v1567 = vpack.c.b16 %v1153, %v1144
        %v1568 = vpack.c.b16 %v1154, %v1145
        %v1569 = vpack.c.b16 %v1155, %v1146
        %v1570 = vpack.c.b16 %v1156, %v1147
        %v1571 = vpack.c.b16 %v1157, %v1148
        %v1572 = vpack.c.b16 %v1158, %v1149
        %v1573 = vpack.c.b16 %v1159, %v1150
        %v1574 = vpack.c.b16 %v1160, %v1151
        %v1575 = vpack.c.b16 %v1170, %v1161
        %v1576 = vpack.c.b16 %v1171, %v1162
        %v1577 = vpack.c.b16 %v1172, %v1163
        %v1578 = vpack.c.b16 %v1173, %v1164
        %v1579 = vpack.c.b16 %v1174, %v1165
        %v1580 = vpack.c.b16 %v1175, %v1166
        %v1581 = vpack.c.b16 %v1176, %v1167
        %v1582 = vpack.c.b16 %v1177, %v1168
        %v1583 = vpack.c.b16 %v1178, %v1169
        %v1584 = vpack.c.b16 %v1188, %v1179
        %v1585 = vpack.c.b16 %v1189, %v1180
        %v1586 = vpack.c.b16 %v1190, %v1181
        %v1587 = vpack.c.b16 %v1191, %v1182
        %v1588 = vpack.c.b16 %v1192, %v1183
        %v1589 = vpack.c.b16 %v1193, %v1184
        %v1590 = vpack.c.b16 %v1194, %v1185
        %v1591 = vpack.c.b16 %v1195, %v1186
        %v1592 = vpack.c.b16 %v1196, %v1187
        %v1593 = vpack.c.b16 %v1206, %v1197
        %v1594 = vpack.c.b16 %v1207, %v1198
        %v1595 = vpack.c.b16 %v1208, %v1199
        %v1596 = vpack.c.b16 %v1209, %v1200
        %v1597 = vpack.c.b16 %v1210, %v1201
        %v1598 = vpack.c.b16 %v1211, %v1202
        %v1599 = vpack.c.b16 %v1212, %v1203
        %v1600 = vpack.c.b16 %v1213, %v1204
        %v1601 = vpack.c.b16 %v1214, %v1205
        %v1602 = vpack.c.b16 %v1224, %v1215
        %v1603 = vpack.c.b16 %v1225, %v1216
        %v1604 = vpack.c.b16 %v1226, %v1217
        %v1605 = vpack.c.b16 %v1227, %v1218
        %v1606 = vpack.c.b16 %v1228, %v1219
        %v1607 = vpack.c.b16 %v1229, %v1220
        %v1608 = vpack.c.b16 %v1230, %v1221
        %v1609 = vpack.c.b16 %v1231, %v1222
        %v1610 = vpack.c.b16 %v1232, %v1223
        %v1611 = vpack.c.b16 %v1242, %v1233
        %v1612 = vpack.c.b16 %v1243, %v1234
        %v1613 = vpack.c.b16 %v1244, %v1235
        %v1614 = vpack.c.b16 %v1245, %v1236
        %v1615 = vpack.c.b16 %v1246, %v1237
        %v1616 = vpack.c.b16 %v1247, %v1238
        %v1617 = vpack.c.b16 %v1248, %v1239
        %v1618 = vpack.c.b16 %v1249, %v1240
        %v1619 = vpack.c.b16 %v1250, %v1241
        %v1620 = vpack.c.b16 %v1260, %v1251
        %v1621 = vpack.c.b16 %v1261, %v1252
        %v1622 = vpack.c.b16 %v1262, %v1253
        %v1623 = vpack.c.b16 %v1263, %v1254
        %v1624 = vpack.c.b16 %v1264, %v1255
        %v1625 = vpack.c.b16 %v1265, %v1256
        %v1626 = vpack.c.b16 %v1266, %v1257
        %v1627 = vpack.c.b16 %v1267, %v1258
        %v1628 = vpack.c.b16 %v1268, %v1259
        %v1629 = vpack.c.b16 %v1278, %v1269
        %v1630 = vpack.c.b16 %v1279, %v1270
        %v1631 = vpack.c.b16 %v1280, %v1271
        %v1632 = vpack.c.b16 %v1281, %v1272
        %v1633 = vpack.c.b16 %v1282, %v1273
        %v1634 = vpack.c.b16 %v1283, %v1274
        %v1635 = vpack.c.b16 %v1284, %v1275
        %v1636 = vpack.c.b16 %v1285, %v1276
        %v1637 = vpack.c.b16 %v1286, %v1277
        %v1638 = vpack.c.b16 %v1296, %v1287
        %v1639 = vpack.c.b16 %v1297, %v1288
        %v1640 = vpack.c.b16 %v1298, %v1289
        %v1641 = vpack.c.b16 %v1299, %v1290
        %v1642 = vpack.c.b16 %v1300, %v1291
        %v1643 = vpack.c.b16 %v1301, %v1292
        %v1644 = vpack.c.b16 %v1302, %v1293
        %v1645 = vpack.c.b16 %v1303, %v1294
        %v1646 = vpack.c.b16 %v1304, %v1295
        %v1647 = vpack.c.b16 %v1314, %v1305
        %v1648 = vpack.c.b16 %v1315, %v1306
        %v1649 = vpack.c.b16 %v1316, %v1307
        %v1650 = vpack.c.b16 %v1317, %v1308
        %v1651 = vpack.c.b16 %v1318, %v1309
        %v1652 = vpack.c.b16 %v1319, %v1310
        %v1653 = vpack.c.b16 %v1320, %v1311
        %v1654 = vpack.c.b16 %v1321, %v1312
        %v1655 = vpack.c.b16 %v1322, %v1313
        %v1656 = vpack.c.b16 %v1332, %v1323
        %v1657 = vpack.c.b16 %v1333, %v1324
        %v1658 = vpack.c.b16 %v1334, %v1325
        %v1659 = vpack.c.b16 %v1335, %v1326
        %v1660 = vpack.c.b16 %v1336, %v1327
        %v1661 = vpack.c.b16 %v1337, %v1328
        %v1662 = vpack.c.b16 %v1338, %v1329
        %v1663 = vpack.c.b16 %v1339, %v1330
        %v1664 = vpack.c.b16 %v1340, %v1331
        %v1665 = vpack.c.b16 %v1350, %v1341
        %v1666 = vpack.c.b16 %v1351, %v1342
        %v1667 = vpack.c.b16 %v1352, %v1343
        %v1668 = vpack.c.b16 %v1353, %v1344
        %v1669 = vpack.c.b16 %v1354, %v1345
        %v1670 = vpack.c.b16 %v1355, %v1346
        %v1671 = vpack.c.b16 %v1356, %v1347
        %v1672 = vpack.c.b16 %v1357, %v1348
        %v1673 = vpack.c.b16 %v1358, %v1349
        %v1674 = vpack.c.b16 %v1368, %v1359
        %v1675 = vpack.c.b16 %v1369, %v1360
        %v1676 = vpack.c.b16 %v1370, %v1361
        %v1677 = vpack.c.b16 %v1371, %v1362
        %v1678 = vpack.c.b16 %v1372, %v1363
        %v1679 = vpack.c.b16 %v1373, %v1364
        %v1680 = vpack.c.b16 %v1374, %v1365
        %v1681 = vpack.c.b16 %v1375, %v1366
        %v1682 = vpack.c.b16 %v1376, %v1367
        %v1683 = vpack.c.b16 %v1386, %v1377
        %v1684 = vpack.c.b16 %v1387, %v1378
        %v1685 = vpack.c.b16 %v1388, %v1379
        %v1686 = vpack.c.b16 %v1389, %v1380
        %v1687 = vpack.c.b16 %v1390, %v1381
        %v1688 = vpack.c.b16 %v1391, %v1382
        %v1689 = vpack.c.b16 %v1392, %v1383
        %v1690 = vpack.c.b16 %v1393, %v1384
        %v1691 = vpack.c.b16 %v1394, %v1385
        %v1692 = vpack.c.b16 %v1404, %v1395
        %v1693 = vpack.c.b16 %v1405, %v1396
        %v1694 = vpack.c.b16 %v1406, %v1397
        %v1695 = vpack.c.b16 %v1407, %v1398
        %v1696 = vpack.c.b16 %v1408, %v1399
        %v1697 = vpack.c.b16 %v1409, %v1400
        %v1698 = vpack.c.b16 %v1410, %v1401
        %v1699 = vpack.c.b16 %v1411, %v1402
        %v1700 = vpack.c.b16 %v1412, %v1403
        %v1701 = vpack.c.b16 %v1422, %v1413
        %v1702 = vpack.c.b16 %v1423, %v1414
        %v1703 = vpack.c.b16 %v1424, %v1415
        %v1704 = vpack.c.b16 %v1425, %v1416
        %v1705 = vpack.c.b16 %v1426, %v1417
        %v1706 = vpack.c.b16 %v1427, %v1418
        %v1707 = vpack.c.b16 %v1428, %v1419
        %v1708 = vpack.c.b16 %v1429, %v1420
        %v1709 = vpack.c.b16 %v1430, %v1421
        %v1710 = vpack.c.b16 %v1440, %v1431
        %v1711 = vpack.c.b16 %v1441, %v1432
        %v1712 = vpack.c.b16 %v1442, %v1433
        %v1713 = vpack.c.b16 %v1443, %v1434
        %v1714 = vpack.c.b16 %v1444, %v1435
        %v1715 = vpack.c.b16 %v1445, %v1436
        %v1716 = vpack.c.b16 %v1446, %v1437
        %v1717 = vpack.c.b16 %v1447, %v1438
        %v1718 = vpack.c.b16 %v1448, %v1439
        %v1719 = vpack.c.b16 %v1458, %v1449
        %v1720 = vpack.c.b16 %v1459, %v1450
        %v1721 = vpack.c.b16 %v1460, %v1451
        %v1722 = vpack.c.b16 %v1461, %v1452
        %v1723 = vpack.c.b16 %v1462, %v1453
        %v1724 = vpack.c.b16 %v1463, %v1454
        %v1725 = vpack.c.b16 %v1464, %v1455
        %v1726 = vpack.c.b16 %v1465, %v1456
        %v1727 = vpack.c.b16 %v1466, %v1457
        %v1728 = vpack.c.b16 %v1476, %v1467
        %v1729 = vpack.c.b16 %v1477, %v1468
        %v1730 = vpack.c.b16 %v1478, %v1469
        %v1731 = vpack.c.b16 %v1479, %v1470
        %v1732 = vpack.c.b16 %v1480, %v1471
        %v1733 = vpack.c.b16 %v1481, %v1472
        %v1734 = vpack.c.b16 %v1482, %v1473
        %v1735 = vpack.c.b16 %v1483, %v1474
        %v1736 = vpack.c.b16 %v1484, %v1475
        %v1737 = vpack.c.b16 %v1494, %v1485
        %v1738 = vpack.c.b16 %v1495, %v1486
        %v1739 = vpack.c.b16 %v1496, %v1487
        %v1740 = vpack.c.b16 %v1497, %v1488
        %v1741 = vpack.c.b16 %v1498, %v1489
        %v1742 = vpack.c.b16 %v1499, %v1490
        %v1743 = vpack.c.b16 %v1500, %v1491
        %v1744 = vpack.c.b16 %v1501, %v1492
        %v1745 = vpack.c.b16 %v1502, %v1493
        %v1746 = vpack.c.b16 %v1512, %v1503
        %v1747 = vpack.c.b16 %v1513, %v1504
        %v1748 = vpack.c.b16 %v1514, %v1505
        %v1749 = vpack.c.b16 %v1515, %v1506
        %v1750 = vpack.c.b16 %v1516, %v1507
        %v1751 = vpack.c.b16 %v1517, %v1508
        %v1752 = vpack.c.b16 %v1518, %v1509
        %v1753 = vpack.c.b16 %v1519, %v1510
        %v1754 = vpack.c.b16 %v1520, %v1511
        %v1755 = vpack.c.b16 %v1530, %v1521
        %v1756 = vpack.c.b16 %v1531, %v1522
        %v1757 = vpack.c.b16 %v1532, %v1523
        %v1758 = vpack.c.b16 %v1533, %v1524
        %v1759 = vpack.c.b16 %v1534, %v1525
        %v1760 = vpack.c.b16 %v1535, %v1526
        %v1761 = vpack.c.b16 %v1536, %v1527
        %v1762 = vpack.c.b16 %v1537, %v1528
        %v1763 = vpack.c.b16 %v1538, %v1529
        %v1764 = vpack.c.b16 %v1548, %v1539
        %v1765 = vpack.c.b16 %v1549, %v1540
        %v1766 = vpack.c.b16 %v1550, %v1541
        %v1767 = vpack.c.b16 %v1551, %v1542
        %v1768 = vpack.c.b16 %v1552, %v1543
        %v1769 = vpack.c.b16 %v1553, %v1544
        %v1770 = vpack.c.b16 %v1554, %v1545
        %v1771 = vpack.c.b16 %v1555, %v1546
        %v1772 = vpack.c.b16 %v1556, %v1547
        %1989 = vmatprep.subr.bf16.mxu0 %v1558
        %1990 = vmatpush1.bf16.msra.mxu0 %v1557
        %1991 = vmatprep.subr.bf16.mxu0 %v1567
        %1992 = vmatpush1.bf16.msra.mxu0 %v1566
        %1993 = vmatprep.subr.bf16.mxu0 %v1576
        %1994 = vmatpush1.bf16.msra.mxu0 %v1575
        %1995 = vmatprep.subr.bf16.mxu0 %v1585
        %1996 = vmatpush1.bf16.msra.mxu0 %v1584
        %1997 = vmatprep.subr.bf16.mxu0 %v1594
        %1998 = vmatpush1.bf16.msra.mxu0 %v1593
        %1999 = vmatprep.subr.bf16.mxu0 %v1603
        %2000 = vmatpush1.bf16.msra.mxu0 %v1602
        %2001 = vmatprep.subr.bf16.mxu0 %v1612
        %2002 = vmatpush1.bf16.msra.mxu0 %v1611
        %2003 = vmatprep.subr.bf16.mxu0 %v1621
        %2004 = vmatpush1.bf16.msra.mxu0 %v1620
        %2005 = vmatprep.subr.bf16.mxu0 %v1630
        %2006 = vmatpush1.bf16.msra.mxu0 %v1629
        %2007 = vmatprep.subr.bf16.mxu0 %v1639
        %2008 = vmatpush1.bf16.msra.mxu0 %v1638
        %2009 = vmatprep.subr.bf16.mxu0 %v1648
        %2010 = vmatpush1.bf16.msra.mxu0 %v1647
        %2011 = vmatprep.subr.bf16.mxu0 %v1657
        %2012 = vmatpush1.bf16.msra.mxu0 %v1656
        %2013 = vmatprep.subr.bf16.mxu0 %v1666
        %2014 = vmatpush1.bf16.msra.mxu0 %v1665
        %2015 = vmatprep.subr.bf16.mxu0 %v1675
        %2016 = vmatpush1.bf16.msra.mxu0 %v1674
        %2017 = vmatprep.subr.bf16.mxu0 %v1684
        %2018 = vmatpush1.bf16.msra.mxu0 %v1683
        %2019 = vmatprep.subr.bf16.mxu0 %v1693
        %2020 = vmatpush1.bf16.msra.mxu0 %v1692
        %2021 = vmatprep.mubr.bf16.mxu0 %v643
        %2022 = vmatmul.mubr.bf16.gmra.mrb[0].mxu0 %v642
        %v2023 = vpop.f32.mrb[0].mxu0
        %v2024 = vadd.f32 0.0, %v2023
        %v2025 = vpop.f32.mrb[0].mxu0
        %v2026 = vadd.f32 0.0, %v2025
        %v2027 = vpop.f32.mrb[0].mxu0
        %v2028 = vpop.f32.mrb[0].mxu0
        %2029 = vdwg.mxu0
        %2030 = vmatprep.subr.bf16.mxu0 %v1702
        %2031 = vmatpush1.bf16.msra.mxu0 %v1701
        %2032 = vmatprep.subr.bf16.mxu0 %v1711
        %2033 = vmatpush1.bf16.msra.mxu0 %v1710
        %2034 = vmatprep.subr.bf16.mxu0 %v1720
        %2035 = vmatpush1.bf16.msra.mxu0 %v1719
        %2036 = vmatprep.subr.bf16.mxu0 %v1729
        %2037 = vmatpush1.bf16.msra.mxu0 %v1728
        %2038 = vmatprep.subr.bf16.mxu0 %v1738
        %2039 = vmatpush1.bf16.msra.mxu0 %v1737
        %2040 = vmatprep.subr.bf16.mxu0 %v1747
        %2041 = vmatpush1.bf16.msra.mxu0 %v1746
        %2042 = vmatprep.subr.bf16.mxu0 %v1756
        %2043 = vmatpush1.bf16.msra.mxu0 %v1755
        %2044 = vmatprep.subr.bf16.mxu0 %v1765
        %2045 = vmatpush1.bf16.msra.mxu0 %v1764
        %2046 = vmatprep.subr.bf16.mxu0 0
        %2047 = vmatpush1.bf16.msra.mxu0 0
        %2048 = vmatprep.subr.bf16.mxu0 0
        %2049 = vmatpush1.bf16.msra.mxu0 0
        %2050 = vmatprep.subr.bf16.mxu0 0
        %2051 = vmatpush1.bf16.msra.mxu0 0
        %2052 = vmatprep.subr.bf16.mxu0 0
        %2053 = vmatpush1.bf16.msra.mxu0 0
        %2054 = vmatprep.subr.bf16.mxu0 0
        %2055 = vmatpush1.bf16.msra.mxu0 0
        %2056 = vmatprep.subr.bf16.mxu0 0
        %2057 = vmatpush1.bf16.msra.mxu0 0
        %2058 = vmatprep.subr.bf16.mxu0 0
        %2059 = vmatpush1.bf16.msra.mxu0 0
        %2060 = vmatprep.subr.bf16.mxu0 0
        %2061 = vmatpush1.bf16.msra.mxu0 0
        %2062 = vmatprep.mubr.bf16.mxu0 0
        %2063 = vmatmul.mubr.bf16.gmra.mrb[0].mxu0 %v644
        %v2064 = vpop.f32.mrb[0].mxu0
        %v2065 = vadd.f32 %v2024, %v2064
        %v2066 = vpop.f32.mrb[0].mxu0
        %v2067 = vadd.f32 %v2026, %v2066
        %v2068 = vpop.f32.mrb[0].mxu0
        %v2069 = vpop.f32.mrb[0].mxu0
        %2070 = vdwg.mxu0
        %2071 = vmatprep.subr.bf16.mxu0 %v1560
        %2072 = vmatpush1.bf16.msra.mxu0 %v1559
        %2073 = vmatprep.subr.bf16.mxu0 %v1569
        %2074 = vmatpush1.bf16.msra.mxu0 %v1568
        %2075 = vmatprep.subr.bf16.mxu0 %v1578
        %2076 = vmatpush1.bf16.msra.mxu0 %v1577
        %2077 = vmatprep.subr.bf16.mxu0 %v1587
        %2078 = vmatpush1.bf16.msra.mxu0 %v1586
        %2079 = vmatprep.subr.bf16.mxu0 %v1596
        %2080 = vmatpush1.bf16.msra.mxu0 %v1595
        %2081 = vmatprep.subr.bf16.mxu0 %v1605
        %2082 = vmatpush1.bf16.msra.mxu0 %v1604
        %2083 = vmatprep.subr.bf16.mxu0 %v1614
        %2084 = vmatpush1.bf16.msra.mxu0 %v1613
        %2085 = vmatprep.subr.bf16.mxu0 %v1623
        %2086 = vmatpush1.bf16.msra.mxu0 %v1622
        %2087 = vmatprep.subr.bf16.mxu0 %v1632
        %2088 = vmatpush1.bf16.msra.mxu0 %v1631
        %2089 = vmatprep.subr.bf16.mxu0 %v1641
        %2090 = vmatpush1.bf16.msra.mxu0 %v1640
        %2091 = vmatprep.subr.bf16.mxu0 %v1650
        %2092 = vmatpush1.bf16.msra.mxu0 %v1649
        %2093 = vmatprep.subr.bf16.mxu0 %v1659
        %2094 = vmatpush1.bf16.msra.mxu0 %v1658
        %2095 = vmatprep.subr.bf16.mxu0 %v1668
        %2096 = vmatpush1.bf16.msra.mxu0 %v1667
        %2097 = vmatprep.subr.bf16.mxu0 %v1677
        %2098 = vmatpush1.bf16.msra.mxu0 %v1676
        %2099 = vmatprep.subr.bf16.mxu0 %v1686
        %2100 = vmatpush1.bf16.msra.mxu0 %v1685
        %2101 = vmatprep.subr.bf16.mxu0 %v1695
        %2102 = vmatpush1.bf16.msra.mxu0 %v1694
        %2103 = vmatprep.mubr.bf16.mxu0 %v643
        %2104 = vmatmul.mubr.bf16.gmra.mrb[0].mxu0 %v642
        %v2105 = vpop.f32.mrb[0].mxu0
        %v2106 = vadd.f32 0.0, %v2105
        %v2107 = vpop.f32.mrb[0].mxu0
        %v2108 = vadd.f32 0.0, %v2107
        %v2109 = vpop.f32.mrb[0].mxu0
        %v2110 = vpop.f32.mrb[0].mxu0
        %2111 = vdwg.mxu0
        %2112 = vmatprep.subr.bf16.mxu0 %v1704
        %2113 = vmatpush1.bf16.msra.mxu0 %v1703
        %2114 = vmatprep.subr.bf16.mxu0 %v1713
        %2115 = vmatpush1.bf16.msra.mxu0 %v1712
        %2116 = vmatprep.subr.bf16.mxu0 %v1722
        %2117 = vmatpush1.bf16.msra.mxu0 %v1721
        %2118 = vmatprep.subr.bf16.mxu0 %v1731
        %2119 = vmatpush1.bf16.msra.mxu0 %v1730
        %2120 = vmatprep.subr.bf16.mxu0 %v1740
        %2121 = vmatpush1.bf16.msra.mxu0 %v1739
        %2122 = vmatprep.subr.bf16.mxu0 %v1749
        %2123 = vmatpush1.bf16.msra.mxu0 %v1748
        %2124 = vmatprep.subr.bf16.mxu0 %v1758
        %2125 = vmatpush1.bf16.msra.mxu0 %v1757
        %2126 = vmatprep.subr.bf16.mxu0 %v1767
        %2127 = vmatpush1.bf16.msra.mxu0 %v1766
        %2128 = vmatprep.subr.bf16.mxu0 0
        %2129 = vmatpush1.bf16.msra.mxu0 0
        %2130 = vmatprep.subr.bf16.mxu0 0
        %2131 = vmatpush1.bf16.msra.mxu0 0
        %2132 = vmatprep.subr.bf16.mxu0 0
        %2133 = vmatpush1.bf16.msra.mxu0 0
        %2134 = vmatprep.subr.bf16.mxu0 0
        %2135 = vmatpush1.bf16.msra.mxu0 0
        %2136 = vmatprep.subr.bf16.mxu0 0
        %2137 = vmatpush1.bf16.msra.mxu0 0
        %2138 = vmatprep.subr.bf16.mxu0 0
        %2139 = vmatpush1.bf16.msra.mxu0 0
        %2140 = vmatprep.subr.bf16.mxu0 0
        %2141 = vmatpush1.bf16.msra.mxu0 0
        %2142 = vmatprep.subr.bf16.mxu0 0
        %2143 = vmatpush1.bf16.msra.mxu0 0
        %2144 = vmatprep.mubr.bf16.mxu0 0
        %2145 = vmatmul.mubr.bf16.gmra.mrb[0].mxu0 %v644
        %v2146 = vpop.f32.mrb[0].mxu0
        %v2147 = vadd.f32 %v2106, %v2146
        %v2148 = vpop.f32.mrb[0].mxu0
        %v2149 = vadd.f32 %v2108, %v2148
        %v2150 = vpop.f32.mrb[0].mxu0
        %v2151 = vpop.f32.mrb[0].mxu0
        %2152 = vdwg.mxu0
        %2153 = vmatprep.subr.bf16.mxu0 %v1562
        %2154 = vmatpush1.bf16.msra.mxu0 %v1561
        %2155 = vmatprep.subr.bf16.mxu0 %v1571
        %2156 = vmatpush1.bf16.msra.mxu0 %v1570
        %2157 = vmatprep.subr.bf16.mxu0 %v1580
        %2158 = vmatpush1.bf16.msra.mxu0 %v1579
        %2159 = vmatprep.subr.bf16.mxu0 %v1589
        %2160 = vmatpush1.bf16.msra.mxu0 %v1588
        %2161 = vmatprep.subr.bf16.mxu0 %v1598
        %2162 = vmatpush1.bf16.msra.mxu0 %v1597
        %2163 = vmatprep.subr.bf16.mxu0 %v1607
        %2164 = vmatpush1.bf16.msra.mxu0 %v1606
        %2165 = vmatprep.subr.bf16.mxu0 %v1616
        %2166 = vmatpush1.bf16.msra.mxu0 %v1615
        %2167 = vmatprep.subr.bf16.mxu0 %v1625
        %2168 = vmatpush1.bf16.msra.mxu0 %v1624
        %2169 = vmatprep.subr.bf16.mxu0 %v1634
        %2170 = vmatpush1.bf16.msra.mxu0 %v1633
        %2171 = vmatprep.subr.bf16.mxu0 %v1643
        %2172 = vmatpush1.bf16.msra.mxu0 %v1642
        %2173 = vmatprep.subr.bf16.mxu0 %v1652
        %2174 = vmatpush1.bf16.msra.mxu0 %v1651
        %2175 = vmatprep.subr.bf16.mxu0 %v1661
        %2176 = vmatpush1.bf16.msra.mxu0 %v1660
        %2177 = vmatprep.subr.bf16.mxu0 %v1670
        %2178 = vmatpush1.bf16.msra.mxu0 %v1669
        %2179 = vmatprep.subr.bf16.mxu0 %v1679
        %2180 = vmatpush1.bf16.msra.mxu0 %v1678
        %2181 = vmatprep.subr.bf16.mxu0 %v1688
        %2182 = vmatpush1.bf16.msra.mxu0 %v1687
        %2183 = vmatprep.subr.bf16.mxu0 %v1697
        %2184 = vmatpush1.bf16.msra.mxu0 %v1696
        %2185 = vmatprep.mubr.bf16.mxu0 %v643
        %2186 = vmatmul.mubr.bf16.gmra.mrb[0].mxu0 %v642
        %v2187 = vpop.f32.mrb[0].mxu0
        %v2188 = vadd.f32 0.0, %v2187
        %v2189 = vpop.f32.mrb[0].mxu0
        %v2190 = vadd.f32 0.0, %v2189
        %v2191 = vpop.f32.mrb[0].mxu0
        %v2192 = vpop.f32.mrb[0].mxu0
        %2193 = vdwg.mxu0
        %2194 = vmatprep.subr.bf16.mxu0 %v1706
        %2195 = vmatpush1.bf16.msra.mxu0 %v1705
        %2196 = vmatprep.subr.bf16.mxu0 %v1715
        %2197 = vmatpush1.bf16.msra.mxu0 %v1714
        %2198 = vmatprep.subr.bf16.mxu0 %v1724
        %2199 = vmatpush1.bf16.msra.mxu0 %v1723
        %2200 = vmatprep.subr.bf16.mxu0 %v1733
        %2201 = vmatpush1.bf16.msra.mxu0 %v1732
        %2202 = vmatprep.subr.bf16.mxu0 %v1742
        %2203 = vmatpush1.bf16.msra.mxu0 %v1741
        %2204 = vmatprep.subr.bf16.mxu0 %v1751
        %2205 = vmatpush1.bf16.msra.mxu0 %v1750
        %2206 = vmatprep.subr.bf16.mxu0 %v1760
        %2207 = vmatpush1.bf16.msra.mxu0 %v1759
        %2208 = vmatprep.subr.bf16.mxu0 %v1769
        %2209 = vmatpush1.bf16.msra.mxu0 %v1768
        %2210 = vmatprep.subr.bf16.mxu0 0
        %2211 = vmatpush1.bf16.msra.mxu0 0
        %2212 = vmatprep.subr.bf16.mxu0 0
        %2213 = vmatpush1.bf16.msra.mxu0 0
        %2214 = vmatprep.subr.bf16.mxu0 0
        %2215 = vmatpush1.bf16.msra.mxu0 0
        %2216 = vmatprep.subr.bf16.mxu0 0
        %2217 = vmatpush1.bf16.msra.mxu0 0
        %2218 = vmatprep.subr.bf16.mxu0 0
        %2219 = vmatpush1.bf16.msra.mxu0 0
        %2220 = vmatprep.subr.bf16.mxu0 0
        %2221 = vmatpush1.bf16.msra.mxu0 0
        %2222 = vmatprep.subr.bf16.mxu0 0
        %2223 = vmatpush1.bf16.msra.mxu0 0
        %2224 = vmatprep.subr.bf16.mxu0 0
        %2225 = vmatpush1.bf16.msra.mxu0 0
        %2226 = vmatprep.mubr.bf16.mxu0 0
        %2227 = vmatmul.mubr.bf16.gmra.mrb[0].mxu0 %v644
        %v2228 = vpop.f32.mrb[0].mxu0
        %v2229 = vadd.f32 %v2188, %v2228
        %v2230 = vpop.f32.mrb[0].mxu0
        %v2231 = vadd.f32 %v2190, %v2230
        %v2232 = vpop.f32.mrb[0].mxu0
        %v2233 = vpop.f32.mrb[0].mxu0
        %2234 = vdwg.mxu0
        %2235 = vmatprep.subr.bf16.mxu0 %v1564
        %2236 = vmatpush1.bf16.msra.mxu0 %v1563
        %2237 = vmatprep.subr.bf16.mxu0 %v1573
        %2238 = vmatpush1.bf16.msra.mxu0 %v1572
        %2239 = vmatprep.subr.bf16.mxu0 %v1582
        %2240 = vmatpush1.bf16.msra.mxu0 %v1581
        %2241 = vmatprep.subr.bf16.mxu0 %v1591
        %2242 = vmatpush1.bf16.msra.mxu0 %v1590
        %2243 = vmatprep.subr.bf16.mxu0 %v1600
        %2244 = vmatpush1.bf16.msra.mxu0 %v1599
        %2245 = vmatprep.subr.bf16.mxu0 %v1609
        %2246 = vmatpush1.bf16.msra.mxu0 %v1608
        %2247 = vmatprep.subr.bf16.mxu0 %v1618
        %2248 = vmatpush1.bf16.msra.mxu0 %v1617
        %2249 = vmatprep.subr.bf16.mxu0 %v1627
        %2250 = vmatpush1.bf16.msra.mxu0 %v1626
        %2251 = vmatprep.subr.bf16.mxu0 %v1636
        %2252 = vmatpush1.bf16.msra.mxu0 %v1635
        %2253 = vmatprep.subr.bf16.mxu0 %v1645
        %2254 = vmatpush1.bf16.msra.mxu0 %v1644
        %2255 = vmatprep.subr.bf16.mxu0 %v1654
        %2256 = vmatpush1.bf16.msra.mxu0 %v1653
        %2257 = vmatprep.subr.bf16.mxu0 %v1663
        %2258 = vmatpush1.bf16.msra.mxu0 %v1662
        %2259 = vmatprep.subr.bf16.mxu0 %v1672
        %2260 = vmatpush1.bf16.msra.mxu0 %v1671
        %2261 = vmatprep.subr.bf16.mxu0 %v1681
        %2262 = vmatpush1.bf16.msra.mxu0 %v1680
        %2263 = vmatprep.subr.bf16.mxu0 %v1690
        %2264 = vmatpush1.bf16.msra.mxu0 %v1689
        %2265 = vmatprep.subr.bf16.mxu0 %v1699
        %2266 = vmatpush1.bf16.msra.mxu0 %v1698
        %2267 = vmatprep.mubr.bf16.mxu0 %v643
        %2268 = vmatmul.mubr.bf16.gmra.mrb[0].mxu0 %v642
        %v2269 = vpop.f32.mrb[0].mxu0
        %v2270 = vadd.f32 0.0, %v2269
        %v2271 = vpop.f32.mrb[0].mxu0
        %v2272 = vadd.f32 0.0, %v2271
        %v2273 = vpop.f32.mrb[0].mxu0
        %v2274 = vpop.f32.mrb[0].mxu0
        %2275 = vdwg.mxu0
        %2276 = vmatprep.subr.bf16.mxu0 %v1708
        %2277 = vmatpush1.bf16.msra.mxu0 %v1707
        %2278 = vmatprep.subr.bf16.mxu0 %v1717
        %2279 = vmatpush1.bf16.msra.mxu0 %v1716
        %2280 = vmatprep.subr.bf16.mxu0 %v1726
        %2281 = vmatpush1.bf16.msra.mxu0 %v1725
        %2282 = vmatprep.subr.bf16.mxu0 %v1735
        %2283 = vmatpush1.bf16.msra.mxu0 %v1734
        %2284 = vmatprep.subr.bf16.mxu0 %v1744
        %2285 = vmatpush1.bf16.msra.mxu0 %v1743
        %2286 = vmatprep.subr.bf16.mxu0 %v1753
        %2287 = vmatpush1.bf16.msra.mxu0 %v1752
        %2288 = vmatprep.subr.bf16.mxu0 %v1762
        %2289 = vmatpush1.bf16.msra.mxu0 %v1761
        %2290 = vmatprep.subr.bf16.mxu0 %v1771
        %2291 = vmatpush1.bf16.msra.mxu0 %v1770
        %2292 = vmatprep.subr.bf16.mxu0 0
        %2293 = vmatpush1.bf16.msra.mxu0 0
        %2294 = vmatprep.subr.bf16.mxu0 0
        %2295 = vmatpush1.bf16.msra.mxu0 0
        %2296 = vmatprep.subr.bf16.mxu0 0
        %2297 = vmatpush1.bf16.msra.mxu0 0
        %2298 = vmatprep.subr.bf16.mxu0 0
        %2299 = vmatpush1.bf16.msra.mxu0 0
        %2300 = vmatprep.subr.bf16.mxu0 0
        %2301 = vmatpush1.bf16.msra.mxu0 0
        %2302 = vmatprep.subr.bf16.mxu0 0
        %2303 = vmatpush1.bf16.msra.mxu0 0
        %2304 = vmatprep.subr.bf16.mxu0 0
        %2305 = vmatpush1.bf16.msra.mxu0 0
        %2306 = vmatprep.subr.bf16.mxu0 0
        %2307 = vmatpush1.bf16.msra.mxu0 0
        %2308 = vmatprep.mubr.bf16.mxu0 0
        %2309 = vmatmul.mubr.bf16.gmra.mrb[0].mxu0 %v644
        %v2310 = vpop.f32.mrb[0].mxu0
        %v2311 = vadd.f32 %v2270, %v2310
        %v2312 = vpop.f32.mrb[0].mxu0
        %v2313 = vadd.f32 %v2272, %v2312
        %v2314 = vpop.f32.mrb[0].mxu0
        %v2315 = vpop.f32.mrb[0].mxu0
        %2316 = vdwg.mxu0
        %2317 = vmatprep.subr.bf16.mxu0 0
        %2318 = vmatpush1.bf16.msra.mxu0 %v1565
        %2319 = vmatprep.subr.bf16.mxu0 0
        %2320 = vmatpush1.bf16.msra.mxu0 %v1574
        %2321 = vmatprep.subr.bf16.mxu0 0
        %2322 = vmatpush1.bf16.msra.mxu0 %v1583
        %2323 = vmatprep.subr.bf16.mxu0 0
        %2324 = vmatpush1.bf16.msra.mxu0 %v1592
        %2325 = vmatprep.subr.bf16.mxu0 0
        %2326 = vmatpush1.bf16.msra.mxu0 %v1601
        %2327 = vmatprep.subr.bf16.mxu0 0
        %2328 = vmatpush1.bf16.msra.mxu0 %v1610
        %2329 = vmatprep.subr.bf16.mxu0 0
        %2330 = vmatpush1.bf16.msra.mxu0 %v1619
        %2331 = vmatprep.subr.bf16.mxu0 0
        %2332 = vmatpush1.bf16.msra.mxu0 %v1628
        %2333 = vmatprep.subr.bf16.mxu0 0
        %2334 = vmatpush1.bf16.msra.mxu0 %v1637
        %2335 = vmatprep.subr.bf16.mxu0 0
        %2336 = vmatpush1.bf16.msra.mxu0 %v1646
        %2337 = vmatprep.subr.bf16.mxu0 0
        %2338 = vmatpush1.bf16.msra.mxu0 %v1655
        %2339 = vmatprep.subr.bf16.mxu0 0
        %2340 = vmatpush1.bf16.msra.mxu0 %v1664
        %2341 = vmatprep.subr.bf16.mxu0 0
        %2342 = vmatpush1.bf16.msra.mxu0 %v1673
        %2343 = vmatprep.subr.bf16.mxu0 0
        %2344 = vmatpush1.bf16.msra.mxu0 %v1682
        %2345 = vmatprep.subr.bf16.mxu0 0
        %2346 = vmatpush1.bf16.msra.mxu0 %v1691
        %2347 = vmatprep.subr.bf16.mxu0 0
        %2348 = vmatpush1.bf16.msra.mxu0 %v1700
        %2349 = vmatprep.mubr.bf16.mxu0 %v643
        %2350 = vmatmul.mubr.bf16.gmra.mrb[0].mxu0 %v642
        %v2351 = vpop.f32.mrb[0].mxu0
        %v2352 = vadd.f32 0.0, %v2351
        %v2353 = vpop.f32.mrb[0].mxu0
        %v2354 = vpop.f32.mrb[0].mxu0
        %v2355 = vpop.f32.mrb[0].mxu0
        %2356 = vdwg.mxu0
        %2357 = vmatprep.subr.bf16.mxu0 0
        %2358 = vmatpush1.bf16.msra.mxu0 %v1709
        %2359 = vmatprep.subr.bf16.mxu0 0
        %2360 = vmatpush1.bf16.msra.mxu0 %v1718
        %2361 = vmatprep.subr.bf16.mxu0 0
        %2362 = vmatpush1.bf16.msra.mxu0 %v1727
        %2363 = vmatprep.subr.bf16.mxu0 0
        %2364 = vmatpush1.bf16.msra.mxu0 %v1736
        %2365 = vmatprep.subr.bf16.mxu0 0
        %2366 = vmatpush1.bf16.msra.mxu0 %v1745
        %2367 = vmatprep.subr.bf16.mxu0 0
        %2368 = vmatpush1.bf16.msra.mxu0 %v1754
        %2369 = vmatprep.subr.bf16.mxu0 0
        %2370 = vmatpush1.bf16.msra.mxu0 %v1763
        %2371 = vmatprep.subr.bf16.mxu0 0
        %2372 = vmatpush1.bf16.msra.mxu0 %v1772
        %2373 = vmatprep.subr.bf16.mxu0 0
        %2374 = vmatpush1.bf16.msra.mxu0 0
        %2375 = vmatprep.subr.bf16.mxu0 0
        %2376 = vmatpush1.bf16.msra.mxu0 0
        %2377 = vmatprep.subr.bf16.mxu0 0
        %2378 = vmatpush1.bf16.msra.mxu0 0
        %2379 = vmatprep.subr.bf16.mxu0 0
        %2380 = vmatpush1.bf16.msra.mxu0 0
        %2381 = vmatprep.subr.bf16.mxu0 0
        %2382 = vmatpush1.bf16.msra.mxu0 0
        %2383 = vmatprep.subr.bf16.mxu0 0
        %2384 = vmatpush1.bf16.msra.mxu0 0
        %2385 = vmatprep.subr.bf16.mxu0 0
        %2386 = vmatpush1.bf16.msra.mxu0 0
        %2387 = vmatprep.subr.bf16.mxu0 0
        %2388 = vmatpush1.bf16.msra.mxu0 0
        %2389 = vmatprep.mubr.bf16.mxu0 0
        %2390 = vmatmul.mubr.bf16.gmra.mrb[0].mxu0 %v644
        %v2391 = vpop.f32.mrb[0].mxu0
        %v2392 = vadd.f32 %v2352, %v2391
        %v2393 = vpop.f32.mrb[0].mxu0
        %v2394 = vpop.f32.mrb[0].mxu0
        %v2395 = vpop.f32.mrb[0].mxu0
        %2396 = vdwg.mxu0
        %v2397 = vmul.f32 %v2065, 0.05103104
        %v2398 = vmul.f32 %v2067, 0.05103104
        %v2399 = vmul.f32 %v2147, 0.05103104
        %v2400 = vpack.c.bf16 %v2397, %v2397
        %v2401 = vpack.c.bf16 %v2398, %v2398
        %v2402 = vpack.c.bf16 %v2399, %v2399
        %v2403 = vpack.c.bf16 %v2149, %v2149
        %v2404 = vpack.c.bf16 %v2229, %v2229
        %v2405 = vpack.c.bf16 %v2231, %v2231
        %v2406 = vpack.c.bf16 %v2311, %v2311
        %v2407 = vpack.c.bf16 %v2313, %v2313
        %v2408 = vpack.c.bf16 %v2392, %v2392
        %v2409 = vlaneseq
        %v2410 = vshrl.u32 %v2409, 7
        %v2411 = vlaneseq
        %v2412 = vand.u32 %v2411, 127
        %vm2413 = vcmp.ge.s32.totalorder %v2410, %v2412
        %vm2414 = vcmask 523264
        %v2416 = vsel %vm2414, %v2400, 0
        %v2419 = vsel %vm2414, %v2403, 0
        %2421 = vmatprep.subr.bf16.mxu0 0
        %2422 = vmatpush1.bf16.xpose.msra.mxu0 %v2419
        %2423 = vmatprep.subr.bf16.mxu0 0
        %2424 = vmatpush1.bf16.xpose.msra.mxu0 0
        %2425 = vmatprep.subr.bf16.mxu0 0
        %2426 = vmatpush1.bf16.xpose.msra.mxu0 0
        %2427 = vmatprep.subr.bf16.mxu0 0
        %2428 = vmatpush1.bf16.xpose.msra.mxu0 0
        %2429 = vmatprep.subr.bf16.mxu0 0
        %2430 = vmatpush1.bf16.xpose.msra.mxu0 0
        %2431 = vmatprep.subr.bf16.mxu0 0
        %2432 = vmatpush1.bf16.xpose.msra.mxu0 0
        %2433 = vmatprep.subr.bf16.mxu0 0
        %2434 = vmatpush1.bf16.xpose.msra.mxu0 0
        %2435 = vmatprep.subr.bf16.mxu0 0
        %2436 = vmatpush1.bf16.xpose.msra.mxu0 0
        %2437 = vmatprep.subr.bf16.mxu0 0
        %2438 = vmatpush1.bf16.xpose.msra.mxu0 0
        %2439 = vmatprep.subr.bf16.mxu0 0
        %2440 = vmatpush1.bf16.xpose.msra.mxu0 0
        %2441 = vmatprep.subr.bf16.mxu0 0
        %2442 = vmatpush1.bf16.xpose.msra.mxu0 0
        %2443 = vmatprep.subr.bf16.mxu0 0
        %2444 = vmatpush1.bf16.xpose.msra.mxu0 0
        %2445 = vmatprep.subr.bf16.mxu0 0
        %2446 = vmatpush1.bf16.xpose.msra.mxu0 0
        %2447 = vmatprep.subr.bf16.mxu0 0
        %2448 = vmatpush1.bf16.xpose.msra.mxu0 0
        %2449 = vmatprep.subr.bf16.mxu0 0
        %2450 = vmatpush1.bf16.xpose.msra.mxu0 0
        %2451 = vmatprep.subr.bf16.mxu0 0
        %2452 = vmatpush1.bf16.xpose.msra.mxu0 0
        %2453 = vmatprep.mubr.bf16.mxu0 0
        %2454 = vmatmul.mubr.bf16.gmra.mrb[0].mxu0 %v2416
        %v2455 = vpop.f32.mrb[0].mxu0
        %v2456 = vadd.f32 0.0, %v2455
        %v2457 = vpop.f32.mrb[0].mxu0
        %v2458 = vpop.f32.mrb[0].mxu0
        %v2459 = vpop.f32.mrb[0].mxu0
        %2460 = vdwg.mxu0
        %v2461 = vsel %vm2413, %v2456, -1e+30
        %vm2462 = vcmask 64512
        %v2463 = vsel %vm2462, %v2461, -inf
        %2464 = vmax.xlane.f32.xlu0 %v2463
        %v2465 = vpop.xlane.xlu0 %2464
        %v2466 = vsub.f32 %v2461, %v2465
        %v2467 = vmul.f32 %v2466, 1.442695
        %v2468 = vpow.pop %v2467
        %v2469 = vpack.c.bf16 %v2468, %v2468
        %v2471 = vsel %vm2462, %v2469, 0
        %vm2473 = vcmask 1043456
        %v2475 = vsel %vm2473, %v2406, 0
        %2477 = vmatprep.subr.bf16.mxu0 0
        %2478 = vmatpush1.bf16.msra.mxu0 %v2475
        %2479 = vmatprep.subr.bf16.mxu0 0
        %2480 = vmatpush1.bf16.msra.mxu0 0
        %2481 = vmatprep.subr.bf16.mxu0 0
        %2482 = vmatpush1.bf16.msra.mxu0 0
        %2483 = vmatprep.subr.bf16.mxu0 0
        %2484 = vmatpush1.bf16.msra.mxu0 0
        %2485 = vmatprep.subr.bf16.mxu0 0
        %2486 = vmatpush1.bf16.msra.mxu0 0
        %2487 = vmatprep.subr.bf16.mxu0 0
        %2488 = vmatpush1.bf16.msra.mxu0 0
        %2489 = vmatprep.subr.bf16.mxu0 0
        %2490 = vmatpush1.bf16.msra.mxu0 0
        %2491 = vmatprep.subr.bf16.mxu0 0
        %2492 = vmatpush1.bf16.msra.mxu0 0
        %2493 = vmatprep.subr.bf16.mxu0 0
        %2494 = vmatpush1.bf16.msra.mxu0 0
        %2495 = vmatprep.subr.bf16.mxu0 0
        %2496 = vmatpush1.bf16.msra.mxu0 0
        %2497 = vmatprep.subr.bf16.mxu0 0
        %2498 = vmatpush1.bf16.msra.mxu0 0
        %2499 = vmatprep.subr.bf16.mxu0 0
        %2500 = vmatpush1.bf16.msra.mxu0 0
        %2501 = vmatprep.subr.bf16.mxu0 0
        %2502 = vmatpush1.bf16.msra.mxu0 0
        %2503 = vmatprep.subr.bf16.mxu0 0
        %2504 = vmatpush1.bf16.msra.mxu0 0
        %2505 = vmatprep.subr.bf16.mxu0 0
        %2506 = vmatpush1.bf16.msra.mxu0 0
        %2507 = vmatprep.subr.bf16.mxu0 0
        %2508 = vmatpush1.bf16.msra.mxu0 0
        %2509 = vmatprep.mubr.bf16.mxu0 0
        %2510 = vmatmul.mubr.bf16.gmra.mrb[0].mxu0 %v2471
        %v2511 = vpop.f32.mrb[0].mxu0
        %v2512 = vadd.f32 0.0, %v2511
        %v2513 = vpop.f32.mrb[0].mxu0
        %v2514 = vpop.f32.mrb[0].mxu0
        %v2515 = vpop.f32.mrb[0].mxu0
        %2516 = vdwg.mxu0
        %v2517 = vsel %vm2462, %v2468, 0.0
        %2518 = vadd.xlane.f32.xlu0 %v2517
        %v2519 = vpop.xlane.xlu0 %2518
        %v2520 = vrcp.pop %v2519
        %v2521 = vmul.f32 %v2512, %v2520
        %v2522 = vpack.c.bf16 %v2521, %v2521
        %2524 = vrot.lane.b32.xlu0 %v2400, 64
        %v2525 = vpop.permute.xlu0 %2524
        %2527 = vrot.lane.b32.xlu0 %v2403, 64
        %v2528 = vpop.permute.xlu0 %2527
        %v2530 = vsel %vm2414, %v2525, 0
        %v2533 = vsel %vm2414, %v2528, 0
        %2535 = vmatprep.subr.bf16.mxu0 0
        %2536 = vmatpush1.bf16.xpose.msra.mxu0 %v2533
        %2537 = vmatprep.subr.bf16.mxu0 0
        %2538 = vmatpush1.bf16.xpose.msra.mxu0 0
        %2539 = vmatprep.subr.bf16.mxu0 0
        %2540 = vmatpush1.bf16.xpose.msra.mxu0 0
        %2541 = vmatprep.subr.bf16.mxu0 0
        %2542 = vmatpush1.bf16.xpose.msra.mxu0 0
        %2543 = vmatprep.subr.bf16.mxu0 0
        %2544 = vmatpush1.bf16.xpose.msra.mxu0 0
        %2545 = vmatprep.subr.bf16.mxu0 0
        %2546 = vmatpush1.bf16.xpose.msra.mxu0 0
        %2547 = vmatprep.subr.bf16.mxu0 0
        %2548 = vmatpush1.bf16.xpose.msra.mxu0 0
        %2549 = vmatprep.subr.bf16.mxu0 0
        %2550 = vmatpush1.bf16.xpose.msra.mxu0 0
        %2551 = vmatprep.subr.bf16.mxu0 0
        %2552 = vmatpush1.bf16.xpose.msra.mxu0 0
        %2553 = vmatprep.subr.bf16.mxu0 0
        %2554 = vmatpush1.bf16.xpose.msra.mxu0 0
        %2555 = vmatprep.subr.bf16.mxu0 0
        %2556 = vmatpush1.bf16.xpose.msra.mxu0 0
        %2557 = vmatprep.subr.bf16.mxu0 0
        %2558 = vmatpush1.bf16.xpose.msra.mxu0 0
        %2559 = vmatprep.subr.bf16.mxu0 0
        %2560 = vmatpush1.bf16.xpose.msra.mxu0 0
        %2561 = vmatprep.subr.bf16.mxu0 0
        %2562 = vmatpush1.bf16.xpose.msra.mxu0 0
        %2563 = vmatprep.subr.bf16.mxu0 0
        %2564 = vmatpush1.bf16.xpose.msra.mxu0 0
        %2565 = vmatprep.subr.bf16.mxu0 0
        %2566 = vmatpush1.bf16.xpose.msra.mxu0 0
        %2567 = vmatprep.mubr.bf16.mxu0 0
        %2568 = vmatmul.mubr.bf16.gmra.mrb[0].mxu0 %v2530
        %v2569 = vpop.f32.mrb[0].mxu0
        %v2570 = vadd.f32 0.0, %v2569
        %v2571 = vpop.f32.mrb[0].mxu0
        %v2572 = vpop.f32.mrb[0].mxu0
        %v2573 = vpop.f32.mrb[0].mxu0
        %2574 = vdwg.mxu0
        %v2575 = vsel %vm2413, %v2570, -1e+30
        %v2576 = vsel %vm2462, %v2575, -inf
        %2577 = vmax.xlane.f32.xlu0 %v2576
        %v2578 = vpop.xlane.xlu0 %2577
        %v2579 = vsub.f32 %v2575, %v2578
        %v2580 = vmul.f32 %v2579, 1.442695
        %v2581 = vpow.pop %v2580
        %v2582 = vpack.c.bf16 %v2581, %v2581
        %2584 = vrot.lane.b32.xlu0 %v2406, 64
        %v2585 = vpop.permute.xlu0 %2584
        %v2587 = vsel %vm2462, %v2582, 0
        %v2590 = vsel %vm2473, %v2585, 0
        %2592 = vmatprep.subr.bf16.mxu0 0
        %2593 = vmatpush1.bf16.msra.mxu0 %v2590
        %2594 = vmatprep.subr.bf16.mxu0 0
        %2595 = vmatpush1.bf16.msra.mxu0 0
        %2596 = vmatprep.subr.bf16.mxu0 0
        %2597 = vmatpush1.bf16.msra.mxu0 0
        %2598 = vmatprep.subr.bf16.mxu0 0
        %2599 = vmatpush1.bf16.msra.mxu0 0
        %2600 = vmatprep.subr.bf16.mxu0 0
        %2601 = vmatpush1.bf16.msra.mxu0 0
        %2602 = vmatprep.subr.bf16.mxu0 0
        %2603 = vmatpush1.bf16.msra.mxu0 0
        %2604 = vmatprep.subr.bf16.mxu0 0
        %2605 = vmatpush1.bf16.msra.mxu0 0
        %2606 = vmatprep.subr.bf16.mxu0 0
        %2607 = vmatpush1.bf16.msra.mxu0 0
        %2608 = vmatprep.subr.bf16.mxu0 0
        %2609 = vmatpush1.bf16.msra.mxu0 0
        %2610 = vmatprep.subr.bf16.mxu0 0
        %2611 = vmatpush1.bf16.msra.mxu0 0
        %2612 = vmatprep.subr.bf16.mxu0 0
        %2613 = vmatpush1.bf16.msra.mxu0 0
        %2614 = vmatprep.subr.bf16.mxu0 0
        %2615 = vmatpush1.bf16.msra.mxu0 0
        %2616 = vmatprep.subr.bf16.mxu0 0
        %2617 = vmatpush1.bf16.msra.mxu0 0
        %2618 = vmatprep.subr.bf16.mxu0 0
        %2619 = vmatpush1.bf16.msra.mxu0 0
        %2620 = vmatprep.subr.bf16.mxu0 0
        %2621 = vmatpush1.bf16.msra.mxu0 0
        %2622 = vmatprep.subr.bf16.mxu0 0
        %2623 = vmatpush1.bf16.msra.mxu0 0
        %2624 = vmatprep.mubr.bf16.mxu0 0
        %2625 = vmatmul.mubr.bf16.gmra.mrb[0].mxu0 %v2587
        %v2626 = vpop.f32.mrb[0].mxu0
        %v2627 = vadd.f32 0.0, %v2626
        %v2628 = vpop.f32.mrb[0].mxu0
        %v2629 = vpop.f32.mrb[0].mxu0
        %v2630 = vpop.f32.mrb[0].mxu0
        %2631 = vdwg.mxu0
        %v2632 = vsel %vm2462, %v2581, 0.0
        %2633 = vadd.xlane.f32.xlu0 %v2632
        %v2634 = vpop.xlane.xlu0 %2633
        %v2635 = vrcp.pop %v2634
        %v2636 = vmul.f32 %v2627, %v2635
        %v2637 = vpack.c.bf16 %v2636, %v2636
        %v2639 = vsel %vm2414, %v2401, 0
        %v2642 = vsel %vm2414, %v2404, 0
        %2644 = vmatprep.subr.bf16.mxu0 0
        %2645 = vmatpush1.bf16.xpose.msra.mxu0 %v2642
        %2646 = vmatprep.subr.bf16.mxu0 0
        %2647 = vmatpush1.bf16.xpose.msra.mxu0 0
        %2648 = vmatprep.subr.bf16.mxu0 0
        %2649 = vmatpush1.bf16.xpose.msra.mxu0 0
        %2650 = vmatprep.subr.bf16.mxu0 0
        %2651 = vmatpush1.bf16.xpose.msra.mxu0 0
        %2652 = vmatprep.subr.bf16.mxu0 0
        %2653 = vmatpush1.bf16.xpose.msra.mxu0 0
        %2654 = vmatprep.subr.bf16.mxu0 0
        %2655 = vmatpush1.bf16.xpose.msra.mxu0 0
        %2656 = vmatprep.subr.bf16.mxu0 0
        %2657 = vmatpush1.bf16.xpose.msra.mxu0 0
        %2658 = vmatprep.subr.bf16.mxu0 0
        %2659 = vmatpush1.bf16.xpose.msra.mxu0 0
        %2660 = vmatprep.subr.bf16.mxu0 0
        %2661 = vmatpush1.bf16.xpose.msra.mxu0 0
        %2662 = vmatprep.subr.bf16.mxu0 0
        %2663 = vmatpush1.bf16.xpose.msra.mxu0 0
        %2664 = vmatprep.subr.bf16.mxu0 0
        %2665 = vmatpush1.bf16.xpose.msra.mxu0 0
        %2666 = vmatprep.subr.bf16.mxu0 0
        %2667 = vmatpush1.bf16.xpose.msra.mxu0 0
        %2668 = vmatprep.subr.bf16.mxu0 0
        %2669 = vmatpush1.bf16.xpose.msra.mxu0 0
        %2670 = vmatprep.subr.bf16.mxu0 0
        %2671 = vmatpush1.bf16.xpose.msra.mxu0 0
        %2672 = vmatprep.subr.bf16.mxu0 0
        %2673 = vmatpush1.bf16.xpose.msra.mxu0 0
        %2674 = vmatprep.subr.bf16.mxu0 0
        %2675 = vmatpush1.bf16.xpose.msra.mxu0 0
        %2676 = vmatprep.mubr.bf16.mxu0 0
        %2677 = vmatmul.mubr.bf16.gmra.mrb[0].mxu0 %v2639
        %v2678 = vpop.f32.mrb[0].mxu0
        %v2679 = vadd.f32 0.0, %v2678
        %v2680 = vpop.f32.mrb[0].mxu0
        %v2681 = vpop.f32.mrb[0].mxu0
        %v2682 = vpop.f32.mrb[0].mxu0
        %2683 = vdwg.mxu0
        %v2684 = vsel %vm2413, %v2679, -1e+30
        %v2685 = vsel %vm2462, %v2684, -inf
        %2686 = vmax.xlane.f32.xlu0 %v2685
        %v2687 = vpop.xlane.xlu0 %2686
        %v2688 = vsub.f32 %v2684, %v2687
        %v2689 = vmul.f32 %v2688, 1.442695
        %v2690 = vpow.pop %v2689
        %v2691 = vpack.c.bf16 %v2690, %v2690
        %v2693 = vsel %vm2462, %v2691, 0
        %v2696 = vsel %vm2473, %v2407, 0
        %2698 = vmatprep.subr.bf16.mxu0 0
        %2699 = vmatpush1.bf16.msra.mxu0 %v2696
        %2700 = vmatprep.subr.bf16.mxu0 0
        %2701 = vmatpush1.bf16.msra.mxu0 0
        %2702 = vmatprep.subr.bf16.mxu0 0
        %2703 = vmatpush1.bf16.msra.mxu0 0
        %2704 = vmatprep.subr.bf16.mxu0 0
        %2705 = vmatpush1.bf16.msra.mxu0 0
        %2706 = vmatprep.subr.bf16.mxu0 0
        %2707 = vmatpush1.bf16.msra.mxu0 0
        %2708 = vmatprep.subr.bf16.mxu0 0
        %2709 = vmatpush1.bf16.msra.mxu0 0
        %2710 = vmatprep.subr.bf16.mxu0 0
        %2711 = vmatpush1.bf16.msra.mxu0 0
        %2712 = vmatprep.subr.bf16.mxu0 0
        %2713 = vmatpush1.bf16.msra.mxu0 0
        %2714 = vmatprep.subr.bf16.mxu0 0
        %2715 = vmatpush1.bf16.msra.mxu0 0
        %2716 = vmatprep.subr.bf16.mxu0 0
        %2717 = vmatpush1.bf16.msra.mxu0 0
        %2718 = vmatprep.subr.bf16.mxu0 0
        %2719 = vmatpush1.bf16.msra.mxu0 0
        %2720 = vmatprep.subr.bf16.mxu0 0
        %2721 = vmatpush1.bf16.msra.mxu0 0
        %2722 = vmatprep.subr.bf16.mxu0 0
        %2723 = vmatpush1.bf16.msra.mxu0 0
        %2724 = vmatprep.subr.bf16.mxu0 0
        %2725 = vmatpush1.bf16.msra.mxu0 0
        %2726 = vmatprep.subr.bf16.mxu0 0
        %2727 = vmatpush1.bf16.msra.mxu0 0
        %2728 = vmatprep.subr.bf16.mxu0 0
        %2729 = vmatpush1.bf16.msra.mxu0 0
        %2730 = vmatprep.mubr.bf16.mxu0 0
        %2731 = vmatmul.mubr.bf16.gmra.mrb[0].mxu0 %v2693
        %v2732 = vpop.f32.mrb[0].mxu0
        %v2733 = vadd.f32 0.0, %v2732
        %v2734 = vpop.f32.mrb[0].mxu0
        %v2735 = vpop.f32.mrb[0].mxu0
        %v2736 = vpop.f32.mrb[0].mxu0
        %2737 = vdwg.mxu0
        %v2738 = vsel %vm2462, %v2690, 0.0
        %2739 = vadd.xlane.f32.xlu0 %v2738
        %v2740 = vpop.xlane.xlu0 %2739
        %v2741 = vrcp.pop %v2740
        %v2742 = vmul.f32 %v2733, %v2741
        %v2743 = vpack.c.bf16 %v2742, %v2742
        %2745 = vrot.lane.b32.xlu0 %v2401, 64
        %v2746 = vpop.permute.xlu0 %2745
        %2748 = vrot.lane.b32.xlu0 %v2404, 64
        %v2749 = vpop.permute.xlu0 %2748
        %v2751 = vsel %vm2414, %v2746, 0
        %v2754 = vsel %vm2414, %v2749, 0
        %2756 = vmatprep.subr.bf16.mxu0 0
        %2757 = vmatpush1.bf16.xpose.msra.mxu0 %v2754
        %2758 = vmatprep.subr.bf16.mxu0 0
        %2759 = vmatpush1.bf16.xpose.msra.mxu0 0
        %2760 = vmatprep.subr.bf16.mxu0 0
        %2761 = vmatpush1.bf16.xpose.msra.mxu0 0
        %2762 = vmatprep.subr.bf16.mxu0 0
        %2763 = vmatpush1.bf16.xpose.msra.mxu0 0
        %2764 = vmatprep.subr.bf16.mxu0 0
        %2765 = vmatpush1.bf16.xpose.msra.mxu0 0
        %2766 = vmatprep.subr.bf16.mxu0 0
        %2767 = vmatpush1.bf16.xpose.msra.mxu0 0
        %2768 = vmatprep.subr.bf16.mxu0 0
        %2769 = vmatpush1.bf16.xpose.msra.mxu0 0
        %2770 = vmatprep.subr.bf16.mxu0 0
        %2771 = vmatpush1.bf16.xpose.msra.mxu0 0
        %2772 = vmatprep.subr.bf16.mxu0 0
        %2773 = vmatpush1.bf16.xpose.msra.mxu0 0
        %2774 = vmatprep.subr.bf16.mxu0 0
        %2775 = vmatpush1.bf16.xpose.msra.mxu0 0
        %2776 = vmatprep.subr.bf16.mxu0 0
        %2777 = vmatpush1.bf16.xpose.msra.mxu0 0
        %2778 = vmatprep.subr.bf16.mxu0 0
        %2779 = vmatpush1.bf16.xpose.msra.mxu0 0
        %2780 = vmatprep.subr.bf16.mxu0 0
        %2781 = vmatpush1.bf16.xpose.msra.mxu0 0
        %2782 = vmatprep.subr.bf16.mxu0 0
        %2783 = vmatpush1.bf16.xpose.msra.mxu0 0
        %2784 = vmatprep.subr.bf16.mxu0 0
        %2785 = vmatpush1.bf16.xpose.msra.mxu0 0
        %2786 = vmatprep.subr.bf16.mxu0 0
        %2787 = vmatpush1.bf16.xpose.msra.mxu0 0
        %2788 = vmatprep.mubr.bf16.mxu0 0
        %2789 = vmatmul.mubr.bf16.gmra.mrb[0].mxu0 %v2751
        %v2790 = vpop.f32.mrb[0].mxu0
        %v2791 = vadd.f32 0.0, %v2790
        %v2792 = vpop.f32.mrb[0].mxu0
        %v2793 = vpop.f32.mrb[0].mxu0
        %v2794 = vpop.f32.mrb[0].mxu0
        %2795 = vdwg.mxu0
        %v2796 = vsel %vm2413, %v2791, -1e+30
        %v2797 = vsel %vm2462, %v2796, -inf
        %2798 = vmax.xlane.f32.xlu0 %v2797
        %v2799 = vpop.xlane.xlu0 %2798
        %v2800 = vsub.f32 %v2796, %v2799
        %v2801 = vmul.f32 %v2800, 1.442695
        %v2802 = vpow.pop %v2801
        %v2803 = vpack.c.bf16 %v2802, %v2802
        %2805 = vrot.lane.b32.xlu0 %v2407, 64
        %v2806 = vpop.permute.xlu0 %2805
        %v2808 = vsel %vm2462, %v2803, 0
        %v2811 = vsel %vm2473, %v2806, 0
        %2813 = vmatprep.subr.bf16.mxu0 0
        %2814 = vmatpush1.bf16.msra.mxu0 %v2811
        %2815 = vmatprep.subr.bf16.mxu0 0
        %2816 = vmatpush1.bf16.msra.mxu0 0
        %2817 = vmatprep.subr.bf16.mxu0 0
        %2818 = vmatpush1.bf16.msra.mxu0 0
        %2819 = vmatprep.subr.bf16.mxu0 0
        %2820 = vmatpush1.bf16.msra.mxu0 0
        %2821 = vmatprep.subr.bf16.mxu0 0
        %2822 = vmatpush1.bf16.msra.mxu0 0
        %2823 = vmatprep.subr.bf16.mxu0 0
        %2824 = vmatpush1.bf16.msra.mxu0 0
        %2825 = vmatprep.subr.bf16.mxu0 0
        %2826 = vmatpush1.bf16.msra.mxu0 0
        %2827 = vmatprep.subr.bf16.mxu0 0
        %2828 = vmatpush1.bf16.msra.mxu0 0
        %2829 = vmatprep.subr.bf16.mxu0 0
        %2830 = vmatpush1.bf16.msra.mxu0 0
        %2831 = vmatprep.subr.bf16.mxu0 0
        %2832 = vmatpush1.bf16.msra.mxu0 0
        %2833 = vmatprep.subr.bf16.mxu0 0
        %2834 = vmatpush1.bf16.msra.mxu0 0
        %2835 = vmatprep.subr.bf16.mxu0 0
        %2836 = vmatpush1.bf16.msra.mxu0 0
        %2837 = vmatprep.subr.bf16.mxu0 0
        %2838 = vmatpush1.bf16.msra.mxu0 0
        %2839 = vmatprep.subr.bf16.mxu0 0
        %2840 = vmatpush1.bf16.msra.mxu0 0
        %2841 = vmatprep.subr.bf16.mxu0 0
        %2842 = vmatpush1.bf16.msra.mxu0 0
        %2843 = vmatprep.subr.bf16.mxu0 0
        %2844 = vmatpush1.bf16.msra.mxu0 0
        %2845 = vmatprep.mubr.bf16.mxu0 0
        %2846 = vmatmul.mubr.bf16.gmra.mrb[0].mxu0 %v2808
        %v2847 = vpop.f32.mrb[0].mxu0
        %v2848 = vadd.f32 0.0, %v2847
        %v2849 = vpop.f32.mrb[0].mxu0
        %v2850 = vpop.f32.mrb[0].mxu0
        %v2851 = vpop.f32.mrb[0].mxu0
        %2852 = vdwg.mxu0
        %v2853 = vsel %vm2462, %v2802, 0.0
        %2854 = vadd.xlane.f32.xlu0 %v2853
        %v2855 = vpop.xlane.xlu0 %2854
        %v2856 = vrcp.pop %v2855
        %v2857 = vmul.f32 %v2848, %v2856
        %v2858 = vpack.c.bf16 %v2857, %v2857
        %v2860 = vsel %vm2414, %v2402, 0
        %v2863 = vsel %vm2414, %v2405, 0
        %2865 = vmatprep.subr.bf16.mxu0 0
        %2866 = vmatpush1.bf16.xpose.msra.mxu0 %v2863
        %2867 = vmatprep.subr.bf16.mxu0 0
        %2868 = vmatpush1.bf16.xpose.msra.mxu0 0
        %2869 = vmatprep.subr.bf16.mxu0 0
        %2870 = vmatpush1.bf16.xpose.msra.mxu0 0
        %2871 = vmatprep.subr.bf16.mxu0 0
        %2872 = vmatpush1.bf16.xpose.msra.mxu0 0
        %2873 = vmatprep.subr.bf16.mxu0 0
        %2874 = vmatpush1.bf16.xpose.msra.mxu0 0
        %2875 = vmatprep.subr.bf16.mxu0 0
        %2876 = vmatpush1.bf16.xpose.msra.mxu0 0
        %2877 = vmatprep.subr.bf16.mxu0 0
        %2878 = vmatpush1.bf16.xpose.msra.mxu0 0
        %2879 = vmatprep.subr.bf16.mxu0 0
        %2880 = vmatpush1.bf16.xpose.msra.mxu0 0
        %2881 = vmatprep.subr.bf16.mxu0 0
        %2882 = vmatpush1.bf16.xpose.msra.mxu0 0
        %2883 = vmatprep.subr.bf16.mxu0 0
        %2884 = vmatpush1.bf16.xpose.msra.mxu0 0
        %2885 = vmatprep.subr.bf16.mxu0 0
        %2886 = vmatpush1.bf16.xpose.msra.mxu0 0
        %2887 = vmatprep.subr.bf16.mxu0 0
        %2888 = vmatpush1.bf16.xpose.msra.mxu0 0
        %2889 = vmatprep.subr.bf16.mxu0 0
        %2890 = vmatpush1.bf16.xpose.msra.mxu0 0
        %2891 = vmatprep.subr.bf16.mxu0 0
        %2892 = vmatpush1.bf16.xpose.msra.mxu0 0
        %2893 = vmatprep.subr.bf16.mxu0 0
        %2894 = vmatpush1.bf16.xpose.msra.mxu0 0
        %2895 = vmatprep.subr.bf16.mxu0 0
        %2896 = vmatpush1.bf16.xpose.msra.mxu0 0
        %2897 = vmatprep.mubr.bf16.mxu0 0
        %2898 = vmatmul.mubr.bf16.gmra.mrb[0].mxu0 %v2860
        %v2899 = vpop.f32.mrb[0].mxu0
        %v2900 = vadd.f32 0.0, %v2899
        %v2901 = vpop.f32.mrb[0].mxu0
        %v2902 = vpop.f32.mrb[0].mxu0
        %v2903 = vpop.f32.mrb[0].mxu0
        %2904 = vdwg.mxu0
        %v2905 = vsel %vm2413, %v2900, -1e+30
        %v2906 = vsel %vm2462, %v2905, -inf
        %2907 = vmax.xlane.f32.xlu0 %v2906
        %v2908 = vpop.xlane.xlu0 %2907
        %v2909 = vsub.f32 %v2905, %v2908
        %v2910 = vmul.f32 %v2909, 1.442695
        %v2911 = vpow.pop %v2910
        %v2912 = vpack.c.bf16 %v2911, %v2911
        %v2914 = vsel %vm2462, %v2912, 0
        %v2917 = vsel %vm2473, %v2408, 0
        %2919 = vmatprep.subr.bf16.mxu0 0
        %2920 = vmatpush1.bf16.msra.mxu0 %v2917
        %2921 = vmatprep.subr.bf16.mxu0 0
        %2922 = vmatpush1.bf16.msra.mxu0 0
        %2923 = vmatprep.subr.bf16.mxu0 0
        %2924 = vmatpush1.bf16.msra.mxu0 0
        %2925 = vmatprep.subr.bf16.mxu0 0
        %2926 = vmatpush1.bf16.msra.mxu0 0
        %2927 = vmatprep.subr.bf16.mxu0 0
        %2928 = vmatpush1.bf16.msra.mxu0 0
        %2929 = vmatprep.subr.bf16.mxu0 0
        %2930 = vmatpush1.bf16.msra.mxu0 0
        %2931 = vmatprep.subr.bf16.mxu0 0
        %2932 = vmatpush1.bf16.msra.mxu0 0
        %2933 = vmatprep.subr.bf16.mxu0 0
        %2934 = vmatpush1.bf16.msra.mxu0 0
        %2935 = vmatprep.subr.bf16.mxu0 0
        %2936 = vmatpush1.bf16.msra.mxu0 0
        %2937 = vmatprep.subr.bf16.mxu0 0
        %2938 = vmatpush1.bf16.msra.mxu0 0
        %2939 = vmatprep.subr.bf16.mxu0 0
        %2940 = vmatpush1.bf16.msra.mxu0 0
        %2941 = vmatprep.subr.bf16.mxu0 0
        %2942 = vmatpush1.bf16.msra.mxu0 0
        %2943 = vmatprep.subr.bf16.mxu0 0
        %2944 = vmatpush1.bf16.msra.mxu0 0
        %2945 = vmatprep.subr.bf16.mxu0 0
        %2946 = vmatpush1.bf16.msra.mxu0 0
        %2947 = vmatprep.subr.bf16.mxu0 0
        %2948 = vmatpush1.bf16.msra.mxu0 0
        %2949 = vmatprep.subr.bf16.mxu0 0
        %2950 = vmatpush1.bf16.msra.mxu0 0
        %2951 = vmatprep.mubr.bf16.mxu0 0
        %2952 = vmatmul.mubr.bf16.gmra.mrb[0].mxu0 %v2914
        %v2953 = vpop.f32.mrb[0].mxu0
        %v2954 = vadd.f32 0.0, %v2953
        %v2955 = vpop.f32.mrb[0].mxu0
        %v2956 = vpop.f32.mrb[0].mxu0
        %v2957 = vpop.f32.mrb[0].mxu0
        %2958 = vdwg.mxu0
        %v2959 = vsel %vm2462, %v2911, 0.0
        %2960 = vadd.xlane.f32.xlu0 %v2959
        %v2961 = vpop.xlane.xlu0 %2960
        %v2962 = vrcp.pop %v2961
        %v2963 = vmul.f32 %v2954, %v2962
        %v2964 = vpack.c.bf16 %v2963, %v2963
        %2966 = vrot.lane.b32.xlu0 %v2402, 64
        %v2967 = vpop.permute.xlu0 %2966
        %2969 = vrot.lane.b32.xlu0 %v2405, 64
        %v2970 = vpop.permute.xlu0 %2969
        %v2972 = vsel %vm2414, %v2967, 0
        %v2975 = vsel %vm2414, %v2970, 0
        %2977 = vmatprep.subr.bf16.mxu0 0
        %2978 = vmatpush1.bf16.xpose.msra.mxu0 %v2975
        %2979 = vmatprep.subr.bf16.mxu0 0
        %2980 = vmatpush1.bf16.xpose.msra.mxu0 0
        %2981 = vmatprep.subr.bf16.mxu0 0
        %2982 = vmatpush1.bf16.xpose.msra.mxu0 0
        %2983 = vmatprep.subr.bf16.mxu0 0
        %2984 = vmatpush1.bf16.xpose.msra.mxu0 0
        %2985 = vmatprep.subr.bf16.mxu0 0
        %2986 = vmatpush1.bf16.xpose.msra.mxu0 0
        %2987 = vmatprep.subr.bf16.mxu0 0
        %2988 = vmatpush1.bf16.xpose.msra.mxu0 0
        %2989 = vmatprep.subr.bf16.mxu0 0
        %2990 = vmatpush1.bf16.xpose.msra.mxu0 0
        %2991 = vmatprep.subr.bf16.mxu0 0
        %2992 = vmatpush1.bf16.xpose.msra.mxu0 0
        %2993 = vmatprep.subr.bf16.mxu0 0
        %2994 = vmatpush1.bf16.xpose.msra.mxu0 0
        %2995 = vmatprep.subr.bf16.mxu0 0
        %2996 = vmatpush1.bf16.xpose.msra.mxu0 0
        %2997 = vmatprep.subr.bf16.mxu0 0
        %2998 = vmatpush1.bf16.xpose.msra.mxu0 0
        %2999 = vmatprep.subr.bf16.mxu0 0
        %3000 = vmatpush1.bf16.xpose.msra.mxu0 0
        %3001 = vmatprep.subr.bf16.mxu0 0
        %3002 = vmatpush1.bf16.xpose.msra.mxu0 0
        %3003 = vmatprep.subr.bf16.mxu0 0
        %3004 = vmatpush1.bf16.xpose.msra.mxu0 0
        %3005 = vmatprep.subr.bf16.mxu0 0
        %3006 = vmatpush1.bf16.xpose.msra.mxu0 0
        %3007 = vmatprep.subr.bf16.mxu0 0
        %3008 = vmatpush1.bf16.xpose.msra.mxu0 0
        %3009 = vmatprep.mubr.bf16.mxu0 0
        %3010 = vmatmul.mubr.bf16.gmra.mrb[0].mxu0 %v2972
        %v3011 = vpop.f32.mrb[0].mxu0
        %v3012 = vadd.f32 0.0, %v3011
        %v3013 = vpop.f32.mrb[0].mxu0
        %v3014 = vpop.f32.mrb[0].mxu0
        %v3015 = vpop.f32.mrb[0].mxu0
        %3016 = vdwg.mxu0
        %v3017 = vsel %vm2413, %v3012, -1e+30
        %v3018 = vsel %vm2462, %v3017, -inf
        %3019 = vmax.xlane.f32.xlu0 %v3018
        %v3020 = vpop.xlane.xlu0 %3019
        %v3021 = vsub.f32 %v3017, %v3020
        %v3022 = vmul.f32 %v3021, 1.442695
        %v3023 = vpow.pop %v3022
        %v3024 = vpack.c.bf16 %v3023, %v3023
        %3026 = vrot.lane.b32.xlu0 %v2408, 64
        %v3027 = vpop.permute.xlu0 %3026
        %v3029 = vsel %vm2462, %v3024, 0
        %v3032 = vsel %vm2473, %v3027, 0
        %3034 = vmatprep.subr.bf16.mxu0 0
        %3035 = vmatpush1.bf16.msra.mxu0 %v3032
        %3036 = vmatprep.subr.bf16.mxu0 0
        %3037 = vmatpush1.bf16.msra.mxu0 0
        %3038 = vmatprep.subr.bf16.mxu0 0
        %3039 = vmatpush1.bf16.msra.mxu0 0
        %3040 = vmatprep.subr.bf16.mxu0 0
        %3041 = vmatpush1.bf16.msra.mxu0 0
        %3042 = vmatprep.subr.bf16.mxu0 0
        %3043 = vmatpush1.bf16.msra.mxu0 0
        %3044 = vmatprep.subr.bf16.mxu0 0
        %3045 = vmatpush1.bf16.msra.mxu0 0
        %3046 = vmatprep.subr.bf16.mxu0 0
        %3047 = vmatpush1.bf16.msra.mxu0 0
        %3048 = vmatprep.subr.bf16.mxu0 0
        %3049 = vmatpush1.bf16.msra.mxu0 0
        %3050 = vmatprep.subr.bf16.mxu0 0
        %3051 = vmatpush1.bf16.msra.mxu0 0
        %3052 = vmatprep.subr.bf16.mxu0 0
        %3053 = vmatpush1.bf16.msra.mxu0 0
        %3054 = vmatprep.subr.bf16.mxu0 0
        %3055 = vmatpush1.bf16.msra.mxu0 0
        %3056 = vmatprep.subr.bf16.mxu0 0
        %3057 = vmatpush1.bf16.msra.mxu0 0
        %3058 = vmatprep.subr.bf16.mxu0 0
        %3059 = vmatpush1.bf16.msra.mxu0 0
        %3060 = vmatprep.subr.bf16.mxu0 0
        %3061 = vmatpush1.bf16.msra.mxu0 0
        %3062 = vmatprep.subr.bf16.mxu0 0
        %3063 = vmatpush1.bf16.msra.mxu0 0
        %3064 = vmatprep.subr.bf16.mxu0 0
        %3065 = vmatpush1.bf16.msra.mxu0 0
        %3066 = vmatprep.mubr.bf16.mxu0 0
        %3067 = vmatmul.mubr.bf16.gmra.mrb[0].mxu0 %v3029
        %v3068 = vpop.f32.mrb[0].mxu0
        %v3069 = vadd.f32 0.0, %v3068
        %v3070 = vpop.f32.mrb[0].mxu0
        %v3071 = vpop.f32.mrb[0].mxu0
        %v3072 = vpop.f32.mrb[0].mxu0
        %3073 = vdwg.mxu0
        %v3074 = vsel %vm2462, %v3023, 0.0
        %3075 = vadd.xlane.f32.xlu0 %v3074
        %v3076 = vpop.xlane.xlu0 %3075
        %v3077 = vrcp.pop %v3076
        %v3078 = vmul.f32 %v3069, %v3077
        %v3079 = vpack.c.bf16 %v3078, %v3078
        %3081 = vrot.lane.b32.xlu0 %v2637, 64
        %v3082 = vpop.permute.xlu0 %3081
        %3084 = vrot.lane.b32.xlu0 %v2858, 64
        %v3085 = vpop.permute.xlu0 %3084
        %3087 = vrot.lane.b32.xlu0 %v3079, 64
        %v3088 = vpop.permute.xlu0 %3087
        %v3091 = vsel %vm2414, %v2522, %v3082
        %v3095 = vsel %vm2414, %v2743, %v3085
        %v3099 = vsel %vm2414, %v2964, %v3088
        %v3101 = vld [vmem:[#allocation10] sm:$0xff]
        %v3102 = vld [vmem:[#allocation10 + $0x8] sm:$0xf]
        %v3103 = vld [vmem:[#allocation10 + $0xc] sm:$0xff]
        %v3104 = vld [vmem:[#allocation10 + $0x14] sm:$0xf]
        %v3105 = vld [vmem:[#allocation10 + $0x18] sm:$0xff]
        %v3106 = vld [vmem:[#allocation10 + $0x20] sm:$0xf]
        %v3107 = vld [vmem:[#allocation10 + $0x24] sm:$0xff]
        %v3108 = vld [vmem:[#allocation10 + $0x2c] sm:$0xf]
        %v3109 = vld [vmem:[#allocation10 + $0x30] sm:$0xff]
        %v3110 = vld [vmem:[#allocation10 + $0x38] sm:$0xf]
        %v3111 = vld [vmem:[#allocation10 + $0x3c] sm:$0xff]
        %v3112 = vld [vmem:[#allocation10 + $0x44] sm:$0xf]
        %v3113 = vld [vmem:[#allocation10 + $0x48] sm:$0xff]
        %v3114 = vld [vmem:[#allocation10 + $0x50] sm:$0xf]
        %v3115 = vld [vmem:[#allocation10 + $0x54] sm:$0xff]
        %v3116 = vld [vmem:[#allocation10 + $0x5c] sm:$0xf]
        %v3117 = vld [vmem:[#allocation10 + $0x60] sm:$0xff]
        %v3118 = vld [vmem:[#allocation10 + $0x68] sm:$0xf]
        %v3119 = vld [vmem:[#allocation10 + $0x6c] sm:$0xff]
        %v3120 = vld [vmem:[#allocation10 + $0x74] sm:$0xf]
        %v3121 = vld [vmem:[#allocation10 + $0x78] sm:$0xff]
        %v3122 = vld [vmem:[#allocation10 + $0x80] sm:$0xf]
        %v3123 = vld [vmem:[#allocation10 + $0x84] sm:$0xff]
        %v3124 = vld [vmem:[#allocation10 + $0x8c] sm:$0xf]
        %v3125 = vld [vmem:[#allocation10 + $0x90] sm:$0xff]
        %v3126 = vld [vmem:[#allocation10 + $0x98] sm:$0xf]
        %v3127 = vld [vmem:[#allocation10 + $0x9c] sm:$0xff]
        %v3128 = vld [vmem:[#allocation10 + $0xa4] sm:$0xf]
        %v3129 = vld [vmem:[#allocation10 + $0xa8] sm:$0xff]
        %v3130 = vld [vmem:[#allocation10 + $0xb0] sm:$0xf]
        %v3131 = vld [vmem:[#allocation10 + $0xb4] sm:$0xff]
        %v3132 = vld [vmem:[#allocation10 + $0xbc] sm:$0xf]
        %v3133 = vld [vmem:[#allocation10 + $0xc0] sm:$0xff]
        %v3134 = vld [vmem:[#allocation10 + $0xc8] sm:$0xf]
        %v3135 = vld [vmem:[#allocation10 + $0xcc] sm:$0xff]
        %v3136 = vld [vmem:[#allocation10 + $0xd4] sm:$0xf]
        %v3137 = vld [vmem:[#allocation10 + $0xd8] sm:$0xff]
        %v3138 = vld [vmem:[#allocation10 + $0xe0] sm:$0xf]
        %v3139 = vld [vmem:[#allocation10 + $0xe4] sm:$0xff]
        %v3140 = vld [vmem:[#allocation10 + $0xec] sm:$0xf]
        %v3141 = vld [vmem:[#allocation10 + $0xf0] sm:$0xff]
        %v3142 = vld [vmem:[#allocation10 + $0xf8] sm:$0xf]
        %v3143 = vld [vmem:[#allocation10 + $0xfc] sm:$0xff]
        %v3144 = vld [vmem:[#allocation10 + $0x104] sm:$0xf]
        %v3145 = vld [vmem:[#allocation10 + $0x108] sm:$0xff]
        %v3146 = vld [vmem:[#allocation10 + $0x110] sm:$0xf]
        %v3147 = vld [vmem:[#allocation10 + $0x114] sm:$0xff]
        %v3148 = vld [vmem:[#allocation10 + $0x11c] sm:$0xf]
        %v3149 = vld [vmem:[#allocation10 + $0x120] sm:$0xff]
        %v3150 = vld [vmem:[#allocation10 + $0x128] sm:$0xf]
        %v3151 = vld [vmem:[#allocation10 + $0x12c] sm:$0xff]
        %v3152 = vld [vmem:[#allocation10 + $0x134] sm:$0xf]
        %v3153 = vld [vmem:[#allocation10 + $0x138] sm:$0xff]
        %v3154 = vld [vmem:[#allocation10 + $0x140] sm:$0xf]
        %v3155 = vld [vmem:[#allocation10 + $0x144] sm:$0xff]
        %v3156 = vld [vmem:[#allocation10 + $0x14c] sm:$0xf]
        %v3157 = vld [vmem:[#allocation10 + $0x150] sm:$0xff]
        %v3158 = vld [vmem:[#allocation10 + $0x158] sm:$0xf]
        %v3159 = vld [vmem:[#allocation10 + $0x15c] sm:$0xff]
        %v3160 = vld [vmem:[#allocation10 + $0x164] sm:$0xf]
        %v3161 = vld [vmem:[#allocation10 + $0x168] sm:$0xff]
        %v3162 = vld [vmem:[#allocation10 + $0x170] sm:$0xf]
        %v3163 = vld [vmem:[#allocation10 + $0x174] sm:$0xff]
        %v3164 = vld [vmem:[#allocation10 + $0x17c] sm:$0xf]
        %v3165 = vld [vmem:[#allocation10 + $0x180] sm:$0xff]
        %v3166 = vld [vmem:[#allocation10 + $0x188] sm:$0xf]
        %v3167 = vld [vmem:[#allocation10 + $0x18c] sm:$0xff]
        %v3168 = vld [vmem:[#allocation10 + $0x194] sm:$0xf]
        %v3169 = vld [vmem:[#allocation10 + $0x198] sm:$0xff]
        %v3170 = vld [vmem:[#allocation10 + $0x1a0] sm:$0xf]
        %v3171 = vld [vmem:[#allocation10 + $0x1a4] sm:$0xff]
        %v3172 = vld [vmem:[#allocation10 + $0x1ac] sm:$0xf]
        %v3173 = vld [vmem:[#allocation10 + $0x1b0] sm:$0xff]
        %v3174 = vld [vmem:[#allocation10 + $0x1b8] sm:$0xf]
        %v3175 = vld [vmem:[#allocation10 + $0x1bc] sm:$0xff]
        %v3176 = vld [vmem:[#allocation10 + $0x1c4] sm:$0xf]
        %v3177 = vld [vmem:[#allocation10 + $0x1c8] sm:$0xff]
        %v3178 = vld [vmem:[#allocation10 + $0x1d0] sm:$0xf]
        %v3179 = vld [vmem:[#allocation10 + $0x1d4] sm:$0xff]
        %v3180 = vld [vmem:[#allocation10 + $0x1dc] sm:$0xf]
        %v3181 = vld [vmem:[#allocation10 + $0x1e0] sm:$0xff]
        %v3182 = vld [vmem:[#allocation10 + $0x1e8] sm:$0xf]
        %v3183 = vld [vmem:[#allocation10 + $0x1ec] sm:$0xff]
        %v3184 = vld [vmem:[#allocation10 + $0x1f4] sm:$0xf]
        %v3185 = vld [vmem:[#allocation10 + $0x1f8] sm:$0xff]
        %v3186 = vld [vmem:[#allocation10 + $0x200] sm:$0xf]
        %v3187 = vld [vmem:[#allocation10 + $0x204] sm:$0xff]
        %v3188 = vld [vmem:[#allocation10 + $0x20c] sm:$0xf]
        %v3189 = vld [vmem:[#allocation10 + $0x210] sm:$0xff]
        %v3190 = vld [vmem:[#allocation10 + $0x218] sm:$0xf]
        %v3191 = vld [vmem:[#allocation10 + $0x21c] sm:$0xff]
        %v3192 = vld [vmem:[#allocation10 + $0x224] sm:$0xf]
        %v3193 = vld [vmem:[#allocation10 + $0x228] sm:$0xff]
        %v3194 = vld [vmem:[#allocation10 + $0x230] sm:$0xf]
        %v3195 = vld [vmem:[#allocation10 + $0x234] sm:$0xff]
        %v3196 = vld [vmem:[#allocation10 + $0x23c] sm:$0xf]
        %v3293 = vunpack.c.l.b16 %v3101
        %v3294 = vunpack.c.h.b16 %v3101
        %v3295 = vunpack.c.l.b16 %v3102
        %v3296 = vunpack.c.l.b16 %v3103
        %v3297 = vunpack.c.h.b16 %v3103
        %v3298 = vunpack.c.l.b16 %v3104
        %v3299 = vunpack.c.l.b16 %v3105
        %v3300 = vunpack.c.h.b16 %v3105
        %v3301 = vunpack.c.l.b16 %v3106
        %v3302 = vunpack.c.l.b16 %v3107
        %v3303 = vunpack.c.h.b16 %v3107
        %v3304 = vunpack.c.l.b16 %v3108
        %v3305 = vunpack.c.l.b16 %v3109
        %v3306 = vunpack.c.h.b16 %v3109
        %v3307 = vunpack.c.l.b16 %v3110
        %v3308 = vunpack.c.l.b16 %v3111
        %v3309 = vunpack.c.h.b16 %v3111
        %v3310 = vunpack.c.l.b16 %v3112
        %v3311 = vunpack.c.l.b16 %v3113
        %v3312 = vunpack.c.h.b16 %v3113
        %v3313 = vunpack.c.l.b16 %v3114
        %v3314 = vunpack.c.l.b16 %v3115
        %v3315 = vunpack.c.h.b16 %v3115
        %v3316 = vunpack.c.l.b16 %v3116
        %v3317 = vunpack.c.l.b16 %v3117
        %v3318 = vunpack.c.h.b16 %v3117
        %v3319 = vunpack.c.l.b16 %v3118
        %v3320 = vunpack.c.l.b16 %v3119
        %v3321 = vunpack.c.h.b16 %v3119
        %v3322 = vunpack.c.l.b16 %v3120
        %v3323 = vunpack.c.l.b16 %v3121
        %v3324 = vunpack.c.h.b16 %v3121
        %v3325 = vunpack.c.l.b16 %v3122
        %v3326 = vunpack.c.l.b16 %v3123
        %v3327 = vunpack.c.h.b16 %v3123
        %v3328 = vunpack.c.l.b16 %v3124
        %v3329 = vunpack.c.l.b16 %v3125
        %v3330 = vunpack.c.h.b16 %v3125
        %v3331 = vunpack.c.l.b16 %v3126
        %v3332 = vunpack.c.l.b16 %v3127
        %v3333 = vunpack.c.h.b16 %v3127
        %v3334 = vunpack.c.l.b16 %v3128
        %v3335 = vunpack.c.l.b16 %v3129
        %v3336 = vunpack.c.h.b16 %v3129
        %v3337 = vunpack.c.l.b16 %v3130
        %v3338 = vunpack.c.l.b16 %v3131
        %v3339 = vunpack.c.h.b16 %v3131
        %v3340 = vunpack.c.l.b16 %v3132
        %v3341 = vunpack.c.l.b16 %v3133
        %v3342 = vunpack.c.h.b16 %v3133
        %v3343 = vunpack.c.l.b16 %v3134
        %v3344 = vunpack.c.l.b16 %v3135
        %v3345 = vunpack.c.h.b16 %v3135
        %v3346 = vunpack.c.l.b16 %v3136
        %v3347 = vunpack.c.l.b16 %v3137
        %v3348 = vunpack.c.h.b16 %v3137
        %v3349 = vunpack.c.l.b16 %v3138
        %v3350 = vunpack.c.l.b16 %v3139
        %v3351 = vunpack.c.h.b16 %v3139
        %v3352 = vunpack.c.l.b16 %v3140
        %v3353 = vunpack.c.l.b16 %v3141
        %v3354 = vunpack.c.h.b16 %v3141
        %v3355 = vunpack.c.l.b16 %v3142
        %v3356 = vunpack.c.l.b16 %v3143
        %v3357 = vunpack.c.h.b16 %v3143
        %v3358 = vunpack.c.l.b16 %v3144
        %v3359 = vunpack.c.l.b16 %v3145
        %v3360 = vunpack.c.h.b16 %v3145
        %v3361 = vunpack.c.l.b16 %v3146
        %v3362 = vunpack.c.l.b16 %v3147
        %v3363 = vunpack.c.h.b16 %v3147
        %v3364 = vunpack.c.l.b16 %v3148
        %v3365 = vunpack.c.l.b16 %v3149
        %v3366 = vunpack.c.h.b16 %v3149
        %v3367 = vunpack.c.l.b16 %v3150
        %v3368 = vunpack.c.l.b16 %v3151
        %v3369 = vunpack.c.h.b16 %v3151
        %v3370 = vunpack.c.l.b16 %v3152
        %v3371 = vunpack.c.l.b16 %v3153
        %v3372 = vunpack.c.h.b16 %v3153
        %v3373 = vunpack.c.l.b16 %v3154
        %v3374 = vunpack.c.l.b16 %v3155
        %v3375 = vunpack.c.h.b16 %v3155
        %v3376 = vunpack.c.l.b16 %v3156
        %v3377 = vunpack.c.l.b16 %v3157
        %v3378 = vunpack.c.h.b16 %v3157
        %v3379 = vunpack.c.l.b16 %v3158
        %v3380 = vunpack.c.l.b16 %v3159
        %v3381 = vunpack.c.h.b16 %v3159
        %v3382 = vunpack.c.l.b16 %v3160
        %v3383 = vunpack.c.l.b16 %v3161
        %v3384 = vunpack.c.h.b16 %v3161
        %v3385 = vunpack.c.l.b16 %v3162
        %v3386 = vunpack.c.l.b16 %v3163
        %v3387 = vunpack.c.h.b16 %v3163
        %v3388 = vunpack.c.l.b16 %v3164
        %v3389 = vunpack.c.l.b16 %v3165
        %v3390 = vunpack.c.h.b16 %v3165
        %v3391 = vunpack.c.l.b16 %v3166
        %v3392 = vunpack.c.l.b16 %v3167
        %v3393 = vunpack.c.h.b16 %v3167
        %v3394 = vunpack.c.l.b16 %v3168
        %v3395 = vunpack.c.l.b16 %v3169
        %v3396 = vunpack.c.h.b16 %v3169
        %v3397 = vunpack.c.l.b16 %v3170
        %v3398 = vunpack.c.l.b16 %v3171
        %v3399 = vunpack.c.h.b16 %v3171
        %v3400 = vunpack.c.l.b16 %v3172
        %v3401 = vunpack.c.l.b16 %v3173
        %v3402 = vunpack.c.h.b16 %v3173
        %v3403 = vunpack.c.l.b16 %v3174
        %v3404 = vunpack.c.l.b16 %v3175
        %v3405 = vunpack.c.h.b16 %v3175
        %v3406 = vunpack.c.l.b16 %v3176
        %v3407 = vunpack.c.l.b16 %v3177
        %v3408 = vunpack.c.h.b16 %v3177
        %v3409 = vunpack.c.l.b16 %v3178
        %v3410 = vunpack.c.l.b16 %v3179
        %v3411 = vunpack.c.h.b16 %v3179
        %v3412 = vunpack.c.l.b16 %v3180
        %v3413 = vunpack.c.l.b16 %v3181
        %v3414 = vunpack.c.h.b16 %v3181
        %v3415 = vunpack.c.l.b16 %v3182
        %v3416 = vunpack.c.l.b16 %v3183
        %v3417 = vunpack.c.h.b16 %v3183
        %v3418 = vunpack.c.l.b16 %v3184
        %v3419 = vunpack.c.l.b16 %v3185
        %v3420 = vunpack.c.h.b16 %v3185
        %v3421 = vunpack.c.l.b16 %v3186
        %v3422 = vunpack.c.l.b16 %v3187
        %v3423 = vunpack.c.h.b16 %v3187
        %v3424 = vunpack.c.l.b16 %v3188
        %v3425 = vunpack.c.l.b16 %v3189
        %v3426 = vunpack.c.h.b16 %v3189
        %v3427 = vunpack.c.l.b16 %v3190
        %v3428 = vunpack.c.l.b16 %v3191
        %v3429 = vunpack.c.h.b16 %v3191
        %v3430 = vunpack.c.l.b16 %v3192
        %v3431 = vunpack.c.l.b16 %v3193
        %v3432 = vunpack.c.h.b16 %v3193
        %v3433 = vunpack.c.l.b16 %v3194
        %v3434 = vunpack.c.l.b16 %v3195
        %v3435 = vunpack.c.h.b16 %v3195
        %v3436 = vunpack.c.l.b16 %v3196
        %v3437 = vpack.c.b16 %v3296, %v3293
        %v3438 = vpack.c.b16 %v3297, %v3294
        %v3439 = vpack.c.b16 %v3298, %v3295
        %v3440 = vpack.c.b16 %v3302, %v3299
        %v3441 = vpack.c.b16 %v3303, %v3300
        %v3442 = vpack.c.b16 %v3304, %v3301
        %v3443 = vpack.c.b16 %v3308, %v3305
        %v3444 = vpack.c.b16 %v3309, %v3306
        %v3445 = vpack.c.b16 %v3310, %v3307
        %v3446 = vpack.c.b16 %v3314, %v3311
        %v3447 = vpack.c.b16 %v3315, %v3312
        %v3448 = vpack.c.b16 %v3316, %v3313
        %v3449 = vpack.c.b16 %v3320, %v3317
        %v3450 = vpack.c.b16 %v3321, %v3318
        %v3451 = vpack.c.b16 %v3322, %v3319
        %v3452 = vpack.c.b16 %v3326, %v3323
        %v3453 = vpack.c.b16 %v3327, %v3324
        %v3454 = vpack.c.b16 %v3328, %v3325
        %v3455 = vpack.c.b16 %v3332, %v3329
        %v3456 = vpack.c.b16 %v3333, %v3330
        %v3457 = vpack.c.b16 %v3334, %v3331
        %v3458 = vpack.c.b16 %v3338, %v3335
        %v3459 = vpack.c.b16 %v3339, %v3336
        %v3460 = vpack.c.b16 %v3340, %v3337
        %v3461 = vpack.c.b16 %v3344, %v3341
        %v3462 = vpack.c.b16 %v3345, %v3342
        %v3463 = vpack.c.b16 %v3346, %v3343
        %v3464 = vpack.c.b16 %v3350, %v3347
        %v3465 = vpack.c.b16 %v3351, %v3348
        %v3466 = vpack.c.b16 %v3352, %v3349
        %v3467 = vpack.c.b16 %v3356, %v3353
        %v3468 = vpack.c.b16 %v3357, %v3354
        %v3469 = vpack.c.b16 %v3358, %v3355
        %v3470 = vpack.c.b16 %v3362, %v3359
        %v3471 = vpack.c.b16 %v3363, %v3360
        %v3472 = vpack.c.b16 %v3364, %v3361
        %v3473 = vpack.c.b16 %v3368, %v3365
        %v3474 = vpack.c.b16 %v3369, %v3366
        %v3475 = vpack.c.b16 %v3370, %v3367
        %v3476 = vpack.c.b16 %v3374, %v3371
        %v3477 = vpack.c.b16 %v3375, %v3372
        %v3478 = vpack.c.b16 %v3376, %v3373
        %v3479 = vpack.c.b16 %v3380, %v3377
        %v3480 = vpack.c.b16 %v3381, %v3378
        %v3481 = vpack.c.b16 %v3382, %v3379
        %v3482 = vpack.c.b16 %v3386, %v3383
        %v3483 = vpack.c.b16 %v3387, %v3384
        %v3484 = vpack.c.b16 %v3388, %v3385
        %v3485 = vpack.c.b16 %v3392, %v3389
        %v3486 = vpack.c.b16 %v3393, %v3390
        %v3487 = vpack.c.b16 %v3394, %v3391
        %v3488 = vpack.c.b16 %v3398, %v3395
        %v3489 = vpack.c.b16 %v3399, %v3396
        %v3490 = vpack.c.b16 %v3400, %v3397
        %v3491 = vpack.c.b16 %v3404, %v3401
        %v3492 = vpack.c.b16 %v3405, %v3402
        %v3493 = vpack.c.b16 %v3406, %v3403
        %v3494 = vpack.c.b16 %v3410, %v3407
        %v3495 = vpack.c.b16 %v3411, %v3408
        %v3496 = vpack.c.b16 %v3412, %v3409
        %v3497 = vpack.c.b16 %v3416, %v3413
        %v3498 = vpack.c.b16 %v3417, %v3414
        %v3499 = vpack.c.b16 %v3418, %v3415
        %v3500 = vpack.c.b16 %v3422, %v3419
        %v3501 = vpack.c.b16 %v3423, %v3420
        %v3502 = vpack.c.b16 %v3424, %v3421
        %v3503 = vpack.c.b16 %v3428, %v3425
        %v3504 = vpack.c.b16 %v3429, %v3426
        %v3505 = vpack.c.b16 %v3430, %v3427
        %v3506 = vpack.c.b16 %v3434, %v3431
        %v3507 = vpack.c.b16 %v3435, %v3432
        %v3508 = vpack.c.b16 %v3436, %v3433
        %3581 = vmatprep.subr.bf16.mxu0 %v3438
        %3582 = vmatpush1.bf16.msra.mxu0 %v3437
        %3583 = vmatprep.subr.bf16.mxu0 %v3441
        %3584 = vmatpush1.bf16.msra.mxu0 %v3440
        %3585 = vmatprep.subr.bf16.mxu0 %v3444
        %3586 = vmatpush1.bf16.msra.mxu0 %v3443
        %3587 = vmatprep.subr.bf16.mxu0 %v3447
        %3588 = vmatpush1.bf16.msra.mxu0 %v3446
        %3589 = vmatprep.subr.bf16.mxu0 %v3450
        %3590 = vmatpush1.bf16.msra.mxu0 %v3449
        %3591 = vmatprep.subr.bf16.mxu0 %v3453
        %3592 = vmatpush1.bf16.msra.mxu0 %v3452
        %3593 = vmatprep.subr.bf16.mxu0 %v3456
        %3594 = vmatpush1.bf16.msra.mxu0 %v3455
        %3595 = vmatprep.subr.bf16.mxu0 %v3459
        %3596 = vmatpush1.bf16.msra.mxu0 %v3458
        %3597 = vmatprep.subr.bf16.mxu0 %v3462
        %3598 = vmatpush1.bf16.msra.mxu0 %v3461
        %3599 = vmatprep.subr.bf16.mxu0 %v3465
        %3600 = vmatpush1.bf16.msra.mxu0 %v3464
        %3601 = vmatprep.subr.bf16.mxu0 %v3468
        %3602 = vmatpush1.bf16.msra.mxu0 %v3467
        %3603 = vmatprep.subr.bf16.mxu0 %v3471
        %3604 = vmatpush1.bf16.msra.mxu0 %v3470
        %3605 = vmatprep.subr.bf16.mxu0 %v3474
        %3606 = vmatpush1.bf16.msra.mxu0 %v3473
        %3607 = vmatprep.subr.bf16.mxu0 %v3477
        %3608 = vmatpush1.bf16.msra.mxu0 %v3476
        %3609 = vmatprep.subr.bf16.mxu0 %v3480
        %3610 = vmatpush1.bf16.msra.mxu0 %v3479
        %3611 = vmatprep.subr.bf16.mxu0 %v3483
        %3612 = vmatpush1.bf16.msra.mxu0 %v3482
        %3613 = vmatprep.mubr.bf16.mxu0 %v3095
        %3614 = vmatmul.mubr.bf16.gmra.mrb[0].mxu0 %v3091
        %v3615 = vpop.f32.mrb[0].mxu0
        %v3616 = vadd.f32 0.0, %v3615
        %v3617 = vpop.f32.mrb[0].mxu0
        %v3618 = vadd.f32 0.0, %v3617
        %v3619 = vpop.f32.mrb[0].mxu0
        %v3620 = vpop.f32.mrb[0].mxu0
        %3621 = vdwg.mxu0
        %3622 = vmatprep.subr.bf16.mxu0 %v3486
        %3623 = vmatpush1.bf16.msra.mxu0 %v3485
        %3624 = vmatprep.subr.bf16.mxu0 %v3489
        %3625 = vmatpush1.bf16.msra.mxu0 %v3488
        %3626 = vmatprep.subr.bf16.mxu0 %v3492
        %3627 = vmatpush1.bf16.msra.mxu0 %v3491
        %3628 = vmatprep.subr.bf16.mxu0 %v3495
        %3629 = vmatpush1.bf16.msra.mxu0 %v3494
        %3630 = vmatprep.subr.bf16.mxu0 %v3498
        %3631 = vmatpush1.bf16.msra.mxu0 %v3497
        %3632 = vmatprep.subr.bf16.mxu0 %v3501
        %3633 = vmatpush1.bf16.msra.mxu0 %v3500
        %3634 = vmatprep.subr.bf16.mxu0 %v3504
        %3635 = vmatpush1.bf16.msra.mxu0 %v3503
        %3636 = vmatprep.subr.bf16.mxu0 %v3507
        %3637 = vmatpush1.bf16.msra.mxu0 %v3506
        %3638 = vmatprep.subr.bf16.mxu0 0
        %3639 = vmatpush1.bf16.msra.mxu0 0
        %3640 = vmatprep.subr.bf16.mxu0 0
        %3641 = vmatpush1.bf16.msra.mxu0 0
        %3642 = vmatprep.subr.bf16.mxu0 0
        %3643 = vmatpush1.bf16.msra.mxu0 0
        %3644 = vmatprep.subr.bf16.mxu0 0
        %3645 = vmatpush1.bf16.msra.mxu0 0
        %3646 = vmatprep.subr.bf16.mxu0 0
        %3647 = vmatpush1.bf16.msra.mxu0 0
        %3648 = vmatprep.subr.bf16.mxu0 0
        %3649 = vmatpush1.bf16.msra.mxu0 0
        %3650 = vmatprep.subr.bf16.mxu0 0
        %3651 = vmatpush1.bf16.msra.mxu0 0
        %3652 = vmatprep.subr.bf16.mxu0 0
        %3653 = vmatpush1.bf16.msra.mxu0 0
        %3654 = vmatprep.mubr.bf16.mxu0 0
        %3655 = vmatmul.mubr.bf16.gmra.mrb[0].mxu0 %v3099
        %v3656 = vpop.f32.mrb[0].mxu0
        %v3657 = vadd.f32 %v3616, %v3656
        %v3658 = vpop.f32.mrb[0].mxu0
        %v3659 = vadd.f32 %v3618, %v3658
        %v3660 = vpop.f32.mrb[0].mxu0
        %v3661 = vpop.f32.mrb[0].mxu0
        %3662 = vdwg.mxu0
        %3663 = vmatprep.subr.bf16.mxu0 0
        %3664 = vmatpush1.bf16.msra.mxu0 %v3439
        %3665 = vmatprep.subr.bf16.mxu0 0
        %3666 = vmatpush1.bf16.msra.mxu0 %v3442
        %3667 = vmatprep.subr.bf16.mxu0 0
        %3668 = vmatpush1.bf16.msra.mxu0 %v3445
        %3669 = vmatprep.subr.bf16.mxu0 0
        %3670 = vmatpush1.bf16.msra.mxu0 %v3448
        %3671 = vmatprep.subr.bf16.mxu0 0
        %3672 = vmatpush1.bf16.msra.mxu0 %v3451
        %3673 = vmatprep.subr.bf16.mxu0 0
        %3674 = vmatpush1.bf16.msra.mxu0 %v3454
        %3675 = vmatprep.subr.bf16.mxu0 0
        %3676 = vmatpush1.bf16.msra.mxu0 %v3457
        %3677 = vmatprep.subr.bf16.mxu0 0
        %3678 = vmatpush1.bf16.msra.mxu0 %v3460
        %3679 = vmatprep.subr.bf16.mxu0 0
        %3680 = vmatpush1.bf16.msra.mxu0 %v3463
        %3681 = vmatprep.subr.bf16.mxu0 0
        %3682 = vmatpush1.bf16.msra.mxu0 %v3466
        %3683 = vmatprep.subr.bf16.mxu0 0
        %3684 = vmatpush1.bf16.msra.mxu0 %v3469
        %3685 = vmatprep.subr.bf16.mxu0 0
        %3686 = vmatpush1.bf16.msra.mxu0 %v3472
        %3687 = vmatprep.subr.bf16.mxu0 0
        %3688 = vmatpush1.bf16.msra.mxu0 %v3475
        %3689 = vmatprep.subr.bf16.mxu0 0
        %3690 = vmatpush1.bf16.msra.mxu0 %v3478
        %3691 = vmatprep.subr.bf16.mxu0 0
        %3692 = vmatpush1.bf16.msra.mxu0 %v3481
        %3693 = vmatprep.subr.bf16.mxu0 0
        %3694 = vmatpush1.bf16.msra.mxu0 %v3484
        %3695 = vmatprep.mubr.bf16.mxu0 %v3095
        %3696 = vmatmul.mubr.bf16.gmra.mrb[0].mxu0 %v3091
        %v3697 = vpop.f32.mrb[0].mxu0
        %v3698 = vadd.f32 0.0, %v3697
        %v3699 = vpop.f32.mrb[0].mxu0
        %v3700 = vpop.f32.mrb[0].mxu0
        %v3701 = vpop.f32.mrb[0].mxu0
        %3702 = vdwg.mxu0
        %3703 = vmatprep.subr.bf16.mxu0 0
        %3704 = vmatpush1.bf16.msra.mxu0 %v3487
        %3705 = vmatprep.subr.bf16.mxu0 0
        %3706 = vmatpush1.bf16.msra.mxu0 %v3490
        %3707 = vmatprep.subr.bf16.mxu0 0
        %3708 = vmatpush1.bf16.msra.mxu0 %v3493
        %3709 = vmatprep.subr.bf16.mxu0 0
        %3710 = vmatpush1.bf16.msra.mxu0 %v3496
        %3711 = vmatprep.subr.bf16.mxu0 0
        %3712 = vmatpush1.bf16.msra.mxu0 %v3499
        %3713 = vmatprep.subr.bf16.mxu0 0
        %3714 = vmatpush1.bf16.msra.mxu0 %v3502
        %3715 = vmatprep.subr.bf16.mxu0 0
        %3716 = vmatpush1.bf16.msra.mxu0 %v3505
        %3717 = vmatprep.subr.bf16.mxu0 0
        %3718 = vmatpush1.bf16.msra.mxu0 %v3508
        %3719 = vmatprep.subr.bf16.mxu0 0
        %3720 = vmatpush1.bf16.msra.mxu0 0
        %3721 = vmatprep.subr.bf16.mxu0 0
        %3722 = vmatpush1.bf16.msra.mxu0 0
        %3723 = vmatprep.subr.bf16.mxu0 0
        %3724 = vmatpush1.bf16.msra.mxu0 0
        %3725 = vmatprep.subr.bf16.mxu0 0
        %3726 = vmatpush1.bf16.msra.mxu0 0
        %3727 = vmatprep.subr.bf16.mxu0 0
        %3728 = vmatpush1.bf16.msra.mxu0 0
        %3729 = vmatprep.subr.bf16.mxu0 0
        %3730 = vmatpush1.bf16.msra.mxu0 0
        %3731 = vmatprep.subr.bf16.mxu0 0
        %3732 = vmatpush1.bf16.msra.mxu0 0
        %3733 = vmatprep.subr.bf16.mxu0 0
        %3734 = vmatpush1.bf16.msra.mxu0 0
        %3735 = vmatprep.mubr.bf16.mxu0 0
        %3736 = vmatmul.mubr.bf16.gmra.mrb[0].mxu0 %v3099
        %v3737 = vpop.f32.mrb[0].mxu0
        %v3738 = vadd.f32 %v3698, %v3737
        %v3739 = vpop.f32.mrb[0].mxu0
        %v3740 = vpop.f32.mrb[0].mxu0
        %v3741 = vpop.f32.mrb[0].mxu0
        %3742 = vdwg.mxu0
        %v3743 = vadd.f32 %v577, %v3657
        %v3744 = vadd.f32 %v578, %v3659
        %v3745 = vadd.f32 %v579, %v3738
        %v3746 = vld [vmem:[#allocation11] sm:$0x7]
        %v3748 = vlaneseq
        %v3749 = vshrl.u32 %v3748, 7
        %v3750 = vsub.s32 0, %v3749
        %v3751 = vrot.slane %v3746, %v3750
        %v3752 = vlaneseq
        %v3753 = vshrl.u32 %v3752, 7
        %v3754 = vsub.s32 1, %v3753
        %v3755 = vrot.slane %v3746, %v3754
        %v3756 = vlaneseq
        %v3757 = vshrl.u32 %v3756, 7
        %v3758 = vsub.s32 2, %v3757
        %v3759 = vrot.slane %v3746, %v3758
        %v3763 = vadd.f32 %v3743, %v3751
        %v3764 = vadd.f32 %v3744, %v3755
        %v3765 = vadd.f32 %v3745, %v3759
        %v3766 = vld [vmem:[#allocation13] sm:$0x7]
        %v3767 = vld [vmem:[#allocation14] sm:$0x7]
        %v3768 = vadd.f32 %v3763, %v3764
        %v3769 = vadd.f32 %v3768, %v3765
        %3770 = vadd.xlane.f32.xlu0 %v3769
        %v3771 = vpop.xlane.xlu0 %3770
        %v3772 = vmul.f32 %v3771, %v586
        %v3773 = vsub.f32 %v3763, %v3772
        %v3774 = vsub.f32 %v3764, %v3772
        %v3775 = vsub.f32 %v3765, %v3772
        %v3776 = vmul.f32 %v3773, %v3773
        %v3777 = vmul.f32 %v3774, %v3774
        %v3778 = vmul.f32 %v3775, %v3775
        %v3779 = vadd.f32 %v3776, %v3777
        %v3780 = vadd.f32 %v3779, %v3778
        %3781 = vadd.xlane.f32.xlu0 %v3780
        %v3782 = vpop.xlane.xlu0 %3781
        %v3783 = vmul.f32 %v3782, %v586
        %v3784 = vadd.f32 %v3783, 1e-05
        %v3785 = vrsqrt.pop %v3784
        %v3786 = vmul.f32 %v3773, %v3785
        %v3787 = vmul.f32 %v3774, %v3785
        %v3788 = vmul.f32 %v3775, %v3785
        %v3790 = vlaneseq
        %v3791 = vshrl.u32 %v3790, 7
        %v3792 = vsub.s32 0, %v3791
        %v3793 = vrot.slane %v3766, %v3792
        %v3794 = vlaneseq
        %v3795 = vshrl.u32 %v3794, 7
        %v3796 = vsub.s32 1, %v3795
        %v3797 = vrot.slane %v3766, %v3796
        %v3798 = vlaneseq
        %v3799 = vshrl.u32 %v3798, 7
        %v3800 = vsub.s32 2, %v3799
        %v3801 = vrot.slane %v3766, %v3800
        %v3805 = vmul.f32 %v3786, %v3793
        %v3806 = vmul.f32 %v3787, %v3797
        %v3807 = vmul.f32 %v3788, %v3801
        %v3809 = vlaneseq
        %v3810 = vshrl.u32 %v3809, 7
        %v3811 = vsub.s32 0, %v3810
        %v3812 = vrot.slane %v3767, %v3811
        %v3813 = vlaneseq
        %v3814 = vshrl.u32 %v3813, 7
        %v3815 = vsub.s32 1, %v3814
        %v3816 = vrot.slane %v3767, %v3815
        %v3817 = vlaneseq
        %v3818 = vshrl.u32 %v3817, 7
        %v3819 = vsub.s32 2, %v3818
        %v3820 = vrot.slane %v3767, %v3819
        %v3824 = vadd.f32 %v3805, %v3812
        %v3825 = vadd.f32 %v3806, %v3816
        %v3826 = vadd.f32 %v3807, %v3820
        %v3827 = vpack.c.bf16 %v3824, %v3824
        %v3828 = vpack.c.bf16 %v3825, %v3825
        %v3829 = vpack.c.bf16 %v3826, %v3826
        %v3830 = vld [vmem:[#allocation16] sm:$0xff]
        %v3831 = vld [vmem:[#allocation16 + $0x8] sm:$0xff]
        %v3832 = vld [vmem:[#allocation16 + $0x10] sm:$0xff]
        %v3833 = vld [vmem:[#allocation16 + $0x18] sm:$0xff]
        %v3834 = vld [vmem:[#allocation16 + $0x20] sm:$0xff]
        %v3835 = vld [vmem:[#allocation16 + $0x28] sm:$0xff]
        %v3836 = vld [vmem:[#allocation16 + $0x30] sm:$0xff]
        %v3837 = vld [vmem:[#allocation16 + $0x38] sm:$0xff]
        %v3838 = vld [vmem:[#allocation16 + $0x40] sm:$0xff]
        %v3839 = vld [vmem:[#allocation16 + $0x48] sm:$0xff]
        %v3840 = vld [vmem:[#allocation16 + $0x50] sm:$0xff]
        %v3841 = vld [vmem:[#allocation16 + $0x58] sm:$0xff]
        %v3842 = vld [vmem:[#allocation16 + $0x60] sm:$0xff]
        %v3843 = vld [vmem:[#allocation16 + $0x68] sm:$0xff]
        %v3844 = vld [vmem:[#allocation16 + $0x70] sm:$0xff]
        %v3845 = vld [vmem:[#allocation16 + $0x78] sm:$0xff]
        %v3846 = vld [vmem:[#allocation16 + $0x80] sm:$0xff]
        %v3847 = vld [vmem:[#allocation16 + $0x88] sm:$0xff]
        %v3848 = vld [vmem:[#allocation16 + $0x90] sm:$0xff]
        %v3849 = vld [vmem:[#allocation16 + $0x98] sm:$0xff]
        %v3850 = vld [vmem:[#allocation16 + $0xa0] sm:$0xff]
        %v3851 = vld [vmem:[#allocation16 + $0xa8] sm:$0xff]
        %v3852 = vld [vmem:[#allocation16 + $0xb0] sm:$0xff]
        %v3853 = vld [vmem:[#allocation16 + $0xb8] sm:$0xff]
        %v3854 = vld [vmem:[#allocation16 + $0xc0] sm:$0xff]
        %v3855 = vld [vmem:[#allocation16 + $0xc8] sm:$0xff]
        %v3856 = vld [vmem:[#allocation16 + $0xd0] sm:$0xff]
        %v3857 = vld [vmem:[#allocation16 + $0xd8] sm:$0xff]
        %v3858 = vld [vmem:[#allocation16 + $0xe0] sm:$0xff]
        %v3859 = vld [vmem:[#allocation16 + $0xe8] sm:$0xff]
        %v3860 = vld [vmem:[#allocation16 + $0xf0] sm:$0xff]
        %v3861 = vld [vmem:[#allocation16 + $0xf8] sm:$0xff]
        %v3862 = vld [vmem:[#allocation16 + $0x100] sm:$0xff]
        %v3863 = vld [vmem:[#allocation16 + $0x108] sm:$0xff]
        %v3864 = vld [vmem:[#allocation16 + $0x110] sm:$0xff]
        %v3865 = vld [vmem:[#allocation16 + $0x118] sm:$0xff]
        %v3866 = vld [vmem:[#allocation16 + $0x120] sm:$0xff]
        %v3867 = vld [vmem:[#allocation16 + $0x128] sm:$0xff]
        %v3868 = vld [vmem:[#allocation16 + $0x130] sm:$0xff]
        %v3869 = vld [vmem:[#allocation16 + $0x138] sm:$0xff]
        %v3870 = vld [vmem:[#allocation16 + $0x140] sm:$0xff]
        %v3871 = vld [vmem:[#allocation16 + $0x148] sm:$0xff]
        %v3872 = vld [vmem:[#allocation16 + $0x150] sm:$0xff]
        %v3873 = vld [vmem:[#allocation16 + $0x158] sm:$0xff]
        %v3874 = vld [vmem:[#allocation16 + $0x160] sm:$0xff]
        %v3875 = vld [vmem:[#allocation16 + $0x168] sm:$0xff]
        %v3876 = vld [vmem:[#allocation16 + $0x170] sm:$0xff]
        %v3877 = vld [vmem:[#allocation16 + $0x178] sm:$0xff]
        %v3878 = vld [vmem:[#allocation16 + $0x180] sm:$0xff]
        %v3879 = vld [vmem:[#allocation16 + $0x188] sm:$0xff]
        %v3880 = vld [vmem:[#allocation16 + $0x190] sm:$0xff]
        %v3881 = vld [vmem:[#allocation16 + $0x198] sm:$0xff]
        %v3882 = vld [vmem:[#allocation16 + $0x1a0] sm:$0xff]
        %v3883 = vld [vmem:[#allocation16 + $0x1a8] sm:$0xff]
        %v3884 = vld [vmem:[#allocation16 + $0x1b0] sm:$0xff]
        %v3885 = vld [vmem:[#allocation16 + $0x1b8] sm:$0xff]
        %v3886 = vld [vmem:[#allocation16 + $0x1c0] sm:$0xff]
        %v3887 = vld [vmem:[#allocation16 + $0x1c8] sm:$0xff]
        %v3888 = vld [vmem:[#allocation16 + $0x1d0] sm:$0xff]
        %v3889 = vld [vmem:[#allocation16 + $0x1d8] sm:$0xff]
        %v3890 = vld [vmem:[#allocation16 + $0x1e0] sm:$0xff]
        %v3891 = vld [vmem:[#allocation16 + $0x1e8] sm:$0xff]
        %v3892 = vld [vmem:[#allocation16 + $0x1f0] sm:$0xff]
        %v3893 = vld [vmem:[#allocation16 + $0x1f8] sm:$0xff]
        %v3894 = vld [vmem:[#allocation16 + $0x200] sm:$0xff]
        %v3895 = vld [vmem:[#allocation16 + $0x208] sm:$0xff]
        %v3896 = vld [vmem:[#allocation16 + $0x210] sm:$0xff]
        %v3897 = vld [vmem:[#allocation16 + $0x218] sm:$0xff]
        %v3898 = vld [vmem:[#allocation16 + $0x220] sm:$0xff]
        %v3899 = vld [vmem:[#allocation16 + $0x228] sm:$0xff]
        %v3900 = vld [vmem:[#allocation16 + $0x230] sm:$0xff]
        %v3901 = vld [vmem:[#allocation16 + $0x238] sm:$0xff]
        %v3902 = vld [vmem:[#allocation16 + $0x240] sm:$0xff]
        %v3903 = vld [vmem:[#allocation16 + $0x248] sm:$0xff]
        %v3904 = vld [vmem:[#allocation16 + $0x250] sm:$0xff]
        %v3905 = vld [vmem:[#allocation16 + $0x258] sm:$0xff]
        %v3906 = vld [vmem:[#allocation16 + $0x260] sm:$0xff]
        %v3907 = vld [vmem:[#allocation16 + $0x268] sm:$0xff]
        %v3908 = vld [vmem:[#allocation16 + $0x270] sm:$0xff]
        %v3909 = vld [vmem:[#allocation16 + $0x278] sm:$0xff]
        %v3910 = vld [vmem:[#allocation16 + $0x280] sm:$0xff]
        %v3911 = vld [vmem:[#allocation16 + $0x288] sm:$0xff]
        %v3912 = vld [vmem:[#allocation16 + $0x290] sm:$0xff]
        %v3913 = vld [vmem:[#allocation16 + $0x298] sm:$0xff]
        %v3914 = vld [vmem:[#allocation16 + $0x2a0] sm:$0xff]
        %v3915 = vld [vmem:[#allocation16 + $0x2a8] sm:$0xff]
        %v3916 = vld [vmem:[#allocation16 + $0x2b0] sm:$0xff]
        %v3917 = vld [vmem:[#allocation16 + $0x2b8] sm:$0xff]
        %v3918 = vld [vmem:[#allocation16 + $0x2c0] sm:$0xff]
        %v3919 = vld [vmem:[#allocation16 + $0x2c8] sm:$0xff]
        %v3920 = vld [vmem:[#allocation16 + $0x2d0] sm:$0xff]
        %v3921 = vld [vmem:[#allocation16 + $0x2d8] sm:$0xff]
        %v3922 = vld [vmem:[#allocation16 + $0x2e0] sm:$0xff]
        %v3923 = vld [vmem:[#allocation16 + $0x2e8] sm:$0xff]
        %v3924 = vld [vmem:[#allocation16 + $0x2f0] sm:$0xff]
        %v3925 = vld [vmem:[#allocation16 + $0x2f8] sm:$0xff]
        %v3926 = vld [vmem:[#allocation16 + $0x300] sm:$0xff]
        %v3927 = vld [vmem:[#allocation16 + $0x308] sm:$0xff]
        %v3928 = vld [vmem:[#allocation16 + $0x310] sm:$0xff]
        %v3929 = vld [vmem:[#allocation16 + $0x318] sm:$0xff]
        %v3930 = vld [vmem:[#allocation16 + $0x320] sm:$0xff]
        %v3931 = vld [vmem:[#allocation16 + $0x328] sm:$0xff]
        %v3932 = vld [vmem:[#allocation16 + $0x330] sm:$0xff]
        %v3933 = vld [vmem:[#allocation16 + $0x338] sm:$0xff]
        %v3934 = vld [vmem:[#allocation16 + $0x340] sm:$0xff]
        %v3935 = vld [vmem:[#allocation16 + $0x348] sm:$0xff]
        %v3936 = vld [vmem:[#allocation16 + $0x350] sm:$0xff]
        %v3937 = vld [vmem:[#allocation16 + $0x358] sm:$0xff]
        %v3938 = vld [vmem:[#allocation16 + $0x360] sm:$0xff]
        %v3939 = vld [vmem:[#allocation16 + $0x368] sm:$0xff]
        %v3940 = vld [vmem:[#allocation16 + $0x370] sm:$0xff]
        %v3941 = vld [vmem:[#allocation16 + $0x378] sm:$0xff]
        %v3942 = vld [vmem:[#allocation16 + $0x380] sm:$0xff]
        %v3943 = vld [vmem:[#allocation16 + $0x388] sm:$0xff]
        %v3944 = vld [vmem:[#allocation16 + $0x390] sm:$0xff]
        %v3945 = vld [vmem:[#allocation16 + $0x398] sm:$0xff]
        %v3946 = vld [vmem:[#allocation16 + $0x3a0] sm:$0xff]
        %v3947 = vld [vmem:[#allocation16 + $0x3a8] sm:$0xff]
        %v3948 = vld [vmem:[#allocation16 + $0x3b0] sm:$0xff]
        %v3949 = vld [vmem:[#allocation16 + $0x3b8] sm:$0xff]
        %v3950 = vld [vmem:[#allocation16 + $0x3c0] sm:$0xff]
        %v3951 = vld [vmem:[#allocation16 + $0x3c8] sm:$0xff]
        %v3952 = vld [vmem:[#allocation16 + $0x3d0] sm:$0xff]
        %v3953 = vld [vmem:[#allocation16 + $0x3d8] sm:$0xff]
        %v3954 = vld [vmem:[#allocation16 + $0x3e0] sm:$0xff]
        %v3955 = vld [vmem:[#allocation16 + $0x3e8] sm:$0xff]
        %v3956 = vld [vmem:[#allocation16 + $0x3f0] sm:$0xff]
        %v3957 = vld [vmem:[#allocation16 + $0x3f8] sm:$0xff]
        %v3958 = vld [vmem:[#allocation16 + $0x400] sm:$0xff]
        %v3959 = vld [vmem:[#allocation16 + $0x408] sm:$0xff]
        %v3960 = vld [vmem:[#allocation16 + $0x410] sm:$0xff]
        %v3961 = vld [vmem:[#allocation16 + $0x418] sm:$0xff]
        %v3962 = vld [vmem:[#allocation16 + $0x420] sm:$0xff]
        %v3963 = vld [vmem:[#allocation16 + $0x428] sm:$0xff]
        %v3964 = vld [vmem:[#allocation16 + $0x430] sm:$0xff]
        %v3965 = vld [vmem:[#allocation16 + $0x438] sm:$0xff]
        %v3966 = vld [vmem:[#allocation16 + $0x440] sm:$0xff]
        %v3967 = vld [vmem:[#allocation16 + $0x448] sm:$0xff]
        %v3968 = vld [vmem:[#allocation16 + $0x450] sm:$0xff]
        %v3969 = vld [vmem:[#allocation16 + $0x458] sm:$0xff]
        %v3970 = vld [vmem:[#allocation16 + $0x460] sm:$0xff]
        %v3971 = vld [vmem:[#allocation16 + $0x468] sm:$0xff]
        %v3972 = vld [vmem:[#allocation16 + $0x470] sm:$0xff]
        %v3973 = vld [vmem:[#allocation16 + $0x478] sm:$0xff]
        %v3974 = vld [vmem:[#allocation16 + $0x480] sm:$0xff]
        %v3975 = vld [vmem:[#allocation16 + $0x488] sm:$0xff]
        %v3976 = vld [vmem:[#allocation16 + $0x490] sm:$0xff]
        %v3977 = vld [vmem:[#allocation16 + $0x498] sm:$0xff]
        %v3978 = vld [vmem:[#allocation16 + $0x4a0] sm:$0xff]
        %v3979 = vld [vmem:[#allocation16 + $0x4a8] sm:$0xff]
        %v3980 = vld [vmem:[#allocation16 + $0x4b0] sm:$0xff]
        %v3981 = vld [vmem:[#allocation16 + $0x4b8] sm:$0xff]
        %v3982 = vld [vmem:[#allocation16 + $0x4c0] sm:$0xff]
        %v3983 = vld [vmem:[#allocation16 + $0x4c8] sm:$0xff]
        %v3984 = vld [vmem:[#allocation16 + $0x4d0] sm:$0xff]
        %v3985 = vld [vmem:[#allocation16 + $0x4d8] sm:$0xff]
        %v3986 = vld [vmem:[#allocation16 + $0x4e0] sm:$0xff]
        %v3987 = vld [vmem:[#allocation16 + $0x4e8] sm:$0xff]
        %v3988 = vld [vmem:[#allocation16 + $0x4f0] sm:$0xff]
        %v3989 = vld [vmem:[#allocation16 + $0x4f8] sm:$0xff]
        %v3990 = vld [vmem:[#allocation16 + $0x500] sm:$0xff]
        %v3991 = vld [vmem:[#allocation16 + $0x508] sm:$0xff]
        %v3992 = vld [vmem:[#allocation16 + $0x510] sm:$0xff]
        %v3993 = vld [vmem:[#allocation16 + $0x518] sm:$0xff]
        %v3994 = vld [vmem:[#allocation16 + $0x520] sm:$0xff]
        %v3995 = vld [vmem:[#allocation16 + $0x528] sm:$0xff]
        %v3996 = vld [vmem:[#allocation16 + $0x530] sm:$0xff]
        %v3997 = vld [vmem:[#allocation16 + $0x538] sm:$0xff]
        %v3998 = vld [vmem:[#allocation16 + $0x540] sm:$0xff]
        %v3999 = vld [vmem:[#allocation16 + $0x548] sm:$0xff]
        %v4000 = vld [vmem:[#allocation16 + $0x550] sm:$0xff]
        %v4001 = vld [vmem:[#allocation16 + $0x558] sm:$0xff]
        %v4002 = vld [vmem:[#allocation16 + $0x560] sm:$0xff]
        %v4003 = vld [vmem:[#allocation16 + $0x568] sm:$0xff]
        %v4004 = vld [vmem:[#allocation16 + $0x570] sm:$0xff]
        %v4005 = vld [vmem:[#allocation16 + $0x578] sm:$0xff]
        %v4006 = vld [vmem:[#allocation16 + $0x580] sm:$0xff]
        %v4007 = vld [vmem:[#allocation16 + $0x588] sm:$0xff]
        %v4008 = vld [vmem:[#allocation16 + $0x590] sm:$0xff]
        %v4009 = vld [vmem:[#allocation16 + $0x598] sm:$0xff]
        %v4010 = vld [vmem:[#allocation16 + $0x5a0] sm:$0xff]
        %v4011 = vld [vmem:[#allocation16 + $0x5a8] sm:$0xff]
        %v4012 = vld [vmem:[#allocation16 + $0x5b0] sm:$0xff]
        %v4013 = vld [vmem:[#allocation16 + $0x5b8] sm:$0xff]
        %v4014 = vld [vmem:[#allocation16 + $0x5c0] sm:$0xff]
        %v4015 = vld [vmem:[#allocation16 + $0x5c8] sm:$0xff]
        %v4016 = vld [vmem:[#allocation16 + $0x5d0] sm:$0xff]
        %v4017 = vld [vmem:[#allocation16 + $0x5d8] sm:$0xff]
        %v4018 = vld [vmem:[#allocation16 + $0x5e0] sm:$0xff]
        %v4019 = vld [vmem:[#allocation16 + $0x5e8] sm:$0xff]
        %v4020 = vld [vmem:[#allocation16 + $0x5f0] sm:$0xff]
        %v4021 = vld [vmem:[#allocation16 + $0x5f8] sm:$0xff]
        %v4022 = vld [vmem:[#allocation16 + $0x600] sm:$0xff]
        %v4023 = vld [vmem:[#allocation16 + $0x608] sm:$0xff]
        %v4024 = vld [vmem:[#allocation16 + $0x610] sm:$0xff]
        %v4025 = vld [vmem:[#allocation16 + $0x618] sm:$0xff]
        %v4026 = vld [vmem:[#allocation16 + $0x620] sm:$0xff]
        %v4027 = vld [vmem:[#allocation16 + $0x628] sm:$0xff]
        %v4028 = vld [vmem:[#allocation16 + $0x630] sm:$0xff]
        %v4029 = vld [vmem:[#allocation16 + $0x638] sm:$0xff]
        %v4030 = vld [vmem:[#allocation16 + $0x640] sm:$0xff]
        %v4031 = vld [vmem:[#allocation16 + $0x648] sm:$0xff]
        %v4032 = vld [vmem:[#allocation16 + $0x650] sm:$0xff]
        %v4033 = vld [vmem:[#allocation16 + $0x658] sm:$0xff]
        %v4034 = vld [vmem:[#allocation16 + $0x660] sm:$0xff]
        %v4035 = vld [vmem:[#allocation16 + $0x668] sm:$0xff]
        %v4036 = vld [vmem:[#allocation16 + $0x670] sm:$0xff]
        %v4037 = vld [vmem:[#allocation16 + $0x678] sm:$0xff]
        %v4038 = vld [vmem:[#allocation16 + $0x680] sm:$0xff]
        %v4039 = vld [vmem:[#allocation16 + $0x688] sm:$0xff]
        %v4040 = vld [vmem:[#allocation16 + $0x690] sm:$0xff]
        %v4041 = vld [vmem:[#allocation16 + $0x698] sm:$0xff]
        %v4042 = vld [vmem:[#allocation16 + $0x6a0] sm:$0xff]
        %v4043 = vld [vmem:[#allocation16 + $0x6a8] sm:$0xff]
        %v4044 = vld [vmem:[#allocation16 + $0x6b0] sm:$0xff]
        %v4045 = vld [vmem:[#allocation16 + $0x6b8] sm:$0xff]
        %v4046 = vld [vmem:[#allocation16 + $0x6c0] sm:$0xff]
        %v4047 = vld [vmem:[#allocation16 + $0x6c8] sm:$0xff]
        %v4048 = vld [vmem:[#allocation16 + $0x6d0] sm:$0xff]
        %v4049 = vld [vmem:[#allocation16 + $0x6d8] sm:$0xff]
        %v4050 = vld [vmem:[#allocation16 + $0x6e0] sm:$0xff]
        %v4051 = vld [vmem:[#allocation16 + $0x6e8] sm:$0xff]
        %v4052 = vld [vmem:[#allocation16 + $0x6f0] sm:$0xff]
        %v4053 = vld [vmem:[#allocation16 + $0x6f8] sm:$0xff]
        %v4054 = vld [vmem:[#allocation16 + $0x700] sm:$0xff]
        %v4055 = vld [vmem:[#allocation16 + $0x708] sm:$0xff]
        %v4056 = vld [vmem:[#allocation16 + $0x710] sm:$0xff]
        %v4057 = vld [vmem:[#allocation16 + $0x718] sm:$0xff]
        %v4058 = vld [vmem:[#allocation16 + $0x720] sm:$0xff]
        %v4059 = vld [vmem:[#allocation16 + $0x728] sm:$0xff]
        %v4060 = vld [vmem:[#allocation16 + $0x730] sm:$0xff]
        %v4061 = vld [vmem:[#allocation16 + $0x738] sm:$0xff]
        %v4062 = vld [vmem:[#allocation16 + $0x740] sm:$0xff]
        %v4063 = vld [vmem:[#allocation16 + $0x748] sm:$0xff]
        %v4064 = vld [vmem:[#allocation16 + $0x750] sm:$0xff]
        %v4065 = vld [vmem:[#allocation16 + $0x758] sm:$0xff]
        %v4066 = vld [vmem:[#allocation16 + $0x760] sm:$0xff]
        %v4067 = vld [vmem:[#allocation16 + $0x768] sm:$0xff]
        %v4068 = vld [vmem:[#allocation16 + $0x770] sm:$0xff]
        %v4069 = vld [vmem:[#allocation16 + $0x778] sm:$0xff]
        %v4070 = vld [vmem:[#allocation16 + $0x780] sm:$0xff]
        %v4071 = vld [vmem:[#allocation16 + $0x788] sm:$0xff]
        %v4072 = vld [vmem:[#allocation16 + $0x790] sm:$0xff]
        %v4073 = vld [vmem:[#allocation16 + $0x798] sm:$0xff]
        %v4074 = vld [vmem:[#allocation16 + $0x7a0] sm:$0xff]
        %v4075 = vld [vmem:[#allocation16 + $0x7a8] sm:$0xff]
        %v4076 = vld [vmem:[#allocation16 + $0x7b0] sm:$0xff]
        %v4077 = vld [vmem:[#allocation16 + $0x7b8] sm:$0xff]
        %v4078 = vld [vmem:[#allocation16 + $0x7c0] sm:$0xff]
        %v4079 = vld [vmem:[#allocation16 + $0x7c8] sm:$0xff]
        %v4080 = vld [vmem:[#allocation16 + $0x7d0] sm:$0xff]
        %v4081 = vld [vmem:[#allocation16 + $0x7d8] sm:$0xff]
        %v4082 = vld [vmem:[#allocation16 + $0x7e0] sm:$0xff]
        %v4083 = vld [vmem:[#allocation16 + $0x7e8] sm:$0xff]
        %v4084 = vld [vmem:[#allocation16 + $0x7f0] sm:$0xff]
        %v4085 = vld [vmem:[#allocation16 + $0x7f8] sm:$0xff]
        %v4086 = vld [vmem:[#allocation16 + $0x800] sm:$0xff]
        %v4087 = vld [vmem:[#allocation16 + $0x808] sm:$0xff]
        %v4088 = vld [vmem:[#allocation16 + $0x810] sm:$0xff]
        %v4089 = vld [vmem:[#allocation16 + $0x818] sm:$0xff]
        %v4090 = vld [vmem:[#allocation16 + $0x820] sm:$0xff]
        %v4091 = vld [vmem:[#allocation16 + $0x828] sm:$0xff]
        %v4092 = vld [vmem:[#allocation16 + $0x830] sm:$0xff]
        %v4093 = vld [vmem:[#allocation16 + $0x838] sm:$0xff]
        %v4094 = vld [vmem:[#allocation16 + $0x840] sm:$0xff]
        %v4095 = vld [vmem:[#allocation16 + $0x848] sm:$0xff]
        %v4096 = vld [vmem:[#allocation16 + $0x850] sm:$0xff]
        %v4097 = vld [vmem:[#allocation16 + $0x858] sm:$0xff]
        %v4098 = vld [vmem:[#allocation16 + $0x860] sm:$0xff]
        %v4099 = vld [vmem:[#allocation16 + $0x868] sm:$0xff]
        %v4100 = vld [vmem:[#allocation16 + $0x870] sm:$0xff]
        %v4101 = vld [vmem:[#allocation16 + $0x878] sm:$0xff]
        %v4102 = vld [vmem:[#allocation16 + $0x880] sm:$0xff]
        %v4103 = vld [vmem:[#allocation16 + $0x888] sm:$0xff]
        %v4104 = vld [vmem:[#allocation16 + $0x890] sm:$0xff]
        %v4105 = vld [vmem:[#allocation16 + $0x898] sm:$0xff]
        %v4106 = vld [vmem:[#allocation16 + $0x8a0] sm:$0xff]
        %v4107 = vld [vmem:[#allocation16 + $0x8a8] sm:$0xff]
        %v4108 = vld [vmem:[#allocation16 + $0x8b0] sm:$0xff]
        %v4109 = vld [vmem:[#allocation16 + $0x8b8] sm:$0xff]
        %v4110 = vld [vmem:[#allocation16 + $0x8c0] sm:$0xff]
        %v4111 = vld [vmem:[#allocation16 + $0x8c8] sm:$0xff]
        %v4112 = vld [vmem:[#allocation16 + $0x8d0] sm:$0xff]
        %v4113 = vld [vmem:[#allocation16 + $0x8d8] sm:$0xff]
        %v4114 = vld [vmem:[#allocation16 + $0x8e0] sm:$0xff]
        %v4115 = vld [vmem:[#allocation16 + $0x8e8] sm:$0xff]
        %v4116 = vld [vmem:[#allocation16 + $0x8f0] sm:$0xff]
        %v4117 = vld [vmem:[#allocation16 + $0x8f8] sm:$0xff]
        %v4118 = vld [vmem:[#allocation17] sm:$0xff]
        %v4119 = vld [vmem:[#allocation17 + $0x8] sm:$0xf]
        %v4122 = vlaneseq
        %v4123 = vshrl.u32 %v4122, 7
        %v4124 = vsub.s32 0, %v4123
        %v4125 = vrot.slane %v4118, %v4124
        %v4126 = vlaneseq
        %v4127 = vshrl.u32 %v4126, 7
        %v4128 = vsub.s32 1, %v4127
        %v4129 = vrot.slane %v4118, %v4128
        %v4130 = vlaneseq
        %v4131 = vshrl.u32 %v4130, 7
        %v4132 = vsub.s32 2, %v4131
        %v4133 = vrot.slane %v4118, %v4132
        %v4134 = vlaneseq
        %v4135 = vshrl.u32 %v4134, 7
        %v4136 = vsub.s32 3, %v4135
        %v4137 = vrot.slane %v4118, %v4136
        %v4138 = vlaneseq
        %v4139 = vshrl.u32 %v4138, 7
        %v4140 = vsub.s32 4, %v4139
        %v4141 = vrot.slane %v4118, %v4140
        %v4142 = vlaneseq
        %v4143 = vshrl.u32 %v4142, 7
        %v4144 = vsub.s32 5, %v4143
        %v4145 = vrot.slane %v4118, %v4144
        %v4146 = vlaneseq
        %v4147 = vshrl.u32 %v4146, 7
        %v4148 = vsub.s32 6, %v4147
        %v4149 = vrot.slane %v4118, %v4148
        %v4150 = vlaneseq
        %v4151 = vshrl.u32 %v4150, 7
        %v4152 = vsub.s32 7, %v4151
        %v4153 = vrot.slane %v4118, %v4152
        %v4154 = vlaneseq
        %v4155 = vshrl.u32 %v4154, 7
        %v4156 = vsub.s32 0, %v4155
        %v4157 = vrot.slane %v4119, %v4156
        %v4158 = vlaneseq
        %v4159 = vshrl.u32 %v4158, 7
        %v4160 = vsub.s32 1, %v4159
        %v4161 = vrot.slane %v4119, %v4160
        %v4162 = vlaneseq
        %v4163 = vshrl.u32 %v4162, 7
        %v4164 = vsub.s32 2, %v4163
        %v4165 = vrot.slane %v4119, %v4164
        %v4166 = vlaneseq
        %v4167 = vshrl.u32 %v4166, 7
        %v4168 = vsub.s32 3, %v4167
        %v4169 = vrot.slane %v4119, %v4168
        %v4470 = vunpack.c.l.b16 %v3830
        %v4471 = vunpack.c.h.b16 %v3830
        %v4472 = vunpack.c.l.b16 %v3831
        %v4473 = vunpack.c.h.b16 %v3831
        %v4474 = vunpack.c.l.b16 %v3832
        %v4475 = vunpack.c.h.b16 %v3832
        %v4476 = vunpack.c.l.b16 %v3833
        %v4477 = vunpack.c.h.b16 %v3833
        %v4478 = vunpack.c.l.b16 %v3834
        %v4479 = vunpack.c.h.b16 %v3834
        %v4480 = vunpack.c.l.b16 %v3835
        %v4481 = vunpack.c.h.b16 %v3835
        %v4482 = vunpack.c.l.b16 %v3836
        %v4483 = vunpack.c.h.b16 %v3836
        %v4484 = vunpack.c.l.b16 %v3837
        %v4485 = vunpack.c.h.b16 %v3837
        %v4486 = vunpack.c.l.b16 %v3838
        %v4487 = vunpack.c.h.b16 %v3838
        %v4488 = vunpack.c.l.b16 %v3839
        %v4489 = vunpack.c.h.b16 %v3839
        %v4490 = vunpack.c.l.b16 %v3840
        %v4491 = vunpack.c.h.b16 %v3840
        %v4492 = vunpack.c.l.b16 %v3841
        %v4493 = vunpack.c.h.b16 %v3841
        %v4494 = vunpack.c.l.b16 %v3842
        %v4495 = vunpack.c.h.b16 %v3842
        %v4496 = vunpack.c.l.b16 %v3843
        %v4497 = vunpack.c.h.b16 %v3843
        %v4498 = vunpack.c.l.b16 %v3844
        %v4499 = vunpack.c.h.b16 %v3844
        %v4500 = vunpack.c.l.b16 %v3845
        %v4501 = vunpack.c.h.b16 %v3845
        %v4502 = vunpack.c.l.b16 %v3846
        %v4503 = vunpack.c.h.b16 %v3846
        %v4504 = vunpack.c.l.b16 %v3847
        %v4505 = vunpack.c.h.b16 %v3847
        %v4506 = vunpack.c.l.b16 %v3848
        %v4507 = vunpack.c.h.b16 %v3848
        %v4508 = vunpack.c.l.b16 %v3849
        %v4509 = vunpack.c.h.b16 %v3849
        %v4510 = vunpack.c.l.b16 %v3850
        %v4511 = vunpack.c.h.b16 %v3850
        %v4512 = vunpack.c.l.b16 %v3851
        %v4513 = vunpack.c.h.b16 %v3851
        %v4514 = vunpack.c.l.b16 %v3852
        %v4515 = vunpack.c.h.b16 %v3852
        %v4516 = vunpack.c.l.b16 %v3853
        %v4517 = vunpack.c.h.b16 %v3853
        %v4518 = vunpack.c.l.b16 %v3854
        %v4519 = vunpack.c.h.b16 %v3854
        %v4520 = vunpack.c.l.b16 %v3855
        %v4521 = vunpack.c.h.b16 %v3855
        %v4522 = vunpack.c.l.b16 %v3856
        %v4523 = vunpack.c.h.b16 %v3856
        %v4524 = vunpack.c.l.b16 %v3857
        %v4525 = vunpack.c.h.b16 %v3857
        %v4526 = vunpack.c.l.b16 %v3858
        %v4527 = vunpack.c.h.b16 %v3858
        %v4528 = vunpack.c.l.b16 %v3859
        %v4529 = vunpack.c.h.b16 %v3859
        %v4530 = vunpack.c.l.b16 %v3860
        %v4531 = vunpack.c.h.b16 %v3860
        %v4532 = vunpack.c.l.b16 %v3861
        %v4533 = vunpack.c.h.b16 %v3861
        %v4534 = vunpack.c.l.b16 %v3862
        %v4535 = vunpack.c.h.b16 %v3862
        %v4536 = vunpack.c.l.b16 %v3863
        %v4537 = vunpack.c.h.b16 %v3863
        %v4538 = vunpack.c.l.b16 %v3864
        %v4539 = vunpack.c.h.b16 %v3864
        %v4540 = vunpack.c.l.b16 %v3865
        %v4541 = vunpack.c.h.b16 %v3865
        %v4542 = vunpack.c.l.b16 %v3866
        %v4543 = vunpack.c.h.b16 %v3866
        %v4544 = vunpack.c.l.b16 %v3867
        %v4545 = vunpack.c.h.b16 %v3867
        %v4546 = vunpack.c.l.b16 %v3868
        %v4547 = vunpack.c.h.b16 %v3868
        %v4548 = vunpack.c.l.b16 %v3869
        %v4549 = vunpack.c.h.b16 %v3869
        %v4550 = vunpack.c.l.b16 %v3870
        %v4551 = vunpack.c.h.b16 %v3870
        %v4552 = vunpack.c.l.b16 %v3871
        %v4553 = vunpack.c.h.b16 %v3871
        %v4554 = vunpack.c.l.b16 %v3872
        %v4555 = vunpack.c.h.b16 %v3872
        %v4556 = vunpack.c.l.b16 %v3873
        %v4557 = vunpack.c.h.b16 %v3873
        %v4558 = vunpack.c.l.b16 %v3874
        %v4559 = vunpack.c.h.b16 %v3874
        %v4560 = vunpack.c.l.b16 %v3875
        %v4561 = vunpack.c.h.b16 %v3875
        %v4562 = vunpack.c.l.b16 %v3876
        %v4563 = vunpack.c.h.b16 %v3876
        %v4564 = vunpack.c.l.b16 %v3877
        %v4565 = vunpack.c.h.b16 %v3877
        %v4566 = vunpack.c.l.b16 %v3878
        %v4567 = vunpack.c.h.b16 %v3878
        %v4568 = vunpack.c.l.b16 %v3879
        %v4569 = vunpack.c.h.b16 %v3879
        %v4570 = vunpack.c.l.b16 %v3880
        %v4571 = vunpack.c.h.b16 %v3880
        %v4572 = vunpack.c.l.b16 %v3881
        %v4573 = vunpack.c.h.b16 %v3881
        %v4574 = vunpack.c.l.b16 %v3882
        %v4575 = vunpack.c.h.b16 %v3882
        %v4576 = vunpack.c.l.b16 %v3883
        %v4577 = vunpack.c.h.b16 %v3883
        %v4578 = vunpack.c.l.b16 %v3884
        %v4579 = vunpack.c.h.b16 %v3884
        %v4580 = vunpack.c.l.b16 %v3885
        %v4581 = vunpack.c.h.b16 %v3885
        %v4582 = vunpack.c.l.b16 %v3886
        %v4583 = vunpack.c.h.b16 %v3886
        %v4584 = vunpack.c.l.b16 %v3887
        %v4585 = vunpack.c.h.b16 %v3887
        %v4586 = vunpack.c.l.b16 %v3888
        %v4587 = vunpack.c.h.b16 %v3888
        %v4588 = vunpack.c.l.b16 %v3889
        %v4589 = vunpack.c.h.b16 %v3889
        %v4590 = vunpack.c.l.b16 %v3890
        %v4591 = vunpack.c.h.b16 %v3890
        %v4592 = vunpack.c.l.b16 %v3891
        %v4593 = vunpack.c.h.b16 %v3891
        %v4594 = vunpack.c.l.b16 %v3892
        %v4595 = vunpack.c.h.b16 %v3892
        %v4596 = vunpack.c.l.b16 %v3893
        %v4597 = vunpack.c.h.b16 %v3893
        %v4598 = vunpack.c.l.b16 %v3894
        %v4599 = vunpack.c.h.b16 %v3894
        %v4600 = vunpack.c.l.b16 %v3895
        %v4601 = vunpack.c.h.b16 %v3895
        %v4602 = vunpack.c.l.b16 %v3896
        %v4603 = vunpack.c.h.b16 %v3896
        %v4604 = vunpack.c.l.b16 %v3897
        %v4605 = vunpack.c.h.b16 %v3897
        %v4606 = vunpack.c.l.b16 %v3898
        %v4607 = vunpack.c.h.b16 %v3898
        %v4608 = vunpack.c.l.b16 %v3899
        %v4609 = vunpack.c.h.b16 %v3899
        %v4610 = vunpack.c.l.b16 %v3900
        %v4611 = vunpack.c.h.b16 %v3900
        %v4612 = vunpack.c.l.b16 %v3901
        %v4613 = vunpack.c.h.b16 %v3901
        %v4614 = vunpack.c.l.b16 %v3902
        %v4615 = vunpack.c.h.b16 %v3902
        %v4616 = vunpack.c.l.b16 %v3903
        %v4617 = vunpack.c.h.b16 %v3903
        %v4618 = vunpack.c.l.b16 %v3904
        %v4619 = vunpack.c.h.b16 %v3904
        %v4620 = vunpack.c.l.b16 %v3905
        %v4621 = vunpack.c.h.b16 %v3905
        %v4622 = vunpack.c.l.b16 %v3906
        %v4623 = vunpack.c.h.b16 %v3906
        %v4624 = vunpack.c.l.b16 %v3907
        %v4625 = vunpack.c.h.b16 %v3907
        %v4626 = vunpack.c.l.b16 %v3908
        %v4627 = vunpack.c.h.b16 %v3908
        %v4628 = vunpack.c.l.b16 %v3909
        %v4629 = vunpack.c.h.b16 %v3909
        %v4630 = vunpack.c.l.b16 %v3910
        %v4631 = vunpack.c.h.b16 %v3910
        %v4632 = vunpack.c.l.b16 %v3911
        %v4633 = vunpack.c.h.b16 %v3911
        %v4634 = vunpack.c.l.b16 %v3912
        %v4635 = vunpack.c.h.b16 %v3912
        %v4636 = vunpack.c.l.b16 %v3913
        %v4637 = vunpack.c.h.b16 %v3913
        %v4638 = vunpack.c.l.b16 %v3914
        %v4639 = vunpack.c.h.b16 %v3914
        %v4640 = vunpack.c.l.b16 %v3915
        %v4641 = vunpack.c.h.b16 %v3915
        %v4642 = vunpack.c.l.b16 %v3916
        %v4643 = vunpack.c.h.b16 %v3916
        %v4644 = vunpack.c.l.b16 %v3917
        %v4645 = vunpack.c.h.b16 %v3917
        %v4646 = vunpack.c.l.b16 %v3918
        %v4647 = vunpack.c.h.b16 %v3918
        %v4648 = vunpack.c.l.b16 %v3919
        %v4649 = vunpack.c.h.b16 %v3919
        %v4650 = vunpack.c.l.b16 %v3920
        %v4651 = vunpack.c.h.b16 %v3920
        %v4652 = vunpack.c.l.b16 %v3921
        %v4653 = vunpack.c.h.b16 %v3921
        %v4654 = vunpack.c.l.b16 %v3922
        %v4655 = vunpack.c.h.b16 %v3922
        %v4656 = vunpack.c.l.b16 %v3923
        %v4657 = vunpack.c.h.b16 %v3923
        %v4658 = vunpack.c.l.b16 %v3924
        %v4659 = vunpack.c.h.b16 %v3924
        %v4660 = vunpack.c.l.b16 %v3925
        %v4661 = vunpack.c.h.b16 %v3925
        %v4662 = vunpack.c.l.b16 %v3926
        %v4663 = vunpack.c.h.b16 %v3926
        %v4664 = vunpack.c.l.b16 %v3927
        %v4665 = vunpack.c.h.b16 %v3927
        %v4666 = vunpack.c.l.b16 %v3928
        %v4667 = vunpack.c.h.b16 %v3928
        %v4668 = vunpack.c.l.b16 %v3929
        %v4669 = vunpack.c.h.b16 %v3929
        %v4670 = vunpack.c.l.b16 %v3930
        %v4671 = vunpack.c.h.b16 %v3930
        %v4672 = vunpack.c.l.b16 %v3931
        %v4673 = vunpack.c.h.b16 %v3931
        %v4674 = vunpack.c.l.b16 %v3932
        %v4675 = vunpack.c.h.b16 %v3932
        %v4676 = vunpack.c.l.b16 %v3933
        %v4677 = vunpack.c.h.b16 %v3933
        %v4678 = vunpack.c.l.b16 %v3934
        %v4679 = vunpack.c.h.b16 %v3934
        %v4680 = vunpack.c.l.b16 %v3935
        %v4681 = vunpack.c.h.b16 %v3935
        %v4682 = vunpack.c.l.b16 %v3936
        %v4683 = vunpack.c.h.b16 %v3936
        %v4684 = vunpack.c.l.b16 %v3937
        %v4685 = vunpack.c.h.b16 %v3937
        %v4686 = vunpack.c.l.b16 %v3938
        %v4687 = vunpack.c.h.b16 %v3938
        %v4688 = vunpack.c.l.b16 %v3939
        %v4689 = vunpack.c.h.b16 %v3939
        %v4690 = vunpack.c.l.b16 %v3940
        %v4691 = vunpack.c.h.b16 %v3940
        %v4692 = vunpack.c.l.b16 %v3941
        %v4693 = vunpack.c.h.b16 %v3941
        %v4694 = vunpack.c.l.b16 %v3942
        %v4695 = vunpack.c.h.b16 %v3942
        %v4696 = vunpack.c.l.b16 %v3943
        %v4697 = vunpack.c.h.b16 %v3943
        %v4698 = vunpack.c.l.b16 %v3944
        %v4699 = vunpack.c.h.b16 %v3944
        %v4700 = vunpack.c.l.b16 %v3945
        %v4701 = vunpack.c.h.b16 %v3945
        %v4702 = vunpack.c.l.b16 %v3946
        %v4703 = vunpack.c.h.b16 %v3946
        %v4704 = vunpack.c.l.b16 %v3947
        %v4705 = vunpack.c.h.b16 %v3947
        %v4706 = vunpack.c.l.b16 %v3948
        %v4707 = vunpack.c.h.b16 %v3948
        %v4708 = vunpack.c.l.b16 %v3949
        %v4709 = vunpack.c.h.b16 %v3949
        %v4710 = vunpack.c.l.b16 %v3950
        %v4711 = vunpack.c.h.b16 %v3950
        %v4712 = vunpack.c.l.b16 %v3951
        %v4713 = vunpack.c.h.b16 %v3951
        %v4714 = vunpack.c.l.b16 %v3952
        %v4715 = vunpack.c.h.b16 %v3952
        %v4716 = vunpack.c.l.b16 %v3953
        %v4717 = vunpack.c.h.b16 %v3953
        %v4718 = vunpack.c.l.b16 %v3954
        %v4719 = vunpack.c.h.b16 %v3954
        %v4720 = vunpack.c.l.b16 %v3955
        %v4721 = vunpack.c.h.b16 %v3955
        %v4722 = vunpack.c.l.b16 %v3956
        %v4723 = vunpack.c.h.b16 %v3956
        %v4724 = vunpack.c.l.b16 %v3957
        %v4725 = vunpack.c.h.b16 %v3957
        %v4726 = vunpack.c.l.b16 %v3958
        %v4727 = vunpack.c.h.b16 %v3958
        %v4728 = vunpack.c.l.b16 %v3959
        %v4729 = vunpack.c.h.b16 %v3959
        %v4730 = vunpack.c.l.b16 %v3960
        %v4731 = vunpack.c.h.b16 %v3960
        %v4732 = vunpack.c.l.b16 %v3961
        %v4733 = vunpack.c.h.b16 %v3961
        %v4734 = vunpack.c.l.b16 %v3962
        %v4735 = vunpack.c.h.b16 %v3962
        %v4736 = vunpack.c.l.b16 %v3963
        %v4737 = vunpack.c.h.b16 %v3963
        %v4738 = vunpack.c.l.b16 %v3964
        %v4739 = vunpack.c.h.b16 %v3964
        %v4740 = vunpack.c.l.b16 %v3965
        %v4741 = vunpack.c.h.b16 %v3965
        %v4742 = vunpack.c.l.b16 %v3966
        %v4743 = vunpack.c.h.b16 %v3966
        %v4744 = vunpack.c.l.b16 %v3967
        %v4745 = vunpack.c.h.b16 %v3967
        %v4746 = vunpack.c.l.b16 %v3968
        %v4747 = vunpack.c.h.b16 %v3968
        %v4748 = vunpack.c.l.b16 %v3969
        %v4749 = vunpack.c.h.b16 %v3969
        %v4750 = vunpack.c.l.b16 %v3970
        %v4751 = vunpack.c.h.b16 %v3970
        %v4752 = vunpack.c.l.b16 %v3971
        %v4753 = vunpack.c.h.b16 %v3971
        %v4754 = vunpack.c.l.b16 %v3972
        %v4755 = vunpack.c.h.b16 %v3972
        %v4756 = vunpack.c.l.b16 %v3973
        %v4757 = vunpack.c.h.b16 %v3973
        %v4758 = vunpack.c.l.b16 %v3974
        %v4759 = vunpack.c.h.b16 %v3974
        %v4760 = vunpack.c.l.b16 %v3975
        %v4761 = vunpack.c.h.b16 %v3975
        %v4762 = vunpack.c.l.b16 %v3976
        %v4763 = vunpack.c.h.b16 %v3976
        %v4764 = vunpack.c.l.b16 %v3977
        %v4765 = vunpack.c.h.b16 %v3977
        %v4766 = vunpack.c.l.b16 %v3978
        %v4767 = vunpack.c.h.b16 %v3978
        %v4768 = vunpack.c.l.b16 %v3979
        %v4769 = vunpack.c.h.b16 %v3979
        %v4770 = vunpack.c.l.b16 %v3980
        %v4771 = vunpack.c.h.b16 %v3980
        %v4772 = vunpack.c.l.b16 %v3981
        %v4773 = vunpack.c.h.b16 %v3981
        %v4774 = vunpack.c.l.b16 %v3982
        %v4775 = vunpack.c.h.b16 %v3982
        %v4776 = vunpack.c.l.b16 %v3983
        %v4777 = vunpack.c.h.b16 %v3983
        %v4778 = vunpack.c.l.b16 %v3984
        %v4779 = vunpack.c.h.b16 %v3984
        %v4780 = vunpack.c.l.b16 %v3985
        %v4781 = vunpack.c.h.b16 %v3985
        %v4782 = vunpack.c.l.b16 %v3986
        %v4783 = vunpack.c.h.b16 %v3986
        %v4784 = vunpack.c.l.b16 %v3987
        %v4785 = vunpack.c.h.b16 %v3987
        %v4786 = vunpack.c.l.b16 %v3988
        %v4787 = vunpack.c.h.b16 %v3988
        %v4788 = vunpack.c.l.b16 %v3989
        %v4789 = vunpack.c.h.b16 %v3989
        %v4790 = vunpack.c.l.b16 %v3990
        %v4791 = vunpack.c.h.b16 %v3990
        %v4792 = vunpack.c.l.b16 %v3991
        %v4793 = vunpack.c.h.b16 %v3991
        %v4794 = vunpack.c.l.b16 %v3992
        %v4795 = vunpack.c.h.b16 %v3992
        %v4796 = vunpack.c.l.b16 %v3993
        %v4797 = vunpack.c.h.b16 %v3993
        %v4798 = vunpack.c.l.b16 %v3994
        %v4799 = vunpack.c.h.b16 %v3994
        %v4800 = vunpack.c.l.b16 %v3995
        %v4801 = vunpack.c.h.b16 %v3995
        %v4802 = vunpack.c.l.b16 %v3996
        %v4803 = vunpack.c.h.b16 %v3996
        %v4804 = vunpack.c.l.b16 %v3997
        %v4805 = vunpack.c.h.b16 %v3997
        %v4806 = vunpack.c.l.b16 %v3998
        %v4807 = vunpack.c.h.b16 %v3998
        %v4808 = vunpack.c.l.b16 %v3999
        %v4809 = vunpack.c.h.b16 %v3999
        %v4810 = vunpack.c.l.b16 %v4000
        %v4811 = vunpack.c.h.b16 %v4000
        %v4812 = vunpack.c.l.b16 %v4001
        %v4813 = vunpack.c.h.b16 %v4001
        %v4814 = vunpack.c.l.b16 %v4002
        %v4815 = vunpack.c.h.b16 %v4002
        %v4816 = vunpack.c.l.b16 %v4003
        %v4817 = vunpack.c.h.b16 %v4003
        %v4818 = vunpack.c.l.b16 %v4004
        %v4819 = vunpack.c.h.b16 %v4004
        %v4820 = vunpack.c.l.b16 %v4005
        %v4821 = vunpack.c.h.b16 %v4005
        %v4822 = vunpack.c.l.b16 %v4006
        %v4823 = vunpack.c.h.b16 %v4006
        %v4824 = vunpack.c.l.b16 %v4007
        %v4825 = vunpack.c.h.b16 %v4007
        %v4826 = vunpack.c.l.b16 %v4008
        %v4827 = vunpack.c.h.b16 %v4008
        %v4828 = vunpack.c.l.b16 %v4009
        %v4829 = vunpack.c.h.b16 %v4009
        %v4830 = vunpack.c.l.b16 %v4010
        %v4831 = vunpack.c.h.b16 %v4010
        %v4832 = vunpack.c.l.b16 %v4011
        %v4833 = vunpack.c.h.b16 %v4011
        %v4834 = vunpack.c.l.b16 %v4012
        %v4835 = vunpack.c.h.b16 %v4012
        %v4836 = vunpack.c.l.b16 %v4013
        %v4837 = vunpack.c.h.b16 %v4013
        %v4838 = vunpack.c.l.b16 %v4014
        %v4839 = vunpack.c.h.b16 %v4014
        %v4840 = vunpack.c.l.b16 %v4015
        %v4841 = vunpack.c.h.b16 %v4015
        %v4842 = vunpack.c.l.b16 %v4016
        %v4843 = vunpack.c.h.b16 %v4016
        %v4844 = vunpack.c.l.b16 %v4017
        %v4845 = vunpack.c.h.b16 %v4017
        %v4846 = vunpack.c.l.b16 %v4018
        %v4847 = vunpack.c.h.b16 %v4018
        %v4848 = vunpack.c.l.b16 %v4019
        %v4849 = vunpack.c.h.b16 %v4019
        %v4850 = vunpack.c.l.b16 %v4020
        %v4851 = vunpack.c.h.b16 %v4020
        %v4852 = vunpack.c.l.b16 %v4021
        %v4853 = vunpack.c.h.b16 %v4021
        %v4854 = vunpack.c.l.b16 %v4022
        %v4855 = vunpack.c.h.b16 %v4022
        %v4856 = vunpack.c.l.b16 %v4023
        %v4857 = vunpack.c.h.b16 %v4023
        %v4858 = vunpack.c.l.b16 %v4024
        %v4859 = vunpack.c.h.b16 %v4024
        %v4860 = vunpack.c.l.b16 %v4025
        %v4861 = vunpack.c.h.b16 %v4025
        %v4862 = vunpack.c.l.b16 %v4026
        %v4863 = vunpack.c.h.b16 %v4026
        %v4864 = vunpack.c.l.b16 %v4027
        %v4865 = vunpack.c.h.b16 %v4027
        %v4866 = vunpack.c.l.b16 %v4028
        %v4867 = vunpack.c.h.b16 %v4028
        %v4868 = vunpack.c.l.b16 %v4029
        %v4869 = vunpack.c.h.b16 %v4029
        %v4870 = vunpack.c.l.b16 %v4030
        %v4871 = vunpack.c.h.b16 %v4030
        %v4872 = vunpack.c.l.b16 %v4031
        %v4873 = vunpack.c.h.b16 %v4031
        %v4874 = vunpack.c.l.b16 %v4032
        %v4875 = vunpack.c.h.b16 %v4032
        %v4876 = vunpack.c.l.b16 %v4033
        %v4877 = vunpack.c.h.b16 %v4033
        %v4878 = vunpack.c.l.b16 %v4034
        %v4879 = vunpack.c.h.b16 %v4034
        %v4880 = vunpack.c.l.b16 %v4035
        %v4881 = vunpack.c.h.b16 %v4035
        %v4882 = vunpack.c.l.b16 %v4036
        %v4883 = vunpack.c.h.b16 %v4036
        %v4884 = vunpack.c.l.b16 %v4037
        %v4885 = vunpack.c.h.b16 %v4037
        %v4886 = vunpack.c.l.b16 %v4038
        %v4887 = vunpack.c.h.b16 %v4038
        %v4888 = vunpack.c.l.b16 %v4039
        %v4889 = vunpack.c.h.b16 %v4039
        %v4890 = vunpack.c.l.b16 %v4040
        %v4891 = vunpack.c.h.b16 %v4040
        %v4892 = vunpack.c.l.b16 %v4041
        %v4893 = vunpack.c.h.b16 %v4041
        %v4894 = vunpack.c.l.b16 %v4042
        %v4895 = vunpack.c.h.b16 %v4042
        %v4896 = vunpack.c.l.b16 %v4043
        %v4897 = vunpack.c.h.b16 %v4043
        %v4898 = vunpack.c.l.b16 %v4044
        %v4899 = vunpack.c.h.b16 %v4044
        %v4900 = vunpack.c.l.b16 %v4045
        %v4901 = vunpack.c.h.b16 %v4045
        %v4902 = vunpack.c.l.b16 %v4046
        %v4903 = vunpack.c.h.b16 %v4046
        %v4904 = vunpack.c.l.b16 %v4047
        %v4905 = vunpack.c.h.b16 %v4047
        %v4906 = vunpack.c.l.b16 %v4048
        %v4907 = vunpack.c.h.b16 %v4048
        %v4908 = vunpack.c.l.b16 %v4049
        %v4909 = vunpack.c.h.b16 %v4049
        %v4910 = vunpack.c.l.b16 %v4050
        %v4911 = vunpack.c.h.b16 %v4050
        %v4912 = vunpack.c.l.b16 %v4051
        %v4913 = vunpack.c.h.b16 %v4051
        %v4914 = vunpack.c.l.b16 %v4052
        %v4915 = vunpack.c.h.b16 %v4052
        %v4916 = vunpack.c.l.b16 %v4053
        %v4917 = vunpack.c.h.b16 %v4053
        %v4918 = vunpack.c.l.b16 %v4054
        %v4919 = vunpack.c.h.b16 %v4054
        %v4920 = vunpack.c.l.b16 %v4055
        %v4921 = vunpack.c.h.b16 %v4055
        %v4922 = vunpack.c.l.b16 %v4056
        %v4923 = vunpack.c.h.b16 %v4056
        %v4924 = vunpack.c.l.b16 %v4057
        %v4925 = vunpack.c.h.b16 %v4057
        %v4926 = vunpack.c.l.b16 %v4058
        %v4927 = vunpack.c.h.b16 %v4058
        %v4928 = vunpack.c.l.b16 %v4059
        %v4929 = vunpack.c.h.b16 %v4059
        %v4930 = vunpack.c.l.b16 %v4060
        %v4931 = vunpack.c.h.b16 %v4060
        %v4932 = vunpack.c.l.b16 %v4061
        %v4933 = vunpack.c.h.b16 %v4061
        %v4934 = vunpack.c.l.b16 %v4062
        %v4935 = vunpack.c.h.b16 %v4062
        %v4936 = vunpack.c.l.b16 %v4063
        %v4937 = vunpack.c.h.b16 %v4063
        %v4938 = vunpack.c.l.b16 %v4064
        %v4939 = vunpack.c.h.b16 %v4064
        %v4940 = vunpack.c.l.b16 %v4065
        %v4941 = vunpack.c.h.b16 %v4065
        %v4942 = vunpack.c.l.b16 %v4066
        %v4943 = vunpack.c.h.b16 %v4066
        %v4944 = vunpack.c.l.b16 %v4067
        %v4945 = vunpack.c.h.b16 %v4067
        %v4946 = vunpack.c.l.b16 %v4068
        %v4947 = vunpack.c.h.b16 %v4068
        %v4948 = vunpack.c.l.b16 %v4069
        %v4949 = vunpack.c.h.b16 %v4069
        %v4950 = vunpack.c.l.b16 %v4070
        %v4951 = vunpack.c.h.b16 %v4070
        %v4952 = vunpack.c.l.b16 %v4071
        %v4953 = vunpack.c.h.b16 %v4071
        %v4954 = vunpack.c.l.b16 %v4072
        %v4955 = vunpack.c.h.b16 %v4072
        %v4956 = vunpack.c.l.b16 %v4073
        %v4957 = vunpack.c.h.b16 %v4073
        %v4958 = vunpack.c.l.b16 %v4074
        %v4959 = vunpack.c.h.b16 %v4074
        %v4960 = vunpack.c.l.b16 %v4075
        %v4961 = vunpack.c.h.b16 %v4075
        %v4962 = vunpack.c.l.b16 %v4076
        %v4963 = vunpack.c.h.b16 %v4076
        %v4964 = vunpack.c.l.b16 %v4077
        %v4965 = vunpack.c.h.b16 %v4077
        %v4966 = vunpack.c.l.b16 %v4078
        %v4967 = vunpack.c.h.b16 %v4078
        %v4968 = vunpack.c.l.b16 %v4079
        %v4969 = vunpack.c.h.b16 %v4079
        %v4970 = vunpack.c.l.b16 %v4080
        %v4971 = vunpack.c.h.b16 %v4080
        %v4972 = vunpack.c.l.b16 %v4081
        %v4973 = vunpack.c.h.b16 %v4081
        %v4974 = vunpack.c.l.b16 %v4082
        %v4975 = vunpack.c.h.b16 %v4082
        %v4976 = vunpack.c.l.b16 %v4083
        %v4977 = vunpack.c.h.b16 %v4083
        %v4978 = vunpack.c.l.b16 %v4084
        %v4979 = vunpack.c.h.b16 %v4084
        %v4980 = vunpack.c.l.b16 %v4085
        %v4981 = vunpack.c.h.b16 %v4085
        %v4982 = vunpack.c.l.b16 %v4086
        %v4983 = vunpack.c.h.b16 %v4086
        %v4984 = vunpack.c.l.b16 %v4087
        %v4985 = vunpack.c.h.b16 %v4087
        %v4986 = vunpack.c.l.b16 %v4088
        %v4987 = vunpack.c.h.b16 %v4088
        %v4988 = vunpack.c.l.b16 %v4089
        %v4989 = vunpack.c.h.b16 %v4089
        %v4990 = vunpack.c.l.b16 %v4090
        %v4991 = vunpack.c.h.b16 %v4090
        %v4992 = vunpack.c.l.b16 %v4091
        %v4993 = vunpack.c.h.b16 %v4091
        %v4994 = vunpack.c.l.b16 %v4092
        %v4995 = vunpack.c.h.b16 %v4092
        %v4996 = vunpack.c.l.b16 %v4093
        %v4997 = vunpack.c.h.b16 %v4093
        %v4998 = vunpack.c.l.b16 %v4094
        %v4999 = vunpack.c.h.b16 %v4094
        %v5000 = vunpack.c.l.b16 %v4095
        %v5001 = vunpack.c.h.b16 %v4095
        %v5002 = vunpack.c.l.b16 %v4096
        %v5003 = vunpack.c.h.b16 %v4096
        %v5004 = vunpack.c.l.b16 %v4097
        %v5005 = vunpack.c.h.b16 %v4097
        %v5006 = vunpack.c.l.b16 %v4098
        %v5007 = vunpack.c.h.b16 %v4098
        %v5008 = vunpack.c.l.b16 %v4099
        %v5009 = vunpack.c.h.b16 %v4099
        %v5010 = vunpack.c.l.b16 %v4100
        %v5011 = vunpack.c.h.b16 %v4100
        %v5012 = vunpack.c.l.b16 %v4101
        %v5013 = vunpack.c.h.b16 %v4101
        %v5014 = vunpack.c.l.b16 %v4102
        %v5015 = vunpack.c.h.b16 %v4102
        %v5016 = vunpack.c.l.b16 %v4103
        %v5017 = vunpack.c.h.b16 %v4103
        %v5018 = vunpack.c.l.b16 %v4104
        %v5019 = vunpack.c.h.b16 %v4104
        %v5020 = vunpack.c.l.b16 %v4105
        %v5021 = vunpack.c.h.b16 %v4105
        %v5022 = vunpack.c.l.b16 %v4106
        %v5023 = vunpack.c.h.b16 %v4106
        %v5024 = vunpack.c.l.b16 %v4107
        %v5025 = vunpack.c.h.b16 %v4107
        %v5026 = vunpack.c.l.b16 %v4108
        %v5027 = vunpack.c.h.b16 %v4108
        %v5028 = vunpack.c.l.b16 %v4109
        %v5029 = vunpack.c.h.b16 %v4109
        %v5030 = vunpack.c.l.b16 %v4110
        %v5031 = vunpack.c.h.b16 %v4110
        %v5032 = vunpack.c.l.b16 %v4111
        %v5033 = vunpack.c.h.b16 %v4111
        %v5034 = vunpack.c.l.b16 %v4112
        %v5035 = vunpack.c.h.b16 %v4112
        %v5036 = vunpack.c.l.b16 %v4113
        %v5037 = vunpack.c.h.b16 %v4113
        %v5038 = vunpack.c.l.b16 %v4114
        %v5039 = vunpack.c.h.b16 %v4114
        %v5040 = vunpack.c.l.b16 %v4115
        %v5041 = vunpack.c.h.b16 %v4115
        %v5042 = vunpack.c.l.b16 %v4116
        %v5043 = vunpack.c.h.b16 %v4116
        %v5044 = vunpack.c.l.b16 %v4117
        %v5045 = vunpack.c.h.b16 %v4117
        %v5046 = vpack.c.b16 %v4482, %v4470
        %v5047 = vpack.c.b16 %v4483, %v4471
        %v5048 = vpack.c.b16 %v4484, %v4472
        %v5049 = vpack.c.b16 %v4485, %v4473
        %v5050 = vpack.c.b16 %v4486, %v4474
        %v5051 = vpack.c.b16 %v4487, %v4475
        %v5052 = vpack.c.b16 %v4488, %v4476
        %v5053 = vpack.c.b16 %v4489, %v4477
        %v5054 = vpack.c.b16 %v4490, %v4478
        %v5055 = vpack.c.b16 %v4491, %v4479
        %v5056 = vpack.c.b16 %v4492, %v4480
        %v5057 = vpack.c.b16 %v4493, %v4481
        %v5058 = vpack.c.b16 %v4506, %v4494
        %v5059 = vpack.c.b16 %v4507, %v4495
        %v5060 = vpack.c.b16 %v4508, %v4496
        %v5061 = vpack.c.b16 %v4509, %v4497
        %v5062 = vpack.c.b16 %v4510, %v4498
        %v5063 = vpack.c.b16 %v4511, %v4499
        %v5064 = vpack.c.b16 %v4512, %v4500
        %v5065 = vpack.c.b16 %v4513, %v4501
        %v5066 = vpack.c.b16 %v4514, %v4502
        %v5067 = vpack.c.b16 %v4515, %v4503
        %v5068 = vpack.c.b16 %v4516, %v4504
        %v5069 = vpack.c.b16 %v4517, %v4505
        %v5070 = vpack.c.b16 %v4530, %v4518
        %v5071 = vpack.c.b16 %v4531, %v4519
        %v5072 = vpack.c.b16 %v4532, %v4520
        %v5073 = vpack.c.b16 %v4533, %v4521
        %v5074 = vpack.c.b16 %v4534, %v4522
        %v5075 = vpack.c.b16 %v4535, %v4523
        %v5076 = vpack.c.b16 %v4536, %v4524
        %v5077 = vpack.c.b16 %v4537, %v4525
        %v5078 = vpack.c.b16 %v4538, %v4526
        %v5079 = vpack.c.b16 %v4539, %v4527
        %v5080 = vpack.c.b16 %v4540, %v4528
        %v5081 = vpack.c.b16 %v4541, %v4529
        %v5082 = vpack.c.b16 %v4554, %v4542
        %v5083 = vpack.c.b16 %v4555, %v4543
        %v5084 = vpack.c.b16 %v4556, %v4544
        %v5085 = vpack.c.b16 %v4557, %v4545
        %v5086 = vpack.c.b16 %v4558, %v4546
        %v5087 = vpack.c.b16 %v4559, %v4547
        %v5088 = vpack.c.b16 %v4560, %v4548
        %v5089 = vpack.c.b16 %v4561, %v4549
        %v5090 = vpack.c.b16 %v4562, %v4550
        %v5091 = vpack.c.b16 %v4563, %v4551
        %v5092 = vpack.c.b16 %v4564, %v4552
        %v5093 = vpack.c.b16 %v4565, %v4553
        %v5094 = vpack.c.b16 %v4578, %v4566
        %v5095 = vpack.c.b16 %v4579, %v4567
        %v5096 = vpack.c.b16 %v4580, %v4568
        %v5097 = vpack.c.b16 %v4581, %v4569
        %v5098 = vpack.c.b16 %v4582, %v4570
        %v5099 = vpack.c.b16 %v4583, %v4571
        %v5100 = vpack.c.b16 %v4584, %v4572
        %v5101 = vpack.c.b16 %v4585, %v4573
        %v5102 = vpack.c.b16 %v4586, %v4574
        %v5103 = vpack.c.b16 %v4587, %v4575
        %v5104 = vpack.c.b16 %v4588, %v4576
        %v5105 = vpack.c.b16 %v4589, %v4577
        %v5106 = vpack.c.b16 %v4602, %v4590
        %v5107 = vpack.c.b16 %v4603, %v4591
        %v5108 = vpack.c.b16 %v4604, %v4592
        %v5109 = vpack.c.b16 %v4605, %v4593
        %v5110 = vpack.c.b16 %v4606, %v4594
        %v5111 = vpack.c.b16 %v4607, %v4595
        %v5112 = vpack.c.b16 %v4608, %v4596
        %v5113 = vpack.c.b16 %v4609, %v4597
        %v5114 = vpack.c.b16 %v4610, %v4598
        %v5115 = vpack.c.b16 %v4611, %v4599
        %v5116 = vpack.c.b16 %v4612, %v4600
        %v5117 = vpack.c.b16 %v4613, %v4601
        %v5118 = vpack.c.b16 %v4626, %v4614
        %v5119 = vpack.c.b16 %v4627, %v4615
        %v5120 = vpack.c.b16 %v4628, %v4616
        %v5121 = vpack.c.b16 %v4629, %v4617
        %v5122 = vpack.c.b16 %v4630, %v4618
        %v5123 = vpack.c.b16 %v4631, %v4619
        %v5124 = vpack.c.b16 %v4632, %v4620
        %v5125 = vpack.c.b16 %v4633, %v4621
        %v5126 = vpack.c.b16 %v4634, %v4622
        %v5127 = vpack.c.b16 %v4635, %v4623
        %v5128 = vpack.c.b16 %v4636, %v4624
        %v5129 = vpack.c.b16 %v4637, %v4625
        %v5130 = vpack.c.b16 %v4650, %v4638
        %v5131 = vpack.c.b16 %v4651, %v4639
        %v5132 = vpack.c.b16 %v4652, %v4640
        %v5133 = vpack.c.b16 %v4653, %v4641
        %v5134 = vpack.c.b16 %v4654, %v4642
        %v5135 = vpack.c.b16 %v4655, %v4643
        %v5136 = vpack.c.b16 %v4656, %v4644
        %v5137 = vpack.c.b16 %v4657, %v4645
        %v5138 = vpack.c.b16 %v4658, %v4646
        %v5139 = vpack.c.b16 %v4659, %v4647
        %v5140 = vpack.c.b16 %v4660, %v4648
        %v5141 = vpack.c.b16 %v4661, %v4649
        %v5142 = vpack.c.b16 %v4674, %v4662
        %v5143 = vpack.c.b16 %v4675, %v4663
        %v5144 = vpack.c.b16 %v4676, %v4664
        %v5145 = vpack.c.b16 %v4677, %v4665
        %v5146 = vpack.c.b16 %v4678, %v4666
        %v5147 = vpack.c.b16 %v4679, %v4667
        %v5148 = vpack.c.b16 %v4680, %v4668
        %v5149 = vpack.c.b16 %v4681, %v4669
        %v5150 = vpack.c.b16 %v4682, %v4670
        %v5151 = vpack.c.b16 %v4683, %v4671
        %v5152 = vpack.c.b16 %v4684, %v4672
        %v5153 = vpack.c.b16 %v4685, %v4673
        %v5154 = vpack.c.b16 %v4698, %v4686
        %v5155 = vpack.c.b16 %v4699, %v4687
        %v5156 = vpack.c.b16 %v4700, %v4688
        %v5157 = vpack.c.b16 %v4701, %v4689
        %v5158 = vpack.c.b16 %v4702, %v4690
        %v5159 = vpack.c.b16 %v4703, %v4691
        %v5160 = vpack.c.b16 %v4704, %v4692
        %v5161 = vpack.c.b16 %v4705, %v4693
        %v5162 = vpack.c.b16 %v4706, %v4694
        %v5163 = vpack.c.b16 %v4707, %v4695
        %v5164 = vpack.c.b16 %v4708, %v4696
        %v5165 = vpack.c.b16 %v4709, %v4697
        %v5166 = vpack.c.b16 %v4722, %v4710
        %v5167 = vpack.c.b16 %v4723, %v4711
        %v5168 = vpack.c.b16 %v4724, %v4712
        %v5169 = vpack.c.b16 %v4725, %v4713
        %v5170 = vpack.c.b16 %v4726, %v4714
        %v5171 = vpack.c.b16 %v4727, %v4715
        %v5172 = vpack.c.b16 %v4728, %v4716
        %v5173 = vpack.c.b16 %v4729, %v4717
        %v5174 = vpack.c.b16 %v4730, %v4718
        %v5175 = vpack.c.b16 %v4731, %v4719
        %v5176 = vpack.c.b16 %v4732, %v4720
        %v5177 = vpack.c.b16 %v4733, %v4721
        %v5178 = vpack.c.b16 %v4746, %v4734
        %v5179 = vpack.c.b16 %v4747, %v4735
        %v5180 = vpack.c.b16 %v4748, %v4736
        %v5181 = vpack.c.b16 %v4749, %v4737
        %v5182 = vpack.c.b16 %v4750, %v4738
        %v5183 = vpack.c.b16 %v4751, %v4739
        %v5184 = vpack.c.b16 %v4752, %v4740
        %v5185 = vpack.c.b16 %v4753, %v4741
        %v5186 = vpack.c.b16 %v4754, %v4742
        %v5187 = vpack.c.b16 %v4755, %v4743
        %v5188 = vpack.c.b16 %v4756, %v4744
        %v5189 = vpack.c.b16 %v4757, %v4745
        %v5190 = vpack.c.b16 %v4770, %v4758
        %v5191 = vpack.c.b16 %v4771, %v4759
        %v5192 = vpack.c.b16 %v4772, %v4760
        %v5193 = vpack.c.b16 %v4773, %v4761
        %v5194 = vpack.c.b16 %v4774, %v4762
        %v5195 = vpack.c.b16 %v4775, %v4763
        %v5196 = vpack.c.b16 %v4776, %v4764
        %v5197 = vpack.c.b16 %v4777, %v4765
        %v5198 = vpack.c.b16 %v4778, %v4766
        %v5199 = vpack.c.b16 %v4779, %v4767
        %v5200 = vpack.c.b16 %v4780, %v4768
        %v5201 = vpack.c.b16 %v4781, %v4769
        %v5202 = vpack.c.b16 %v4794, %v4782
        %v5203 = vpack.c.b16 %v4795, %v4783
        %v5204 = vpack.c.b16 %v4796, %v4784
        %v5205 = vpack.c.b16 %v4797, %v4785
        %v5206 = vpack.c.b16 %v4798, %v4786
        %v5207 = vpack.c.b16 %v4799, %v4787
        %v5208 = vpack.c.b16 %v4800, %v4788
        %v5209 = vpack.c.b16 %v4801, %v4789
        %v5210 = vpack.c.b16 %v4802, %v4790
        %v5211 = vpack.c.b16 %v4803, %v4791
        %v5212 = vpack.c.b16 %v4804, %v4792
        %v5213 = vpack.c.b16 %v4805, %v4793
        %v5214 = vpack.c.b16 %v4818, %v4806
        %v5215 = vpack.c.b16 %v4819, %v4807
        %v5216 = vpack.c.b16 %v4820, %v4808
        %v5217 = vpack.c.b16 %v4821, %v4809
        %v5218 = vpack.c.b16 %v4822, %v4810
        %v5219 = vpack.c.b16 %v4823, %v4811
        %v5220 = vpack.c.b16 %v4824, %v4812
        %v5221 = vpack.c.b16 %v4825, %v4813
        %v5222 = vpack.c.b16 %v4826, %v4814
        %v5223 = vpack.c.b16 %v4827, %v4815
        %v5224 = vpack.c.b16 %v4828, %v4816
        %v5225 = vpack.c.b16 %v4829, %v4817
        %v5226 = vpack.c.b16 %v4842, %v4830
        %v5227 = vpack.c.b16 %v4843, %v4831
        %v5228 = vpack.c.b16 %v4844, %v4832
        %v5229 = vpack.c.b16 %v4845, %v4833
        %v5230 = vpack.c.b16 %v4846, %v4834
        %v5231 = vpack.c.b16 %v4847, %v4835
        %v5232 = vpack.c.b16 %v4848, %v4836
        %v5233 = vpack.c.b16 %v4849, %v4837
        %v5234 = vpack.c.b16 %v4850, %v4838
        %v5235 = vpack.c.b16 %v4851, %v4839
        %v5236 = vpack.c.b16 %v4852, %v4840
        %v5237 = vpack.c.b16 %v4853, %v4841
        %v5238 = vpack.c.b16 %v4866, %v4854
        %v5239 = vpack.c.b16 %v4867, %v4855
        %v5240 = vpack.c.b16 %v4868, %v4856
        %v5241 = vpack.c.b16 %v4869, %v4857
        %v5242 = vpack.c.b16 %v4870, %v4858
        %v5243 = vpack.c.b16 %v4871, %v4859
        %v5244 = vpack.c.b16 %v4872, %v4860
        %v5245 = vpack.c.b16 %v4873, %v4861
        %v5246 = vpack.c.b16 %v4874, %v4862
        %v5247 = vpack.c.b16 %v4875, %v4863
        %v5248 = vpack.c.b16 %v4876, %v4864
        %v5249 = vpack.c.b16 %v4877, %v4865
        %v5250 = vpack.c.b16 %v4890, %v4878
        %v5251 = vpack.c.b16 %v4891, %v4879
        %v5252 = vpack.c.b16 %v4892, %v4880
        %v5253 = vpack.c.b16 %v4893, %v4881
        %v5254 = vpack.c.b16 %v4894, %v4882
        %v5255 = vpack.c.b16 %v4895, %v4883
        %v5256 = vpack.c.b16 %v4896, %v4884
        %v5257 = vpack.c.b16 %v4897, %v4885
        %v5258 = vpack.c.b16 %v4898, %v4886
        %v5259 = vpack.c.b16 %v4899, %v4887
        %v5260 = vpack.c.b16 %v4900, %v4888
        %v5261 = vpack.c.b16 %v4901, %v4889
        %v5262 = vpack.c.b16 %v4914, %v4902
        %v5263 = vpack.c.b16 %v4915, %v4903
        %v5264 = vpack.c.b16 %v4916, %v4904
        %v5265 = vpack.c.b16 %v4917, %v4905
        %v5266 = vpack.c.b16 %v4918, %v4906
        %v5267 = vpack.c.b16 %v4919, %v4907
        %v5268 = vpack.c.b16 %v4920, %v4908
        %v5269 = vpack.c.b16 %v4921, %v4909
        %v5270 = vpack.c.b16 %v4922, %v4910
        %v5271 = vpack.c.b16 %v4923, %v4911
        %v5272 = vpack.c.b16 %v4924, %v4912
        %v5273 = vpack.c.b16 %v4925, %v4913
        %v5274 = vpack.c.b16 %v4938, %v4926
        %v5275 = vpack.c.b16 %v4939, %v4927
        %v5276 = vpack.c.b16 %v4940, %v4928
        %v5277 = vpack.c.b16 %v4941, %v4929
        %v5278 = vpack.c.b16 %v4942, %v4930
        %v5279 = vpack.c.b16 %v4943, %v4931
        %v5280 = vpack.c.b16 %v4944, %v4932
        %v5281 = vpack.c.b16 %v4945, %v4933
        %v5282 = vpack.c.b16 %v4946, %v4934
        %v5283 = vpack.c.b16 %v4947, %v4935
        %v5284 = vpack.c.b16 %v4948, %v4936
        %v5285 = vpack.c.b16 %v4949, %v4937
        %v5286 = vpack.c.b16 %v4962, %v4950
        %v5287 = vpack.c.b16 %v4963, %v4951
        %v5288 = vpack.c.b16 %v4964, %v4952
        %v5289 = vpack.c.b16 %v4965, %v4953
        %v5290 = vpack.c.b16 %v4966, %v4954
        %v5291 = vpack.c.b16 %v4967, %v4955
        %v5292 = vpack.c.b16 %v4968, %v4956
        %v5293 = vpack.c.b16 %v4969, %v4957
        %v5294 = vpack.c.b16 %v4970, %v4958
        %v5295 = vpack.c.b16 %v4971, %v4959
        %v5296 = vpack.c.b16 %v4972, %v4960
        %v5297 = vpack.c.b16 %v4973, %v4961
        %v5298 = vpack.c.b16 %v4986, %v4974
        %v5299 = vpack.c.b16 %v4987, %v4975
        %v5300 = vpack.c.b16 %v4988, %v4976
        %v5301 = vpack.c.b16 %v4989, %v4977
        %v5302 = vpack.c.b16 %v4990, %v4978
        %v5303 = vpack.c.b16 %v4991, %v4979
        %v5304 = vpack.c.b16 %v4992, %v4980
        %v5305 = vpack.c.b16 %v4993, %v4981
        %v5306 = vpack.c.b16 %v4994, %v4982
        %v5307 = vpack.c.b16 %v4995, %v4983
        %v5308 = vpack.c.b16 %v4996, %v4984
        %v5309 = vpack.c.b16 %v4997, %v4985
        %v5310 = vpack.c.b16 %v5010, %v4998
        %v5311 = vpack.c.b16 %v5011, %v4999
        %v5312 = vpack.c.b16 %v5012, %v5000
        %v5313 = vpack.c.b16 %v5013, %v5001
        %v5314 = vpack.c.b16 %v5014, %v5002
        %v5315 = vpack.c.b16 %v5015, %v5003
        %v5316 = vpack.c.b16 %v5016, %v5004
        %v5317 = vpack.c.b16 %v5017, %v5005
        %v5318 = vpack.c.b16 %v5018, %v5006
        %v5319 = vpack.c.b16 %v5019, %v5007
        %v5320 = vpack.c.b16 %v5020, %v5008
        %v5321 = vpack.c.b16 %v5021, %v5009
        %v5322 = vpack.c.b16 %v5034, %v5022
        %v5323 = vpack.c.b16 %v5035, %v5023
        %v5324 = vpack.c.b16 %v5036, %v5024
        %v5325 = vpack.c.b16 %v5037, %v5025
        %v5326 = vpack.c.b16 %v5038, %v5026
        %v5327 = vpack.c.b16 %v5039, %v5027
        %v5328 = vpack.c.b16 %v5040, %v5028
        %v5329 = vpack.c.b16 %v5041, %v5029
        %v5330 = vpack.c.b16 %v5042, %v5030
        %v5331 = vpack.c.b16 %v5043, %v5031
        %v5332 = vpack.c.b16 %v5044, %v5032
        %v5333 = vpack.c.b16 %v5045, %v5033
        %5622 = vmatprep.subr.bf16.mxu0 %v5047
        %5623 = vmatpush1.bf16.msra.mxu0 %v5046
        %5624 = vmatprep.subr.bf16.mxu0 %v5059
        %5625 = vmatpush1.bf16.msra.mxu0 %v5058
        %5626 = vmatprep.subr.bf16.mxu0 %v5071
        %5627 = vmatpush1.bf16.msra.mxu0 %v5070
        %5628 = vmatprep.subr.bf16.mxu0 %v5083
        %5629 = vmatpush1.bf16.msra.mxu0 %v5082
        %5630 = vmatprep.subr.bf16.mxu0 %v5095
        %5631 = vmatpush1.bf16.msra.mxu0 %v5094
        %5632 = vmatprep.subr.bf16.mxu0 %v5107
        %5633 = vmatpush1.bf16.msra.mxu0 %v5106
        %5634 = vmatprep.subr.bf16.mxu0 %v5119
        %5635 = vmatpush1.bf16.msra.mxu0 %v5118
        %5636 = vmatprep.subr.bf16.mxu0 %v5131
        %5637 = vmatpush1.bf16.msra.mxu0 %v5130
        %5638 = vmatprep.subr.bf16.mxu0 %v5143
        %5639 = vmatpush1.bf16.msra.mxu0 %v5142
        %5640 = vmatprep.subr.bf16.mxu0 %v5155
        %5641 = vmatpush1.bf16.msra.mxu0 %v5154
        %5642 = vmatprep.subr.bf16.mxu0 %v5167
        %5643 = vmatpush1.bf16.msra.mxu0 %v5166
        %5644 = vmatprep.subr.bf16.mxu0 %v5179
        %5645 = vmatpush1.bf16.msra.mxu0 %v5178
        %5646 = vmatprep.subr.bf16.mxu0 %v5191
        %5647 = vmatpush1.bf16.msra.mxu0 %v5190
        %5648 = vmatprep.subr.bf16.mxu0 %v5203
        %5649 = vmatpush1.bf16.msra.mxu0 %v5202
        %5650 = vmatprep.subr.bf16.mxu0 %v5215
        %5651 = vmatpush1.bf16.msra.mxu0 %v5214
        %5652 = vmatprep.subr.bf16.mxu0 %v5227
        %5653 = vmatpush1.bf16.msra.mxu0 %v5226
        %5654 = vmatprep.mubr.bf16.mxu0 %v3828
        %5655 = vmatmul.mubr.bf16.gmra.mrb[0].mxu0 %v3827
        %v5656 = vpop.f32.mrb[0].mxu0
        %v5657 = vadd.f32 %v4125, %v5656
        %v5658 = vpop.f32.mrb[0].mxu0
        %v5659 = vadd.f32 %v4129, %v5658
        %v5660 = vpop.f32.mrb[0].mxu0
        %v5661 = vpop.f32.mrb[0].mxu0
        %5662 = vdwg.mxu0
        %5663 = vmatprep.subr.bf16.mxu0 %v5239
        %5664 = vmatpush1.bf16.msra.mxu0 %v5238
        %5665 = vmatprep.subr.bf16.mxu0 %v5251
        %5666 = vmatpush1.bf16.msra.mxu0 %v5250
        %5667 = vmatprep.subr.bf16.mxu0 %v5263
        %5668 = vmatpush1.bf16.msra.mxu0 %v5262
        %5669 = vmatprep.subr.bf16.mxu0 %v5275
        %5670 = vmatpush1.bf16.msra.mxu0 %v5274
        %5671 = vmatprep.subr.bf16.mxu0 %v5287
        %5672 = vmatpush1.bf16.msra.mxu0 %v5286
        %5673 = vmatprep.subr.bf16.mxu0 %v5299
        %5674 = vmatpush1.bf16.msra.mxu0 %v5298
        %5675 = vmatprep.subr.bf16.mxu0 %v5311
        %5676 = vmatpush1.bf16.msra.mxu0 %v5310
        %5677 = vmatprep.subr.bf16.mxu0 %v5323
        %5678 = vmatpush1.bf16.msra.mxu0 %v5322
        %5679 = vmatprep.subr.bf16.mxu0 0
        %5680 = vmatpush1.bf16.msra.mxu0 0
        %5681 = vmatprep.subr.bf16.mxu0 0
        %5682 = vmatpush1.bf16.msra.mxu0 0
        %5683 = vmatprep.subr.bf16.mxu0 0
        %5684 = vmatpush1.bf16.msra.mxu0 0
        %5685 = vmatprep.subr.bf16.mxu0 0
        %5686 = vmatpush1.bf16.msra.mxu0 0
        %5687 = vmatprep.subr.bf16.mxu0 0
        %5688 = vmatpush1.bf16.msra.mxu0 0
        %5689 = vmatprep.subr.bf16.mxu0 0
        %5690 = vmatpush1.bf16.msra.mxu0 0
        %5691 = vmatprep.subr.bf16.mxu0 0
        %5692 = vmatpush1.bf16.msra.mxu0 0
        %5693 = vmatprep.subr.bf16.mxu0 0
        %5694 = vmatpush1.bf16.msra.mxu0 0
        %5695 = vmatprep.mubr.bf16.mxu0 0
        %5696 = vmatmul.mubr.bf16.gmra.mrb[0].mxu0 %v3829
        %v5697 = vpop.f32.mrb[0].mxu0
        %v5698 = vadd.f32 %v5657, %v5697
        %v5699 = vpop.f32.mrb[0].mxu0
        %v5700 = vadd.f32 %v5659, %v5699
        %v5701 = vpop.f32.mrb[0].mxu0
        %v5702 = vpop.f32.mrb[0].mxu0
        %5703 = vdwg.mxu0
        %5704 = vmatprep.subr.bf16.mxu0 %v5049
        %5705 = vmatpush1.bf16.msra.mxu0 %v5048
        %5706 = vmatprep.subr.bf16.mxu0 %v5061
        %5707 = vmatpush1.bf16.msra.mxu0 %v5060
        %5708 = vmatprep.subr.bf16.mxu0 %v5073
        %5709 = vmatpush1.bf16.msra.mxu0 %v5072
        %5710 = vmatprep.subr.bf16.mxu0 %v5085
        %5711 = vmatpush1.bf16.msra.mxu0 %v5084
        %5712 = vmatprep.subr.bf16.mxu0 %v5097
        %5713 = vmatpush1.bf16.msra.mxu0 %v5096
        %5714 = vmatprep.subr.bf16.mxu0 %v5109
        %5715 = vmatpush1.bf16.msra.mxu0 %v5108
        %5716 = vmatprep.subr.bf16.mxu0 %v5121
        %5717 = vmatpush1.bf16.msra.mxu0 %v5120
        %5718 = vmatprep.subr.bf16.mxu0 %v5133
        %5719 = vmatpush1.bf16.msra.mxu0 %v5132
        %5720 = vmatprep.subr.bf16.mxu0 %v5145
        %5721 = vmatpush1.bf16.msra.mxu0 %v5144
        %5722 = vmatprep.subr.bf16.mxu0 %v5157
        %5723 = vmatpush1.bf16.msra.mxu0 %v5156
        %5724 = vmatprep.subr.bf16.mxu0 %v5169
        %5725 = vmatpush1.bf16.msra.mxu0 %v5168
        %5726 = vmatprep.subr.bf16.mxu0 %v5181
        %5727 = vmatpush1.bf16.msra.mxu0 %v5180
        %5728 = vmatprep.subr.bf16.mxu0 %v5193
        %5729 = vmatpush1.bf16.msra.mxu0 %v5192
        %5730 = vmatprep.subr.bf16.mxu0 %v5205
        %5731 = vmatpush1.bf16.msra.mxu0 %v5204
        %5732 = vmatprep.subr.bf16.mxu0 %v5217
        %5733 = vmatpush1.bf16.msra.mxu0 %v5216
        %5734 = vmatprep.subr.bf16.mxu0 %v5229
        %5735 = vmatpush1.bf16.msra.mxu0 %v5228
        %5736 = vmatprep.mubr.bf16.mxu0 %v3828
        %5737 = vmatmul.mubr.bf16.gmra.mrb[0].mxu0 %v3827
        %v5738 = vpop.f32.mrb[0].mxu0
        %v5739 = vadd.f32 %v4133, %v5738
        %v5740 = vpop.f32.mrb[0].mxu0
        %v5741 = vadd.f32 %v4137, %v5740
        %v5742 = vpop.f32.mrb[0].mxu0
        %v5743 = vpop.f32.mrb[0].mxu0
        %5744 = vdwg.mxu0
        %5745 = vmatprep.subr.bf16.mxu0 %v5241
        %5746 = vmatpush1.bf16.msra.mxu0 %v5240
        %5747 = vmatprep.subr.bf16.mxu0 %v5253
        %5748 = vmatpush1.bf16.msra.mxu0 %v5252
        %5749 = vmatprep.subr.bf16.mxu0 %v5265
        %5750 = vmatpush1.bf16.msra.mxu0 %v5264
        %5751 = vmatprep.subr.bf16.mxu0 %v5277
        %5752 = vmatpush1.bf16.msra.mxu0 %v5276
        %5753 = vmatprep.subr.bf16.mxu0 %v5289
        %5754 = vmatpush1.bf16.msra.mxu0 %v5288
        %5755 = vmatprep.subr.bf16.mxu0 %v5301
        %5756 = vmatpush1.bf16.msra.mxu0 %v5300
        %5757 = vmatprep.subr.bf16.mxu0 %v5313
        %5758 = vmatpush1.bf16.msra.mxu0 %v5312
        %5759 = vmatprep.subr.bf16.mxu0 %v5325
        %5760 = vmatpush1.bf16.msra.mxu0 %v5324
        %5761 = vmatprep.subr.bf16.mxu0 0
        %5762 = vmatpush1.bf16.msra.mxu0 0
        %5763 = vmatprep.subr.bf16.mxu0 0
        %5764 = vmatpush1.bf16.msra.mxu0 0
        %5765 = vmatprep.subr.bf16.mxu0 0
        %5766 = vmatpush1.bf16.msra.mxu0 0
        %5767 = vmatprep.subr.bf16.mxu0 0
        %5768 = vmatpush1.bf16.msra.mxu0 0
        %5769 = vmatprep.subr.bf16.mxu0 0
        %5770 = vmatpush1.bf16.msra.mxu0 0
        %5771 = vmatprep.subr.bf16.mxu0 0
        %5772 = vmatpush1.bf16.msra.mxu0 0
        %5773 = vmatprep.subr.bf16.mxu0 0
        %5774 = vmatpush1.bf16.msra.mxu0 0
        %5775 = vmatprep.subr.bf16.mxu0 0
        %5776 = vmatpush1.bf16.msra.mxu0 0
        %5777 = vmatprep.mubr.bf16.mxu0 0
        %5778 = vmatmul.mubr.bf16.gmra.mrb[0].mxu0 %v3829
        %v5779 = vpop.f32.mrb[0].mxu0
        %v5780 = vadd.f32 %v5739, %v5779
        %v5781 = vpop.f32.mrb[0].mxu0
        %v5782 = vadd.f32 %v5741, %v5781
        %v5783 = vpop.f32.mrb[0].mxu0
        %v5784 = vpop.f32.mrb[0].mxu0
        %5785 = vdwg.mxu0
        %5786 = vmatprep.subr.bf16.mxu0 %v5051
        %5787 = vmatpush1.bf16.msra.mxu0 %v5050
        %5788 = vmatprep.subr.bf16.mxu0 %v5063
        %5789 = vmatpush1.bf16.msra.mxu0 %v5062
        %5790 = vmatprep.subr.bf16.mxu0 %v5075
        %5791 = vmatpush1.bf16.msra.mxu0 %v5074
        %5792 = vmatprep.subr.bf16.mxu0 %v5087
        %5793 = vmatpush1.bf16.msra.mxu0 %v5086
        %5794 = vmatprep.subr.bf16.mxu0 %v5099
        %5795 = vmatpush1.bf16.msra.mxu0 %v5098
        %5796 = vmatprep.subr.bf16.mxu0 %v5111
        %5797 = vmatpush1.bf16.msra.mxu0 %v5110
        %5798 = vmatprep.subr.bf16.mxu0 %v5123
        %5799 = vmatpush1.bf16.msra.mxu0 %v5122
        %5800 = vmatprep.subr.bf16.mxu0 %v5135
        %5801 = vmatpush1.bf16.msra.mxu0 %v5134
        %5802 = vmatprep.subr.bf16.mxu0 %v5147
        %5803 = vmatpush1.bf16.msra.mxu0 %v5146
        %5804 = vmatprep.subr.bf16.mxu0 %v5159
        %5805 = vmatpush1.bf16.msra.mxu0 %v5158
        %5806 = vmatprep.subr.bf16.mxu0 %v5171
        %5807 = vmatpush1.bf16.msra.mxu0 %v5170
        %5808 = vmatprep.subr.bf16.mxu0 %v5183
        %5809 = vmatpush1.bf16.msra.mxu0 %v5182
        %5810 = vmatprep.subr.bf16.mxu0 %v5195
        %5811 = vmatpush1.bf16.msra.mxu0 %v5194
        %5812 = vmatprep.subr.bf16.mxu0 %v5207
        %5813 = vmatpush1.bf16.msra.mxu0 %v5206
        %5814 = vmatprep.subr.bf16.mxu0 %v5219
        %5815 = vmatpush1.bf16.msra.mxu0 %v5218
        %5816 = vmatprep.subr.bf16.mxu0 %v5231
        %5817 = vmatpush1.bf16.msra.mxu0 %v5230
        %5818 = vmatprep.mubr.bf16.mxu0 %v3828
        %5819 = vmatmul.mubr.bf16.gmra.mrb[0].mxu0 %v3827
        %v5820 = vpop.f32.mrb[0].mxu0
        %v5821 = vadd.f32 %v4141, %v5820
        %v5822 = vpop.f32.mrb[0].mxu0
        %v5823 = vadd.f32 %v4145, %v5822
        %v5824 = vpop.f32.mrb[0].mxu0
        %v5825 = vpop.f32.mrb[0].mxu0
        %5826 = vdwg.mxu0
        %5827 = vmatprep.subr.bf16.mxu0 %v5243
        %5828 = vmatpush1.bf16.msra.mxu0 %v5242
        %5829 = vmatprep.subr.bf16.mxu0 %v5255
        %5830 = vmatpush1.bf16.msra.mxu0 %v5254
        %5831 = vmatprep.subr.bf16.mxu0 %v5267
        %5832 = vmatpush1.bf16.msra.mxu0 %v5266
        %5833 = vmatprep.subr.bf16.mxu0 %v5279
        %5834 = vmatpush1.bf16.msra.mxu0 %v5278
        %5835 = vmatprep.subr.bf16.mxu0 %v5291
        %5836 = vmatpush1.bf16.msra.mxu0 %v5290
        %5837 = vmatprep.subr.bf16.mxu0 %v5303
        %5838 = vmatpush1.bf16.msra.mxu0 %v5302
        %5839 = vmatprep.subr.bf16.mxu0 %v5315
        %5840 = vmatpush1.bf16.msra.mxu0 %v5314
        %5841 = vmatprep.subr.bf16.mxu0 %v5327
        %5842 = vmatpush1.bf16.msra.mxu0 %v5326
        %5843 = vmatprep.subr.bf16.mxu0 0
        %5844 = vmatpush1.bf16.msra.mxu0 0
        %5845 = vmatprep.subr.bf16.mxu0 0
        %5846 = vmatpush1.bf16.msra.mxu0 0
        %5847 = vmatprep.subr.bf16.mxu0 0
        %5848 = vmatpush1.bf16.msra.mxu0 0
        %5849 = vmatprep.subr.bf16.mxu0 0
        %5850 = vmatpush1.bf16.msra.mxu0 0
        %5851 = vmatprep.subr.bf16.mxu0 0
        %5852 = vmatpush1.bf16.msra.mxu0 0
        %5853 = vmatprep.subr.bf16.mxu0 0
        %5854 = vmatpush1.bf16.msra.mxu0 0
        %5855 = vmatprep.subr.bf16.mxu0 0
        %5856 = vmatpush1.bf16.msra.mxu0 0
        %5857 = vmatprep.subr.bf16.mxu0 0
        %5858 = vmatpush1.bf16.msra.mxu0 0
        %5859 = vmatprep.mubr.bf16.mxu0 0
        %5860 = vmatmul.mubr.bf16.gmra.mrb[0].mxu0 %v3829
        %v5861 = vpop.f32.mrb[0].mxu0
        %v5862 = vadd.f32 %v5821, %v5861
        %v5863 = vpop.f32.mrb[0].mxu0
        %v5864 = vadd.f32 %v5823, %v5863
        %v5865 = vpop.f32.mrb[0].mxu0
        %v5866 = vpop.f32.mrb[0].mxu0
        %5867 = vdwg.mxu0
        %5868 = vmatprep.subr.bf16.mxu0 %v5053
        %5869 = vmatpush1.bf16.msra.mxu0 %v5052
        %5870 = vmatprep.subr.bf16.mxu0 %v5065
        %5871 = vmatpush1.bf16.msra.mxu0 %v5064
        %5872 = vmatprep.subr.bf16.mxu0 %v5077
        %5873 = vmatpush1.bf16.msra.mxu0 %v5076
        %5874 = vmatprep.subr.bf16.mxu0 %v5089
        %5875 = vmatpush1.bf16.msra.mxu0 %v5088
        %5876 = vmatprep.subr.bf16.mxu0 %v5101
        %5877 = vmatpush1.bf16.msra.mxu0 %v5100
        %5878 = vmatprep.subr.bf16.mxu0 %v5113
        %5879 = vmatpush1.bf16.msra.mxu0 %v5112
        %5880 = vmatprep.subr.bf16.mxu0 %v5125
        %5881 = vmatpush1.bf16.msra.mxu0 %v5124
        %5882 = vmatprep.subr.bf16.mxu0 %v5137
        %5883 = vmatpush1.bf16.msra.mxu0 %v5136
        %5884 = vmatprep.subr.bf16.mxu0 %v5149
        %5885 = vmatpush1.bf16.msra.mxu0 %v5148
        %5886 = vmatprep.subr.bf16.mxu0 %v5161
        %5887 = vmatpush1.bf16.msra.mxu0 %v5160
        %5888 = vmatprep.subr.bf16.mxu0 %v5173
        %5889 = vmatpush1.bf16.msra.mxu0 %v5172
        %5890 = vmatprep.subr.bf16.mxu0 %v5185
        %5891 = vmatpush1.bf16.msra.mxu0 %v5184
        %5892 = vmatprep.subr.bf16.mxu0 %v5197
        %5893 = vmatpush1.bf16.msra.mxu0 %v5196
        %5894 = vmatprep.subr.bf16.mxu0 %v5209
        %5895 = vmatpush1.bf16.msra.mxu0 %v5208
        %5896 = vmatprep.subr.bf16.mxu0 %v5221
        %5897 = vmatpush1.bf16.msra.mxu0 %v5220
        %5898 = vmatprep.subr.bf16.mxu0 %v5233
        %5899 = vmatpush1.bf16.msra.mxu0 %v5232
        %5900 = vmatprep.mubr.bf16.mxu0 %v3828
        %5901 = vmatmul.mubr.bf16.gmra.mrb[0].mxu0 %v3827
        %v5902 = vpop.f32.mrb[0].mxu0
        %v5903 = vadd.f32 %v4149, %v5902
        %v5904 = vpop.f32.mrb[0].mxu0
        %v5905 = vadd.f32 %v4153, %v5904
        %v5906 = vpop.f32.mrb[0].mxu0
        %v5907 = vpop.f32.mrb[0].mxu0
        %5908 = vdwg.mxu0
        %5909 = vmatprep.subr.bf16.mxu0 %v5245
        %5910 = vmatpush1.bf16.msra.mxu0 %v5244
        %5911 = vmatprep.subr.bf16.mxu0 %v5257
        %5912 = vmatpush1.bf16.msra.mxu0 %v5256
        %5913 = vmatprep.subr.bf16.mxu0 %v5269
        %5914 = vmatpush1.bf16.msra.mxu0 %v5268
        %5915 = vmatprep.subr.bf16.mxu0 %v5281
        %5916 = vmatpush1.bf16.msra.mxu0 %v5280
        %5917 = vmatprep.subr.bf16.mxu0 %v5293
        %5918 = vmatpush1.bf16.msra.mxu0 %v5292
        %5919 = vmatprep.subr.bf16.mxu0 %v5305
        %5920 = vmatpush1.bf16.msra.mxu0 %v5304
        %5921 = vmatprep.subr.bf16.mxu0 %v5317
        %5922 = vmatpush1.bf16.msra.mxu0 %v5316
        %5923 = vmatprep.subr.bf16.mxu0 %v5329
        %5924 = vmatpush1.bf16.msra.mxu0 %v5328
        %5925 = vmatprep.subr.bf16.mxu0 0
        %5926 = vmatpush1.bf16.msra.mxu0 0
        %5927 = vmatprep.subr.bf16.mxu0 0
        %5928 = vmatpush1.bf16.msra.mxu0 0
        %5929 = vmatprep.subr.bf16.mxu0 0
        %5930 = vmatpush1.bf16.msra.mxu0 0
        %5931 = vmatprep.subr.bf16.mxu0 0
        %5932 = vmatpush1.bf16.msra.mxu0 0
        %5933 = vmatprep.subr.bf16.mxu0 0
        %5934 = vmatpush1.bf16.msra.mxu0 0
        %5935 = vmatprep.subr.bf16.mxu0 0
        %5936 = vmatpush1.bf16.msra.mxu0 0
        %5937 = vmatprep.subr.bf16.mxu0 0
        %5938 = vmatpush1.bf16.msra.mxu0 0
        %5939 = vmatprep.subr.bf16.mxu0 0
        %5940 = vmatpush1.bf16.msra.mxu0 0
        %5941 = vmatprep.mubr.bf16.mxu0 0
        %5942 = vmatmul.mubr.bf16.gmra.mrb[0].mxu0 %v3829
        %v5943 = vpop.f32.mrb[0].mxu0
        %v5944 = vadd.f32 %v5903, %v5943
        %v5945 = vpop.f32.mrb[0].mxu0
        %v5946 = vadd.f32 %v5905, %v5945
        %v5947 = vpop.f32.mrb[0].mxu0
        %v5948 = vpop.f32.mrb[0].mxu0
        %5949 = vdwg.mxu0
        %5950 = vmatprep.subr.bf16.mxu0 %v5055
        %5951 = vmatpush1.bf16.msra.mxu0 %v5054
        %5952 = vmatprep.subr.bf16.mxu0 %v5067
        %5953 = vmatpush1.bf16.msra.mxu0 %v5066
        %5954 = vmatprep.subr.bf16.mxu0 %v5079
        %5955 = vmatpush1.bf16.msra.mxu0 %v5078
        %5956 = vmatprep.subr.bf16.mxu0 %v5091
        %5957 = vmatpush1.bf16.msra.mxu0 %v5090
        %5958 = vmatprep.subr.bf16.mxu0 %v5103
        %5959 = vmatpush1.bf16.msra.mxu0 %v5102
        %5960 = vmatprep.subr.bf16.mxu0 %v5115
        %5961 = vmatpush1.bf16.msra.mxu0 %v5114
        %5962 = vmatprep.subr.bf16.mxu0 %v5127
        %5963 = vmatpush1.bf16.msra.mxu0 %v5126
        %5964 = vmatprep.subr.bf16.mxu0 %v5139
        %5965 = vmatpush1.bf16.msra.mxu0 %v5138
        %5966 = vmatprep.subr.bf16.mxu0 %v5151
        %5967 = vmatpush1.bf16.msra.mxu0 %v5150
        %5968 = vmatprep.subr.bf16.mxu0 %v5163
        %5969 = vmatpush1.bf16.msra.mxu0 %v5162
        %5970 = vmatprep.subr.bf16.mxu0 %v5175
        %5971 = vmatpush1.bf16.msra.mxu0 %v5174
        %5972 = vmatprep.subr.bf16.mxu0 %v5187
        %5973 = vmatpush1.bf16.msra.mxu0 %v5186
        %5974 = vmatprep.subr.bf16.mxu0 %v5199
        %5975 = vmatpush1.bf16.msra.mxu0 %v5198
        %5976 = vmatprep.subr.bf16.mxu0 %v5211
        %5977 = vmatpush1.bf16.msra.mxu0 %v5210
        %5978 = vmatprep.subr.bf16.mxu0 %v5223
        %5979 = vmatpush1.bf16.msra.mxu0 %v5222
        %5980 = vmatprep.subr.bf16.mxu0 %v5235
        %5981 = vmatpush1.bf16.msra.mxu0 %v5234
        %5982 = vmatprep.mubr.bf16.mxu0 %v3828
        %5983 = vmatmul.mubr.bf16.gmra.mrb[0].mxu0 %v3827
        %v5984 = vpop.f32.mrb[0].mxu0
        %v5985 = vadd.f32 %v4157, %v5984
        %v5986 = vpop.f32.mrb[0].mxu0
        %v5987 = vadd.f32 %v4161, %v5986
        %v5988 = vpop.f32.mrb[0].mxu0
        %v5989 = vpop.f32.mrb[0].mxu0
        %5990 = vdwg.mxu0
        %5991 = vmatprep.subr.bf16.mxu0 %v5247
        %5992 = vmatpush1.bf16.msra.mxu0 %v5246
        %5993 = vmatprep.subr.bf16.mxu0 %v5259
        %5994 = vmatpush1.bf16.msra.mxu0 %v5258
        %5995 = vmatprep.subr.bf16.mxu0 %v5271
        %5996 = vmatpush1.bf16.msra.mxu0 %v5270
        %5997 = vmatprep.subr.bf16.mxu0 %v5283
        %5998 = vmatpush1.bf16.msra.mxu0 %v5282
        %5999 = vmatprep.subr.bf16.mxu0 %v5295
        %6000 = vmatpush1.bf16.msra.mxu0 %v5294
        %6001 = vmatprep.subr.bf16.mxu0 %v5307
        %6002 = vmatpush1.bf16.msra.mxu0 %v5306
        %6003 = vmatprep.subr.bf16.mxu0 %v5319
        %6004 = vmatpush1.bf16.msra.mxu0 %v5318
        %6005 = vmatprep.subr.bf16.mxu0 %v5331
        %6006 = vmatpush1.bf16.msra.mxu0 %v5330
        %6007 = vmatprep.subr.bf16.mxu0 0
        %6008 = vmatpush1.bf16.msra.mxu0 0
        %6009 = vmatprep.subr.bf16.mxu0 0
        %6010 = vmatpush1.bf16.msra.mxu0 0
        %6011 = vmatprep.subr.bf16.mxu0 0
        %6012 = vmatpush1.bf16.msra.mxu0 0
        %6013 = vmatprep.subr.bf16.mxu0 0
        %6014 = vmatpush1.bf16.msra.mxu0 0
        %6015 = vmatprep.subr.bf16.mxu0 0
        %6016 = vmatpush1.bf16.msra.mxu0 0
        %6017 = vmatprep.subr.bf16.mxu0 0
        %6018 = vmatpush1.bf16.msra.mxu0 0
        %6019 = vmatprep.subr.bf16.mxu0 0
        %6020 = vmatpush1.bf16.msra.mxu0 0
        %6021 = vmatprep.subr.bf16.mxu0 0
        %6022 = vmatpush1.bf16.msra.mxu0 0
        %6023 = vmatprep.mubr.bf16.mxu0 0
        %6024 = vmatmul.mubr.bf16.gmra.mrb[0].mxu0 %v3829
        %v6025 = vpop.f32.mrb[0].mxu0
        %v6026 = vadd.f32 %v5985, %v6025
        %v6027 = vpop.f32.mrb[0].mxu0
        %v6028 = vadd.f32 %v5987, %v6027
        %v6029 = vpop.f32.mrb[0].mxu0
        %v6030 = vpop.f32.mrb[0].mxu0
        %6031 = vdwg.mxu0
        %6032 = vmatprep.subr.bf16.mxu0 %v5057
        %6033 = vmatpush1.bf16.msra.mxu0 %v5056
        %6034 = vmatprep.subr.bf16.mxu0 %v5069
        %6035 = vmatpush1.bf16.msra.mxu0 %v5068
        %6036 = vmatprep.subr.bf16.mxu0 %v5081
        %6037 = vmatpush1.bf16.msra.mxu0 %v5080
        %6038 = vmatprep.subr.bf16.mxu0 %v5093
        %6039 = vmatpush1.bf16.msra.mxu0 %v5092
        %6040 = vmatprep.subr.bf16.mxu0 %v5105
        %6041 = vmatpush1.bf16.msra.mxu0 %v5104
        %6042 = vmatprep.subr.bf16.mxu0 %v5117
        %6043 = vmatpush1.bf16.msra.mxu0 %v5116
        %6044 = vmatprep.subr.bf16.mxu0 %v5129
        %6045 = vmatpush1.bf16.msra.mxu0 %v5128
        %6046 = vmatprep.subr.bf16.mxu0 %v5141
        %6047 = vmatpush1.bf16.msra.mxu0 %v5140
        %6048 = vmatprep.subr.bf16.mxu0 %v5153
        %6049 = vmatpush1.bf16.msra.mxu0 %v5152
        %6050 = vmatprep.subr.bf16.mxu0 %v5165
        %6051 = vmatpush1.bf16.msra.mxu0 %v5164
        %6052 = vmatprep.subr.bf16.mxu0 %v5177
        %6053 = vmatpush1.bf16.msra.mxu0 %v5176
        %6054 = vmatprep.subr.bf16.mxu0 %v5189
        %6055 = vmatpush1.bf16.msra.mxu0 %v5188
        %6056 = vmatprep.subr.bf16.mxu0 %v5201
        %6057 = vmatpush1.bf16.msra.mxu0 %v5200
        %6058 = vmatprep.subr.bf16.mxu0 %v5213
        %6059 = vmatpush1.bf16.msra.mxu0 %v5212
        %6060 = vmatprep.subr.bf16.mxu0 %v5225
        %6061 = vmatpush1.bf16.msra.mxu0 %v5224
        %6062 = vmatprep.subr.bf16.mxu0 %v5237
        %6063 = vmatpush1.bf16.msra.mxu0 %v5236
        %6064 = vmatprep.mubr.bf16.mxu0 %v3828
        %6065 = vmatmul.mubr.bf16.gmra.mrb[0].mxu0 %v3827
        %v6066 = vpop.f32.mrb[0].mxu0
        %v6067 = vadd.f32 %v4165, %v6066
        %v6068 = vpop.f32.mrb[0].mxu0
        %v6069 = vadd.f32 %v4169, %v6068
        %v6070 = vpop.f32.mrb[0].mxu0
        %v6071 = vpop.f32.mrb[0].mxu0
        %6072 = vdwg.mxu0
        %6073 = vmatprep.subr.bf16.mxu0 %v5249
        %6074 = vmatpush1.bf16.msra.mxu0 %v5248
        %6075 = vmatprep.subr.bf16.mxu0 %v5261
        %6076 = vmatpush1.bf16.msra.mxu0 %v5260
        %6077 = vmatprep.subr.bf16.mxu0 %v5273
        %6078 = vmatpush1.bf16.msra.mxu0 %v5272
        %6079 = vmatprep.subr.bf16.mxu0 %v5285
        %6080 = vmatpush1.bf16.msra.mxu0 %v5284
        %6081 = vmatprep.subr.bf16.mxu0 %v5297
        %6082 = vmatpush1.bf16.msra.mxu0 %v5296
        %6083 = vmatprep.subr.bf16.mxu0 %v5309
        %6084 = vmatpush1.bf16.msra.mxu0 %v5308
        %6085 = vmatprep.subr.bf16.mxu0 %v5321
        %6086 = vmatpush1.bf16.msra.mxu0 %v5320
        %6087 = vmatprep.subr.bf16.mxu0 %v5333
        %6088 = vmatpush1.bf16.msra.mxu0 %v5332
        %6089 = vmatprep.subr.bf16.mxu0 0
        %6090 = vmatpush1.bf16.msra.mxu0 0
        %6091 = vmatprep.subr.bf16.mxu0 0
        %6092 = vmatpush1.bf16.msra.mxu0 0
        %6093 = vmatprep.subr.bf16.mxu0 0
        %6094 = vmatpush1.bf16.msra.mxu0 0
        %6095 = vmatprep.subr.bf16.mxu0 0
        %6096 = vmatpush1.bf16.msra.mxu0 0
        %6097 = vmatprep.subr.bf16.mxu0 0
        %6098 = vmatpush1.bf16.msra.mxu0 0
        %6099 = vmatprep.subr.bf16.mxu0 0
        %6100 = vmatpush1.bf16.msra.mxu0 0
        %6101 = vmatprep.subr.bf16.mxu0 0
        %6102 = vmatpush1.bf16.msra.mxu0 0
        %6103 = vmatprep.subr.bf16.mxu0 0
        %6104 = vmatpush1.bf16.msra.mxu0 0
        %6105 = vmatprep.mubr.bf16.mxu0 0
        %6106 = vmatmul.mubr.bf16.gmra.mrb[0].mxu0 %v3829
        %v6107 = vpop.f32.mrb[0].mxu0
        %v6108 = vadd.f32 %v6067, %v6107
        %v6109 = vpop.f32.mrb[0].mxu0
        %v6110 = vadd.f32 %v6069, %v6109
        %v6111 = vpop.f32.mrb[0].mxu0
        %v6112 = vpop.f32.mrb[0].mxu0
        %6113 = vdwg.mxu0
        %v6114 = vmax.f32 %v5698, 0.0
        %v6115 = vmax.f32 %v5700, 0.0
        %v6116 = vmax.f32 %v5780, 0.0
        %v6117 = vmax.f32 %v5782, 0.0
        %v6118 = vmax.f32 %v5862, 0.0
        %v6119 = vmax.f32 %v5864, 0.0
        %v6120 = vmax.f32 %v5944, 0.0
        %v6121 = vmax.f32 %v5946, 0.0
        %v6122 = vmax.f32 %v6026, 0.0
        %v6123 = vmax.f32 %v6028, 0.0
        %v6124 = vmax.f32 %v6108, 0.0
        %v6125 = vmax.f32 %v6110, 0.0
        %v6126 = vpack.c.bf16 %v6114, %v6114
        %v6127 = vpack.c.bf16 %v6115, %v6115
        %v6128 = vpack.c.bf16 %v6116, %v6116
        %v6129 = vpack.c.bf16 %v6117, %v6117
        %v6130 = vpack.c.bf16 %v6118, %v6118
        %v6131 = vpack.c.bf16 %v6119, %v6119
        %v6132 = vpack.c.bf16 %v6120, %v6120
        %v6133 = vpack.c.bf16 %v6121, %v6121
        %v6134 = vpack.c.bf16 %v6122, %v6122
        %v6135 = vpack.c.bf16 %v6123, %v6123
        %v6136 = vpack.c.bf16 %v6124, %v6124
        %v6137 = vpack.c.bf16 %v6125, %v6125
        %v6138 = vld [vmem:[#allocation19] sm:$0xff]
        %v6139 = vld [vmem:[#allocation19 + $0x8] sm:$0xf]
        %v6140 = vld [vmem:[#allocation19 + $0xc] sm:$0xff]
        %v6141 = vld [vmem:[#allocation19 + $0x14] sm:$0xf]
        %v6142 = vld [vmem:[#allocation19 + $0x18] sm:$0xff]
        %v6143 = vld [vmem:[#allocation19 + $0x20] sm:$0xf]
        %v6144 = vld [vmem:[#allocation19 + $0x24] sm:$0xff]
        %v6145 = vld [vmem:[#allocation19 + $0x2c] sm:$0xf]
        %v6146 = vld [vmem:[#allocation19 + $0x30] sm:$0xff]
        %v6147 = vld [vmem:[#allocation19 + $0x38] sm:$0xf]
        %v6148 = vld [vmem:[#allocation19 + $0x3c] sm:$0xff]
        %v6149 = vld [vmem:[#allocation19 + $0x44] sm:$0xf]
        %v6150 = vld [vmem:[#allocation19 + $0x48] sm:$0xff]
        %v6151 = vld [vmem:[#allocation19 + $0x50] sm:$0xf]
        %v6152 = vld [vmem:[#allocation19 + $0x54] sm:$0xff]
        %v6153 = vld [vmem:[#allocation19 + $0x5c] sm:$0xf]
        %v6154 = vld [vmem:[#allocation19 + $0x60] sm:$0xff]
        %v6155 = vld [vmem:[#allocation19 + $0x68] sm:$0xf]
        %v6156 = vld [vmem:[#allocation19 + $0x6c] sm:$0xff]
        %v6157 = vld [vmem:[#allocation19 + $0x74] sm:$0xf]
        %v6158 = vld [vmem:[#allocation19 + $0x78] sm:$0xff]
        %v6159 = vld [vmem:[#allocation19 + $0x80] sm:$0xf]
        %v6160 = vld [vmem:[#allocation19 + $0x84] sm:$0xff]
        %v6161 = vld [vmem:[#allocation19 + $0x8c] sm:$0xf]
        %v6162 = vld [vmem:[#allocation19 + $0x90] sm:$0xff]
        %v6163 = vld [vmem:[#allocation19 + $0x98] sm:$0xf]
        %v6164 = vld [vmem:[#allocation19 + $0x9c] sm:$0xff]
        %v6165 = vld [vmem:[#allocation19 + $0xa4] sm:$0xf]
        %v6166 = vld [vmem:[#allocation19 + $0xa8] sm:$0xff]
        %v6167 = vld [vmem:[#allocation19 + $0xb0] sm:$0xf]
        %v6168 = vld [vmem:[#allocation19 + $0xb4] sm:$0xff]
        %v6169 = vld [vmem:[#allocation19 + $0xbc] sm:$0xf]
        %v6170 = vld [vmem:[#allocation19 + $0xc0] sm:$0xff]
        %v6171 = vld [vmem:[#allocation19 + $0xc8] sm:$0xf]
        %v6172 = vld [vmem:[#allocation19 + $0xcc] sm:$0xff]
        %v6173 = vld [vmem:[#allocation19 + $0xd4] sm:$0xf]
        %v6174 = vld [vmem:[#allocation19 + $0xd8] sm:$0xff]
        %v6175 = vld [vmem:[#allocation19 + $0xe0] sm:$0xf]
        %v6176 = vld [vmem:[#allocation19 + $0xe4] sm:$0xff]
        %v6177 = vld [vmem:[#allocation19 + $0xec] sm:$0xf]
        %v6178 = vld [vmem:[#allocation19 + $0xf0] sm:$0xff]
        %v6179 = vld [vmem:[#allocation19 + $0xf8] sm:$0xf]
        %v6180 = vld [vmem:[#allocation19 + $0xfc] sm:$0xff]
        %v6181 = vld [vmem:[#allocation19 + $0x104] sm:$0xf]
        %v6182 = vld [vmem:[#allocation19 + $0x108] sm:$0xff]
        %v6183 = vld [vmem:[#allocation19 + $0x110] sm:$0xf]
        %v6184 = vld [vmem:[#allocation19 + $0x114] sm:$0xff]
        %v6185 = vld [vmem:[#allocation19 + $0x11c] sm:$0xf]
        %v6186 = vld [vmem:[#allocation19 + $0x120] sm:$0xff]
        %v6187 = vld [vmem:[#allocation19 + $0x128] sm:$0xf]
        %v6188 = vld [vmem:[#allocation19 + $0x12c] sm:$0xff]
        %v6189 = vld [vmem:[#allocation19 + $0x134] sm:$0xf]
        %v6190 = vld [vmem:[#allocation19 + $0x138] sm:$0xff]
        %v6191 = vld [vmem:[#allocation19 + $0x140] sm:$0xf]
        %v6192 = vld [vmem:[#allocation19 + $0x144] sm:$0xff]
        %v6193 = vld [vmem:[#allocation19 + $0x14c] sm:$0xf]
        %v6194 = vld [vmem:[#allocation19 + $0x150] sm:$0xff]
        %v6195 = vld [vmem:[#allocation19 + $0x158] sm:$0xf]
        %v6196 = vld [vmem:[#allocation19 + $0x15c] sm:$0xff]
        %v6197 = vld [vmem:[#allocation19 + $0x164] sm:$0xf]
        %v6198 = vld [vmem:[#allocation19 + $0x168] sm:$0xff]
        %v6199 = vld [vmem:[#allocation19 + $0x170] sm:$0xf]
        %v6200 = vld [vmem:[#allocation19 + $0x174] sm:$0xff]
        %v6201 = vld [vmem:[#allocation19 + $0x17c] sm:$0xf]
        %v6202 = vld [vmem:[#allocation19 + $0x180] sm:$0xff]
        %v6203 = vld [vmem:[#allocation19 + $0x188] sm:$0xf]
        %v6204 = vld [vmem:[#allocation19 + $0x18c] sm:$0xff]
        %v6205 = vld [vmem:[#allocation19 + $0x194] sm:$0xf]
        %v6206 = vld [vmem:[#allocation19 + $0x198] sm:$0xff]
        %v6207 = vld [vmem:[#allocation19 + $0x1a0] sm:$0xf]
        %v6208 = vld [vmem:[#allocation19 + $0x1a4] sm:$0xff]
        %v6209 = vld [vmem:[#allocation19 + $0x1ac] sm:$0xf]
        %v6210 = vld [vmem:[#allocation19 + $0x1b0] sm:$0xff]
        %v6211 = vld [vmem:[#allocation19 + $0x1b8] sm:$0xf]
        %v6212 = vld [vmem:[#allocation19 + $0x1bc] sm:$0xff]
        %v6213 = vld [vmem:[#allocation19 + $0x1c4] sm:$0xf]
        %v6214 = vld [vmem:[#allocation19 + $0x1c8] sm:$0xff]
        %v6215 = vld [vmem:[#allocation19 + $0x1d0] sm:$0xf]
        %v6216 = vld [vmem:[#allocation19 + $0x1d4] sm:$0xff]
        %v6217 = vld [vmem:[#allocation19 + $0x1dc] sm:$0xf]
        %v6218 = vld [vmem:[#allocation19 + $0x1e0] sm:$0xff]
        %v6219 = vld [vmem:[#allocation19 + $0x1e8] sm:$0xf]
        %v6220 = vld [vmem:[#allocation19 + $0x1ec] sm:$0xff]
        %v6221 = vld [vmem:[#allocation19 + $0x1f4] sm:$0xf]
        %v6222 = vld [vmem:[#allocation19 + $0x1f8] sm:$0xff]
        %v6223 = vld [vmem:[#allocation19 + $0x200] sm:$0xf]
        %v6224 = vld [vmem:[#allocation19 + $0x204] sm:$0xff]
        %v6225 = vld [vmem:[#allocation19 + $0x20c] sm:$0xf]
        %v6226 = vld [vmem:[#allocation19 + $0x210] sm:$0xff]
        %v6227 = vld [vmem:[#allocation19 + $0x218] sm:$0xf]
        %v6228 = vld [vmem:[#allocation19 + $0x21c] sm:$0xff]
        %v6229 = vld [vmem:[#allocation19 + $0x224] sm:$0xf]
        %v6230 = vld [vmem:[#allocation19 + $0x228] sm:$0xff]
        %v6231 = vld [vmem:[#allocation19 + $0x230] sm:$0xf]
        %v6232 = vld [vmem:[#allocation19 + $0x234] sm:$0xff]
        %v6233 = vld [vmem:[#allocation19 + $0x23c] sm:$0xf]
        %v6234 = vld [vmem:[#allocation19 + $0x240] sm:$0xff]
        %v6235 = vld [vmem:[#allocation19 + $0x248] sm:$0xf]
        %v6236 = vld [vmem:[#allocation19 + $0x24c] sm:$0xff]
        %v6237 = vld [vmem:[#allocation19 + $0x254] sm:$0xf]
        %v6238 = vld [vmem:[#allocation19 + $0x258] sm:$0xff]
        %v6239 = vld [vmem:[#allocation19 + $0x260] sm:$0xf]
        %v6240 = vld [vmem:[#allocation19 + $0x264] sm:$0xff]
        %v6241 = vld [vmem:[#allocation19 + $0x26c] sm:$0xf]
        %v6242 = vld [vmem:[#allocation19 + $0x270] sm:$0xff]
        %v6243 = vld [vmem:[#allocation19 + $0x278] sm:$0xf]
        %v6244 = vld [vmem:[#allocation19 + $0x27c] sm:$0xff]
        %v6245 = vld [vmem:[#allocation19 + $0x284] sm:$0xf]
        %v6246 = vld [vmem:[#allocation19 + $0x288] sm:$0xff]
        %v6247 = vld [vmem:[#allocation19 + $0x290] sm:$0xf]
        %v6248 = vld [vmem:[#allocation19 + $0x294] sm:$0xff]
        %v6249 = vld [vmem:[#allocation19 + $0x29c] sm:$0xf]
        %v6250 = vld [vmem:[#allocation19 + $0x2a0] sm:$0xff]
        %v6251 = vld [vmem:[#allocation19 + $0x2a8] sm:$0xf]
        %v6252 = vld [vmem:[#allocation19 + $0x2ac] sm:$0xff]
        %v6253 = vld [vmem:[#allocation19 + $0x2b4] sm:$0xf]
        %v6254 = vld [vmem:[#allocation19 + $0x2b8] sm:$0xff]
        %v6255 = vld [vmem:[#allocation19 + $0x2c0] sm:$0xf]
        %v6256 = vld [vmem:[#allocation19 + $0x2c4] sm:$0xff]
        %v6257 = vld [vmem:[#allocation19 + $0x2cc] sm:$0xf]
        %v6258 = vld [vmem:[#allocation19 + $0x2d0] sm:$0xff]
        %v6259 = vld [vmem:[#allocation19 + $0x2d8] sm:$0xf]
        %v6260 = vld [vmem:[#allocation19 + $0x2dc] sm:$0xff]
        %v6261 = vld [vmem:[#allocation19 + $0x2e4] sm:$0xf]
        %v6262 = vld [vmem:[#allocation19 + $0x2e8] sm:$0xff]
        %v6263 = vld [vmem:[#allocation19 + $0x2f0] sm:$0xf]
        %v6264 = vld [vmem:[#allocation19 + $0x2f4] sm:$0xff]
        %v6265 = vld [vmem:[#allocation19 + $0x2fc] sm:$0xf]
        %v6266 = vld [vmem:[#allocation19 + $0x300] sm:$0xff]
        %v6267 = vld [vmem:[#allocation19 + $0x308] sm:$0xf]
        %v6268 = vld [vmem:[#allocation19 + $0x30c] sm:$0xff]
        %v6269 = vld [vmem:[#allocation19 + $0x314] sm:$0xf]
        %v6270 = vld [vmem:[#allocation19 + $0x318] sm:$0xff]
        %v6271 = vld [vmem:[#allocation19 + $0x320] sm:$0xf]
        %v6272 = vld [vmem:[#allocation19 + $0x324] sm:$0xff]
        %v6273 = vld [vmem:[#allocation19 + $0x32c] sm:$0xf]
        %v6274 = vld [vmem:[#allocation19 + $0x330] sm:$0xff]
        %v6275 = vld [vmem:[#allocation19 + $0x338] sm:$0xf]
        %v6276 = vld [vmem:[#allocation19 + $0x33c] sm:$0xff]
        %v6277 = vld [vmem:[#allocation19 + $0x344] sm:$0xf]
        %v6278 = vld [vmem:[#allocation19 + $0x348] sm:$0xff]
        %v6279 = vld [vmem:[#allocation19 + $0x350] sm:$0xf]
        %v6280 = vld [vmem:[#allocation19 + $0x354] sm:$0xff]
        %v6281 = vld [vmem:[#allocation19 + $0x35c] sm:$0xf]
        %v6282 = vld [vmem:[#allocation19 + $0x360] sm:$0xff]
        %v6283 = vld [vmem:[#allocation19 + $0x368] sm:$0xf]
        %v6284 = vld [vmem:[#allocation19 + $0x36c] sm:$0xff]
        %v6285 = vld [vmem:[#allocation19 + $0x374] sm:$0xf]
        %v6286 = vld [vmem:[#allocation19 + $0x378] sm:$0xff]
        %v6287 = vld [vmem:[#allocation19 + $0x380] sm:$0xf]
        %v6288 = vld [vmem:[#allocation19 + $0x384] sm:$0xff]
        %v6289 = vld [vmem:[#allocation19 + $0x38c] sm:$0xf]
        %v6290 = vld [vmem:[#allocation19 + $0x390] sm:$0xff]
        %v6291 = vld [vmem:[#allocation19 + $0x398] sm:$0xf]
        %v6292 = vld [vmem:[#allocation19 + $0x39c] sm:$0xff]
        %v6293 = vld [vmem:[#allocation19 + $0x3a4] sm:$0xf]
        %v6294 = vld [vmem:[#allocation19 + $0x3a8] sm:$0xff]
        %v6295 = vld [vmem:[#allocation19 + $0x3b0] sm:$0xf]
        %v6296 = vld [vmem:[#allocation19 + $0x3b4] sm:$0xff]
        %v6297 = vld [vmem:[#allocation19 + $0x3bc] sm:$0xf]
        %v6298 = vld [vmem:[#allocation19 + $0x3c0] sm:$0xff]
        %v6299 = vld [vmem:[#allocation19 + $0x3c8] sm:$0xf]
        %v6300 = vld [vmem:[#allocation19 + $0x3cc] sm:$0xff]
        %v6301 = vld [vmem:[#allocation19 + $0x3d4] sm:$0xf]
        %v6302 = vld [vmem:[#allocation19 + $0x3d8] sm:$0xff]
        %v6303 = vld [vmem:[#allocation19 + $0x3e0] sm:$0xf]
        %v6304 = vld [vmem:[#allocation19 + $0x3e4] sm:$0xff]
        %v6305 = vld [vmem:[#allocation19 + $0x3ec] sm:$0xf]
        %v6306 = vld [vmem:[#allocation19 + $0x3f0] sm:$0xff]
        %v6307 = vld [vmem:[#allocation19 + $0x3f8] sm:$0xf]
        %v6308 = vld [vmem:[#allocation19 + $0x3fc] sm:$0xff]
        %v6309 = vld [vmem:[#allocation19 + $0x404] sm:$0xf]
        %v6310 = vld [vmem:[#allocation19 + $0x408] sm:$0xff]
        %v6311 = vld [vmem:[#allocation19 + $0x410] sm:$0xf]
        %v6312 = vld [vmem:[#allocation19 + $0x414] sm:$0xff]
        %v6313 = vld [vmem:[#allocation19 + $0x41c] sm:$0xf]
        %v6314 = vld [vmem:[#allocation19 + $0x420] sm:$0xff]
        %v6315 = vld [vmem:[#allocation19 + $0x428] sm:$0xf]
        %v6316 = vld [vmem:[#allocation19 + $0x42c] sm:$0xff]
        %v6317 = vld [vmem:[#allocation19 + $0x434] sm:$0xf]
        %v6318 = vld [vmem:[#allocation19 + $0x438] sm:$0xff]
        %v6319 = vld [vmem:[#allocation19 + $0x440] sm:$0xf]
        %v6320 = vld [vmem:[#allocation19 + $0x444] sm:$0xff]
        %v6321 = vld [vmem:[#allocation19 + $0x44c] sm:$0xf]
        %v6322 = vld [vmem:[#allocation19 + $0x450] sm:$0xff]
        %v6323 = vld [vmem:[#allocation19 + $0x458] sm:$0xf]
        %v6324 = vld [vmem:[#allocation19 + $0x45c] sm:$0xff]
        %v6325 = vld [vmem:[#allocation19 + $0x464] sm:$0xf]
        %v6326 = vld [vmem:[#allocation19 + $0x468] sm:$0xff]
        %v6327 = vld [vmem:[#allocation19 + $0x470] sm:$0xf]
        %v6328 = vld [vmem:[#allocation19 + $0x474] sm:$0xff]
        %v6329 = vld [vmem:[#allocation19 + $0x47c] sm:$0xf]
        %v6330 = vld [vmem:[#allocation19 + $0x480] sm:$0xff]
        %v6331 = vld [vmem:[#allocation19 + $0x488] sm:$0xf]
        %v6332 = vld [vmem:[#allocation19 + $0x48c] sm:$0xff]
        %v6333 = vld [vmem:[#allocation19 + $0x494] sm:$0xf]
        %v6334 = vld [vmem:[#allocation19 + $0x498] sm:$0xff]
        %v6335 = vld [vmem:[#allocation19 + $0x4a0] sm:$0xf]
        %v6336 = vld [vmem:[#allocation19 + $0x4a4] sm:$0xff]
        %v6337 = vld [vmem:[#allocation19 + $0x4ac] sm:$0xf]
        %v6338 = vld [vmem:[#allocation19 + $0x4b0] sm:$0xff]
        %v6339 = vld [vmem:[#allocation19 + $0x4b8] sm:$0xf]
        %v6340 = vld [vmem:[#allocation19 + $0x4bc] sm:$0xff]
        %v6341 = vld [vmem:[#allocation19 + $0x4c4] sm:$0xf]
        %v6342 = vld [vmem:[#allocation19 + $0x4c8] sm:$0xff]
        %v6343 = vld [vmem:[#allocation19 + $0x4d0] sm:$0xf]
        %v6344 = vld [vmem:[#allocation19 + $0x4d4] sm:$0xff]
        %v6345 = vld [vmem:[#allocation19 + $0x4dc] sm:$0xf]
        %v6346 = vld [vmem:[#allocation19 + $0x4e0] sm:$0xff]
        %v6347 = vld [vmem:[#allocation19 + $0x4e8] sm:$0xf]
        %v6348 = vld [vmem:[#allocation19 + $0x4ec] sm:$0xff]
        %v6349 = vld [vmem:[#allocation19 + $0x4f4] sm:$0xf]
        %v6350 = vld [vmem:[#allocation19 + $0x4f8] sm:$0xff]
        %v6351 = vld [vmem:[#allocation19 + $0x500] sm:$0xf]
        %v6352 = vld [vmem:[#allocation19 + $0x504] sm:$0xff]
        %v6353 = vld [vmem:[#allocation19 + $0x50c] sm:$0xf]
        %v6354 = vld [vmem:[#allocation19 + $0x510] sm:$0xff]
        %v6355 = vld [vmem:[#allocation19 + $0x518] sm:$0xf]
        %v6356 = vld [vmem:[#allocation19 + $0x51c] sm:$0xff]
        %v6357 = vld [vmem:[#allocation19 + $0x524] sm:$0xf]
        %v6358 = vld [vmem:[#allocation19 + $0x528] sm:$0xff]
        %v6359 = vld [vmem:[#allocation19 + $0x530] sm:$0xf]
        %v6360 = vld [vmem:[#allocation19 + $0x534] sm:$0xff]
        %v6361 = vld [vmem:[#allocation19 + $0x53c] sm:$0xf]
        %v6362 = vld [vmem:[#allocation19 + $0x540] sm:$0xff]
        %v6363 = vld [vmem:[#allocation19 + $0x548] sm:$0xf]
        %v6364 = vld [vmem:[#allocation19 + $0x54c] sm:$0xff]
        %v6365 = vld [vmem:[#allocation19 + $0x554] sm:$0xf]
        %v6366 = vld [vmem:[#allocation19 + $0x558] sm:$0xff]
        %v6367 = vld [vmem:[#allocation19 + $0x560] sm:$0xf]
        %v6368 = vld [vmem:[#allocation19 + $0x564] sm:$0xff]
        %v6369 = vld [vmem:[#allocation19 + $0x56c] sm:$0xf]
        %v6370 = vld [vmem:[#allocation19 + $0x570] sm:$0xff]
        %v6371 = vld [vmem:[#allocation19 + $0x578] sm:$0xf]
        %v6372 = vld [vmem:[#allocation19 + $0x57c] sm:$0xff]
        %v6373 = vld [vmem:[#allocation19 + $0x584] sm:$0xf]
        %v6374 = vld [vmem:[#allocation19 + $0x588] sm:$0xff]
        %v6375 = vld [vmem:[#allocation19 + $0x590] sm:$0xf]
        %v6376 = vld [vmem:[#allocation19 + $0x594] sm:$0xff]
        %v6377 = vld [vmem:[#allocation19 + $0x59c] sm:$0xf]
        %v6378 = vld [vmem:[#allocation19 + $0x5a0] sm:$0xff]
        %v6379 = vld [vmem:[#allocation19 + $0x5a8] sm:$0xf]
        %v6380 = vld [vmem:[#allocation19 + $0x5ac] sm:$0xff]
        %v6381 = vld [vmem:[#allocation19 + $0x5b4] sm:$0xf]
        %v6382 = vld [vmem:[#allocation19 + $0x5b8] sm:$0xff]
        %v6383 = vld [vmem:[#allocation19 + $0x5c0] sm:$0xf]
        %v6384 = vld [vmem:[#allocation19 + $0x5c4] sm:$0xff]
        %v6385 = vld [vmem:[#allocation19 + $0x5cc] sm:$0xf]
        %v6386 = vld [vmem:[#allocation19 + $0x5d0] sm:$0xff]
        %v6387 = vld [vmem:[#allocation19 + $0x5d8] sm:$0xf]
        %v6388 = vld [vmem:[#allocation19 + $0x5dc] sm:$0xff]
        %v6389 = vld [vmem:[#allocation19 + $0x5e4] sm:$0xf]
        %v6390 = vld [vmem:[#allocation19 + $0x5e8] sm:$0xff]
        %v6391 = vld [vmem:[#allocation19 + $0x5f0] sm:$0xf]
        %v6392 = vld [vmem:[#allocation19 + $0x5f4] sm:$0xff]
        %v6393 = vld [vmem:[#allocation19 + $0x5fc] sm:$0xf]
        %v6394 = vld [vmem:[#allocation19 + $0x600] sm:$0xff]
        %v6395 = vld [vmem:[#allocation19 + $0x608] sm:$0xf]
        %v6396 = vld [vmem:[#allocation19 + $0x60c] sm:$0xff]
        %v6397 = vld [vmem:[#allocation19 + $0x614] sm:$0xf]
        %v6398 = vld [vmem:[#allocation19 + $0x618] sm:$0xff]
        %v6399 = vld [vmem:[#allocation19 + $0x620] sm:$0xf]
        %v6400 = vld [vmem:[#allocation19 + $0x624] sm:$0xff]
        %v6401 = vld [vmem:[#allocation19 + $0x62c] sm:$0xf]
        %v6402 = vld [vmem:[#allocation19 + $0x630] sm:$0xff]
        %v6403 = vld [vmem:[#allocation19 + $0x638] sm:$0xf]
        %v6404 = vld [vmem:[#allocation19 + $0x63c] sm:$0xff]
        %v6405 = vld [vmem:[#allocation19 + $0x644] sm:$0xf]
        %v6406 = vld [vmem:[#allocation19 + $0x648] sm:$0xff]
        %v6407 = vld [vmem:[#allocation19 + $0x650] sm:$0xf]
        %v6408 = vld [vmem:[#allocation19 + $0x654] sm:$0xff]
        %v6409 = vld [vmem:[#allocation19 + $0x65c] sm:$0xf]
        %v6410 = vld [vmem:[#allocation19 + $0x660] sm:$0xff]
        %v6411 = vld [vmem:[#allocation19 + $0x668] sm:$0xf]
        %v6412 = vld [vmem:[#allocation19 + $0x66c] sm:$0xff]
        %v6413 = vld [vmem:[#allocation19 + $0x674] sm:$0xf]
        %v6414 = vld [vmem:[#allocation19 + $0x678] sm:$0xff]
        %v6415 = vld [vmem:[#allocation19 + $0x680] sm:$0xf]
        %v6416 = vld [vmem:[#allocation19 + $0x684] sm:$0xff]
        %v6417 = vld [vmem:[#allocation19 + $0x68c] sm:$0xf]
        %v6418 = vld [vmem:[#allocation19 + $0x690] sm:$0xff]
        %v6419 = vld [vmem:[#allocation19 + $0x698] sm:$0xf]
        %v6420 = vld [vmem:[#allocation19 + $0x69c] sm:$0xff]
        %v6421 = vld [vmem:[#allocation19 + $0x6a4] sm:$0xf]
        %v6422 = vld [vmem:[#allocation19 + $0x6a8] sm:$0xff]
        %v6423 = vld [vmem:[#allocation19 + $0x6b0] sm:$0xf]
        %v6424 = vld [vmem:[#allocation19 + $0x6b4] sm:$0xff]
        %v6425 = vld [vmem:[#allocation19 + $0x6bc] sm:$0xf]
        %v6426 = vld [vmem:[#allocation19 + $0x6c0] sm:$0xff]
        %v6427 = vld [vmem:[#allocation19 + $0x6c8] sm:$0xf]
        %v6428 = vld [vmem:[#allocation19 + $0x6cc] sm:$0xff]
        %v6429 = vld [vmem:[#allocation19 + $0x6d4] sm:$0xf]
        %v6430 = vld [vmem:[#allocation19 + $0x6d8] sm:$0xff]
        %v6431 = vld [vmem:[#allocation19 + $0x6e0] sm:$0xf]
        %v6432 = vld [vmem:[#allocation19 + $0x6e4] sm:$0xff]
        %v6433 = vld [vmem:[#allocation19 + $0x6ec] sm:$0xf]
        %v6434 = vld [vmem:[#allocation19 + $0x6f0] sm:$0xff]
        %v6435 = vld [vmem:[#allocation19 + $0x6f8] sm:$0xf]
        %v6436 = vld [vmem:[#allocation19 + $0x6fc] sm:$0xff]
        %v6437 = vld [vmem:[#allocation19 + $0x704] sm:$0xf]
        %v6438 = vld [vmem:[#allocation19 + $0x708] sm:$0xff]
        %v6439 = vld [vmem:[#allocation19 + $0x710] sm:$0xf]
        %v6440 = vld [vmem:[#allocation19 + $0x714] sm:$0xff]
        %v6441 = vld [vmem:[#allocation19 + $0x71c] sm:$0xf]
        %v6442 = vld [vmem:[#allocation19 + $0x720] sm:$0xff]
        %v6443 = vld [vmem:[#allocation19 + $0x728] sm:$0xf]
        %v6444 = vld [vmem:[#allocation19 + $0x72c] sm:$0xff]
        %v6445 = vld [vmem:[#allocation19 + $0x734] sm:$0xf]
        %v6446 = vld [vmem:[#allocation19 + $0x738] sm:$0xff]
        %v6447 = vld [vmem:[#allocation19 + $0x740] sm:$0xf]
        %v6448 = vld [vmem:[#allocation19 + $0x744] sm:$0xff]
        %v6449 = vld [vmem:[#allocation19 + $0x74c] sm:$0xf]
        %v6450 = vld [vmem:[#allocation19 + $0x750] sm:$0xff]
        %v6451 = vld [vmem:[#allocation19 + $0x758] sm:$0xf]
        %v6452 = vld [vmem:[#allocation19 + $0x75c] sm:$0xff]
        %v6453 = vld [vmem:[#allocation19 + $0x764] sm:$0xf]
        %v6454 = vld [vmem:[#allocation19 + $0x768] sm:$0xff]
        %v6455 = vld [vmem:[#allocation19 + $0x770] sm:$0xf]
        %v6456 = vld [vmem:[#allocation19 + $0x774] sm:$0xff]
        %v6457 = vld [vmem:[#allocation19 + $0x77c] sm:$0xf]
        %v6458 = vld [vmem:[#allocation19 + $0x780] sm:$0xff]
        %v6459 = vld [vmem:[#allocation19 + $0x788] sm:$0xf]
        %v6460 = vld [vmem:[#allocation19 + $0x78c] sm:$0xff]
        %v6461 = vld [vmem:[#allocation19 + $0x794] sm:$0xf]
        %v6462 = vld [vmem:[#allocation19 + $0x798] sm:$0xff]
        %v6463 = vld [vmem:[#allocation19 + $0x7a0] sm:$0xf]
        %v6464 = vld [vmem:[#allocation19 + $0x7a4] sm:$0xff]
        %v6465 = vld [vmem:[#allocation19 + $0x7ac] sm:$0xf]
        %v6466 = vld [vmem:[#allocation19 + $0x7b0] sm:$0xff]
        %v6467 = vld [vmem:[#allocation19 + $0x7b8] sm:$0xf]
        %v6468 = vld [vmem:[#allocation19 + $0x7bc] sm:$0xff]
        %v6469 = vld [vmem:[#allocation19 + $0x7c4] sm:$0xf]
        %v6470 = vld [vmem:[#allocation19 + $0x7c8] sm:$0xff]
        %v6471 = vld [vmem:[#allocation19 + $0x7d0] sm:$0xf]
        %v6472 = vld [vmem:[#allocation19 + $0x7d4] sm:$0xff]
        %v6473 = vld [vmem:[#allocation19 + $0x7dc] sm:$0xf]
        %v6474 = vld [vmem:[#allocation19 + $0x7e0] sm:$0xff]
        %v6475 = vld [vmem:[#allocation19 + $0x7e8] sm:$0xf]
        %v6476 = vld [vmem:[#allocation19 + $0x7ec] sm:$0xff]
        %v6477 = vld [vmem:[#allocation19 + $0x7f4] sm:$0xf]
        %v6478 = vld [vmem:[#allocation19 + $0x7f8] sm:$0xff]
        %v6479 = vld [vmem:[#allocation19 + $0x800] sm:$0xf]
        %v6480 = vld [vmem:[#allocation19 + $0x804] sm:$0xff]
        %v6481 = vld [vmem:[#allocation19 + $0x80c] sm:$0xf]
        %v6482 = vld [vmem:[#allocation19 + $0x810] sm:$0xff]
        %v6483 = vld [vmem:[#allocation19 + $0x818] sm:$0xf]
        %v6484 = vld [vmem:[#allocation19 + $0x81c] sm:$0xff]
        %v6485 = vld [vmem:[#allocation19 + $0x824] sm:$0xf]
        %v6486 = vld [vmem:[#allocation19 + $0x828] sm:$0xff]
        %v6487 = vld [vmem:[#allocation19 + $0x830] sm:$0xf]
        %v6488 = vld [vmem:[#allocation19 + $0x834] sm:$0xff]
        %v6489 = vld [vmem:[#allocation19 + $0x83c] sm:$0xf]
        %v6490 = vld [vmem:[#allocation19 + $0x840] sm:$0xff]
        %v6491 = vld [vmem:[#allocation19 + $0x848] sm:$0xf]
        %v6492 = vld [vmem:[#allocation19 + $0x84c] sm:$0xff]
        %v6493 = vld [vmem:[#allocation19 + $0x854] sm:$0xf]
        %v6494 = vld [vmem:[#allocation19 + $0x858] sm:$0xff]
        %v6495 = vld [vmem:[#allocation19 + $0x860] sm:$0xf]
        %v6496 = vld [vmem:[#allocation19 + $0x864] sm:$0xff]
        %v6497 = vld [vmem:[#allocation19 + $0x86c] sm:$0xf]
        %v6498 = vld [vmem:[#allocation19 + $0x870] sm:$0xff]
        %v6499 = vld [vmem:[#allocation19 + $0x878] sm:$0xf]
        %v6500 = vld [vmem:[#allocation19 + $0x87c] sm:$0xff]
        %v6501 = vld [vmem:[#allocation19 + $0x884] sm:$0xf]
        %v6502 = vld [vmem:[#allocation19 + $0x888] sm:$0xff]
        %v6503 = vld [vmem:[#allocation19 + $0x890] sm:$0xf]
        %v6504 = vld [vmem:[#allocation19 + $0x894] sm:$0xff]
        %v6505 = vld [vmem:[#allocation19 + $0x89c] sm:$0xf]
        %v6506 = vld [vmem:[#allocation19 + $0x8a0] sm:$0xff]
        %v6507 = vld [vmem:[#allocation19 + $0x8a8] sm:$0xf]
        %v6508 = vld [vmem:[#allocation19 + $0x8ac] sm:$0xff]
        %v6509 = vld [vmem:[#allocation19 + $0x8b4] sm:$0xf]
        %v6510 = vld [vmem:[#allocation19 + $0x8b8] sm:$0xff]
        %v6511 = vld [vmem:[#allocation19 + $0x8c0] sm:$0xf]
        %v6512 = vld [vmem:[#allocation19 + $0x8c4] sm:$0xff]
        %v6513 = vld [vmem:[#allocation19 + $0x8cc] sm:$0xf]
        %v6514 = vld [vmem:[#allocation19 + $0x8d0] sm:$0xff]
        %v6515 = vld [vmem:[#allocation19 + $0x8d8] sm:$0xf]
        %v6516 = vld [vmem:[#allocation19 + $0x8dc] sm:$0xff]
        %v6517 = vld [vmem:[#allocation19 + $0x8e4] sm:$0xf]
        %v6518 = vld [vmem:[#allocation19 + $0x8e8] sm:$0xff]
        %v6519 = vld [vmem:[#allocation19 + $0x8f0] sm:$0xf]
        %v6520 = vld [vmem:[#allocation19 + $0x8f4] sm:$0xff]
        %v6521 = vld [vmem:[#allocation19 + $0x8fc] sm:$0xf]
        %v6522 = vld [vmem:[#allocation20] sm:$0x7]
        %v6524 = vlaneseq
        %v6525 = vshrl.u32 %v6524, 7
        %v6526 = vsub.s32 0, %v6525
        %v6527 = vrot.slane %v6522, %v6526
        %v6528 = vlaneseq
        %v6529 = vshrl.u32 %v6528, 7
        %v6530 = vsub.s32 1, %v6529
        %v6531 = vrot.slane %v6522, %v6530
        %v6532 = vlaneseq
        %v6533 = vshrl.u32 %v6532, 7
        %v6534 = vsub.s32 2, %v6533
        %v6535 = vrot.slane %v6522, %v6534
        %v6923 = vunpack.c.l.b16 %v6138
        %v6924 = vunpack.c.h.b16 %v6138
        %v6925 = vunpack.c.l.b16 %v6139
        %v6926 = vunpack.c.l.b16 %v6140
        %v6927 = vunpack.c.h.b16 %v6140
        %v6928 = vunpack.c.l.b16 %v6141
        %v6929 = vunpack.c.l.b16 %v6142
        %v6930 = vunpack.c.h.b16 %v6142
        %v6931 = vunpack.c.l.b16 %v6143
        %v6932 = vunpack.c.l.b16 %v6144
        %v6933 = vunpack.c.h.b16 %v6144
        %v6934 = vunpack.c.l.b16 %v6145
        %v6935 = vunpack.c.l.b16 %v6146
        %v6936 = vunpack.c.h.b16 %v6146
        %v6937 = vunpack.c.l.b16 %v6147
        %v6938 = vunpack.c.l.b16 %v6148
        %v6939 = vunpack.c.h.b16 %v6148
        %v6940 = vunpack.c.l.b16 %v6149
        %v6941 = vunpack.c.l.b16 %v6150
        %v6942 = vunpack.c.h.b16 %v6150
        %v6943 = vunpack.c.l.b16 %v6151
        %v6944 = vunpack.c.l.b16 %v6152
        %v6945 = vunpack.c.h.b16 %v6152
        %v6946 = vunpack.c.l.b16 %v6153
        %v6947 = vunpack.c.l.b16 %v6154
        %v6948 = vunpack.c.h.b16 %v6154
        %v6949 = vunpack.c.l.b16 %v6155
        %v6950 = vunpack.c.l.b16 %v6156
        %v6951 = vunpack.c.h.b16 %v6156
        %v6952 = vunpack.c.l.b16 %v6157
        %v6953 = vunpack.c.l.b16 %v6158
        %v6954 = vunpack.c.h.b16 %v6158
        %v6955 = vunpack.c.l.b16 %v6159
        %v6956 = vunpack.c.l.b16 %v6160
        %v6957 = vunpack.c.h.b16 %v6160
        %v6958 = vunpack.c.l.b16 %v6161
        %v6959 = vunpack.c.l.b16 %v6162
        %v6960 = vunpack.c.h.b16 %v6162
        %v6961 = vunpack.c.l.b16 %v6163
        %v6962 = vunpack.c.l.b16 %v6164
        %v6963 = vunpack.c.h.b16 %v6164
        %v6964 = vunpack.c.l.b16 %v6165
        %v6965 = vunpack.c.l.b16 %v6166
        %v6966 = vunpack.c.h.b16 %v6166
        %v6967 = vunpack.c.l.b16 %v6167
        %v6968 = vunpack.c.l.b16 %v6168
        %v6969 = vunpack.c.h.b16 %v6168
        %v6970 = vunpack.c.l.b16 %v6169
        %v6971 = vunpack.c.l.b16 %v6170
        %v6972 = vunpack.c.h.b16 %v6170
        %v6973 = vunpack.c.l.b16 %v6171
        %v6974 = vunpack.c.l.b16 %v6172
        %v6975 = vunpack.c.h.b16 %v6172
        %v6976 = vunpack.c.l.b16 %v6173
        %v6977 = vunpack.c.l.b16 %v6174
        %v6978 = vunpack.c.h.b16 %v6174
        %v6979 = vunpack.c.l.b16 %v6175
        %v6980 = vunpack.c.l.b16 %v6176
        %v6981 = vunpack.c.h.b16 %v6176
        %v6982 = vunpack.c.l.b16 %v6177
        %v6983 = vunpack.c.l.b16 %v6178
        %v6984 = vunpack.c.h.b16 %v6178
        %v6985 = vunpack.c.l.b16 %v6179
        %v6986 = vunpack.c.l.b16 %v6180
        %v6987 = vunpack.c.h.b16 %v6180
        %v6988 = vunpack.c.l.b16 %v6181
        %v6989 = vunpack.c.l.b16 %v6182
        %v6990 = vunpack.c.h.b16 %v6182
        %v6991 = vunpack.c.l.b16 %v6183
        %v6992 = vunpack.c.l.b16 %v6184
        %v6993 = vunpack.c.h.b16 %v6184
        %v6994 = vunpack.c.l.b16 %v6185
        %v6995 = vunpack.c.l.b16 %v6186
        %v6996 = vunpack.c.h.b16 %v6186
        %v6997 = vunpack.c.l.b16 %v6187
        %v6998 = vunpack.c.l.b16 %v6188
        %v6999 = vunpack.c.h.b16 %v6188
        %v7000 = vunpack.c.l.b16 %v6189
        %v7001 = vunpack.c.l.b16 %v6190
        %v7002 = vunpack.c.h.b16 %v6190
        %v7003 = vunpack.c.l.b16 %v6191
        %v7004 = vunpack.c.l.b16 %v6192
        %v7005 = vunpack.c.h.b16 %v6192
        %v7006 = vunpack.c.l.b16 %v6193
        %v7007 = vunpack.c.l.b16 %v6194
        %v7008 = vunpack.c.h.b16 %v6194
        %v7009 = vunpack.c.l.b16 %v6195
        %v7010 = vunpack.c.l.b16 %v6196
        %v7011 = vunpack.c.h.b16 %v6196
        %v7012 = vunpack.c.l.b16 %v6197
        %v7013 = vunpack.c.l.b16 %v6198
        %v7014 = vunpack.c.h.b16 %v6198
        %v7015 = vunpack.c.l.b16 %v6199
        %v7016 = vunpack.c.l.b16 %v6200
        %v7017 = vunpack.c.h.b16 %v6200
        %v7018 = vunpack.c.l.b16 %v6201
        %v7019 = vunpack.c.l.b16 %v6202
        %v7020 = vunpack.c.h.b16 %v6202
        %v7021 = vunpack.c.l.b16 %v6203
        %v7022 = vunpack.c.l.b16 %v6204
        %v7023 = vunpack.c.h.b16 %v6204
        %v7024 = vunpack.c.l.b16 %v6205
        %v7025 = vunpack.c.l.b16 %v6206
        %v7026 = vunpack.c.h.b16 %v6206
        %v7027 = vunpack.c.l.b16 %v6207
        %v7028 = vunpack.c.l.b16 %v6208
        %v7029 = vunpack.c.h.b16 %v6208
        %v7030 = vunpack.c.l.b16 %v6209
        %v7031 = vunpack.c.l.b16 %v6210
        %v7032 = vunpack.c.h.b16 %v6210
        %v7033 = vunpack.c.l.b16 %v6211
        %v7034 = vunpack.c.l.b16 %v6212
        %v7035 = vunpack.c.h.b16 %v6212
        %v7036 = vunpack.c.l.b16 %v6213
        %v7037 = vunpack.c.l.b16 %v6214
        %v7038 = vunpack.c.h.b16 %v6214
        %v7039 = vunpack.c.l.b16 %v6215
        %v7040 = vunpack.c.l.b16 %v6216
        %v7041 = vunpack.c.h.b16 %v6216
        %v7042 = vunpack.c.l.b16 %v6217
        %v7043 = vunpack.c.l.b16 %v6218
        %v7044 = vunpack.c.h.b16 %v6218
        %v7045 = vunpack.c.l.b16 %v6219
        %v7046 = vunpack.c.l.b16 %v6220
        %v7047 = vunpack.c.h.b16 %v6220
        %v7048 = vunpack.c.l.b16 %v6221
        %v7049 = vunpack.c.l.b16 %v6222
        %v7050 = vunpack.c.h.b16 %v6222
        %v7051 = vunpack.c.l.b16 %v6223
        %v7052 = vunpack.c.l.b16 %v6224
        %v7053 = vunpack.c.h.b16 %v6224
        %v7054 = vunpack.c.l.b16 %v6225
        %v7055 = vunpack.c.l.b16 %v6226
        %v7056 = vunpack.c.h.b16 %v6226
        %v7057 = vunpack.c.l.b16 %v6227
        %v7058 = vunpack.c.l.b16 %v6228
        %v7059 = vunpack.c.h.b16 %v6228
        %v7060 = vunpack.c.l.b16 %v6229
        %v7061 = vunpack.c.l.b16 %v6230
        %v7062 = vunpack.c.h.b16 %v6230
        %v7063 = vunpack.c.l.b16 %v6231
        %v7064 = vunpack.c.l.b16 %v6232
        %v7065 = vunpack.c.h.b16 %v6232
        %v7066 = vunpack.c.l.b16 %v6233
        %v7067 = vunpack.c.l.b16 %v6234
        %v7068 = vunpack.c.h.b16 %v6234
        %v7069 = vunpack.c.l.b16 %v6235
        %v7070 = vunpack.c.l.b16 %v6236
        %v7071 = vunpack.c.h.b16 %v6236
        %v7072 = vunpack.c.l.b16 %v6237
        %v7073 = vunpack.c.l.b16 %v6238
        %v7074 = vunpack.c.h.b16 %v6238
        %v7075 = vunpack.c.l.b16 %v6239
        %v7076 = vunpack.c.l.b16 %v6240
        %v7077 = vunpack.c.h.b16 %v6240
        %v7078 = vunpack.c.l.b16 %v6241
        %v7079 = vunpack.c.l.b16 %v6242
        %v7080 = vunpack.c.h.b16 %v6242
        %v7081 = vunpack.c.l.b16 %v6243
        %v7082 = vunpack.c.l.b16 %v6244
        %v7083 = vunpack.c.h.b16 %v6244
        %v7084 = vunpack.c.l.b16 %v6245
        %v7085 = vunpack.c.l.b16 %v6246
        %v7086 = vunpack.c.h.b16 %v6246
        %v7087 = vunpack.c.l.b16 %v6247
        %v7088 = vunpack.c.l.b16 %v6248
        %v7089 = vunpack.c.h.b16 %v6248
        %v7090 = vunpack.c.l.b16 %v6249
        %v7091 = vunpack.c.l.b16 %v6250
        %v7092 = vunpack.c.h.b16 %v6250
        %v7093 = vunpack.c.l.b16 %v6251
        %v7094 = vunpack.c.l.b16 %v6252
        %v7095 = vunpack.c.h.b16 %v6252
        %v7096 = vunpack.c.l.b16 %v6253
        %v7097 = vunpack.c.l.b16 %v6254
        %v7098 = vunpack.c.h.b16 %v6254
        %v7099 = vunpack.c.l.b16 %v6255
        %v7100 = vunpack.c.l.b16 %v6256
        %v7101 = vunpack.c.h.b16 %v6256
        %v7102 = vunpack.c.l.b16 %v6257
        %v7103 = vunpack.c.l.b16 %v6258
        %v7104 = vunpack.c.h.b16 %v6258
        %v7105 = vunpack.c.l.b16 %v6259
        %v7106 = vunpack.c.l.b16 %v6260
        %v7107 = vunpack.c.h.b16 %v6260
        %v7108 = vunpack.c.l.b16 %v6261
        %v7109 = vunpack.c.l.b16 %v6262
        %v7110 = vunpack.c.h.b16 %v6262
        %v7111 = vunpack.c.l.b16 %v6263
        %v7112 = vunpack.c.l.b16 %v6264
        %v7113 = vunpack.c.h.b16 %v6264
        %v7114 = vunpack.c.l.b16 %v6265
        %v7115 = vunpack.c.l.b16 %v6266
        %v7116 = vunpack.c.h.b16 %v6266
        %v7117 = vunpack.c.l.b16 %v6267
        %v7118 = vunpack.c.l.b16 %v6268
        %v7119 = vunpack.c.h.b16 %v6268
        %v7120 = vunpack.c.l.b16 %v6269
        %v7121 = vunpack.c.l.b16 %v6270
        %v7122 = vunpack.c.h.b16 %v6270
        %v7123 = vunpack.c.l.b16 %v6271
        %v7124 = vunpack.c.l.b16 %v6272
        %v7125 = vunpack.c.h.b16 %v6272
        %v7126 = vunpack.c.l.b16 %v6273
        %v7127 = vunpack.c.l.b16 %v6274
        %v7128 = vunpack.c.h.b16 %v6274
        %v7129 = vunpack.c.l.b16 %v6275
        %v7130 = vunpack.c.l.b16 %v6276
        %v7131 = vunpack.c.h.b16 %v6276
        %v7132 = vunpack.c.l.b16 %v6277
        %v7133 = vunpack.c.l.b16 %v6278
        %v7134 = vunpack.c.h.b16 %v6278
        %v7135 = vunpack.c.l.b16 %v6279
        %v7136 = vunpack.c.l.b16 %v6280
        %v7137 = vunpack.c.h.b16 %v6280
        %v7138 = vunpack.c.l.b16 %v6281
        %v7139 = vunpack.c.l.b16 %v6282
        %v7140 = vunpack.c.h.b16 %v6282
        %v7141 = vunpack.c.l.b16 %v6283
        %v7142 = vunpack.c.l.b16 %v6284
        %v7143 = vunpack.c.h.b16 %v6284
        %v7144 = vunpack.c.l.b16 %v6285
        %v7145 = vunpack.c.l.b16 %v6286
        %v7146 = vunpack.c.h.b16 %v6286
        %v7147 = vunpack.c.l.b16 %v6287
        %v7148 = vunpack.c.l.b16 %v6288
        %v7149 = vunpack.c.h.b16 %v6288
        %v7150 = vunpack.c.l.b16 %v6289
        %v7151 = vunpack.c.l.b16 %v6290
        %v7152 = vunpack.c.h.b16 %v6290
        %v7153 = vunpack.c.l.b16 %v6291
        %v7154 = vunpack.c.l.b16 %v6292
        %v7155 = vunpack.c.h.b16 %v6292
        %v7156 = vunpack.c.l.b16 %v6293
        %v7157 = vunpack.c.l.b16 %v6294
        %v7158 = vunpack.c.h.b16 %v6294
        %v7159 = vunpack.c.l.b16 %v6295
        %v7160 = vunpack.c.l.b16 %v6296
        %v7161 = vunpack.c.h.b16 %v6296
        %v7162 = vunpack.c.l.b16 %v6297
        %v7163 = vunpack.c.l.b16 %v6298
        %v7164 = vunpack.c.h.b16 %v6298
        %v7165 = vunpack.c.l.b16 %v6299
        %v7166 = vunpack.c.l.b16 %v6300
        %v7167 = vunpack.c.h.b16 %v6300
        %v7168 = vunpack.c.l.b16 %v6301
        %v7169 = vunpack.c.l.b16 %v6302
        %v7170 = vunpack.c.h.b16 %v6302
        %v7171 = vunpack.c.l.b16 %v6303
        %v7172 = vunpack.c.l.b16 %v6304
        %v7173 = vunpack.c.h.b16 %v6304
        %v7174 = vunpack.c.l.b16 %v6305
        %v7175 = vunpack.c.l.b16 %v6306
        %v7176 = vunpack.c.h.b16 %v6306
        %v7177 = vunpack.c.l.b16 %v6307
        %v7178 = vunpack.c.l.b16 %v6308
        %v7179 = vunpack.c.h.b16 %v6308
        %v7180 = vunpack.c.l.b16 %v6309
        %v7181 = vunpack.c.l.b16 %v6310
        %v7182 = vunpack.c.h.b16 %v6310
        %v7183 = vunpack.c.l.b16 %v6311
        %v7184 = vunpack.c.l.b16 %v6312
        %v7185 = vunpack.c.h.b16 %v6312
        %v7186 = vunpack.c.l.b16 %v6313
        %v7187 = vunpack.c.l.b16 %v6314
        %v7188 = vunpack.c.h.b16 %v6314
        %v7189 = vunpack.c.l.b16 %v6315
        %v7190 = vunpack.c.l.b16 %v6316
        %v7191 = vunpack.c.h.b16 %v6316
        %v7192 = vunpack.c.l.b16 %v6317
        %v7193 = vunpack.c.l.b16 %v6318
        %v7194 = vunpack.c.h.b16 %v6318
        %v7195 = vunpack.c.l.b16 %v6319
        %v7196 = vunpack.c.l.b16 %v6320
        %v7197 = vunpack.c.h.b16 %v6320
        %v7198 = vunpack.c.l.b16 %v6321
        %v7199 = vunpack.c.l.b16 %v6322
        %v7200 = vunpack.c.h.b16 %v6322
        %v7201 = vunpack.c.l.b16 %v6323
        %v7202 = vunpack.c.l.b16 %v6324
        %v7203 = vunpack.c.h.b16 %v6324
        %v7204 = vunpack.c.l.b16 %v6325
        %v7205 = vunpack.c.l.b16 %v6326
        %v7206 = vunpack.c.h.b16 %v6326
        %v7207 = vunpack.c.l.b16 %v6327
        %v7208 = vunpack.c.l.b16 %v6328
        %v7209 = vunpack.c.h.b16 %v6328
        %v7210 = vunpack.c.l.b16 %v6329
        %v7211 = vunpack.c.l.b16 %v6330
        %v7212 = vunpack.c.h.b16 %v6330
        %v7213 = vunpack.c.l.b16 %v6331
        %v7214 = vunpack.c.l.b16 %v6332
        %v7215 = vunpack.c.h.b16 %v6332
        %v7216 = vunpack.c.l.b16 %v6333
        %v7217 = vunpack.c.l.b16 %v6334
        %v7218 = vunpack.c.h.b16 %v6334
        %v7219 = vunpack.c.l.b16 %v6335
        %v7220 = vunpack.c.l.b16 %v6336
        %v7221 = vunpack.c.h.b16 %v6336
        %v7222 = vunpack.c.l.b16 %v6337
        %v7223 = vunpack.c.l.b16 %v6338
        %v7224 = vunpack.c.h.b16 %v6338
        %v7225 = vunpack.c.l.b16 %v6339
        %v7226 = vunpack.c.l.b16 %v6340
        %v7227 = vunpack.c.h.b16 %v6340
        %v7228 = vunpack.c.l.b16 %v6341
        %v7229 = vunpack.c.l.b16 %v6342
        %v7230 = vunpack.c.h.b16 %v6342
        %v7231 = vunpack.c.l.b16 %v6343
        %v7232 = vunpack.c.l.b16 %v6344
        %v7233 = vunpack.c.h.b16 %v6344
        %v7234 = vunpack.c.l.b16 %v6345
        %v7235 = vunpack.c.l.b16 %v6346
        %v7236 = vunpack.c.h.b16 %v6346
        %v7237 = vunpack.c.l.b16 %v6347
        %v7238 = vunpack.c.l.b16 %v6348
        %v7239 = vunpack.c.h.b16 %v6348
        %v7240 = vunpack.c.l.b16 %v6349
        %v7241 = vunpack.c.l.b16 %v6350
        %v7242 = vunpack.c.h.b16 %v6350
        %v7243 = vunpack.c.l.b16 %v6351
        %v7244 = vunpack.c.l.b16 %v6352
        %v7245 = vunpack.c.h.b16 %v6352
        %v7246 = vunpack.c.l.b16 %v6353
        %v7247 = vunpack.c.l.b16 %v6354
        %v7248 = vunpack.c.h.b16 %v6354
        %v7249 = vunpack.c.l.b16 %v6355
        %v7250 = vunpack.c.l.b16 %v6356
        %v7251 = vunpack.c.h.b16 %v6356
        %v7252 = vunpack.c.l.b16 %v6357
        %v7253 = vunpack.c.l.b16 %v6358
        %v7254 = vunpack.c.h.b16 %v6358
        %v7255 = vunpack.c.l.b16 %v6359
        %v7256 = vunpack.c.l.b16 %v6360
        %v7257 = vunpack.c.h.b16 %v6360
        %v7258 = vunpack.c.l.b16 %v6361
        %v7259 = vunpack.c.l.b16 %v6362
        %v7260 = vunpack.c.h.b16 %v6362
        %v7261 = vunpack.c.l.b16 %v6363
        %v7262 = vunpack.c.l.b16 %v6364
        %v7263 = vunpack.c.h.b16 %v6364
        %v7264 = vunpack.c.l.b16 %v6365
        %v7265 = vunpack.c.l.b16 %v6366
        %v7266 = vunpack.c.h.b16 %v6366
        %v7267 = vunpack.c.l.b16 %v6367
        %v7268 = vunpack.c.l.b16 %v6368
        %v7269 = vunpack.c.h.b16 %v6368
        %v7270 = vunpack.c.l.b16 %v6369
        %v7271 = vunpack.c.l.b16 %v6370
        %v7272 = vunpack.c.h.b16 %v6370
        %v7273 = vunpack.c.l.b16 %v6371
        %v7274 = vunpack.c.l.b16 %v6372
        %v7275 = vunpack.c.h.b16 %v6372
        %v7276 = vunpack.c.l.b16 %v6373
        %v7277 = vunpack.c.l.b16 %v6374
        %v7278 = vunpack.c.h.b16 %v6374
        %v7279 = vunpack.c.l.b16 %v6375
        %v7280 = vunpack.c.l.b16 %v6376
        %v7281 = vunpack.c.h.b16 %v6376
        %v7282 = vunpack.c.l.b16 %v6377
        %v7283 = vunpack.c.l.b16 %v6378
        %v7284 = vunpack.c.h.b16 %v6378
        %v7285 = vunpack.c.l.b16 %v6379
        %v7286 = vunpack.c.l.b16 %v6380
        %v7287 = vunpack.c.h.b16 %v6380
        %v7288 = vunpack.c.l.b16 %v6381
        %v7289 = vunpack.c.l.b16 %v6382
        %v7290 = vunpack.c.h.b16 %v6382
        %v7291 = vunpack.c.l.b16 %v6383
        %v7292 = vunpack.c.l.b16 %v6384
        %v7293 = vunpack.c.h.b16 %v6384
        %v7294 = vunpack.c.l.b16 %v6385
        %v7295 = vunpack.c.l.b16 %v6386
        %v7296 = vunpack.c.h.b16 %v6386
        %v7297 = vunpack.c.l.b16 %v6387
        %v7298 = vunpack.c.l.b16 %v6388
        %v7299 = vunpack.c.h.b16 %v6388
        %v7300 = vunpack.c.l.b16 %v6389
        %v7301 = vunpack.c.l.b16 %v6390
        %v7302 = vunpack.c.h.b16 %v6390
        %v7303 = vunpack.c.l.b16 %v6391
        %v7304 = vunpack.c.l.b16 %v6392
        %v7305 = vunpack.c.h.b16 %v6392
        %v7306 = vunpack.c.l.b16 %v6393
        %v7307 = vunpack.c.l.b16 %v6394
        %v7308 = vunpack.c.h.b16 %v6394
        %v7309 = vunpack.c.l.b16 %v6395
        %v7310 = vunpack.c.l.b16 %v6396
        %v7311 = vunpack.c.h.b16 %v6396
        %v7312 = vunpack.c.l.b16 %v6397
        %v7313 = vunpack.c.l.b16 %v6398
        %v7314 = vunpack.c.h.b16 %v6398
        %v7315 = vunpack.c.l.b16 %v6399
        %v7316 = vunpack.c.l.b16 %v6400
        %v7317 = vunpack.c.h.b16 %v6400
        %v7318 = vunpack.c.l.b16 %v6401
        %v7319 = vunpack.c.l.b16 %v6402
        %v7320 = vunpack.c.h.b16 %v6402
        %v7321 = vunpack.c.l.b16 %v6403
        %v7322 = vunpack.c.l.b16 %v6404
        %v7323 = vunpack.c.h.b16 %v6404
        %v7324 = vunpack.c.l.b16 %v6405
        %v7325 = vunpack.c.l.b16 %v6406
        %v7326 = vunpack.c.h.b16 %v6406
        %v7327 = vunpack.c.l.b16 %v6407
        %v7328 = vunpack.c.l.b16 %v6408
        %v7329 = vunpack.c.h.b16 %v6408
        %v7330 = vunpack.c.l.b16 %v6409
        %v7331 = vunpack.c.l.b16 %v6410
        %v7332 = vunpack.c.h.b16 %v6410
        %v7333 = vunpack.c.l.b16 %v6411
        %v7334 = vunpack.c.l.b16 %v6412
        %v7335 = vunpack.c.h.b16 %v6412
        %v7336 = vunpack.c.l.b16 %v6413
        %v7337 = vunpack.c.l.b16 %v6414
        %v7338 = vunpack.c.h.b16 %v6414
        %v7339 = vunpack.c.l.b16 %v6415
        %v7340 = vunpack.c.l.b16 %v6416
        %v7341 = vunpack.c.h.b16 %v6416
        %v7342 = vunpack.c.l.b16 %v6417
        %v7343 = vunpack.c.l.b16 %v6418
        %v7344 = vunpack.c.h.b16 %v6418
        %v7345 = vunpack.c.l.b16 %v6419
        %v7346 = vunpack.c.l.b16 %v6420
        %v7347 = vunpack.c.h.b16 %v6420
        %v7348 = vunpack.c.l.b16 %v6421
        %v7349 = vunpack.c.l.b16 %v6422
        %v7350 = vunpack.c.h.b16 %v6422
        %v7351 = vunpack.c.l.b16 %v6423
        %v7352 = vunpack.c.l.b16 %v6424
        %v7353 = vunpack.c.h.b16 %v6424
        %v7354 = vunpack.c.l.b16 %v6425
        %v7355 = vunpack.c.l.b16 %v6426
        %v7356 = vunpack.c.h.b16 %v6426
        %v7357 = vunpack.c.l.b16 %v6427
        %v7358 = vunpack.c.l.b16 %v6428
        %v7359 = vunpack.c.h.b16 %v6428
        %v7360 = vunpack.c.l.b16 %v6429
        %v7361 = vunpack.c.l.b16 %v6430
        %v7362 = vunpack.c.h.b16 %v6430
        %v7363 = vunpack.c.l.b16 %v6431
        %v7364 = vunpack.c.l.b16 %v6432
        %v7365 = vunpack.c.h.b16 %v6432
        %v7366 = vunpack.c.l.b16 %v6433
        %v7367 = vunpack.c.l.b16 %v6434
        %v7368 = vunpack.c.h.b16 %v6434
        %v7369 = vunpack.c.l.b16 %v6435
        %v7370 = vunpack.c.l.b16 %v6436
        %v7371 = vunpack.c.h.b16 %v6436
        %v7372 = vunpack.c.l.b16 %v6437
        %v7373 = vunpack.c.l.b16 %v6438
        %v7374 = vunpack.c.h.b16 %v6438
        %v7375 = vunpack.c.l.b16 %v6439
        %v7376 = vunpack.c.l.b16 %v6440
        %v7377 = vunpack.c.h.b16 %v6440
        %v7378 = vunpack.c.l.b16 %v6441
        %v7379 = vunpack.c.l.b16 %v6442
        %v7380 = vunpack.c.h.b16 %v6442
        %v7381 = vunpack.c.l.b16 %v6443
        %v7382 = vunpack.c.l.b16 %v6444
        %v7383 = vunpack.c.h.b16 %v6444
        %v7384 = vunpack.c.l.b16 %v6445
        %v7385 = vunpack.c.l.b16 %v6446
        %v7386 = vunpack.c.h.b16 %v6446
        %v7387 = vunpack.c.l.b16 %v6447
        %v7388 = vunpack.c.l.b16 %v6448
        %v7389 = vunpack.c.h.b16 %v6448
        %v7390 = vunpack.c.l.b16 %v6449
        %v7391 = vunpack.c.l.b16 %v6450
        %v7392 = vunpack.c.h.b16 %v6450
        %v7393 = vunpack.c.l.b16 %v6451
        %v7394 = vunpack.c.l.b16 %v6452
        %v7395 = vunpack.c.h.b16 %v6452
        %v7396 = vunpack.c.l.b16 %v6453
        %v7397 = vunpack.c.l.b16 %v6454
        %v7398 = vunpack.c.h.b16 %v6454
        %v7399 = vunpack.c.l.b16 %v6455
        %v7400 = vunpack.c.l.b16 %v6456
        %v7401 = vunpack.c.h.b16 %v6456
        %v7402 = vunpack.c.l.b16 %v6457
        %v7403 = vunpack.c.l.b16 %v6458
        %v7404 = vunpack.c.h.b16 %v6458
        %v7405 = vunpack.c.l.b16 %v6459
        %v7406 = vunpack.c.l.b16 %v6460
        %v7407 = vunpack.c.h.b16 %v6460
        %v7408 = vunpack.c.l.b16 %v6461
        %v7409 = vunpack.c.l.b16 %v6462
        %v7410 = vunpack.c.h.b16 %v6462
        %v7411 = vunpack.c.l.b16 %v6463
        %v7412 = vunpack.c.l.b16 %v6464
        %v7413 = vunpack.c.h.b16 %v6464
        %v7414 = vunpack.c.l.b16 %v6465
        %v7415 = vunpack.c.l.b16 %v6466
        %v7416 = vunpack.c.h.b16 %v6466
        %v7417 = vunpack.c.l.b16 %v6467
        %v7418 = vunpack.c.l.b16 %v6468
        %v7419 = vunpack.c.h.b16 %v6468
        %v7420 = vunpack.c.l.b16 %v6469
        %v7421 = vunpack.c.l.b16 %v6470
        %v7422 = vunpack.c.h.b16 %v6470
        %v7423 = vunpack.c.l.b16 %v6471
        %v7424 = vunpack.c.l.b16 %v6472
        %v7425 = vunpack.c.h.b16 %v6472
        %v7426 = vunpack.c.l.b16 %v6473
        %v7427 = vunpack.c.l.b16 %v6474
        %v7428 = vunpack.c.h.b16 %v6474
        %v7429 = vunpack.c.l.b16 %v6475
        %v7430 = vunpack.c.l.b16 %v6476
        %v7431 = vunpack.c.h.b16 %v6476
        %v7432 = vunpack.c.l.b16 %v6477
        %v7433 = vunpack.c.l.b16 %v6478
        %v7434 = vunpack.c.h.b16 %v6478
        %v7435 = vunpack.c.l.b16 %v6479
        %v7436 = vunpack.c.l.b16 %v6480
        %v7437 = vunpack.c.h.b16 %v6480
        %v7438 = vunpack.c.l.b16 %v6481
        %v7439 = vunpack.c.l.b16 %v6482
        %v7440 = vunpack.c.h.b16 %v6482
        %v7441 = vunpack.c.l.b16 %v6483
        %v7442 = vunpack.c.l.b16 %v6484
        %v7443 = vunpack.c.h.b16 %v6484
        %v7444 = vunpack.c.l.b16 %v6485
        %v7445 = vunpack.c.l.b16 %v6486
        %v7446 = vunpack.c.h.b16 %v6486
        %v7447 = vunpack.c.l.b16 %v6487
        %v7448 = vunpack.c.l.b16 %v6488
        %v7449 = vunpack.c.h.b16 %v6488
        %v7450 = vunpack.c.l.b16 %v6489
        %v7451 = vunpack.c.l.b16 %v6490
        %v7452 = vunpack.c.h.b16 %v6490
        %v7453 = vunpack.c.l.b16 %v6491
        %v7454 = vunpack.c.l.b16 %v6492
        %v7455 = vunpack.c.h.b16 %v6492
        %v7456 = vunpack.c.l.b16 %v6493
        %v7457 = vunpack.c.l.b16 %v6494
        %v7458 = vunpack.c.h.b16 %v6494
        %v7459 = vunpack.c.l.b16 %v6495
        %v7460 = vunpack.c.l.b16 %v6496
        %v7461 = vunpack.c.h.b16 %v6496
        %v7462 = vunpack.c.l.b16 %v6497
        %v7463 = vunpack.c.l.b16 %v6498
        %v7464 = vunpack.c.h.b16 %v6498
        %v7465 = vunpack.c.l.b16 %v6499
        %v7466 = vunpack.c.l.b16 %v6500
        %v7467 = vunpack.c.h.b16 %v6500
        %v7468 = vunpack.c.l.b16 %v6501
        %v7469 = vunpack.c.l.b16 %v6502
        %v7470 = vunpack.c.h.b16 %v6502
        %v7471 = vunpack.c.l.b16 %v6503
        %v7472 = vunpack.c.l.b16 %v6504
        %v7473 = vunpack.c.h.b16 %v6504
        %v7474 = vunpack.c.l.b16 %v6505
        %v7475 = vunpack.c.l.b16 %v6506
        %v7476 = vunpack.c.h.b16 %v6506
        %v7477 = vunpack.c.l.b16 %v6507
        %v7478 = vunpack.c.l.b16 %v6508
        %v7479 = vunpack.c.h.b16 %v6508
        %v7480 = vunpack.c.l.b16 %v6509
        %v7481 = vunpack.c.l.b16 %v6510
        %v7482 = vunpack.c.h.b16 %v6510
        %v7483 = vunpack.c.l.b16 %v6511
        %v7484 = vunpack.c.l.b16 %v6512
        %v7485 = vunpack.c.h.b16 %v6512
        %v7486 = vunpack.c.l.b16 %v6513
        %v7487 = vunpack.c.l.b16 %v6514
        %v7488 = vunpack.c.h.b16 %v6514
        %v7489 = vunpack.c.l.b16 %v6515
        %v7490 = vunpack.c.l.b16 %v6516
        %v7491 = vunpack.c.h.b16 %v6516
        %v7492 = vunpack.c.l.b16 %v6517
        %v7493 = vunpack.c.l.b16 %v6518
        %v7494 = vunpack.c.h.b16 %v6518
        %v7495 = vunpack.c.l.b16 %v6519
        %v7496 = vunpack.c.l.b16 %v6520
        %v7497 = vunpack.c.h.b16 %v6520
        %v7498 = vunpack.c.l.b16 %v6521
        %v7499 = vpack.c.b16 %v6926, %v6923
        %v7500 = vpack.c.b16 %v6927, %v6924
        %v7501 = vpack.c.b16 %v6928, %v6925
        %v7502 = vpack.c.b16 %v6932, %v6929
        %v7503 = vpack.c.b16 %v6933, %v6930
        %v7504 = vpack.c.b16 %v6934, %v6931
        %v7505 = vpack.c.b16 %v6938, %v6935
        %v7506 = vpack.c.b16 %v6939, %v6936
        %v7507 = vpack.c.b16 %v6940, %v6937
        %v7508 = vpack.c.b16 %v6944, %v6941
        %v7509 = vpack.c.b16 %v6945, %v6942
        %v7510 = vpack.c.b16 %v6946, %v6943
        %v7511 = vpack.c.b16 %v6950, %v6947
        %v7512 = vpack.c.b16 %v6951, %v6948
        %v7513 = vpack.c.b16 %v6952, %v6949
        %v7514 = vpack.c.b16 %v6956, %v6953
        %v7515 = vpack.c.b16 %v6957, %v6954
        %v7516 = vpack.c.b16 %v6958, %v6955
        %v7517 = vpack.c.b16 %v6962, %v6959
        %v7518 = vpack.c.b16 %v6963, %v6960
        %v7519 = vpack.c.b16 %v6964, %v6961
        %v7520 = vpack.c.b16 %v6968, %v6965
        %v7521 = vpack.c.b16 %v6969, %v6966
        %v7522 = vpack.c.b16 %v6970, %v6967
        %v7523 = vpack.c.b16 %v6974, %v6971
        %v7524 = vpack.c.b16 %v6975, %v6972
        %v7525 = vpack.c.b16 %v6976, %v6973
        %v7526 = vpack.c.b16 %v6980, %v6977
        %v7527 = vpack.c.b16 %v6981, %v6978
        %v7528 = vpack.c.b16 %v6982, %v6979
        %v7529 = vpack.c.b16 %v6986, %v6983
        %v7530 = vpack.c.b16 %v6987, %v6984
        %v7531 = vpack.c.b16 %v6988, %v6985
        %v7532 = vpack.c.b16 %v6992, %v6989
        %v7533 = vpack.c.b16 %v6993, %v6990
        %v7534 = vpack.c.b16 %v6994, %v6991
        %v7535 = vpack.c.b16 %v6998, %v6995
        %v7536 = vpack.c.b16 %v6999, %v6996
        %v7537 = vpack.c.b16 %v7000, %v6997
        %v7538 = vpack.c.b16 %v7004, %v7001
        %v7539 = vpack.c.b16 %v7005, %v7002
        %v7540 = vpack.c.b16 %v7006, %v7003
        %v7541 = vpack.c.b16 %v7010, %v7007
        %v7542 = vpack.c.b16 %v7011, %v7008
        %v7543 = vpack.c.b16 %v7012, %v7009
        %v7544 = vpack.c.b16 %v7016, %v7013
        %v7545 = vpack.c.b16 %v7017, %v7014
        %v7546 = vpack.c.b16 %v7018, %v7015
        %v7547 = vpack.c.b16 %v7022, %v7019
        %v7548 = vpack.c.b16 %v7023, %v7020
        %v7549 = vpack.c.b16 %v7024, %v7021
        %v7550 = vpack.c.b16 %v7028, %v7025
        %v7551 = vpack.c.b16 %v7029, %v7026
        %v7552 = vpack.c.b16 %v7030, %v7027
        %v7553 = vpack.c.b16 %v7034, %v7031
        %v7554 = vpack.c.b16 %v7035, %v7032
        %v7555 = vpack.c.b16 %v7036, %v7033
        %v7556 = vpack.c.b16 %v7040, %v7037
        %v7557 = vpack.c.b16 %v7041, %v7038
        %v7558 = vpack.c.b16 %v7042, %v7039
        %v7559 = vpack.c.b16 %v7046, %v7043
        %v7560 = vpack.c.b16 %v7047, %v7044
        %v7561 = vpack.c.b16 %v7048, %v7045
        %v7562 = vpack.c.b16 %v7052, %v7049
        %v7563 = vpack.c.b16 %v7053, %v7050
        %v7564 = vpack.c.b16 %v7054, %v7051
        %v7565 = vpack.c.b16 %v7058, %v7055
        %v7566 = vpack.c.b16 %v7059, %v7056
        %v7567 = vpack.c.b16 %v7060, %v7057
        %v7568 = vpack.c.b16 %v7064, %v7061
        %v7569 = vpack.c.b16 %v7065, %v7062
        %v7570 = vpack.c.b16 %v7066, %v7063
        %v7571 = vpack.c.b16 %v7070, %v7067
        %v7572 = vpack.c.b16 %v7071, %v7068
        %v7573 = vpack.c.b16 %v7072, %v7069
        %v7574 = vpack.c.b16 %v7076, %v7073
        %v7575 = vpack.c.b16 %v7077, %v7074
        %v7576 = vpack.c.b16 %v7078, %v7075
        %v7577 = vpack.c.b16 %v7082, %v7079
        %v7578 = vpack.c.b16 %v7083, %v7080
        %v7579 = vpack.c.b16 %v7084, %v7081
        %v7580 = vpack.c.b16 %v7088, %v7085
        %v7581 = vpack.c.b16 %v7089, %v7086
        %v7582 = vpack.c.b16 %v7090, %v7087
        %v7583 = vpack.c.b16 %v7094, %v7091
        %v7584 = vpack.c.b16 %v7095, %v7092
        %v7585 = vpack.c.b16 %v7096, %v7093
        %v7586 = vpack.c.b16 %v7100, %v7097
        %v7587 = vpack.c.b16 %v7101, %v7098
        %v7588 = vpack.c.b16 %v7102, %v7099
        %v7589 = vpack.c.b16 %v7106, %v7103
        %v7590 = vpack.c.b16 %v7107, %v7104
        %v7591 = vpack.c.b16 %v7108, %v7105
        %v7592 = vpack.c.b16 %v7112, %v7109
        %v7593 = vpack.c.b16 %v7113, %v7110
        %v7594 = vpack.c.b16 %v7114, %v7111
        %v7595 = vpack.c.b16 %v7118, %v7115
        %v7596 = vpack.c.b16 %v7119, %v7116
        %v7597 = vpack.c.b16 %v7120, %v7117
        %v7598 = vpack.c.b16 %v7124, %v7121
        %v7599 = vpack.c.b16 %v7125, %v7122
        %v7600 = vpack.c.b16 %v7126, %v7123
        %v7601 = vpack.c.b16 %v7130, %v7127
        %v7602 = vpack.c.b16 %v7131, %v7128
        %v7603 = vpack.c.b16 %v7132, %v7129
        %v7604 = vpack.c.b16 %v7136, %v7133
        %v7605 = vpack.c.b16 %v7137, %v7134
        %v7606 = vpack.c.b16 %v7138, %v7135
        %v7607 = vpack.c.b16 %v7142, %v7139
        %v7608 = vpack.c.b16 %v7143, %v7140
        %v7609 = vpack.c.b16 %v7144, %v7141
        %v7610 = vpack.c.b16 %v7148, %v7145
        %v7611 = vpack.c.b16 %v7149, %v7146
        %v7612 = vpack.c.b16 %v7150, %v7147
        %v7613 = vpack.c.b16 %v7154, %v7151
        %v7614 = vpack.c.b16 %v7155, %v7152
        %v7615 = vpack.c.b16 %v7156, %v7153
        %v7616 = vpack.c.b16 %v7160, %v7157
        %v7617 = vpack.c.b16 %v7161, %v7158
        %v7618 = vpack.c.b16 %v7162, %v7159
        %v7619 = vpack.c.b16 %v7166, %v7163
        %v7620 = vpack.c.b16 %v7167, %v7164
        %v7621 = vpack.c.b16 %v7168, %v7165
        %v7622 = vpack.c.b16 %v7172, %v7169
        %v7623 = vpack.c.b16 %v7173, %v7170
        %v7624 = vpack.c.b16 %v7174, %v7171
        %v7625 = vpack.c.b16 %v7178, %v7175
        %v7626 = vpack.c.b16 %v7179, %v7176
        %v7627 = vpack.c.b16 %v7180, %v7177
        %v7628 = vpack.c.b16 %v7184, %v7181
        %v7629 = vpack.c.b16 %v7185, %v7182
        %v7630 = vpack.c.b16 %v7186, %v7183
        %v7631 = vpack.c.b16 %v7190, %v7187
        %v7632 = vpack.c.b16 %v7191, %v7188
        %v7633 = vpack.c.b16 %v7192, %v7189
        %v7634 = vpack.c.b16 %v7196, %v7193
        %v7635 = vpack.c.b16 %v7197, %v7194
        %v7636 = vpack.c.b16 %v7198, %v7195
        %v7637 = vpack.c.b16 %v7202, %v7199
        %v7638 = vpack.c.b16 %v7203, %v7200
        %v7639 = vpack.c.b16 %v7204, %v7201
        %v7640 = vpack.c.b16 %v7208, %v7205
        %v7641 = vpack.c.b16 %v7209, %v7206
        %v7642 = vpack.c.b16 %v7210, %v7207
        %v7643 = vpack.c.b16 %v7214, %v7211
        %v7644 = vpack.c.b16 %v7215, %v7212
        %v7645 = vpack.c.b16 %v7216, %v7213
        %v7646 = vpack.c.b16 %v7220, %v7217
        %v7647 = vpack.c.b16 %v7221, %v7218
        %v7648 = vpack.c.b16 %v7222, %v7219
        %v7649 = vpack.c.b16 %v7226, %v7223
        %v7650 = vpack.c.b16 %v7227, %v7224
        %v7651 = vpack.c.b16 %v7228, %v7225
        %v7652 = vpack.c.b16 %v7232, %v7229
        %v7653 = vpack.c.b16 %v7233, %v7230
        %v7654 = vpack.c.b16 %v7234, %v7231
        %v7655 = vpack.c.b16 %v7238, %v7235
        %v7656 = vpack.c.b16 %v7239, %v7236
        %v7657 = vpack.c.b16 %v7240, %v7237
        %v7658 = vpack.c.b16 %v7244, %v7241
        %v7659 = vpack.c.b16 %v7245, %v7242
        %v7660 = vpack.c.b16 %v7246, %v7243
        %v7661 = vpack.c.b16 %v7250, %v7247
        %v7662 = vpack.c.b16 %v7251, %v7248
        %v7663 = vpack.c.b16 %v7252, %v7249
        %v7664 = vpack.c.b16 %v7256, %v7253
        %v7665 = vpack.c.b16 %v7257, %v7254
        %v7666 = vpack.c.b16 %v7258, %v7255
        %v7667 = vpack.c.b16 %v7262, %v7259
        %v7668 = vpack.c.b16 %v7263, %v7260
        %v7669 = vpack.c.b16 %v7264, %v7261
        %v7670 = vpack.c.b16 %v7268, %v7265
        %v7671 = vpack.c.b16 %v7269, %v7266
        %v7672 = vpack.c.b16 %v7270, %v7267
        %v7673 = vpack.c.b16 %v7274, %v7271
        %v7674 = vpack.c.b16 %v7275, %v7272
        %v7675 = vpack.c.b16 %v7276, %v7273
        %v7676 = vpack.c.b16 %v7280, %v7277
        %v7677 = vpack.c.b16 %v7281, %v7278
        %v7678 = vpack.c.b16 %v7282, %v7279
        %v7679 = vpack.c.b16 %v7286, %v7283
        %v7680 = vpack.c.b16 %v7287, %v7284
        %v7681 = vpack.c.b16 %v7288, %v7285
        %v7682 = vpack.c.b16 %v7292, %v7289
        %v7683 = vpack.c.b16 %v7293, %v7290
        %v7684 = vpack.c.b16 %v7294, %v7291
        %v7685 = vpack.c.b16 %v7298, %v7295
        %v7686 = vpack.c.b16 %v7299, %v7296
        %v7687 = vpack.c.b16 %v7300, %v7297
        %v7688 = vpack.c.b16 %v7304, %v7301
        %v7689 = vpack.c.b16 %v7305, %v7302
        %v7690 = vpack.c.b16 %v7306, %v7303
        %v7691 = vpack.c.b16 %v7310, %v7307
        %v7692 = vpack.c.b16 %v7311, %v7308
        %v7693 = vpack.c.b16 %v7312, %v7309
        %v7694 = vpack.c.b16 %v7316, %v7313
        %v7695 = vpack.c.b16 %v7317, %v7314
        %v7696 = vpack.c.b16 %v7318, %v7315
        %v7697 = vpack.c.b16 %v7322, %v7319
        %v7698 = vpack.c.b16 %v7323, %v7320
        %v7699 = vpack.c.b16 %v7324, %v7321
        %v7700 = vpack.c.b16 %v7328, %v7325
        %v7701 = vpack.c.b16 %v7329, %v7326
        %v7702 = vpack.c.b16 %v7330, %v7327
        %v7703 = vpack.c.b16 %v7334, %v7331
        %v7704 = vpack.c.b16 %v7335, %v7332
        %v7705 = vpack.c.b16 %v7336, %v7333
        %v7706 = vpack.c.b16 %v7340, %v7337
        %v7707 = vpack.c.b16 %v7341, %v7338
        %v7708 = vpack.c.b16 %v7342, %v7339
        %v7709 = vpack.c.b16 %v7346, %v7343
        %v7710 = vpack.c.b16 %v7347, %v7344
        %v7711 = vpack.c.b16 %v7348, %v7345
        %v7712 = vpack.c.b16 %v7352, %v7349
        %v7713 = vpack.c.b16 %v7353, %v7350
        %v7714 = vpack.c.b16 %v7354, %v7351
        %v7715 = vpack.c.b16 %v7358, %v7355
        %v7716 = vpack.c.b16 %v7359, %v7356
        %v7717 = vpack.c.b16 %v7360, %v7357
        %v7718 = vpack.c.b16 %v7364, %v7361
        %v7719 = vpack.c.b16 %v7365, %v7362
        %v7720 = vpack.c.b16 %v7366, %v7363
        %v7721 = vpack.c.b16 %v7370, %v7367
        %v7722 = vpack.c.b16 %v7371, %v7368
        %v7723 = vpack.c.b16 %v7372, %v7369
        %v7724 = vpack.c.b16 %v7376, %v7373
        %v7725 = vpack.c.b16 %v7377, %v7374
        %v7726 = vpack.c.b16 %v7378, %v7375
        %v7727 = vpack.c.b16 %v7382, %v7379
        %v7728 = vpack.c.b16 %v7383, %v7380
        %v7729 = vpack.c.b16 %v7384, %v7381
        %v7730 = vpack.c.b16 %v7388, %v7385
        %v7731 = vpack.c.b16 %v7389, %v7386
        %v7732 = vpack.c.b16 %v7390, %v7387
        %v7733 = vpack.c.b16 %v7394, %v7391
        %v7734 = vpack.c.b16 %v7395, %v7392
        %v7735 = vpack.c.b16 %v7396, %v7393
        %v7736 = vpack.c.b16 %v7400, %v7397
        %v7737 = vpack.c.b16 %v7401, %v7398
        %v7738 = vpack.c.b16 %v7402, %v7399
        %v7739 = vpack.c.b16 %v7406, %v7403
        %v7740 = vpack.c.b16 %v7407, %v7404
        %v7741 = vpack.c.b16 %v7408, %v7405
        %v7742 = vpack.c.b16 %v7412, %v7409
        %v7743 = vpack.c.b16 %v7413, %v7410
        %v7744 = vpack.c.b16 %v7414, %v7411
        %v7745 = vpack.c.b16 %v7418, %v7415
        %v7746 = vpack.c.b16 %v7419, %v7416
        %v7747 = vpack.c.b16 %v7420, %v7417
        %v7748 = vpack.c.b16 %v7424, %v7421
        %v7749 = vpack.c.b16 %v7425, %v7422
        %v7750 = vpack.c.b16 %v7426, %v7423
        %v7751 = vpack.c.b16 %v7430, %v7427
        %v7752 = vpack.c.b16 %v7431, %v7428
        %v7753 = vpack.c.b16 %v7432, %v7429
        %v7754 = vpack.c.b16 %v7436, %v7433
        %v7755 = vpack.c.b16 %v7437, %v7434
        %v7756 = vpack.c.b16 %v7438, %v7435
        %v7757 = vpack.c.b16 %v7442, %v7439
        %v7758 = vpack.c.b16 %v7443, %v7440
        %v7759 = vpack.c.b16 %v7444, %v7441
        %v7760 = vpack.c.b16 %v7448, %v7445
        %v7761 = vpack.c.b16 %v7449, %v7446
        %v7762 = vpack.c.b16 %v7450, %v7447
        %v7763 = vpack.c.b16 %v7454, %v7451
        %v7764 = vpack.c.b16 %v7455, %v7452
        %v7765 = vpack.c.b16 %v7456, %v7453
        %v7766 = vpack.c.b16 %v7460, %v7457
        %v7767 = vpack.c.b16 %v7461, %v7458
        %v7768 = vpack.c.b16 %v7462, %v7459
        %v7769 = vpack.c.b16 %v7466, %v7463
        %v7770 = vpack.c.b16 %v7467, %v7464
        %v7771 = vpack.c.b16 %v7468, %v7465
        %v7772 = vpack.c.b16 %v7472, %v7469
        %v7773 = vpack.c.b16 %v7473, %v7470
        %v7774 = vpack.c.b16 %v7474, %v7471
        %v7775 = vpack.c.b16 %v7478, %v7475
        %v7776 = vpack.c.b16 %v7479, %v7476
        %v7777 = vpack.c.b16 %v7480, %v7477
        %v7778 = vpack.c.b16 %v7484, %v7481
        %v7779 = vpack.c.b16 %v7485, %v7482
        %v7780 = vpack.c.b16 %v7486, %v7483
        %v7781 = vpack.c.b16 %v7490, %v7487
        %v7782 = vpack.c.b16 %v7491, %v7488
        %v7783 = vpack.c.b16 %v7492, %v7489
        %v7784 = vpack.c.b16 %v7496, %v7493
        %v7785 = vpack.c.b16 %v7497, %v7494
        %v7786 = vpack.c.b16 %v7498, %v7495
        %8075 = vmatprep.subr.bf16.mxu0 %v7500
        %8076 = vmatpush1.bf16.msra.mxu0 %v7499
        %8077 = vmatprep.subr.bf16.mxu0 %v7503
        %8078 = vmatpush1.bf16.msra.mxu0 %v7502
        %8079 = vmatprep.subr.bf16.mxu0 %v7506
        %8080 = vmatpush1.bf16.msra.mxu0 %v7505
        %8081 = vmatprep.subr.bf16.mxu0 %v7509
        %8082 = vmatpush1.bf16.msra.mxu0 %v7508
        %8083 = vmatprep.subr.bf16.mxu0 %v7512
        %8084 = vmatpush1.bf16.msra.mxu0 %v7511
        %8085 = vmatprep.subr.bf16.mxu0 %v7515
        %8086 = vmatpush1.bf16.msra.mxu0 %v7514
        %8087 = vmatprep.subr.bf16.mxu0 %v7518
        %8088 = vmatpush1.bf16.msra.mxu0 %v7517
        %8089 = vmatprep.subr.bf16.mxu0 %v7521
        %8090 = vmatpush1.bf16.msra.mxu0 %v7520
        %8091 = vmatprep.subr.bf16.mxu0 %v7524
        %8092 = vmatpush1.bf16.msra.mxu0 %v7523
        %8093 = vmatprep.subr.bf16.mxu0 %v7527
        %8094 = vmatpush1.bf16.msra.mxu0 %v7526
        %8095 = vmatprep.subr.bf16.mxu0 %v7530
        %8096 = vmatpush1.bf16.msra.mxu0 %v7529
        %8097 = vmatprep.subr.bf16.mxu0 %v7533
        %8098 = vmatpush1.bf16.msra.mxu0 %v7532
        %8099 = vmatprep.subr.bf16.mxu0 %v7536
        %8100 = vmatpush1.bf16.msra.mxu0 %v7535
        %8101 = vmatprep.subr.bf16.mxu0 %v7539
        %8102 = vmatpush1.bf16.msra.mxu0 %v7538
        %8103 = vmatprep.subr.bf16.mxu0 %v7542
        %8104 = vmatpush1.bf16.msra.mxu0 %v7541
        %8105 = vmatprep.subr.bf16.mxu0 %v7545
        %8106 = vmatpush1.bf16.msra.mxu0 %v7544
        %8107 = vmatprep.mubr.bf16.mxu0 %v6127
        %8108 = vmatmul.mubr.bf16.gmra.mrb[0].mxu0 %v6126
        %v8109 = vpop.f32.mrb[0].mxu0
        %v8110 = vadd.f32 %v6527, %v8109
        %v8111 = vpop.f32.mrb[0].mxu0
        %v8112 = vadd.f32 %v6531, %v8111
        %v8113 = vpop.f32.mrb[0].mxu0
        %v8114 = vpop.f32.mrb[0].mxu0
        %8115 = vdwg.mxu0
        %8116 = vmatprep.subr.bf16.mxu0 %v7548
        %8117 = vmatpush1.bf16.msra.mxu0 %v7547
        %8118 = vmatprep.subr.bf16.mxu0 %v7551
        %8119 = vmatpush1.bf16.msra.mxu0 %v7550
        %8120 = vmatprep.subr.bf16.mxu0 %v7554
        %8121 = vmatpush1.bf16.msra.mxu0 %v7553
        %8122 = vmatprep.subr.bf16.mxu0 %v7557
        %8123 = vmatpush1.bf16.msra.mxu0 %v7556
        %8124 = vmatprep.subr.bf16.mxu0 %v7560
        %8125 = vmatpush1.bf16.msra.mxu0 %v7559
        %8126 = vmatprep.subr.bf16.mxu0 %v7563
        %8127 = vmatpush1.bf16.msra.mxu0 %v7562
        %8128 = vmatprep.subr.bf16.mxu0 %v7566
        %8129 = vmatpush1.bf16.msra.mxu0 %v7565
        %8130 = vmatprep.subr.bf16.mxu0 %v7569
        %8131 = vmatpush1.bf16.msra.mxu0 %v7568
        %8132 = vmatprep.subr.bf16.mxu0 %v7572
        %8133 = vmatpush1.bf16.msra.mxu0 %v7571
        %8134 = vmatprep.subr.bf16.mxu0 %v7575
        %8135 = vmatpush1.bf16.msra.mxu0 %v7574
        %8136 = vmatprep.subr.bf16.mxu0 %v7578
        %8137 = vmatpush1.bf16.msra.mxu0 %v7577
        %8138 = vmatprep.subr.bf16.mxu0 %v7581
        %8139 = vmatpush1.bf16.msra.mxu0 %v7580
        %8140 = vmatprep.subr.bf16.mxu0 %v7584
        %8141 = vmatpush1.bf16.msra.mxu0 %v7583
        %8142 = vmatprep.subr.bf16.mxu0 %v7587
        %8143 = vmatpush1.bf16.msra.mxu0 %v7586
        %8144 = vmatprep.subr.bf16.mxu0 %v7590
        %8145 = vmatpush1.bf16.msra.mxu0 %v7589
        %8146 = vmatprep.subr.bf16.mxu0 %v7593
        %8147 = vmatpush1.bf16.msra.mxu0 %v7592
        %8148 = vmatprep.mubr.bf16.mxu0 %v6129
        %8149 = vmatmul.mubr.bf16.gmra.mrb[0].mxu0 %v6128
        %v8150 = vpop.f32.mrb[0].mxu0
        %v8151 = vadd.f32 %v8110, %v8150
        %v8152 = vpop.f32.mrb[0].mxu0
        %v8153 = vadd.f32 %v8112, %v8152
        %v8154 = vpop.f32.mrb[0].mxu0
        %v8155 = vpop.f32.mrb[0].mxu0
        %8156 = vdwg.mxu0
        %8157 = vmatprep.subr.bf16.mxu0 %v7596
        %8158 = vmatpush1.bf16.msra.mxu0 %v7595
        %8159 = vmatprep.subr.bf16.mxu0 %v7599
        %8160 = vmatpush1.bf16.msra.mxu0 %v7598
        %8161 = vmatprep.subr.bf16.mxu0 %v7602
        %8162 = vmatpush1.bf16.msra.mxu0 %v7601
        %8163 = vmatprep.subr.bf16.mxu0 %v7605
        %8164 = vmatpush1.bf16.msra.mxu0 %v7604
        %8165 = vmatprep.subr.bf16.mxu0 %v7608
        %8166 = vmatpush1.bf16.msra.mxu0 %v7607
        %8167 = vmatprep.subr.bf16.mxu0 %v7611
        %8168 = vmatpush1.bf16.msra.mxu0 %v7610
        %8169 = vmatprep.subr.bf16.mxu0 %v7614
        %8170 = vmatpush1.bf16.msra.mxu0 %v7613
        %8171 = vmatprep.subr.bf16.mxu0 %v7617
        %8172 = vmatpush1.bf16.msra.mxu0 %v7616
        %8173 = vmatprep.subr.bf16.mxu0 %v7620
        %8174 = vmatpush1.bf16.msra.mxu0 %v7619
        %8175 = vmatprep.subr.bf16.mxu0 %v7623
        %8176 = vmatpush1.bf16.msra.mxu0 %v7622
        %8177 = vmatprep.subr.bf16.mxu0 %v7626
        %8178 = vmatpush1.bf16.msra.mxu0 %v7625
        %8179 = vmatprep.subr.bf16.mxu0 %v7629
        %8180 = vmatpush1.bf16.msra.mxu0 %v7628
        %8181 = vmatprep.subr.bf16.mxu0 %v7632
        %8182 = vmatpush1.bf16.msra.mxu0 %v7631
        %8183 = vmatprep.subr.bf16.mxu0 %v7635
        %8184 = vmatpush1.bf16.msra.mxu0 %v7634
        %8185 = vmatprep.subr.bf16.mxu0 %v7638
        %8186 = vmatpush1.bf16.msra.mxu0 %v7637
        %8187 = vmatprep.subr.bf16.mxu0 %v7641
        %8188 = vmatpush1.bf16.msra.mxu0 %v7640
        %8189 = vmatprep.mubr.bf16.mxu0 %v6131
        %8190 = vmatmul.mubr.bf16.gmra.mrb[0].mxu0 %v6130
        %v8191 = vpop.f32.mrb[0].mxu0
        %v8192 = vadd.f32 %v8151, %v8191
        %v8193 = vpop.f32.mrb[0].mxu0
        %v8194 = vadd.f32 %v8153, %v8193
        %v8195 = vpop.f32.mrb[0].mxu0
        %v8196 = vpop.f32.mrb[0].mxu0
        %8197 = vdwg.mxu0
        %8198 = vmatprep.subr.bf16.mxu0 %v7644
        %8199 = vmatpush1.bf16.msra.mxu0 %v7643
        %8200 = vmatprep.subr.bf16.mxu0 %v7647
        %8201 = vmatpush1.bf16.msra.mxu0 %v7646
        %8202 = vmatprep.subr.bf16.mxu0 %v7650
        %8203 = vmatpush1.bf16.msra.mxu0 %v7649
        %8204 = vmatprep.subr.bf16.mxu0 %v7653
        %8205 = vmatpush1.bf16.msra.mxu0 %v7652
        %8206 = vmatprep.subr.bf16.mxu0 %v7656
        %8207 = vmatpush1.bf16.msra.mxu0 %v7655
        %8208 = vmatprep.subr.bf16.mxu0 %v7659
        %8209 = vmatpush1.bf16.msra.mxu0 %v7658
        %8210 = vmatprep.subr.bf16.mxu0 %v7662
        %8211 = vmatpush1.bf16.msra.mxu0 %v7661
        %8212 = vmatprep.subr.bf16.mxu0 %v7665
        %8213 = vmatpush1.bf16.msra.mxu0 %v7664
        %8214 = vmatprep.subr.bf16.mxu0 %v7668
        %8215 = vmatpush1.bf16.msra.mxu0 %v7667
        %8216 = vmatprep.subr.bf16.mxu0 %v7671
        %8217 = vmatpush1.bf16.msra.mxu0 %v7670
        %8218 = vmatprep.subr.bf16.mxu0 %v7674
        %8219 = vmatpush1.bf16.msra.mxu0 %v7673
        %8220 = vmatprep.subr.bf16.mxu0 %v7677
        %8221 = vmatpush1.bf16.msra.mxu0 %v7676
        %8222 = vmatprep.subr.bf16.mxu0 %v7680
        %8223 = vmatpush1.bf16.msra.mxu0 %v7679
        %8224 = vmatprep.subr.bf16.mxu0 %v7683
        %8225 = vmatpush1.bf16.msra.mxu0 %v7682
        %8226 = vmatprep.subr.bf16.mxu0 %v7686
        %8227 = vmatpush1.bf16.msra.mxu0 %v7685
        %8228 = vmatprep.subr.bf16.mxu0 %v7689
        %8229 = vmatpush1.bf16.msra.mxu0 %v7688
        %8230 = vmatprep.mubr.bf16.mxu0 %v6133
        %8231 = vmatmul.mubr.bf16.gmra.mrb[0].mxu0 %v6132
        %v8232 = vpop.f32.mrb[0].mxu0
        %v8233 = vadd.f32 %v8192, %v8232
        %v8234 = vpop.f32.mrb[0].mxu0
        %v8235 = vadd.f32 %v8194, %v8234
        %v8236 = vpop.f32.mrb[0].mxu0
        %v8237 = vpop.f32.mrb[0].mxu0
        %8238 = vdwg.mxu0
        %8239 = vmatprep.subr.bf16.mxu0 %v7692
        %8240 = vmatpush1.bf16.msra.mxu0 %v7691
        %8241 = vmatprep.subr.bf16.mxu0 %v7695
        %8242 = vmatpush1.bf16.msra.mxu0 %v7694
        %8243 = vmatprep.subr.bf16.mxu0 %v7698
        %8244 = vmatpush1.bf16.msra.mxu0 %v7697
        %8245 = vmatprep.subr.bf16.mxu0 %v7701
        %8246 = vmatpush1.bf16.msra.mxu0 %v7700
        %8247 = vmatprep.subr.bf16.mxu0 %v7704
        %8248 = vmatpush1.bf16.msra.mxu0 %v7703
        %8249 = vmatprep.subr.bf16.mxu0 %v7707
        %8250 = vmatpush1.bf16.msra.mxu0 %v7706
        %8251 = vmatprep.subr.bf16.mxu0 %v7710
        %8252 = vmatpush1.bf16.msra.mxu0 %v7709
        %8253 = vmatprep.subr.bf16.mxu0 %v7713
        %8254 = vmatpush1.bf16.msra.mxu0 %v7712
        %8255 = vmatprep.subr.bf16.mxu0 %v7716
        %8256 = vmatpush1.bf16.msra.mxu0 %v7715
        %8257 = vmatprep.subr.bf16.mxu0 %v7719
        %8258 = vmatpush1.bf16.msra.mxu0 %v7718
        %8259 = vmatprep.subr.bf16.mxu0 %v7722
        %8260 = vmatpush1.bf16.msra.mxu0 %v7721
        %8261 = vmatprep.subr.bf16.mxu0 %v7725
        %8262 = vmatpush1.bf16.msra.mxu0 %v7724
        %8263 = vmatprep.subr.bf16.mxu0 %v7728
        %8264 = vmatpush1.bf16.msra.mxu0 %v7727
        %8265 = vmatprep.subr.bf16.mxu0 %v7731
        %8266 = vmatpush1.bf16.msra.mxu0 %v7730
        %8267 = vmatprep.subr.bf16.mxu0 %v7734
        %8268 = vmatpush1.bf16.msra.mxu0 %v7733
        %8269 = vmatprep.subr.bf16.mxu0 %v7737
        %8270 = vmatpush1.bf16.msra.mxu0 %v7736
        %8271 = vmatprep.mubr.bf16.mxu0 %v6135
        %8272 = vmatmul.mubr.bf16.gmra.mrb[0].mxu0 %v6134
        %v8273 = vpop.f32.mrb[0].mxu0
        %v8274 = vadd.f32 %v8233, %v8273
        %v8275 = vpop.f32.mrb[0].mxu0
        %v8276 = vadd.f32 %v8235, %v8275
        %v8277 = vpop.f32.mrb[0].mxu0
        %v8278 = vpop.f32.mrb[0].mxu0
        %8279 = vdwg.mxu0
        %8280 = vmatprep.subr.bf16.mxu0 %v7740
        %8281 = vmatpush1.bf16.msra.mxu0 %v7739
        %8282 = vmatprep.subr.bf16.mxu0 %v7743
        %8283 = vmatpush1.bf16.msra.mxu0 %v7742
        %8284 = vmatprep.subr.bf16.mxu0 %v7746
        %8285 = vmatpush1.bf16.msra.mxu0 %v7745
        %8286 = vmatprep.subr.bf16.mxu0 %v7749
        %8287 = vmatpush1.bf16.msra.mxu0 %v7748
        %8288 = vmatprep.subr.bf16.mxu0 %v7752
        %8289 = vmatpush1.bf16.msra.mxu0 %v7751
        %8290 = vmatprep.subr.bf16.mxu0 %v7755
        %8291 = vmatpush1.bf16.msra.mxu0 %v7754
        %8292 = vmatprep.subr.bf16.mxu0 %v7758
        %8293 = vmatpush1.bf16.msra.mxu0 %v7757
        %8294 = vmatprep.subr.bf16.mxu0 %v7761
        %8295 = vmatpush1.bf16.msra.mxu0 %v7760
        %8296 = vmatprep.subr.bf16.mxu0 %v7764
        %8297 = vmatpush1.bf16.msra.mxu0 %v7763
        %8298 = vmatprep.subr.bf16.mxu0 %v7767
        %8299 = vmatpush1.bf16.msra.mxu0 %v7766
        %8300 = vmatprep.subr.bf16.mxu0 %v7770
        %8301 = vmatpush1.bf16.msra.mxu0 %v7769
        %8302 = vmatprep.subr.bf16.mxu0 %v7773
        %8303 = vmatpush1.bf16.msra.mxu0 %v7772
        %8304 = vmatprep.subr.bf16.mxu0 %v7776
        %8305 = vmatpush1.bf16.msra.mxu0 %v7775
        %8306 = vmatprep.subr.bf16.mxu0 %v7779
        %8307 = vmatpush1.bf16.msra.mxu0 %v7778
        %8308 = vmatprep.subr.bf16.mxu0 %v7782
        %8309 = vmatpush1.bf16.msra.mxu0 %v7781
        %8310 = vmatprep.subr.bf16.mxu0 %v7785
        %8311 = vmatpush1.bf16.msra.mxu0 %v7784
        %8312 = vmatprep.mubr.bf16.mxu0 %v6137
        %8313 = vmatmul.mubr.bf16.gmra.mrb[0].mxu0 %v6136
        %v8314 = vpop.f32.mrb[0].mxu0
        %v8315 = vadd.f32 %v8274, %v8314
        %v8316 = vpop.f32.mrb[0].mxu0
        %v8317 = vadd.f32 %v8276, %v8316
        %v8318 = vpop.f32.mrb[0].mxu0
        %v8319 = vpop.f32.mrb[0].mxu0
        %8320 = vdwg.mxu0
        %8321 = vmatprep.subr.bf16.mxu0 0
        %8322 = vmatpush1.bf16.msra.mxu0 %v7501
        %8323 = vmatprep.subr.bf16.mxu0 0
        %8324 = vmatpush1.bf16.msra.mxu0 %v7504
        %8325 = vmatprep.subr.bf16.mxu0 0
        %8326 = vmatpush1.bf16.msra.mxu0 %v7507
        %8327 = vmatprep.subr.bf16.mxu0 0
        %8328 = vmatpush1.bf16.msra.mxu0 %v7510
        %8329 = vmatprep.subr.bf16.mxu0 0
        %8330 = vmatpush1.bf16.msra.mxu0 %v7513
        %8331 = vmatprep.subr.bf16.mxu0 0
        %8332 = vmatpush1.bf16.msra.mxu0 %v7516
        %8333 = vmatprep.subr.bf16.mxu0 0
        %8334 = vmatpush1.bf16.msra.mxu0 %v7519
        %8335 = vmatprep.subr.bf16.mxu0 0
        %8336 = vmatpush1.bf16.msra.mxu0 %v7522
        %8337 = vmatprep.subr.bf16.mxu0 0
        %8338 = vmatpush1.bf16.msra.mxu0 %v7525
        %8339 = vmatprep.subr.bf16.mxu0 0
        %8340 = vmatpush1.bf16.msra.mxu0 %v7528
        %8341 = vmatprep.subr.bf16.mxu0 0
        %8342 = vmatpush1.bf16.msra.mxu0 %v7531
        %8343 = vmatprep.subr.bf16.mxu0 0
        %8344 = vmatpush1.bf16.msra.mxu0 %v7534
        %8345 = vmatprep.subr.bf16.mxu0 0
        %8346 = vmatpush1.bf16.msra.mxu0 %v7537
        %8347 = vmatprep.subr.bf16.mxu0 0
        %8348 = vmatpush1.bf16.msra.mxu0 %v7540
        %8349 = vmatprep.subr.bf16.mxu0 0
        %8350 = vmatpush1.bf16.msra.mxu0 %v7543
        %8351 = vmatprep.subr.bf16.mxu0 0
        %8352 = vmatpush1.bf16.msra.mxu0 %v7546
        %8353 = vmatprep.mubr.bf16.mxu0 %v6127
        %8354 = vmatmul.mubr.bf16.gmra.mrb[0].mxu0 %v6126
        %v8355 = vpop.f32.mrb[0].mxu0
        %v8356 = vadd.f32 %v6535, %v8355
        %v8357 = vpop.f32.mrb[0].mxu0
        %v8358 = vpop.f32.mrb[0].mxu0
        %v8359 = vpop.f32.mrb[0].mxu0
        %8360 = vdwg.mxu0
        %8361 = vmatprep.subr.bf16.mxu0 0
        %8362 = vmatpush1.bf16.msra.mxu0 %v7549
        %8363 = vmatprep.subr.bf16.mxu0 0
        %8364 = vmatpush1.bf16.msra.mxu0 %v7552
        %8365 = vmatprep.subr.bf16.mxu0 0
        %8366 = vmatpush1.bf16.msra.mxu0 %v7555
        %8367 = vmatprep.subr.bf16.mxu0 0
        %8368 = vmatpush1.bf16.msra.mxu0 %v7558
        %8369 = vmatprep.subr.bf16.mxu0 0
        %8370 = vmatpush1.bf16.msra.mxu0 %v7561
        %8371 = vmatprep.subr.bf16.mxu0 0
        %8372 = vmatpush1.bf16.msra.mxu0 %v7564
        %8373 = vmatprep.subr.bf16.mxu0 0
        %8374 = vmatpush1.bf16.msra.mxu0 %v7567
        %8375 = vmatprep.subr.bf16.mxu0 0
        %8376 = vmatpush1.bf16.msra.mxu0 %v7570
        %8377 = vmatprep.subr.bf16.mxu0 0
        %8378 = vmatpush1.bf16.msra.mxu0 %v7573
        %8379 = vmatprep.subr.bf16.mxu0 0
        %8380 = vmatpush1.bf16.msra.mxu0 %v7576
        %8381 = vmatprep.subr.bf16.mxu0 0
        %8382 = vmatpush1.bf16.msra.mxu0 %v7579
        %8383 = vmatprep.subr.bf16.mxu0 0
        %8384 = vmatpush1.bf16.msra.mxu0 %v7582
        %8385 = vmatprep.subr.bf16.mxu0 0
        %8386 = vmatpush1.bf16.msra.mxu0 %v7585
        %8387 = vmatprep.subr.bf16.mxu0 0
        %8388 = vmatpush1.bf16.msra.mxu0 %v7588
        %8389 = vmatprep.subr.bf16.mxu0 0
        %8390 = vmatpush1.bf16.msra.mxu0 %v7591
        %8391 = vmatprep.subr.bf16.mxu0 0
        %8392 = vmatpush1.bf16.msra.mxu0 %v7594
        %8393 = vmatprep.mubr.bf16.mxu0 %v6129
        %8394 = vmatmul.mubr.bf16.gmra.mrb[0].mxu0 %v6128
        %v8395 = vpop.f32.mrb[0].mxu0
        %v8396 = vadd.f32 %v8356, %v8395
        %v8397 = vpop.f32.mrb[0].mxu0
        %v8398 = vpop.f32.mrb[0].mxu0
        %v8399 = vpop.f32.mrb[0].mxu0
        %8400 = vdwg.mxu0
        %8401 = vmatprep.subr.bf16.mxu0 0
        %8402 = vmatpush1.bf16.msra.mxu0 %v7597
        %8403 = vmatprep.subr.bf16.mxu0 0
        %8404 = vmatpush1.bf16.msra.mxu0 %v7600
        %8405 = vmatprep.subr.bf16.mxu0 0
        %8406 = vmatpush1.bf16.msra.mxu0 %v7603
        %8407 = vmatprep.subr.bf16.mxu0 0
        %8408 = vmatpush1.bf16.msra.mxu0 %v7606
        %8409 = vmatprep.subr.bf16.mxu0 0
        %8410 = vmatpush1.bf16.msra.mxu0 %v7609
        %8411 = vmatprep.subr.bf16.mxu0 0
        %8412 = vmatpush1.bf16.msra.mxu0 %v7612
        %8413 = vmatprep.subr.bf16.mxu0 0
        %8414 = vmatpush1.bf16.msra.mxu0 %v7615
        %8415 = vmatprep.subr.bf16.mxu0 0
        %8416 = vmatpush1.bf16.msra.mxu0 %v7618
        %8417 = vmatprep.subr.bf16.mxu0 0
        %8418 = vmatpush1.bf16.msra.mxu0 %v7621
        %8419 = vmatprep.subr.bf16.mxu0 0
        %8420 = vmatpush1.bf16.msra.mxu0 %v7624
        %8421 = vmatprep.subr.bf16.mxu0 0
        %8422 = vmatpush1.bf16.msra.mxu0 %v7627
        %8423 = vmatprep.subr.bf16.mxu0 0
        %8424 = vmatpush1.bf16.msra.mxu0 %v7630
        %8425 = vmatprep.subr.bf16.mxu0 0
        %8426 = vmatpush1.bf16.msra.mxu0 %v7633
        %8427 = vmatprep.subr.bf16.mxu0 0
        %8428 = vmatpush1.bf16.msra.mxu0 %v7636
        %8429 = vmatprep.subr.bf16.mxu0 0
        %8430 = vmatpush1.bf16.msra.mxu0 %v7639
        %8431 = vmatprep.subr.bf16.mxu0 0
        %8432 = vmatpush1.bf16.msra.mxu0 %v7642
        %8433 = vmatprep.mubr.bf16.mxu0 %v6131
        %8434 = vmatmul.mubr.bf16.gmra.mrb[0].mxu0 %v6130
        %v8435 = vpop.f32.mrb[0].mxu0
        %v8436 = vadd.f32 %v8396, %v8435
        %v8437 = vpop.f32.mrb[0].mxu0
        %v8438 = vpop.f32.mrb[0].mxu0
        %v8439 = vpop.f32.mrb[0].mxu0
        %8440 = vdwg.mxu0
        %8441 = vmatprep.subr.bf16.mxu0 0
        %8442 = vmatpush1.bf16.msra.mxu0 %v7645
        %8443 = vmatprep.subr.bf16.mxu0 0
        %8444 = vmatpush1.bf16.msra.mxu0 %v7648
        %8445 = vmatprep.subr.bf16.mxu0 0
        %8446 = vmatpush1.bf16.msra.mxu0 %v7651
        %8447 = vmatprep.subr.bf16.mxu0 0
        %8448 = vmatpush1.bf16.msra.mxu0 %v7654
        %8449 = vmatprep.subr.bf16.mxu0 0
        %8450 = vmatpush1.bf16.msra.mxu0 %v7657
        %8451 = vmatprep.subr.bf16.mxu0 0
        %8452 = vmatpush1.bf16.msra.mxu0 %v7660
        %8453 = vmatprep.subr.bf16.mxu0 0
        %8454 = vmatpush1.bf16.msra.mxu0 %v7663
        %8455 = vmatprep.subr.bf16.mxu0 0
        %8456 = vmatpush1.bf16.msra.mxu0 %v7666
        %8457 = vmatprep.subr.bf16.mxu0 0
        %8458 = vmatpush1.bf16.msra.mxu0 %v7669
        %8459 = vmatprep.subr.bf16.mxu0 0
        %8460 = vmatpush1.bf16.msra.mxu0 %v7672
        %8461 = vmatprep.subr.bf16.mxu0 0
        %8462 = vmatpush1.bf16.msra.mxu0 %v7675
        %8463 = vmatprep.subr.bf16.mxu0 0
        %8464 = vmatpush1.bf16.msra.mxu0 %v7678
        %8465 = vmatprep.subr.bf16.mxu0 0
        %8466 = vmatpush1.bf16.msra.mxu0 %v7681
        %8467 = vmatprep.subr.bf16.mxu0 0
        %8468 = vmatpush1.bf16.msra.mxu0 %v7684
        %8469 = vmatprep.subr.bf16.mxu0 0
        %8470 = vmatpush1.bf16.msra.mxu0 %v7687
        %8471 = vmatprep.subr.bf16.mxu0 0
        %8472 = vmatpush1.bf16.msra.mxu0 %v7690
        %8473 = vmatprep.mubr.bf16.mxu0 %v6133
        %8474 = vmatmul.mubr.bf16.gmra.mrb[0].mxu0 %v6132
        %v8475 = vpop.f32.mrb[0].mxu0
        %v8476 = vadd.f32 %v8436, %v8475
        %v8477 = vpop.f32.mrb[0].mxu0
        %v8478 = vpop.f32.mrb[0].mxu0
        %v8479 = vpop.f32.mrb[0].mxu0
        %8480 = vdwg.mxu0
        %8481 = vmatprep.subr.bf16.mxu0 0
        %8482 = vmatpush1.bf16.msra.mxu0 %v7693
        %8483 = vmatprep.subr.bf16.mxu0 0
        %8484 = vmatpush1.bf16.msra.mxu0 %v7696
        %8485 = vmatprep.subr.bf16.mxu0 0
        %8486 = vmatpush1.bf16.msra.mxu0 %v7699
        %8487 = vmatprep.subr.bf16.mxu0 0
        %8488 = vmatpush1.bf16.msra.mxu0 %v7702
        %8489 = vmatprep.subr.bf16.mxu0 0
        %8490 = vmatpush1.bf16.msra.mxu0 %v7705
        %8491 = vmatprep.subr.bf16.mxu0 0
        %8492 = vmatpush1.bf16.msra.mxu0 %v7708
        %8493 = vmatprep.subr.bf16.mxu0 0
        %8494 = vmatpush1.bf16.msra.mxu0 %v7711
        %8495 = vmatprep.subr.bf16.mxu0 0
        %8496 = vmatpush1.bf16.msra.mxu0 %v7714
        %8497 = vmatprep.subr.bf16.mxu0 0
        %8498 = vmatpush1.bf16.msra.mxu0 %v7717
        %8499 = vmatprep.subr.bf16.mxu0 0
        %8500 = vmatpush1.bf16.msra.mxu0 %v7720
        %8501 = vmatprep.subr.bf16.mxu0 0
        %8502 = vmatpush1.bf16.msra.mxu0 %v7723
        %8503 = vmatprep.subr.bf16.mxu0 0
        %8504 = vmatpush1.bf16.msra.mxu0 %v7726
        %8505 = vmatprep.subr.bf16.mxu0 0
        %8506 = vmatpush1.bf16.msra.mxu0 %v7729
        %8507 = vmatprep.subr.bf16.mxu0 0
        %8508 = vmatpush1.bf16.msra.mxu0 %v7732
        %8509 = vmatprep.subr.bf16.mxu0 0
        %8510 = vmatpush1.bf16.msra.mxu0 %v7735
        %8511 = vmatprep.subr.bf16.mxu0 0
        %8512 = vmatpush1.bf16.msra.mxu0 %v7738
        %8513 = vmatprep.mubr.bf16.mxu0 %v6135
        %8514 = vmatmul.mubr.bf16.gmra.mrb[0].mxu0 %v6134
        %v8515 = vpop.f32.mrb[0].mxu0
        %v8516 = vadd.f32 %v8476, %v8515
        %v8517 = vpop.f32.mrb[0].mxu0
        %v8518 = vpop.f32.mrb[0].mxu0
        %v8519 = vpop.f32.mrb[0].mxu0
        %8520 = vdwg.mxu0
        %8521 = vmatprep.subr.bf16.mxu0 0
        %8522 = vmatpush1.bf16.msra.mxu0 %v7741
        %8523 = vmatprep.subr.bf16.mxu0 0
        %8524 = vmatpush1.bf16.msra.mxu0 %v7744
        %8525 = vmatprep.subr.bf16.mxu0 0
        %8526 = vmatpush1.bf16.msra.mxu0 %v7747
        %8527 = vmatprep.subr.bf16.mxu0 0
        %8528 = vmatpush1.bf16.msra.mxu0 %v7750
        %8529 = vmatprep.subr.bf16.mxu0 0
        %8530 = vmatpush1.bf16.msra.mxu0 %v7753
        %8531 = vmatprep.subr.bf16.mxu0 0
        %8532 = vmatpush1.bf16.msra.mxu0 %v7756
        %8533 = vmatprep.subr.bf16.mxu0 0
        %8534 = vmatpush1.bf16.msra.mxu0 %v7759
        %8535 = vmatprep.subr.bf16.mxu0 0
        %8536 = vmatpush1.bf16.msra.mxu0 %v7762
        %8537 = vmatprep.subr.bf16.mxu0 0
        %8538 = vmatpush1.bf16.msra.mxu0 %v7765
        %8539 = vmatprep.subr.bf16.mxu0 0
        %8540 = vmatpush1.bf16.msra.mxu0 %v7768
        %8541 = vmatprep.subr.bf16.mxu0 0
        %8542 = vmatpush1.bf16.msra.mxu0 %v7771
        %8543 = vmatprep.subr.bf16.mxu0 0
        %8544 = vmatpush1.bf16.msra.mxu0 %v7774
        %8545 = vmatprep.subr.bf16.mxu0 0
        %8546 = vmatpush1.bf16.msra.mxu0 %v7777
        %8547 = vmatprep.subr.bf16.mxu0 0
        %8548 = vmatpush1.bf16.msra.mxu0 %v7780
        %8549 = vmatprep.subr.bf16.mxu0 0
        %8550 = vmatpush1.bf16.msra.mxu0 %v7783
        %8551 = vmatprep.subr.bf16.mxu0 0
        %8552 = vmatpush1.bf16.msra.mxu0 %v7786
        %8553 = vmatprep.mubr.bf16.mxu0 %v6137
        %8554 = vmatmul.mubr.bf16.gmra.mrb[0].mxu0 %v6136
        %v8555 = vpop.f32.mrb[0].mxu0
        %v8556 = vadd.f32 %v8516, %v8555
        %v8557 = vpop.f32.mrb[0].mxu0
        %v8558 = vpop.f32.mrb[0].mxu0
        %v8559 = vpop.f32.mrb[0].mxu0
        %8560 = vdwg.mxu0
        %v8561 = vadd.f32 %v3763, %v8315
        %v8562 = vadd.f32 %v3764, %v8317
        %v8563 = vadd.f32 %v3765, %v8556
        %8564 = vst [vmem:[%s575] sm:$0xff] %v8561
        %8565 = vst [vmem:[%s575 + $0x8] sm:$0xff] %v8562
        %8566 = vst [vmem:[%s575 + $0x10] sm:$0xff] %v8563
        %s8567 = sand.u32 %s300, 1
        %s8568 = scalar_lea.sflag [#allocation4], %s8567
        %s8569 = sand.u32 %s300, 1
        %s8570 = smul.addr %s8569, 24
        %s8571 = scalar_lea.vmem [#allocation22], %s8570
        // Predicated region
        $region117: #{tpu_custom_call.1} parent=67 // pred_check
          %p8572 = pneg %p310
        $region118: #{tpu_custom_call.1} parent=67 // pred_check_branch
          %8574 = sbr.rel (%p8572) target = $region120
        $region119: #{tpu_custom_call.1} parent=67 // pred_region
          %s8576 = ssub.s32 384, 384
          %8577 = vsyncadd %s8568, %s8576
          %s8578 = smul.addr %s35, 3
          %s8579 = smul.addr %s8578, 128
          %s8580 = scalar_lea.hbm %s12, %s8579
          %s8582 = sshll.u32 %s8571, 4
          %s8583 = int_to_ptr.vmem [resolvable:$true] %s8582
          %8585 = dma.vmem_to_hbm [thread:$0]  %s8583, 384, %s8580, %s8568
        $region120: #{tpu_custom_call.1} parent=67 // pred_fallthru
          _
      $region68: #{tpu_custom_call.1} parent=5 // pred_fallthru
        _
      %p8586 = scmp.le.s32.totalorder 2, %s30
      // Predicated region
      $region121: #{tpu_custom_call.1} parent=5 // pred_check
        %p8587 = pneg %p8586
      $region122: #{tpu_custom_call.1} parent=5 // pred_check_branch
        %8589 = sbr.rel (%p8587) target = $region124
      $region123: #{tpu_custom_call.1} parent=5 // pred_region
        %s8590 = ssub.s32 %s30, 2
        // Predicated region
        $region125: #{tpu_custom_call.1} parent=123 // pred_check
          %p8591 = pneg %p316
        $region126: #{tpu_custom_call.1} parent=123 // pred_check_branch
          %8593 = sbr.rel (%p8591) target = $region128
        $region127: #{tpu_custom_call.1} parent=123 // pred_region
          %s8594 = sand.u32 %s301, 1
          %s8595 = scalar_lea.sflag [#allocation4], %s8594
          %s8596 = sand.u32 %s301, 1
          %s8597 = smul.addr %s8596, 24
          %s8598 = scalar_lea.vmem [#allocation22], %s8597
          %8599 = dma.done %s8595, 384
        $region128: #{tpu_custom_call.1} parent=123 // pred_fallthru
          _
      $region124: #{tpu_custom_call.1} parent=5 // pred_fallthru
        _
    $region6: #{tpu_custom_call.1} parent=1 // loop_footer
      %s34 = sadd.s32 1, %s30
    $region7: #{tpu_custom_call.1} parent=1 // loop_footer_branch
      %29 = sbr.rel target = $region3
    $region8: #{tpu_custom_call.1} parent=1 // loop_exit
      _
    %8600 = vsyncpa [#allocation3], 1
    %s8601 = scalar_lea.sflag [#allocation3], 1
    %8602 = vsyncpa %s8601, 1
    %8603 = vsyncpa [#allocation6], 1
    %8604 = vsyncpa [#allocation9], 1
    %8605 = vsyncpa [#allocation12], 1
    %8606 = vsyncpa [#allocation15], 1
    %8607 = vsyncpa [#allocation18], 1
    %8608 = vsyncpa [#allocation21], 1
    %8609 = vsyncpa [#allocation4], 1
    %s8610 = scalar_lea.sflag [#allocation4], 1
    %8611 = vsyncpa %s8610, 1

</llo_original>
